<compile_context>
chip_gen: v5e
topology: v5e:2x2
jax: 0.10.0
libtpu: 0.0.40
codegen_flags: <defaults>
</compile_context>

<pallas_src>
import jax
import jax.numpy as jnp
import numpy as np
from jax.experimental import pallas as pl
from jax.experimental.pallas import tpu as pltpu


TILE_N = 256  # rows per grid step; >= MXU height on v6e/v7x, multiple of 128 for v5e


# ----------------------------------------------------------------------------
# Pallas kernel: one batch tile of the fused SAHR forward.
# Dropout layers are identity (inference semantics).
# ----------------------------------------------------------------------------
def sahr_forward_kernel(
    gb_ref,                        # (1,1)  SMEM  global bias (scalar)
    u_ref, i_ref,                  # (T,D)  VMEM  user / item embeddings (f32)
    ub_ref, ib_ref,                # (T,1)  VMEM  user / item bias (f32)
    uf_ref, if_ref,                # (T,Ku*D), (T,Ki*D)  flattened feats (bf16)
    uw1, ub1, uw2, ub2, uw3, ub3,  # user MLP (weights bf16, biases f32), (in,out)
    iw1, ib1, iw2, ib2, iw3, ib3,  # item MLP
    vatt_ref,                      # (1,D)  collapsed attention gate vector (f32)
    tgt_ref,                       # (T,1)  targets (f32)
    msk_ref,                       # (T,1)  1.0 real row / 0.0 padded row
    sse_ref,                       # (1,3)  SMEM output: accumulated sum-sq-errors
):
    b = pl.program_id(0)

    @pl.when(b == 0)
    def _init():
        sse_ref[0, 0] = 0.0
        sse_ref[0, 1] = 0.0
        sse_ref[0, 2] = 0.0

    users = u_ref[...]
    items = i_ref[...]

    # cf score: row-wise dot product
    cf_score = jnp.sum(users * items, axis=1, keepdims=True)            # (T,1)

    def mlp(x, w1, b1, w2, b2, w3, b3):
        h = jnp.dot(x, w1[...], preferred_element_type=jnp.float32) + b1[...]
        h = jnp.maximum(h, 0.0).astype(jnp.bfloat16)
        h = jnp.dot(h, w2[...], preferred_element_type=jnp.float32) + b2[...]
        h = jnp.maximum(h, 0.0).astype(jnp.bfloat16)
        return jnp.dot(h, w3[...], preferred_element_type=jnp.float32) + b3[...]

    cb_users = mlp(uf_ref[...], uw1, ub1, uw2, ub2, uw3, ub3)            # (T,D) f32
    cb_items = mlp(if_ref[...], iw1, ib1, iw2, ib2, iw3, ib3)            # (T,D) f32
    cb_score = jnp.sum(cb_users * cb_items, axis=1, keepdims=True)       # (T,1)

    # Collapsed attention gate: logit(v) = v @ (att_w @ att_h); the att_w bias
    # is identical for both logits and cancels inside the sigmoid, and
    # exp(a)/(exp(a)+exp(b)) == sigmoid(a-b) exactly.
    vatt = vatt_ref[...]                                                 # (1,D)

    def gate_logit(v):
        return jnp.sum(v * vatt, axis=1, keepdims=True)                  # (T,1)

    def att_combine(cf, cb):
        w_cf = jax.nn.sigmoid(gate_logit(cf) - gate_logit(cb))
        return w_cf * cf + (1.0 - w_cf) * cb

    users_c = att_combine(users, cb_users)
    items_c = att_combine(items, cb_items)
    score = jnp.sum(users_c * items_c, axis=1, keepdims=True)            # (T,1)

    # Shared residual term (bias_score - target), computed once per tile.
    db = ub_ref[...] + ib_ref[...] + gb_ref[0, 0] - tgt_ref[...]         # (T,1)
    m = msk_ref[...]

    def sse(pred):
        e = (pred + db) * m
        return jnp.sum(e * e)

    sse_ref[0, 0] += sse(cf_score)
    sse_ref[0, 1] += sse(cb_score)
    sse_ref[0, 2] += sse(score)


# ----------------------------------------------------------------------------
# Wrapper
# ----------------------------------------------------------------------------
def sahr_forward(params, users, items, user_feats, item_feats, targets,
                 *, tile_n=TILE_N):
    n = users.shape[0]
    d = params["user_emb"].shape[1]

    # glue: embedding gathers + flatten (row-major, same as torch .view(N,-1))
    u_emb = params["user_emb"][users]
    i_emb = params["item_emb"][items]
    u_b = params["user_bias"][users]
    i_b = params["item_bias"][items]
    uf = params["feat_emb"][user_feats].reshape(n, -1)
    ifl = params["feat_emb"][item_feats].reshape(n, -1)
    tgt = targets.reshape(n, 1).astype(jnp.float32)

    # pad batch to a multiple of tile_n; mask zeroes padded rows' error.
    n_pad = ((n + tile_n - 1) // tile_n) * tile_n
    pad = n_pad - n
    mask = jnp.concatenate(
        [jnp.ones((n, 1), jnp.float32), jnp.zeros((pad, 1), jnp.float32)], axis=0)

    def pad_rows(x):
        return jnp.pad(x, ((0, pad), (0, 0))) if pad else x

    u_emb, i_emb, u_b, i_b, tgt = map(pad_rows, (u_emb, i_emb, u_b, i_b, tgt))
    uf = pad_rows(uf).astype(jnp.bfloat16)
    ifl = pad_rows(ifl).astype(jnp.bfloat16)

    # Zero-pad the 500-wide hidden layer to 512 for clean (8,128) MXU tiles.
    # Exact: padded columns give ReLU(0)=0 and hit zero rows of w2.
    h1 = params["u_w1"].shape[1]
    h1_pad = ((h1 + 127) // 128) * 128
    dh = h1_pad - h1

    def pad_hidden(w1, b1, w2):
        return (jnp.pad(w1, ((0, 0), (0, dh))),
                jnp.pad(b1, ((0, 0), (0, dh))),
                jnp.pad(w2, ((0, dh), (0, 0))))

    uw1, ub1, uw2 = pad_hidden(params["u_w1"], params["u_b1"], params["u_w2"])
    iw1, ib1, iw2 = pad_hidden(params["i_w1"], params["i_b1"], params["i_w2"])

    bf16 = lambda x: x.astype(jnp.bfloat16)
    uw1, uw2, uw3 = bf16(uw1), bf16(uw2), bf16(params["u_w3"])
    iw1, iw2, iw3 = bf16(iw1), bf16(iw2), bf16(params["i_w3"])

    # Collapse the attention gate's two linears (no nonlinearity in between).
    v_att = (params["att_w"] @ params["att_h"]).reshape(1, d).astype(jnp.float32)

    d_in_u = uf.shape[1]
    d_in_i = ifl.shape[1]
    h2 = uw2.shape[1]
    grid = (n_pad // tile_n,)

    def row_spec(feat):                      # batch-tiled operands
        return pl.BlockSpec((tile_n, feat), lambda b: (b, 0))

    def full_spec(shape):                    # resident weights
        return pl.BlockSpec(shape, lambda b: (0, 0))

    smem11 = pl.BlockSpec((1, 1), lambda b: (0, 0),
                          memory_space=pltpu.MemorySpace.SMEM)

    in_specs = [
        smem11,                                   # global bias
        row_spec(d), row_spec(d),                 # u_emb, i_emb
        row_spec(1), row_spec(1),                 # u_b, i_b
        row_spec(d_in_u), row_spec(d_in_i),       # uf, ifl
        full_spec((d_in_u, h1_pad)), full_spec((1, h1_pad)),
        full_spec((h1_pad, h2)), full_spec((1, h2)),
        full_spec((h2, d)), full_spec((1, d)),
        full_spec((d_in_i, h1_pad)), full_spec((1, h1_pad)),
        full_spec((h1_pad, h2)), full_spec((1, h2)),
        full_spec((h2, d)), full_spec((1, d)),
        full_spec((1, d)),                        # v_att
        row_spec(1), row_spec(1),                 # tgt, mask
    ]

    sse = pl.pallas_call(
        sahr_forward_kernel,
        out_shape=jax.ShapeDtypeStruct((1, 3), jnp.float32),
        grid=grid,
        in_specs=in_specs,
        out_specs=pl.BlockSpec((1, 3), lambda b: (0, 0),
                               memory_space=pltpu.MemorySpace.SMEM),
        compiler_params=pltpu.CompilerParams(
            # batch axis is a reduction into the resident SMEM accumulator
            dimension_semantics=("arbitrary",)),
    )(
        params["global_bias"],
        u_emb, i_emb, u_b, i_b, uf, ifl,
        uw1, ub1, uw2, params["u_b2"], uw3, params["u_b3"],
        iw1, ib1, iw2, params["i_b2"], iw3, params["i_b3"],
        v_att, tgt, mask,
    )

    inv_n = 1.0 / float(n)
    return (jnp.sqrt(sse[0, 0] * inv_n)
            + jnp.sqrt(sse[0, 1] * inv_n)
            + jnp.sqrt(sse[0, 2] * inv_n))


# ----------------------------------------------------------------------------
# Pure-JAX reference (faithful to the torch forward) for a numerical check.
# ----------------------------------------------------------------------------
def sahr_forward_ref(params, users, items, user_feats, item_feats, targets):
    n = users.shape[0]
    u = params["user_emb"][users]
    it = params["item_emb"][items]
    ub = params["user_bias"][users]
    ib = params["item_bias"][items]
    uf = params["feat_emb"][user_feats].reshape(n, -1)
    ifl = params["feat_emb"][item_feats].reshape(n, -1)
    tgt = targets.reshape(n, 1).astype(jnp.float32)

    def mlp(x, p):
        h = jnp.maximum(x @ params[p + "_w1"] + params[p + "_b1"], 0.0)
        h = jnp.maximum(h @ params[p + "_w2"] + params[p + "_b2"], 0.0)
        return h @ params[p + "_w3"] + params[p + "_b3"]

    cf_score = jnp.sum(u * it, axis=1, keepdims=True)
    cb_u, cb_i = mlp(uf, "u"), mlp(ifl, "i")
    cb_score = jnp.sum(cb_u * cb_i, axis=1, keepdims=True)
    bias_score = ub + ib + params["global_bias"][0, 0]

    def gate(v):
        return jnp.exp((v @ params["att_w"] + params["att_w_b"]) @ params["att_h"])

    def comb(cf, cb):
        e_cf, e_cb = gate(cf), gate(cb)
        w = e_cf / (e_cf + e_cb)
        return w * cf + (1.0 - w) * cb

    uc, ic = comb(u, cb_u), comb(it, cb_i)
    score = jnp.sum(uc * ic, axis=1, keepdims=True)

    def rmse(pred):
        return jnp.sqrt(jnp.mean((pred - tgt) ** 2))

    return (rmse(cf_score + bias_score) + rmse(cb_score + bias_score)
            + rmse(score + bias_score))


def make_params(key, *, n_users, n_items, n_feats, n_user_feats, n_item_feats,
                embed_dim=32, att_dim=16, d_model=32, d_ff2=(500, 64), std=0.01):
    ks = jax.random.split(key, 20)
    f32 = jnp.float32

    def nrm(k, shape, s=std):
        return (s * jax.random.normal(k, shape)).astype(f32)

    def unif(k, shape, fan_in):
        lim = 1.0 / np.sqrt(fan_in)
        return jax.random.uniform(k, shape, minval=-lim, maxval=lim).astype(f32)

    p = {}
    # init_weight(): biases zeroed, global bias = 0.1, embeddings ~ N(0, std)
    p["user_bias"] = jnp.zeros((n_users, 1), f32)
    p["item_bias"] = jnp.zeros((n_items, 1), f32)
    p["global_bias"] = jnp.full((1, 1), 0.1, f32)
    p["user_emb"] = nrm(ks[0], (n_users, embed_dim))
    p["item_emb"] = nrm(ks[1], (n_items, embed_dim))
    p["feat_emb"] = nrm(ks[2], (n_feats, d_model))
    # attention (weights stored transposed as (in,out) for the kernel)
    p["att_w"] = nrm(ks[3], (embed_dim, att_dim))
    p["att_w_b"] = unif(ks[4], (1, att_dim), embed_dim)
    p["att_h"] = nrm(ks[5], (att_dim, 1))
    # ConcatFeedForward MLPs: w_1, w_2 default (uniform) init, w_3 ~ N(0, std)
    d_in_u = n_user_feats * d_model
    d_in_i = n_item_feats * d_model
    h1, h2 = d_ff2
    p["u_w1"] = unif(ks[6], (d_in_u, h1), d_in_u)
    p["u_b1"] = unif(ks[7], (1, h1), d_in_u)
    p["u_w2"] = unif(ks[8], (h1, h2), h1)
    p["u_b2"] = unif(ks[9], (1, h2), h1)
    p["u_w3"] = nrm(ks[10], (h2, embed_dim))
    p["u_b3"] = unif(ks[11], (1, embed_dim), h2)
    p["i_w1"] = unif(ks[12], (d_in_i, h1), d_in_i)
    p["i_b1"] = unif(ks[13], (1, h1), d_in_i)
    p["i_w2"] = unif(ks[14], (h1, h2), h1)
    p["i_b2"] = unif(ks[15], (1, h2), h1)
    p["i_w3"] = nrm(ks[16], (h2, embed_dim))
    p["i_b3"] = unif(ks[17], (1, embed_dim), h2)
    return p


if __name__ == "__main__":
    # Small config consistent with the module defaults; batch > TILE_N so the
    # grid, accumulation and ragged-tile masking are all exercised.
    N = 500
    n_users, n_items, n_feats = 50, 60, 40
    n_user_feats, n_item_feats = 3, 4
    embed_dim = d_model = 32
    att_dim = 16
    d_ff2 = (500, 64)

    key = jax.random.PRNGKey(0)
    kp, k1, k2, k3, k4, k5 = jax.random.split(key, 6)

    params = make_params(
        kp, n_users=n_users, n_items=n_items, n_feats=n_feats,
        n_user_feats=n_user_feats, n_item_feats=n_item_feats,
        embed_dim=embed_dim, att_dim=att_dim, d_model=d_model, d_ff2=d_ff2,
    )

    users = jax.random.randint(k1, (N,), 0, n_users)
    items = jax.random.randint(k2, (N,), 0, n_items)
    user_feats = jax.random.randint(k3, (N, n_user_feats), 0, n_feats)
    item_feats = jax.random.randint(k4, (N, n_item_feats), 0, n_feats)
    targets = jax.random.uniform(k5, (N,), minval=0.0, maxval=5.0)

    loss = sahr_forward(params, users, items, user_feats, item_feats, targets)
    loss = jax.block_until_ready(loss)

    loss_ref = jax.block_until_ready(
        sahr_forward_ref(params, users, items, user_feats, item_feats, targets)
    )
    assert np.isfinite(float(loss))
    # bf16 MXU inputs (f32 accumulation) -> allow a slightly loose tolerance.
    assert abs(float(loss) - float(loss_ref)) < 1e-2 * max(1.0, abs(float(loss_ref))), (
        float(loss), float(loss_ref))

    print("KERNEL_OK")
</pallas_src>

<mosaic_0001>
module attributes {stable_mosaic.version = 11 : i64} {
  func.func @sahr_forward_kernel(%arg0: i32, %arg1: memref<1x1xf32, #tpu.memory_space<smem>>, %arg2: memref<256x32xf32, #tpu.memory_space<vmem>>, %arg3: memref<256x32xf32, #tpu.memory_space<vmem>>, %arg4: memref<256x1xf32, #tpu.memory_space<vmem>>, %arg5: memref<256x1xf32, #tpu.memory_space<vmem>>, %arg6: memref<256x96xbf16, #tpu.memory_space<vmem>>, %arg7: memref<256x128xbf16, #tpu.memory_space<vmem>>, %arg8: memref<96x512xbf16, #tpu.memory_space<vmem>>, %arg9: memref<1x512xf32, #tpu.memory_space<vmem>>, %arg10: memref<512x64xbf16, #tpu.memory_space<vmem>>, %arg11: memref<1x64xf32, #tpu.memory_space<vmem>>, %arg12: memref<64x32xbf16, #tpu.memory_space<vmem>>, %arg13: memref<1x32xf32, #tpu.memory_space<vmem>>, %arg14: memref<128x512xbf16, #tpu.memory_space<vmem>>, %arg15: memref<1x512xf32, #tpu.memory_space<vmem>>, %arg16: memref<512x64xbf16, #tpu.memory_space<vmem>>, %arg17: memref<1x64xf32, #tpu.memory_space<vmem>>, %arg18: memref<64x32xbf16, #tpu.memory_space<vmem>>, %arg19: memref<1x32xf32, #tpu.memory_space<vmem>>, %arg20: memref<1x32xf32, #tpu.memory_space<vmem>>, %arg21: memref<256x1xf32, #tpu.memory_space<vmem>>, %arg22: memref<256x1xf32, #tpu.memory_space<vmem>>, %arg23: memref<1x3xf32, #tpu.memory_space<smem>>) attributes {dimension_semantics = [#tpu.dimension_semantics<arbitrary>], iteration_bounds = array<i64: 2>, scalar_prefetch = 0 : i64, scratch_operands = 0 : i64, tpu.core_type = #tpu.core_type<tc>, window_params = [{transform_indices = @transform_0, window_bounds = array<i64: 1, 1>}, {transform_indices = @transform_1, window_bounds = array<i64: 256, 32>}, {transform_indices = @transform_2, window_bounds = array<i64: 256, 32>}, {transform_indices = @transform_3, window_bounds = array<i64: 256, 1>}, {transform_indices = @transform_4, window_bounds = array<i64: 256, 1>}, {transform_indices = @transform_5, window_bounds = array<i64: 256, 96>}, {transform_indices = @transform_6, window_bounds = array<i64: 256, 128>}, {pipeline_mode = #tpu.pipeline_mode<synchronous>, transform_indices = @transform_7, window_bounds = array<i64: 96, 512>}, {pipeline_mode = #tpu.pipeline_mode<synchronous>, transform_indices = @transform_8, window_bounds = array<i64: 1, 512>}, {pipeline_mode = #tpu.pipeline_mode<synchronous>, transform_indices = @transform_9, window_bounds = array<i64: 512, 64>}, {pipeline_mode = #tpu.pipeline_mode<synchronous>, transform_indices = @transform_10, window_bounds = array<i64: 1, 64>}, {pipeline_mode = #tpu.pipeline_mode<synchronous>, transform_indices = @transform_11, window_bounds = array<i64: 64, 32>}, {pipeline_mode = #tpu.pipeline_mode<synchronous>, transform_indices = @transform_12, window_bounds = array<i64: 1, 32>}, {pipeline_mode = #tpu.pipeline_mode<synchronous>, transform_indices = @transform_13, window_bounds = array<i64: 128, 512>}, {pipeline_mode = #tpu.pipeline_mode<synchronous>, transform_indices = @transform_14, window_bounds = array<i64: 1, 512>}, {pipeline_mode = #tpu.pipeline_mode<synchronous>, transform_indices = @transform_15, window_bounds = array<i64: 512, 64>}, {pipeline_mode = #tpu.pipeline_mode<synchronous>, transform_indices = @transform_16, window_bounds = array<i64: 1, 64>}, {pipeline_mode = #tpu.pipeline_mode<synchronous>, transform_indices = @transform_17, window_bounds = array<i64: 64, 32>}, {pipeline_mode = #tpu.pipeline_mode<synchronous>, transform_indices = @transform_18, window_bounds = array<i64: 1, 32>}, {pipeline_mode = #tpu.pipeline_mode<synchronous>, transform_indices = @transform_19, window_bounds = array<i64: 1, 32>}, {transform_indices = @transform_20, window_bounds = array<i64: 256, 1>}, {transform_indices = @transform_21, window_bounds = array<i64: 256, 1>}, {transform_indices = @transform_22, window_bounds = array<i64: 1, 3>}]} {
    %c0_i32 = arith.constant 0 : i32
    %0 = arith.cmpi eq, %arg0, %c0_i32 : i32
    %1 = arith.extui %0 : i1 to i32
    %c0_i32_0 = arith.constant 0 : i32
    %2 = arith.cmpi ne, %1, %c0_i32_0 : i32
    scf.if %2 {
      %cst_77 = arith.constant 0.000000e+00 : f32
      %c0_78 = arith.constant 0 : index
      %c0_79 = arith.constant 0 : index
      %140 = memref.load %arg23[%c0_78, %c0_79] : memref<1x3xf32, #tpu.memory_space<smem>>
      memref.store %cst_77, %arg23[%c0_78, %c0_79] : memref<1x3xf32, #tpu.memory_space<smem>>
      %cst_80 = arith.constant 0.000000e+00 : f32
      %c0_81 = arith.constant 0 : index
      %c1_82 = arith.constant 1 : index
      %141 = memref.load %arg23[%c0_81, %c1_82] : memref<1x3xf32, #tpu.memory_space<smem>>
      memref.store %cst_80, %arg23[%c0_81, %c1_82] : memref<1x3xf32, #tpu.memory_space<smem>>
      %cst_83 = arith.constant 0.000000e+00 : f32
      %c0_84 = arith.constant 0 : index
      %c2_85 = arith.constant 2 : index
      %142 = memref.load %arg23[%c0_84, %c2_85] : memref<1x3xf32, #tpu.memory_space<smem>>
      memref.store %cst_83, %arg23[%c0_84, %c2_85] : memref<1x3xf32, #tpu.memory_space<smem>>
    } else {
    }
    %c0 = arith.constant 0 : index
    %c0_1 = arith.constant 0 : index
    %3 = vector.load %arg2[%c0, %c0_1] : memref<256x32xf32, #tpu.memory_space<vmem>>, vector<256x32xf32>
    %c0_2 = arith.constant 0 : index
    %c0_3 = arith.constant 0 : index
    %4 = vector.load %arg3[%c0_2, %c0_3] : memref<256x32xf32, #tpu.memory_space<vmem>>, vector<256x32xf32>
    %5 = arith.mulf %3, %4 : vector<256x32xf32>
    %cst = arith.constant dense<0.000000e+00> : vector<256xf32>
    %6 = vector.multi_reduction <add>, %5, %cst [1] : vector<256x32xf32> to vector<256xf32>
    %7 = vector.shape_cast %6 : vector<256xf32> to vector<256x1xf32>
    %c0_4 = arith.constant 0 : index
    %c0_5 = arith.constant 0 : index
    %8 = vector.load %arg6[%c0_4, %c0_5] : memref<256x96xbf16, #tpu.memory_space<vmem>>, vector<256x96xbf16>
    %c0_6 = arith.constant 0 : index
    %c0_7 = arith.constant 0 : index
    %9 = vector.load %arg8[%c0_6, %c0_7] : memref<96x512xbf16, #tpu.memory_space<vmem>>, vector<96x512xbf16>
    %cst_8 = arith.constant dense<0.000000e+00> : vector<256x512xf32>
    %10 = tpu.matmul %8, %9, %cst_8 {dimension_numbers = #tpu.dot_dimension_numbers<[1], [0], [0], [1], [0, 0, 1, 1], [], []>} : vector<256x96xbf16>, vector<96x512xbf16>, vector<256x512xf32> -> vector<256x512xf32>
    %c0_9 = arith.constant 0 : index
    %c0_10 = arith.constant 0 : index
    %11 = vector.load %arg9[%c0_9, %c0_10] : memref<1x512xf32, #tpu.memory_space<vmem>>, vector<1x512xf32>
    %12 = vector.broadcast %11 : vector<1x512xf32> to vector<256x512xf32>
    %13 = arith.addf %10, %12 : vector<256x512xf32>
    %cst_11 = arith.constant 0.000000e+00 : f32
    %14 = vector.broadcast %cst_11 : f32 to vector<256x512xf32>
    %15 = arith.maximumf %13, %14 : vector<256x512xf32>
    %16 = arith.truncf %15 : vector<256x512xf32> to vector<256x512xbf16>
    %c0_12 = arith.constant 0 : index
    %c0_13 = arith.constant 0 : index
    %17 = vector.load %arg10[%c0_12, %c0_13] : memref<512x64xbf16, #tpu.memory_space<vmem>>, vector<512x64xbf16>
    %cst_14 = arith.constant dense<0.000000e+00> : vector<256x64xf32>
    %18 = tpu.matmul %16, %17, %cst_14 {dimension_numbers = #tpu.dot_dimension_numbers<[1], [0], [0], [1], [0, 0, 1, 1], [], []>} : vector<256x512xbf16>, vector<512x64xbf16>, vector<256x64xf32> -> vector<256x64xf32>
    %c0_15 = arith.constant 0 : index
    %c0_16 = arith.constant 0 : index
    %19 = vector.load %arg11[%c0_15, %c0_16] : memref<1x64xf32, #tpu.memory_space<vmem>>, vector<1x64xf32>
    %20 = vector.broadcast %19 : vector<1x64xf32> to vector<256x64xf32>
    %21 = arith.addf %18, %20 : vector<256x64xf32>
    %cst_17 = arith.constant 0.000000e+00 : f32
    %22 = vector.broadcast %cst_17 : f32 to vector<256x64xf32>
    %23 = arith.maximumf %21, %22 : vector<256x64xf32>
    %24 = arith.truncf %23 : vector<256x64xf32> to vector<256x64xbf16>
    %c0_18 = arith.constant 0 : index
    %c0_19 = arith.constant 0 : index
    %25 = vector.load %arg12[%c0_18, %c0_19] : memref<64x32xbf16, #tpu.memory_space<vmem>>, vector<64x32xbf16>
    %cst_20 = arith.constant dense<0.000000e+00> : vector<256x32xf32>
    %26 = tpu.matmul %24, %25, %cst_20 {dimension_numbers = #tpu.dot_dimension_numbers<[1], [0], [0], [1], [0, 0, 1, 1], [], []>} : vector<256x64xbf16>, vector<64x32xbf16>, vector<256x32xf32> -> vector<256x32xf32>
    %c0_21 = arith.constant 0 : index
    %c0_22 = arith.constant 0 : index
    %27 = vector.load %arg13[%c0_21, %c0_22] : memref<1x32xf32, #tpu.memory_space<vmem>>, vector<1x32xf32>
    %28 = vector.broadcast %27 : vector<1x32xf32> to vector<256x32xf32>
    %29 = arith.addf %26, %28 : vector<256x32xf32>
    %c0_23 = arith.constant 0 : index
    %c0_24 = arith.constant 0 : index
    %30 = vector.load %arg7[%c0_23, %c0_24] : memref<256x128xbf16, #tpu.memory_space<vmem>>, vector<256x128xbf16>
    %c0_25 = arith.constant 0 : index
    %c0_26 = arith.constant 0 : index
    %31 = vector.load %arg14[%c0_25, %c0_26] : memref<128x512xbf16, #tpu.memory_space<vmem>>, vector<128x512xbf16>
    %cst_27 = arith.constant dense<0.000000e+00> : vector<256x512xf32>
    %32 = tpu.matmul %30, %31, %cst_27 {dimension_numbers = #tpu.dot_dimension_numbers<[1], [0], [0], [1], [0, 0, 1, 1], [], []>} : vector<256x128xbf16>, vector<128x512xbf16>, vector<256x512xf32> -> vector<256x512xf32>
    %c0_28 = arith.constant 0 : index
    %c0_29 = arith.constant 0 : index
    %33 = vector.load %arg15[%c0_28, %c0_29] : memref<1x512xf32, #tpu.memory_space<vmem>>, vector<1x512xf32>
    %34 = vector.broadcast %33 : vector<1x512xf32> to vector<256x512xf32>
    %35 = arith.addf %32, %34 : vector<256x512xf32>
    %cst_30 = arith.constant 0.000000e+00 : f32
    %36 = vector.broadcast %cst_30 : f32 to vector<256x512xf32>
    %37 = arith.maximumf %35, %36 : vector<256x512xf32>
    %38 = arith.truncf %37 : vector<256x512xf32> to vector<256x512xbf16>
    %c0_31 = arith.constant 0 : index
    %c0_32 = arith.constant 0 : index
    %39 = vector.load %arg16[%c0_31, %c0_32] : memref<512x64xbf16, #tpu.memory_space<vmem>>, vector<512x64xbf16>
    %cst_33 = arith.constant dense<0.000000e+00> : vector<256x64xf32>
    %40 = tpu.matmul %38, %39, %cst_33 {dimension_numbers = #tpu.dot_dimension_numbers<[1], [0], [0], [1], [0, 0, 1, 1], [], []>} : vector<256x512xbf16>, vector<512x64xbf16>, vector<256x64xf32> -> vector<256x64xf32>
    %c0_34 = arith.constant 0 : index
    %c0_35 = arith.constant 0 : index
    %41 = vector.load %arg17[%c0_34, %c0_35] : memref<1x64xf32, #tpu.memory_space<vmem>>, vector<1x64xf32>
    %42 = vector.broadcast %41 : vector<1x64xf32> to vector<256x64xf32>
    %43 = arith.addf %40, %42 : vector<256x64xf32>
    %cst_36 = arith.constant 0.000000e+00 : f32
    %44 = vector.broadcast %cst_36 : f32 to vector<256x64xf32>
    %45 = arith.maximumf %43, %44 : vector<256x64xf32>
    %46 = arith.truncf %45 : vector<256x64xf32> to vector<256x64xbf16>
    %c0_37 = arith.constant 0 : index
    %c0_38 = arith.constant 0 : index
    %47 = vector.load %arg18[%c0_37, %c0_38] : memref<64x32xbf16, #tpu.memory_space<vmem>>, vector<64x32xbf16>
    %cst_39 = arith.constant dense<0.000000e+00> : vector<256x32xf32>
    %48 = tpu.matmul %46, %47, %cst_39 {dimension_numbers = #tpu.dot_dimension_numbers<[1], [0], [0], [1], [0, 0, 1, 1], [], []>} : vector<256x64xbf16>, vector<64x32xbf16>, vector<256x32xf32> -> vector<256x32xf32>
    %c0_40 = arith.constant 0 : index
    %c0_41 = arith.constant 0 : index
    %49 = vector.load %arg19[%c0_40, %c0_41] : memref<1x32xf32, #tpu.memory_space<vmem>>, vector<1x32xf32>
    %50 = vector.broadcast %49 : vector<1x32xf32> to vector<256x32xf32>
    %51 = arith.addf %48, %50 : vector<256x32xf32>
    %52 = arith.mulf %29, %51 : vector<256x32xf32>
    %cst_42 = arith.constant dense<0.000000e+00> : vector<256xf32>
    %53 = vector.multi_reduction <add>, %52, %cst_42 [1] : vector<256x32xf32> to vector<256xf32>
    %54 = vector.shape_cast %53 : vector<256xf32> to vector<256x1xf32>
    %c0_43 = arith.constant 0 : index
    %c0_44 = arith.constant 0 : index
    %55 = vector.load %arg20[%c0_43, %c0_44] : memref<1x32xf32, #tpu.memory_space<vmem>>, vector<1x32xf32>
    %56 = vector.broadcast %55 : vector<1x32xf32> to vector<256x32xf32>
    %57 = arith.mulf %3, %56 : vector<256x32xf32>
    %cst_45 = arith.constant dense<0.000000e+00> : vector<256xf32>
    %58 = vector.multi_reduction <add>, %57, %cst_45 [1] : vector<256x32xf32> to vector<256xf32>
    %59 = vector.shape_cast %58 : vector<256xf32> to vector<256x1xf32>
    %60 = vector.broadcast %55 : vector<1x32xf32> to vector<256x32xf32>
    %61 = arith.mulf %29, %60 : vector<256x32xf32>
    %cst_46 = arith.constant dense<0.000000e+00> : vector<256xf32>
    %62 = vector.multi_reduction <add>, %61, %cst_46 [1] : vector<256x32xf32> to vector<256xf32>
    %63 = vector.shape_cast %62 : vector<256xf32> to vector<256x1xf32>
    %64 = arith.subf %59, %63 : vector<256x1xf32>
    %65 = arith.negf %64 : vector<256x1xf32>
    %66 = math.exp %65 : vector<256x1xf32>
    %cst_47 = arith.constant 1.000000e+00 : f32
    %67 = vector.broadcast %cst_47 : f32 to vector<256x1xf32>
    %68 = arith.addf %67, %66 : vector<256x1xf32>
    %69 = arith.divf %67, %68 : vector<256x1xf32>
    %70 = vector.broadcast %69 : vector<256x1xf32> to vector<256x32xf32>
    %71 = arith.mulf %70, %3 : vector<256x32xf32>
    %cst_48 = arith.constant 1.000000e+00 : f32
    %72 = vector.broadcast %cst_48 : f32 to vector<256x1xf32>
    %73 = arith.subf %72, %69 : vector<256x1xf32>
    %74 = vector.broadcast %73 : vector<256x1xf32> to vector<256x32xf32>
    %75 = arith.mulf %74, %29 : vector<256x32xf32>
    %76 = arith.addf %71, %75 : vector<256x32xf32>
    %77 = vector.broadcast %55 : vector<1x32xf32> to vector<256x32xf32>
    %78 = arith.mulf %4, %77 : vector<256x32xf32>
    %cst_49 = arith.constant dense<0.000000e+00> : vector<256xf32>
    %79 = vector.multi_reduction <add>, %78, %cst_49 [1] : vector<256x32xf32> to vector<256xf32>
    %80 = vector.shape_cast %79 : vector<256xf32> to vector<256x1xf32>
    %81 = vector.broadcast %55 : vector<1x32xf32> to vector<256x32xf32>
    %82 = arith.mulf %51, %81 : vector<256x32xf32>
    %cst_50 = arith.constant dense<0.000000e+00> : vector<256xf32>
    %83 = vector.multi_reduction <add>, %82, %cst_50 [1] : vector<256x32xf32> to vector<256xf32>
    %84 = vector.shape_cast %83 : vector<256xf32> to vector<256x1xf32>
    %85 = arith.subf %80, %84 : vector<256x1xf32>
    %86 = arith.negf %85 : vector<256x1xf32>
    %87 = math.exp %86 : vector<256x1xf32>
    %cst_51 = arith.constant 1.000000e+00 : f32
    %88 = vector.broadcast %cst_51 : f32 to vector<256x1xf32>
    %89 = arith.addf %88, %87 : vector<256x1xf32>
    %90 = arith.divf %88, %89 : vector<256x1xf32>
    %91 = vector.broadcast %90 : vector<256x1xf32> to vector<256x32xf32>
    %92 = arith.mulf %91, %4 : vector<256x32xf32>
    %cst_52 = arith.constant 1.000000e+00 : f32
    %93 = vector.broadcast %cst_52 : f32 to vector<256x1xf32>
    %94 = arith.subf %93, %90 : vector<256x1xf32>
    %95 = vector.broadcast %94 : vector<256x1xf32> to vector<256x32xf32>
    %96 = arith.mulf %95, %51 : vector<256x32xf32>
    %97 = arith.addf %92, %96 : vector<256x32xf32>
    %98 = arith.mulf %76, %97 : vector<256x32xf32>
    %cst_53 = arith.constant dense<0.000000e+00> : vector<256xf32>
    %99 = vector.multi_reduction <add>, %98, %cst_53 [1] : vector<256x32xf32> to vector<256xf32>
    %100 = vector.shape_cast %99 : vector<256xf32> to vector<256x1xf32>
    %c0_54 = arith.constant 0 : index
    %c0_55 = arith.constant 0 : index
    %101 = vector.load %arg4[%c0_54, %c0_55] : memref<256x1xf32, #tpu.memory_space<vmem>>, vector<256x1xf32>
    %c0_56 = arith.constant 0 : index
    %c0_57 = arith.constant 0 : index
    %102 = vector.load %arg5[%c0_56, %c0_57] : memref<256x1xf32, #tpu.memory_space<vmem>>, vector<256x1xf32>
    %103 = arith.addf %101, %102 : vector<256x1xf32>
    %c0_58 = arith.constant 0 : index
    %c0_59 = arith.constant 0 : index
    %104 = memref.load %arg1[%c0_58, %c0_59] : memref<1x1xf32, #tpu.memory_space<smem>>
    %105 = vector.broadcast %104 : f32 to vector<256x1xf32>
    %106 = arith.addf %103, %105 : vector<256x1xf32>
    %c0_60 = arith.constant 0 : index
    %c0_61 = arith.constant 0 : index
    %107 = vector.load %arg21[%c0_60, %c0_61] : memref<256x1xf32, #tpu.memory_space<vmem>>, vector<256x1xf32>
    %108 = arith.subf %106, %107 : vector<256x1xf32>
    %c0_62 = arith.constant 0 : index
    %c0_63 = arith.constant 0 : index
    %109 = vector.load %arg22[%c0_62, %c0_63] : memref<256x1xf32, #tpu.memory_space<vmem>>, vector<256x1xf32>
    %c0_64 = arith.constant 0 : index
    %c0_65 = arith.constant 0 : index
    %110 = memref.load %arg23[%c0_64, %c0_65] : memref<1x3xf32, #tpu.memory_space<smem>>
    %111 = arith.addf %7, %108 : vector<256x1xf32>
    %112 = arith.mulf %111, %109 : vector<256x1xf32>
    %113 = arith.mulf %112, %112 : vector<256x1xf32>
    %114 = vector.shape_cast %113 : vector<256x1xf32> to vector<1x256x1xf32>
    %cst_66 = arith.constant dense<0.000000e+00> : vector<1xf32>
    %115 = vector.multi_reduction <add>, %114, %cst_66 [1, 2] : vector<1x256x1xf32> to vector<1xf32>
    %116 = vector.shape_cast %115 : vector<1xf32> to vector<1x1x1xf32>
    %117 = vector.extract %116[0, 0, 0] : f32 from vector<1x1x1xf32>
    %118 = arith.addf %110, %117 : f32
    %c0_67 = arith.constant 0 : index
    %c0_68 = arith.constant 0 : index
    %119 = memref.load %arg23[%c0_67, %c0_68] : memref<1x3xf32, #tpu.memory_space<smem>>
    memref.store %118, %arg23[%c0_67, %c0_68] : memref<1x3xf32, #tpu.memory_space<smem>>
    %c0_69 = arith.constant 0 : index
    %c1 = arith.constant 1 : index
    %120 = memref.load %arg23[%c0_69, %c1] : memref<1x3xf32, #tpu.memory_space<smem>>
    %121 = arith.addf %54, %108 : vector<256x1xf32>
    %122 = arith.mulf %121, %109 : vector<256x1xf32>
    %123 = arith.mulf %122, %122 : vector<256x1xf32>
    %124 = vector.shape_cast %123 : vector<256x1xf32> to vector<1x256x1xf32>
    %cst_70 = arith.constant dense<0.000000e+00> : vector<1xf32>
    %125 = vector.multi_reduction <add>, %124, %cst_70 [1, 2] : vector<1x256x1xf32> to vector<1xf32>
    %126 = vector.shape_cast %125 : vector<1xf32> to vector<1x1x1xf32>
    %127 = vector.extract %126[0, 0, 0] : f32 from vector<1x1x1xf32>
    %128 = arith.addf %120, %127 : f32
    %c0_71 = arith.constant 0 : index
    %c1_72 = arith.constant 1 : index
    %129 = memref.load %arg23[%c0_71, %c1_72] : memref<1x3xf32, #tpu.memory_space<smem>>
    memref.store %128, %arg23[%c0_71, %c1_72] : memref<1x3xf32, #tpu.memory_space<smem>>
    %c0_73 = arith.constant 0 : index
    %c2 = arith.constant 2 : index
    %130 = memref.load %arg23[%c0_73, %c2] : memref<1x3xf32, #tpu.memory_space<smem>>
    %131 = arith.addf %100, %108 : vector<256x1xf32>
    %132 = arith.mulf %131, %109 : vector<256x1xf32>
    %133 = arith.mulf %132, %132 : vector<256x1xf32>
    %134 = vector.shape_cast %133 : vector<256x1xf32> to vector<1x256x1xf32>
    %cst_74 = arith.constant dense<0.000000e+00> : vector<1xf32>
    %135 = vector.multi_reduction <add>, %134, %cst_74 [1, 2] : vector<1x256x1xf32> to vector<1xf32>
    %136 = vector.shape_cast %135 : vector<1xf32> to vector<1x1x1xf32>
    %137 = vector.extract %136[0, 0, 0] : f32 from vector<1x1x1xf32>
    %138 = arith.addf %130, %137 : f32
    %c0_75 = arith.constant 0 : index
    %c2_76 = arith.constant 2 : index
    %139 = memref.load %arg23[%c0_75, %c2_76] : memref<1x3xf32, #tpu.memory_space<smem>>
    memref.store %138, %arg23[%c0_75, %c2_76] : memref<1x3xf32, #tpu.memory_space<smem>>
    return
  }
  func.func @transform_0(%arg0: i32) -> (i32, i32) {
    %c0_i32 = arith.constant 0 : i32
    %c0_i32_0 = arith.constant 0 : i32
    %c0_i32_1 = arith.constant 0 : i32
    return %c0_i32, %c0_i32_0 : i32, i32
  }
  func.func @transform_1(%arg0: i32) -> (i32, i32) {
    %c0_i32 = arith.constant 0 : i32
    %c0_i32_0 = arith.constant 0 : i32
    return %arg0, %c0_i32 : i32, i32
  }
  func.func @transform_2(%arg0: i32) -> (i32, i32) {
    %c0_i32 = arith.constant 0 : i32
    %c0_i32_0 = arith.constant 0 : i32
    return %arg0, %c0_i32 : i32, i32
  }
  func.func @transform_3(%arg0: i32) -> (i32, i32) {
    %c0_i32 = arith.constant 0 : i32
    %c0_i32_0 = arith.constant 0 : i32
    return %arg0, %c0_i32 : i32, i32
  }
  func.func @transform_4(%arg0: i32) -> (i32, i32) {
    %c0_i32 = arith.constant 0 : i32
    %c0_i32_0 = arith.constant 0 : i32
    return %arg0, %c0_i32 : i32, i32
  }
  func.func @transform_5(%arg0: i32) -> (i32, i32) {
    %c0_i32 = arith.constant 0 : i32
    %c0_i32_0 = arith.constant 0 : i32
    return %arg0, %c0_i32 : i32, i32
  }
  func.func @transform_6(%arg0: i32) -> (i32, i32) {
    %c0_i32 = arith.constant 0 : i32
    %c0_i32_0 = arith.constant 0 : i32
    return %arg0, %c0_i32 : i32, i32
  }
  func.func @transform_7(%arg0: i32) -> (i32, i32) {
    %c0_i32 = arith.constant 0 : i32
    %c0_i32_0 = arith.constant 0 : i32
    %c0_i32_1 = arith.constant 0 : i32
    return %c0_i32, %c0_i32_0 : i32, i32
  }
  func.func @transform_8(%arg0: i32) -> (i32, i32) {
    %c0_i32 = arith.constant 0 : i32
    %c0_i32_0 = arith.constant 0 : i32
    %c0_i32_1 = arith.constant 0 : i32
    return %c0_i32, %c0_i32_0 : i32, i32
  }
  func.func @transform_9(%arg0: i32) -> (i32, i32) {
    %c0_i32 = arith.constant 0 : i32
    %c0_i32_0 = arith.constant 0 : i32
    %c0_i32_1 = arith.constant 0 : i32
    return %c0_i32, %c0_i32_0 : i32, i32
  }
  func.func @transform_10(%arg0: i32) -> (i32, i32) {
    %c0_i32 = arith.constant 0 : i32
    %c0_i32_0 = arith.constant 0 : i32
    %c0_i32_1 = arith.constant 0 : i32
    return %c0_i32, %c0_i32_0 : i32, i32
  }
  func.func @transform_11(%arg0: i32) -> (i32, i32) {
    %c0_i32 = arith.constant 0 : i32
    %c0_i32_0 = arith.constant 0 : i32
    %c0_i32_1 = arith.constant 0 : i32
    return %c0_i32, %c0_i32_0 : i32, i32
  }
  func.func @transform_12(%arg0: i32) -> (i32, i32) {
    %c0_i32 = arith.constant 0 : i32
    %c0_i32_0 = arith.constant 0 : i32
    %c0_i32_1 = arith.constant 0 : i32
    return %c0_i32, %c0_i32_0 : i32, i32
  }
  func.func @transform_13(%arg0: i32) -> (i32, i32) {
    %c0_i32 = arith.constant 0 : i32
    %c0_i32_0 = arith.constant 0 : i32
    %c0_i32_1 = arith.constant 0 : i32
    return %c0_i32, %c0_i32_0 : i32, i32
  }
  func.func @transform_14(%arg0: i32) -> (i32, i32) {
    %c0_i32 = arith.constant 0 : i32
    %c0_i32_0 = arith.constant 0 : i32
    %c0_i32_1 = arith.constant 0 : i32
    return %c0_i32, %c0_i32_0 : i32, i32
  }
  func.func @transform_15(%arg0: i32) -> (i32, i32) {
    %c0_i32 = arith.constant 0 : i32
    %c0_i32_0 = arith.constant 0 : i32
    %c0_i32_1 = arith.constant 0 : i32
    return %c0_i32, %c0_i32_0 : i32, i32
  }
  func.func @transform_16(%arg0: i32) -> (i32, i32) {
    %c0_i32 = arith.constant 0 : i32
    %c0_i32_0 = arith.constant 0 : i32
    %c0_i32_1 = arith.constant 0 : i32
    return %c0_i32, %c0_i32_0 : i32, i32
  }
  func.func @transform_17(%arg0: i32) -> (i32, i32) {
    %c0_i32 = arith.constant 0 : i32
    %c0_i32_0 = arith.constant 0 : i32
    %c0_i32_1 = arith.constant 0 : i32
    return %c0_i32, %c0_i32_0 : i32, i32
  }
  func.func @transform_18(%arg0: i32) -> (i32, i32) {
    %c0_i32 = arith.constant 0 : i32
    %c0_i32_0 = arith.constant 0 : i32
    %c0_i32_1 = arith.constant 0 : i32
    return %c0_i32, %c0_i32_0 : i32, i32
  }
  func.func @transform_19(%arg0: i32) -> (i32, i32) {
    %c0_i32 = arith.constant 0 : i32
    %c0_i32_0 = arith.constant 0 : i32
    %c0_i32_1 = arith.constant 0 : i32
    return %c0_i32, %c0_i32_0 : i32, i32
  }
  func.func @transform_20(%arg0: i32) -> (i32, i32) {
    %c0_i32 = arith.constant 0 : i32
    %c0_i32_0 = arith.constant 0 : i32
    return %arg0, %c0_i32 : i32, i32
  }
  func.func @transform_21(%arg0: i32) -> (i32, i32) {
    %c0_i32 = arith.constant 0 : i32
    %c0_i32_0 = arith.constant 0 : i32
    return %arg0, %c0_i32 : i32, i32
  }
  func.func @transform_22(%arg0: i32) -> (i32, i32) {
    %c0_i32 = arith.constant 0 : i32
    %c0_i32_0 = arith.constant 0 : i32
    %c0_i32_1 = arith.constant 0 : i32
    return %c0_i32, %c0_i32_0 : i32, i32
  }
}

</mosaic_0001>

<llo_original>
// kernel: tpu_custom_call.1
$region0: #{tpu_custom_call.1}
  #allocation0 [shape = 'u32[]', space=smem, size = 0x4, offset = 0x4, fixed_abs, tag = 'smem constant byte address 0x4 - core index']
  #allocation1 [shape = 'u32[72,128]{1,0:T(1,128)}', space=vmem, size = 0x9000, scoped, tag = 'internal scratch']
  #allocation2 [shape = 'f32[1,1]{1,0:T(1,128)S(6)}', space=smem, size = 0x200, scoped, tag = 'scoped memory for tpu_custom_call.1']
  %s0 = inlined_call_operand.<no memory space> [shape: f32[1,1], index: 0, kind: input, shape index: {}]
  %s1 = inlined_call_operand.vmem [shape: f32[512,32], index: 1, kind: input, shape index: {}]
  %s2 = inlined_call_operand.vmem [shape: f32[512,32], index: 2, kind: input, shape index: {}]
  %s3 = inlined_call_operand.vmem [shape: f32[512,1], index: 3, kind: input, shape index: {}]
  %s4 = inlined_call_operand.vmem [shape: f32[512,1], index: 4, kind: input, shape index: {}]
  %s5 = inlined_call_operand.vmem [shape: bf16[512,96], index: 5, kind: input, shape index: {}]
  %s6 = inlined_call_operand.vmem [shape: bf16[512,128], index: 6, kind: input, shape index: {}]
  %s7 = inlined_call_operand.vmem [shape: bf16[96,512], index: 7, kind: input, shape index: {}]
  %s8 = inlined_call_operand.vmem [shape: f32[1,512], index: 8, kind: input, shape index: {}]
  %s9 = inlined_call_operand.vmem [shape: bf16[512,64], index: 9, kind: input, shape index: {}]
  %s10 = inlined_call_operand.vmem [shape: f32[1,64], index: 10, kind: input, shape index: {}]
  %s11 = inlined_call_operand.vmem [shape: bf16[64,32], index: 11, kind: input, shape index: {}]
  %s12 = inlined_call_operand.vmem [shape: f32[1,32], index: 12, kind: input, shape index: {}]
  %s13 = inlined_call_operand.vmem [shape: bf16[128,512], index: 13, kind: input, shape index: {}]
  %s14 = inlined_call_operand.vmem [shape: f32[1,512], index: 14, kind: input, shape index: {}]
  %s15 = inlined_call_operand.vmem [shape: bf16[512,64], index: 15, kind: input, shape index: {}]
  %s16 = inlined_call_operand.vmem [shape: f32[1,64], index: 16, kind: input, shape index: {}]
  %s17 = inlined_call_operand.vmem [shape: bf16[64,32], index: 17, kind: input, shape index: {}]
  %s18 = inlined_call_operand.vmem [shape: f32[1,32], index: 18, kind: input, shape index: {}]
  %s19 = inlined_call_operand.vmem [shape: f32[1,32], index: 19, kind: input, shape index: {}]
  %s20 = inlined_call_operand.vmem [shape: f32[512,1], index: 20, kind: input, shape index: {}]
  %s21 = inlined_call_operand.vmem [shape: f32[512,1], index: 21, kind: input, shape index: {}]
  %s22 = inlined_call_operand.hbm [shape: f32[1,3], index: 22, kind: output, shape index: {}]
  %s23 = sld [smem:[#allocation0]]
  $region125: #{tpu_custom_call.1} parent=0
    _
  %s25 = ssub.s32 1, %s23
  %s26 = scalar_select 0, %s25, %s23
  %27 = sst [smem:[#allocation2]] %s0
  $region1: #{tpu_custom_call.1} parent=0
    #allocation3 [shape = 'u8[512]{0}', space=smem, size = 0x200, scoped, tag = 'output window, operand 0, single buffered']
    #allocation4 [shape = 's32[2]{0}', space=sflag, size = 0x8, scoped, tag = 'scoped memory for tpu_custom_call.1']
    %28 = vsyncpa [#allocation4], 0
    loop: start=0, step=1, limit=4
    $region2: #{tpu_custom_call.1} parent=1 // loop_pre_header
      _
    $region3: #{tpu_custom_call.1} parent=1 // loop_header
      %s30 = sphi 0, %s34
      %p31 = scmp.ge.s32.totalorder %s30, 4
      %s38 = sphi 0, %s38
      %s40 = sphi 0, %s38
      %s41 = sphi 0, %s40
      %s55 = sphi 0, %s41
      %s61 = sphi 0, %s63
      %s64 = sphi 0, %s61
      %s65 = sphi 0, %s64
      %s81 = sphi 0, %s65
      %s87 = sphi 0, %s89
      %s90 = sphi 0, %s87
      %s91 = sphi 0, %s90
      %s107 = sphi 0, %s91
      %s113 = sphi 0, %s115
      %s116 = sphi 0, %s113
      %s117 = sphi 0, %s116
      %s133 = sphi 0, %s117
      %s139 = sphi 0, %s141
      %s142 = sphi 0, %s139
      %s143 = sphi 0, %s142
      %s159 = sphi 0, %s143
      %s165 = sphi 0, %s167
      %s168 = sphi 0, %s165
      %s169 = sphi 0, %s168
      %s185 = sphi 0, %s169
      %s191 = sphi 0, %s193
      %s194 = sphi 0, %s191
      %s195 = sphi 0, %s194
      %s211 = sphi 0, %s195
      %s215 = sphi 0, %s215
      %s217 = sphi 0, %s215
      %s218 = sphi 0, %s217
      %s232 = sphi 0, %s218
      %s236 = sphi 0, %s236
      %s238 = sphi 0, %s236
      %s239 = sphi 0, %s238
      %s253 = sphi 0, %s239
      %s257 = sphi 0, %s257
      %s259 = sphi 0, %s257
      %s260 = sphi 0, %s259
      %s274 = sphi 0, %s260
      %s278 = sphi 0, %s278
      %s280 = sphi 0, %s278
      %s281 = sphi 0, %s280
      %s295 = sphi 0, %s281
      %s299 = sphi 0, %s299
      %s301 = sphi 0, %s299
      %s302 = sphi 0, %s301
      %s316 = sphi 0, %s302
      %s320 = sphi 0, %s320
      %s322 = sphi 0, %s320
      %s323 = sphi 0, %s322
      %s337 = sphi 0, %s323
      %s341 = sphi 0, %s341
      %s343 = sphi 0, %s341
      %s344 = sphi 0, %s343
      %s358 = sphi 0, %s344
      %s362 = sphi 0, %s362
      %s364 = sphi 0, %s362
      %s365 = sphi 0, %s364
      %s379 = sphi 0, %s365
      %s383 = sphi 0, %s383
      %s385 = sphi 0, %s383
      %s386 = sphi 0, %s385
      %s400 = sphi 0, %s386
      %s404 = sphi 0, %s404
      %s406 = sphi 0, %s404
      %s407 = sphi 0, %s406
      %s421 = sphi 0, %s407
      %s425 = sphi 0, %s425
      %s427 = sphi 0, %s425
      %s428 = sphi 0, %s427
      %s442 = sphi 0, %s428
      %s446 = sphi 0, %s446
      %s448 = sphi 0, %s446
      %s449 = sphi 0, %s448
      %s463 = sphi 0, %s449
      %s467 = sphi 0, %s467
      %s469 = sphi 0, %s467
      %s470 = sphi 0, %s469
      %s484 = sphi 0, %s470
      %s490 = sphi 0, %s492
      %s493 = sphi 0, %s490
      %s494 = sphi 0, %s493
      %s510 = sphi 0, %s494
      %s516 = sphi 0, %s518
      %s519 = sphi 0, %s516
      %s520 = sphi 0, %s519
      %s536 = sphi 0, %s520
      %s540 = sphi 0, %s540
      %s542 = sphi 0, %s540
      %s543 = sphi 0, %s542
      %s557 = sphi 0, %s543
    $region4: #{tpu_custom_call.1} parent=1 // loop_header_branch
      %33 = sbr.rel (%p31) target = $region8
    $region5: #{tpu_custom_call.1} parent=1 // loop_body
      %s35 = ssub.s32 %s30, 1
      %s36 = ssub.s32 %s30, 2
      %s37 = sadd.s32 %s30, 1
      %s39 = sadd.s32 %s38, 1
      %p42 = scmp.eq.s32.totalorder %s30, 1
      %p43 = scmp.ne.s32.totalorder %s38, %s40
      %p44 = scmp.eq.s32.totalorder %s30, 0
      %p45 = por %p43, %p44
      %p46 = scmp.ne.s32.totalorder %s38, %s40
      %p47 = scmp.eq.s32.totalorder %s35, 1
      %p48 = por %p46, %p47
      %p49 = scmp.ne.s32.totalorder %s40, %s41
      %p50 = scmp.eq.s32.totalorder %s35, 0
      %p51 = por %p49, %p50
      %p52 = scmp.ne.s32.totalorder %s40, %s41
      %p53 = scmp.eq.s32.totalorder %s36, 1
      %p54 = por %p52, %p53
      %p56 = scmp.ne.s32.totalorder %s41, %s55
      %p57 = scmp.eq.s32.totalorder %s36, 0
      %p58 = por %p56, %p57
      %s59 = ssub.s32 %s30, %s37
      %p60 = scmp.eq.s32.totalorder %s59, 0
      %s62 = sadd.s32 %s61, 1
      %s63 = scalar_select %p60, %s61, %s62
      %p66 = pneg %p60
      %p67 = scmp.eq.s32.totalorder %s30, 1
      %p68 = por %p66, %p67
      %p69 = scmp.ne.s32.totalorder %s61, %s64
      %p70 = scmp.eq.s32.totalorder %s30, 0
      %p71 = por %p69, %p70
      %p72 = scmp.ne.s32.totalorder %s61, %s64
      %p73 = scmp.eq.s32.totalorder %s35, 1
      %p74 = por %p72, %p73
      %p75 = scmp.ne.s32.totalorder %s64, %s65
      %p76 = scmp.eq.s32.totalorder %s35, 0
      %p77 = por %p75, %p76
      %p78 = scmp.ne.s32.totalorder %s64, %s65
      %p79 = scmp.eq.s32.totalorder %s36, 1
      %p80 = por %p78, %p79
      %p82 = scmp.ne.s32.totalorder %s65, %s81
      %p83 = scmp.eq.s32.totalorder %s36, 0
      %p84 = por %p82, %p83
      %s85 = ssub.s32 %s30, %s37
      %p86 = scmp.eq.s32.totalorder %s85, 0
      %s88 = sadd.s32 %s87, 1
      %s89 = scalar_select %p86, %s87, %s88
      %p92 = pneg %p86
      %p93 = scmp.eq.s32.totalorder %s30, 1
      %p94 = por %p92, %p93
      %p95 = scmp.ne.s32.totalorder %s87, %s90
      %p96 = scmp.eq.s32.totalorder %s30, 0
      %p97 = por %p95, %p96
      %p98 = scmp.ne.s32.totalorder %s87, %s90
      %p99 = scmp.eq.s32.totalorder %s35, 1
      %p100 = por %p98, %p99
      %p101 = scmp.ne.s32.totalorder %s90, %s91
      %p102 = scmp.eq.s32.totalorder %s35, 0
      %p103 = por %p101, %p102
      %p104 = scmp.ne.s32.totalorder %s90, %s91
      %p105 = scmp.eq.s32.totalorder %s36, 1
      %p106 = por %p104, %p105
      %p108 = scmp.ne.s32.totalorder %s91, %s107
      %p109 = scmp.eq.s32.totalorder %s36, 0
      %p110 = por %p108, %p109
      %s111 = ssub.s32 %s30, %s37
      %p112 = scmp.eq.s32.totalorder %s111, 0
      %s114 = sadd.s32 %s113, 1
      %s115 = scalar_select %p112, %s113, %s114
      %p118 = pneg %p112
      %p119 = scmp.eq.s32.totalorder %s30, 1
      %p120 = por %p118, %p119
      %p121 = scmp.ne.s32.totalorder %s113, %s116
      %p122 = scmp.eq.s32.totalorder %s30, 0
      %p123 = por %p121, %p122
      %p124 = scmp.ne.s32.totalorder %s113, %s116
      %p125 = scmp.eq.s32.totalorder %s35, 1
      %p126 = por %p124, %p125
      %p127 = scmp.ne.s32.totalorder %s116, %s117
      %p128 = scmp.eq.s32.totalorder %s35, 0
      %p129 = por %p127, %p128
      %p130 = scmp.ne.s32.totalorder %s116, %s117
      %p131 = scmp.eq.s32.totalorder %s36, 1
      %p132 = por %p130, %p131
      %p134 = scmp.ne.s32.totalorder %s117, %s133
      %p135 = scmp.eq.s32.totalorder %s36, 0
      %p136 = por %p134, %p135
      %s137 = ssub.s32 %s30, %s37
      %p138 = scmp.eq.s32.totalorder %s137, 0
      %s140 = sadd.s32 %s139, 1
      %s141 = scalar_select %p138, %s139, %s140
      %p144 = pneg %p138
      %p145 = scmp.eq.s32.totalorder %s30, 1
      %p146 = por %p144, %p145
      %p147 = scmp.ne.s32.totalorder %s139, %s142
      %p148 = scmp.eq.s32.totalorder %s30, 0
      %p149 = por %p147, %p148
      %p150 = scmp.ne.s32.totalorder %s139, %s142
      %p151 = scmp.eq.s32.totalorder %s35, 1
      %p152 = por %p150, %p151
      %p153 = scmp.ne.s32.totalorder %s142, %s143
      %p154 = scmp.eq.s32.totalorder %s35, 0
      %p155 = por %p153, %p154
      %p156 = scmp.ne.s32.totalorder %s142, %s143
      %p157 = scmp.eq.s32.totalorder %s36, 1
      %p158 = por %p156, %p157
      %p160 = scmp.ne.s32.totalorder %s143, %s159
      %p161 = scmp.eq.s32.totalorder %s36, 0
      %p162 = por %p160, %p161
      %s163 = ssub.s32 %s30, %s37
      %p164 = scmp.eq.s32.totalorder %s163, 0
      %s166 = sadd.s32 %s165, 1
      %s167 = scalar_select %p164, %s165, %s166
      %p170 = pneg %p164
      %p171 = scmp.eq.s32.totalorder %s30, 1
      %p172 = por %p170, %p171
      %p173 = scmp.ne.s32.totalorder %s165, %s168
      %p174 = scmp.eq.s32.totalorder %s30, 0
      %p175 = por %p173, %p174
      %p176 = scmp.ne.s32.totalorder %s165, %s168
      %p177 = scmp.eq.s32.totalorder %s35, 1
      %p178 = por %p176, %p177
      %p179 = scmp.ne.s32.totalorder %s168, %s169
      %p180 = scmp.eq.s32.totalorder %s35, 0
      %p181 = por %p179, %p180
      %p182 = scmp.ne.s32.totalorder %s168, %s169
      %p183 = scmp.eq.s32.totalorder %s36, 1
      %p184 = por %p182, %p183
      %p186 = scmp.ne.s32.totalorder %s169, %s185
      %p187 = scmp.eq.s32.totalorder %s36, 0
      %p188 = por %p186, %p187
      %s189 = ssub.s32 %s30, %s37
      %p190 = scmp.eq.s32.totalorder %s189, 0
      %s192 = sadd.s32 %s191, 1
      %s193 = scalar_select %p190, %s191, %s192
      %p196 = pneg %p190
      %p197 = scmp.eq.s32.totalorder %s30, 1
      %p198 = por %p196, %p197
      %p199 = scmp.ne.s32.totalorder %s191, %s194
      %p200 = scmp.eq.s32.totalorder %s30, 0
      %p201 = por %p199, %p200
      %p202 = scmp.ne.s32.totalorder %s191, %s194
      %p203 = scmp.eq.s32.totalorder %s35, 1
      %p204 = por %p202, %p203
      %p205 = scmp.ne.s32.totalorder %s194, %s195
      %p206 = scmp.eq.s32.totalorder %s35, 0
      %p207 = por %p205, %p206
      %p208 = scmp.ne.s32.totalorder %s194, %s195
      %p209 = scmp.eq.s32.totalorder %s36, 1
      %p210 = por %p208, %p209
      %p212 = scmp.ne.s32.totalorder %s195, %s211
      %p213 = scmp.eq.s32.totalorder %s36, 0
      %p214 = por %p212, %p213
      %s216 = sadd.s32 %s215, 1
      %p219 = scmp.eq.s32.totalorder %s30, 1
      %p220 = scmp.ne.s32.totalorder %s215, %s217
      %p221 = scmp.eq.s32.totalorder %s30, 0
      %p222 = por %p220, %p221
      %p223 = scmp.ne.s32.totalorder %s215, %s217
      %p224 = scmp.eq.s32.totalorder %s35, 1
      %p225 = por %p223, %p224
      %p226 = scmp.ne.s32.totalorder %s217, %s218
      %p227 = scmp.eq.s32.totalorder %s35, 0
      %p228 = por %p226, %p227
      %p229 = scmp.ne.s32.totalorder %s217, %s218
      %p230 = scmp.eq.s32.totalorder %s36, 1
      %p231 = por %p229, %p230
      %p233 = scmp.ne.s32.totalorder %s218, %s232
      %p234 = scmp.eq.s32.totalorder %s36, 0
      %p235 = por %p233, %p234
      %s237 = sadd.s32 %s236, 1
      %p240 = scmp.eq.s32.totalorder %s30, 1
      %p241 = scmp.ne.s32.totalorder %s236, %s238
      %p242 = scmp.eq.s32.totalorder %s30, 0
      %p243 = por %p241, %p242
      %p244 = scmp.ne.s32.totalorder %s236, %s238
      %p245 = scmp.eq.s32.totalorder %s35, 1
      %p246 = por %p244, %p245
      %p247 = scmp.ne.s32.totalorder %s238, %s239
      %p248 = scmp.eq.s32.totalorder %s35, 0
      %p249 = por %p247, %p248
      %p250 = scmp.ne.s32.totalorder %s238, %s239
      %p251 = scmp.eq.s32.totalorder %s36, 1
      %p252 = por %p250, %p251
      %p254 = scmp.ne.s32.totalorder %s239, %s253
      %p255 = scmp.eq.s32.totalorder %s36, 0
      %p256 = por %p254, %p255
      %s258 = sadd.s32 %s257, 1
      %p261 = scmp.eq.s32.totalorder %s30, 1
      %p262 = scmp.ne.s32.totalorder %s257, %s259
      %p263 = scmp.eq.s32.totalorder %s30, 0
      %p264 = por %p262, %p263
      %p265 = scmp.ne.s32.totalorder %s257, %s259
      %p266 = scmp.eq.s32.totalorder %s35, 1
      %p267 = por %p265, %p266
      %p268 = scmp.ne.s32.totalorder %s259, %s260
      %p269 = scmp.eq.s32.totalorder %s35, 0
      %p270 = por %p268, %p269
      %p271 = scmp.ne.s32.totalorder %s259, %s260
      %p272 = scmp.eq.s32.totalorder %s36, 1
      %p273 = por %p271, %p272
      %p275 = scmp.ne.s32.totalorder %s260, %s274
      %p276 = scmp.eq.s32.totalorder %s36, 0
      %p277 = por %p275, %p276
      %s279 = sadd.s32 %s278, 1
      %p282 = scmp.eq.s32.totalorder %s30, 1
      %p283 = scmp.ne.s32.totalorder %s278, %s280
      %p284 = scmp.eq.s32.totalorder %s30, 0
      %p285 = por %p283, %p284
      %p286 = scmp.ne.s32.totalorder %s278, %s280
      %p287 = scmp.eq.s32.totalorder %s35, 1
      %p288 = por %p286, %p287
      %p289 = scmp.ne.s32.totalorder %s280, %s281
      %p290 = scmp.eq.s32.totalorder %s35, 0
      %p291 = por %p289, %p290
      %p292 = scmp.ne.s32.totalorder %s280, %s281
      %p293 = scmp.eq.s32.totalorder %s36, 1
      %p294 = por %p292, %p293
      %p296 = scmp.ne.s32.totalorder %s281, %s295
      %p297 = scmp.eq.s32.totalorder %s36, 0
      %p298 = por %p296, %p297
      %s300 = sadd.s32 %s299, 1
      %p303 = scmp.eq.s32.totalorder %s30, 1
      %p304 = scmp.ne.s32.totalorder %s299, %s301
      %p305 = scmp.eq.s32.totalorder %s30, 0
      %p306 = por %p304, %p305
      %p307 = scmp.ne.s32.totalorder %s299, %s301
      %p308 = scmp.eq.s32.totalorder %s35, 1
      %p309 = por %p307, %p308
      %p310 = scmp.ne.s32.totalorder %s301, %s302
      %p311 = scmp.eq.s32.totalorder %s35, 0
      %p312 = por %p310, %p311
      %p313 = scmp.ne.s32.totalorder %s301, %s302
      %p314 = scmp.eq.s32.totalorder %s36, 1
      %p315 = por %p313, %p314
      %p317 = scmp.ne.s32.totalorder %s302, %s316
      %p318 = scmp.eq.s32.totalorder %s36, 0
      %p319 = por %p317, %p318
      %s321 = sadd.s32 %s320, 1
      %p324 = scmp.eq.s32.totalorder %s30, 1
      %p325 = scmp.ne.s32.totalorder %s320, %s322
      %p326 = scmp.eq.s32.totalorder %s30, 0
      %p327 = por %p325, %p326
      %p328 = scmp.ne.s32.totalorder %s320, %s322
      %p329 = scmp.eq.s32.totalorder %s35, 1
      %p330 = por %p328, %p329
      %p331 = scmp.ne.s32.totalorder %s322, %s323
      %p332 = scmp.eq.s32.totalorder %s35, 0
      %p333 = por %p331, %p332
      %p334 = scmp.ne.s32.totalorder %s322, %s323
      %p335 = scmp.eq.s32.totalorder %s36, 1
      %p336 = por %p334, %p335
      %p338 = scmp.ne.s32.totalorder %s323, %s337
      %p339 = scmp.eq.s32.totalorder %s36, 0
      %p340 = por %p338, %p339
      %s342 = sadd.s32 %s341, 1
      %p345 = scmp.eq.s32.totalorder %s30, 1
      %p346 = scmp.ne.s32.totalorder %s341, %s343
      %p347 = scmp.eq.s32.totalorder %s30, 0
      %p348 = por %p346, %p347
      %p349 = scmp.ne.s32.totalorder %s341, %s343
      %p350 = scmp.eq.s32.totalorder %s35, 1
      %p351 = por %p349, %p350
      %p352 = scmp.ne.s32.totalorder %s343, %s344
      %p353 = scmp.eq.s32.totalorder %s35, 0
      %p354 = por %p352, %p353
      %p355 = scmp.ne.s32.totalorder %s343, %s344
      %p356 = scmp.eq.s32.totalorder %s36, 1
      %p357 = por %p355, %p356
      %p359 = scmp.ne.s32.totalorder %s344, %s358
      %p360 = scmp.eq.s32.totalorder %s36, 0
      %p361 = por %p359, %p360
      %s363 = sadd.s32 %s362, 1
      %p366 = scmp.eq.s32.totalorder %s30, 1
      %p367 = scmp.ne.s32.totalorder %s362, %s364
      %p368 = scmp.eq.s32.totalorder %s30, 0
      %p369 = por %p367, %p368
      %p370 = scmp.ne.s32.totalorder %s362, %s364
      %p371 = scmp.eq.s32.totalorder %s35, 1
      %p372 = por %p370, %p371
      %p373 = scmp.ne.s32.totalorder %s364, %s365
      %p374 = scmp.eq.s32.totalorder %s35, 0
      %p375 = por %p373, %p374
      %p376 = scmp.ne.s32.totalorder %s364, %s365
      %p377 = scmp.eq.s32.totalorder %s36, 1
      %p378 = por %p376, %p377
      %p380 = scmp.ne.s32.totalorder %s365, %s379
      %p381 = scmp.eq.s32.totalorder %s36, 0
      %p382 = por %p380, %p381
      %s384 = sadd.s32 %s383, 1
      %p387 = scmp.eq.s32.totalorder %s30, 1
      %p388 = scmp.ne.s32.totalorder %s383, %s385
      %p389 = scmp.eq.s32.totalorder %s30, 0
      %p390 = por %p388, %p389
      %p391 = scmp.ne.s32.totalorder %s383, %s385
      %p392 = scmp.eq.s32.totalorder %s35, 1
      %p393 = por %p391, %p392
      %p394 = scmp.ne.s32.totalorder %s385, %s386
      %p395 = scmp.eq.s32.totalorder %s35, 0
      %p396 = por %p394, %p395
      %p397 = scmp.ne.s32.totalorder %s385, %s386
      %p398 = scmp.eq.s32.totalorder %s36, 1
      %p399 = por %p397, %p398
      %p401 = scmp.ne.s32.totalorder %s386, %s400
      %p402 = scmp.eq.s32.totalorder %s36, 0
      %p403 = por %p401, %p402
      %s405 = sadd.s32 %s404, 1
      %p408 = scmp.eq.s32.totalorder %s30, 1
      %p409 = scmp.ne.s32.totalorder %s404, %s406
      %p410 = scmp.eq.s32.totalorder %s30, 0
      %p411 = por %p409, %p410
      %p412 = scmp.ne.s32.totalorder %s404, %s406
      %p413 = scmp.eq.s32.totalorder %s35, 1
      %p414 = por %p412, %p413
      %p415 = scmp.ne.s32.totalorder %s406, %s407
      %p416 = scmp.eq.s32.totalorder %s35, 0
      %p417 = por %p415, %p416
      %p418 = scmp.ne.s32.totalorder %s406, %s407
      %p419 = scmp.eq.s32.totalorder %s36, 1
      %p420 = por %p418, %p419
      %p422 = scmp.ne.s32.totalorder %s407, %s421
      %p423 = scmp.eq.s32.totalorder %s36, 0
      %p424 = por %p422, %p423
      %s426 = sadd.s32 %s425, 1
      %p429 = scmp.eq.s32.totalorder %s30, 1
      %p430 = scmp.ne.s32.totalorder %s425, %s427
      %p431 = scmp.eq.s32.totalorder %s30, 0
      %p432 = por %p430, %p431
      %p433 = scmp.ne.s32.totalorder %s425, %s427
      %p434 = scmp.eq.s32.totalorder %s35, 1
      %p435 = por %p433, %p434
      %p436 = scmp.ne.s32.totalorder %s427, %s428
      %p437 = scmp.eq.s32.totalorder %s35, 0
      %p438 = por %p436, %p437
      %p439 = scmp.ne.s32.totalorder %s427, %s428
      %p440 = scmp.eq.s32.totalorder %s36, 1
      %p441 = por %p439, %p440
      %p443 = scmp.ne.s32.totalorder %s428, %s442
      %p444 = scmp.eq.s32.totalorder %s36, 0
      %p445 = por %p443, %p444
      %s447 = sadd.s32 %s446, 1
      %p450 = scmp.eq.s32.totalorder %s30, 1
      %p451 = scmp.ne.s32.totalorder %s446, %s448
      %p452 = scmp.eq.s32.totalorder %s30, 0
      %p453 = por %p451, %p452
      %p454 = scmp.ne.s32.totalorder %s446, %s448
      %p455 = scmp.eq.s32.totalorder %s35, 1
      %p456 = por %p454, %p455
      %p457 = scmp.ne.s32.totalorder %s448, %s449
      %p458 = scmp.eq.s32.totalorder %s35, 0
      %p459 = por %p457, %p458
      %p460 = scmp.ne.s32.totalorder %s448, %s449
      %p461 = scmp.eq.s32.totalorder %s36, 1
      %p462 = por %p460, %p461
      %p464 = scmp.ne.s32.totalorder %s449, %s463
      %p465 = scmp.eq.s32.totalorder %s36, 0
      %p466 = por %p464, %p465
      %s468 = sadd.s32 %s467, 1
      %p471 = scmp.eq.s32.totalorder %s30, 1
      %p472 = scmp.ne.s32.totalorder %s467, %s469
      %p473 = scmp.eq.s32.totalorder %s30, 0
      %p474 = por %p472, %p473
      %p475 = scmp.ne.s32.totalorder %s467, %s469
      %p476 = scmp.eq.s32.totalorder %s35, 1
      %p477 = por %p475, %p476
      %p478 = scmp.ne.s32.totalorder %s469, %s470
      %p479 = scmp.eq.s32.totalorder %s35, 0
      %p480 = por %p478, %p479
      %p481 = scmp.ne.s32.totalorder %s469, %s470
      %p482 = scmp.eq.s32.totalorder %s36, 1
      %p483 = por %p481, %p482
      %p485 = scmp.ne.s32.totalorder %s470, %s484
      %p486 = scmp.eq.s32.totalorder %s36, 0
      %p487 = por %p485, %p486
      %s488 = ssub.s32 %s30, %s37
      %p489 = scmp.eq.s32.totalorder %s488, 0
      %s491 = sadd.s32 %s490, 1
      %s492 = scalar_select %p489, %s490, %s491
      %p495 = pneg %p489
      %p496 = scmp.eq.s32.totalorder %s30, 1
      %p497 = por %p495, %p496
      %p498 = scmp.ne.s32.totalorder %s490, %s493
      %p499 = scmp.eq.s32.totalorder %s30, 0
      %p500 = por %p498, %p499
      %p501 = scmp.ne.s32.totalorder %s490, %s493
      %p502 = scmp.eq.s32.totalorder %s35, 1
      %p503 = por %p501, %p502
      %p504 = scmp.ne.s32.totalorder %s493, %s494
      %p505 = scmp.eq.s32.totalorder %s35, 0
      %p506 = por %p504, %p505
      %p507 = scmp.ne.s32.totalorder %s493, %s494
      %p508 = scmp.eq.s32.totalorder %s36, 1
      %p509 = por %p507, %p508
      %p511 = scmp.ne.s32.totalorder %s494, %s510
      %p512 = scmp.eq.s32.totalorder %s36, 0
      %p513 = por %p511, %p512
      %s514 = ssub.s32 %s30, %s37
      %p515 = scmp.eq.s32.totalorder %s514, 0
      %s517 = sadd.s32 %s516, 1
      %s518 = scalar_select %p515, %s516, %s517
      %p521 = pneg %p515
      %p522 = scmp.eq.s32.totalorder %s30, 1
      %p523 = por %p521, %p522
      %p524 = scmp.ne.s32.totalorder %s516, %s519
      %p525 = scmp.eq.s32.totalorder %s30, 0
      %p526 = por %p524, %p525
      %p527 = scmp.ne.s32.totalorder %s516, %s519
      %p528 = scmp.eq.s32.totalorder %s35, 1
      %p529 = por %p527, %p528
      %p530 = scmp.ne.s32.totalorder %s519, %s520
      %p531 = scmp.eq.s32.totalorder %s35, 0
      %p532 = por %p530, %p531
      %p533 = scmp.ne.s32.totalorder %s519, %s520
      %p534 = scmp.eq.s32.totalorder %s36, 1
      %p535 = por %p533, %p534
      %p537 = scmp.ne.s32.totalorder %s520, %s536
      %p538 = scmp.eq.s32.totalorder %s36, 0
      %p539 = por %p537, %p538
      %s541 = sadd.s32 %s540, 1
      %p544 = scmp.eq.s32.totalorder %s30, 1
      %p545 = scmp.ne.s32.totalorder %s540, %s542
      %p546 = scmp.eq.s32.totalorder %s30, 0
      %p547 = por %p545, %p546
      %p548 = scmp.ne.s32.totalorder %s540, %s542
      %p549 = scmp.eq.s32.totalorder %s35, 1
      %p550 = por %p548, %p549
      %p551 = scmp.ne.s32.totalorder %s542, %s543
      %p552 = scmp.eq.s32.totalorder %s35, 0
      %p553 = por %p551, %p552
      %p554 = scmp.ne.s32.totalorder %s542, %s543
      %p555 = scmp.eq.s32.totalorder %s36, 1
      %p556 = por %p554, %p555
      %p558 = scmp.ne.s32.totalorder %s543, %s557
      %p559 = scmp.eq.s32.totalorder %s36, 0
      %p560 = por %p558, %p559
      %p561 = scmp.le.s32.totalorder 1, %s30
      %p562 = scmp.lt.s32.totalorder %s30, 3
      %p563 = pnand %p561, %p562
      %p564 = pneg %p563
      // Predicated region
      $region9: #{tpu_custom_call.1} parent=5 // pred_check
        _
      $region10: #{tpu_custom_call.1} parent=5 // pred_check_branch
        %566 = sbr.rel (%p563) target = $region12
      $region11: #{tpu_custom_call.1} parent=5 // pred_region
        %s567 = ssub.s32 %s30, 1
        // Predicated region
        $region13: #{tpu_custom_call.1} parent=11 // pred_check
          %p568 = pneg %p51
        $region14: #{tpu_custom_call.1} parent=11 // pred_check_branch
          %570 = sbr.rel (%p568) target = $region16
        $region15: #{tpu_custom_call.1} parent=11 // pred_region
          _
        $region16: #{tpu_custom_call.1} parent=11 // pred_fallthru
          _
        // Predicated region
        $region17: #{tpu_custom_call.1} parent=11 // pred_check
          %p571 = pneg %p228
        $region18: #{tpu_custom_call.1} parent=11 // pred_check_branch
          %573 = sbr.rel (%p571) target = $region20
        $region19: #{tpu_custom_call.1} parent=11 // pred_region
          _
        $region20: #{tpu_custom_call.1} parent=11 // pred_fallthru
          _
        // Predicated region
        $region21: #{tpu_custom_call.1} parent=11 // pred_check
          %p574 = pneg %p249
        $region22: #{tpu_custom_call.1} parent=11 // pred_check_branch
          %576 = sbr.rel (%p574) target = $region24
        $region23: #{tpu_custom_call.1} parent=11 // pred_region
          _
        $region24: #{tpu_custom_call.1} parent=11 // pred_fallthru
          _
        // Predicated region
        $region25: #{tpu_custom_call.1} parent=11 // pred_check
          %p577 = pneg %p270
        $region26: #{tpu_custom_call.1} parent=11 // pred_check_branch
          %579 = sbr.rel (%p577) target = $region28
        $region27: #{tpu_custom_call.1} parent=11 // pred_region
          _
        $region28: #{tpu_custom_call.1} parent=11 // pred_fallthru
          _
        // Predicated region
        $region29: #{tpu_custom_call.1} parent=11 // pred_check
          %p580 = pneg %p291
        $region30: #{tpu_custom_call.1} parent=11 // pred_check_branch
          %582 = sbr.rel (%p580) target = $region32
        $region31: #{tpu_custom_call.1} parent=11 // pred_region
          _
        $region32: #{tpu_custom_call.1} parent=11 // pred_fallthru
          _
        // Predicated region
        $region33: #{tpu_custom_call.1} parent=11 // pred_check
          %p583 = pneg %p312
        $region34: #{tpu_custom_call.1} parent=11 // pred_check_branch
          %585 = sbr.rel (%p583) target = $region36
        $region35: #{tpu_custom_call.1} parent=11 // pred_region
          _
        $region36: #{tpu_custom_call.1} parent=11 // pred_fallthru
          _
        // Predicated region
        $region37: #{tpu_custom_call.1} parent=11 // pred_check
          %p586 = pneg %p333
        $region38: #{tpu_custom_call.1} parent=11 // pred_check_branch
          %588 = sbr.rel (%p586) target = $region40
        $region39: #{tpu_custom_call.1} parent=11 // pred_region
          _
        $region40: #{tpu_custom_call.1} parent=11 // pred_fallthru
          _
        // Predicated region
        $region41: #{tpu_custom_call.1} parent=11 // pred_check
          %p589 = pneg %p354
        $region42: #{tpu_custom_call.1} parent=11 // pred_check_branch
          %591 = sbr.rel (%p589) target = $region44
        $region43: #{tpu_custom_call.1} parent=11 // pred_region
          _
        $region44: #{tpu_custom_call.1} parent=11 // pred_fallthru
          _
        // Predicated region
        $region45: #{tpu_custom_call.1} parent=11 // pred_check
          %p592 = pneg %p375
        $region46: #{tpu_custom_call.1} parent=11 // pred_check_branch
          %594 = sbr.rel (%p592) target = $region48
        $region47: #{tpu_custom_call.1} parent=11 // pred_region
          _
        $region48: #{tpu_custom_call.1} parent=11 // pred_fallthru
          _
        // Predicated region
        $region49: #{tpu_custom_call.1} parent=11 // pred_check
          %p595 = pneg %p396
        $region50: #{tpu_custom_call.1} parent=11 // pred_check_branch
          %597 = sbr.rel (%p595) target = $region52
        $region51: #{tpu_custom_call.1} parent=11 // pred_region
          _
        $region52: #{tpu_custom_call.1} parent=11 // pred_fallthru
          _
        // Predicated region
        $region53: #{tpu_custom_call.1} parent=11 // pred_check
          %p598 = pneg %p417
        $region54: #{tpu_custom_call.1} parent=11 // pred_check_branch
          %600 = sbr.rel (%p598) target = $region56
        $region55: #{tpu_custom_call.1} parent=11 // pred_region
          _
        $region56: #{tpu_custom_call.1} parent=11 // pred_fallthru
          _
        // Predicated region
        $region57: #{tpu_custom_call.1} parent=11 // pred_check
          %p601 = pneg %p438
        $region58: #{tpu_custom_call.1} parent=11 // pred_check_branch
          %603 = sbr.rel (%p601) target = $region60
        $region59: #{tpu_custom_call.1} parent=11 // pred_region
          _
        $region60: #{tpu_custom_call.1} parent=11 // pred_fallthru
          _
        // Predicated region
        $region61: #{tpu_custom_call.1} parent=11 // pred_check
          %p604 = pneg %p459
        $region62: #{tpu_custom_call.1} parent=11 // pred_check_branch
          %606 = sbr.rel (%p604) target = $region64
        $region63: #{tpu_custom_call.1} parent=11 // pred_region
          _
        $region64: #{tpu_custom_call.1} parent=11 // pred_fallthru
          _
        // Predicated region
        $region65: #{tpu_custom_call.1} parent=11 // pred_check
          %p607 = pneg %p480
        $region66: #{tpu_custom_call.1} parent=11 // pred_check_branch
          %609 = sbr.rel (%p607) target = $region68
        $region67: #{tpu_custom_call.1} parent=11 // pred_region
          _
        $region68: #{tpu_custom_call.1} parent=11 // pred_fallthru
          _
      $region12: #{tpu_custom_call.1} parent=5 // pred_fallthru
        _
      %p610 = scmp.lt.s32.totalorder %s30, 2
      // Predicated region
      $region69: #{tpu_custom_call.1} parent=5 // pred_check
        %p611 = pneg %p610
      $region70: #{tpu_custom_call.1} parent=5 // pred_check_branch
        %613 = sbr.rel (%p611) target = $region72
      $region71: #{tpu_custom_call.1} parent=5 // pred_region
        // Predicated region
        $region73: #{tpu_custom_call.1} parent=71 // pred_check
          %p614 = pneg %p71
        $region74: #{tpu_custom_call.1} parent=71 // pred_check_branch
          %616 = sbr.rel (%p614) target = $region76
        $region75: #{tpu_custom_call.1} parent=71 // pred_region
          %s617 = smul.u32 32, %s30
          %p618 = scmp.lt.s32.totalorder %s617, 63
          %s619 = scalar_select %p618, %s617, 63
          %s620 = smul.addr %s619, 8
          %s621 = scalar_lea.vmem %s1, %s620
          %s622 = smul.u32 32, %s30
        $region76: #{tpu_custom_call.1} parent=71 // pred_fallthru
          _
        // Predicated region
        $region77: #{tpu_custom_call.1} parent=71 // pred_check
          %p623 = pneg %p97
        $region78: #{tpu_custom_call.1} parent=71 // pred_check_branch
          %625 = sbr.rel (%p623) target = $region80
        $region79: #{tpu_custom_call.1} parent=71 // pred_region
          %s626 = smul.u32 32, %s30
          %p627 = scmp.lt.s32.totalorder %s626, 63
          %s628 = scalar_select %p627, %s626, 63
          %s629 = smul.addr %s628, 8
          %s630 = scalar_lea.vmem %s2, %s629
          %s631 = smul.u32 32, %s30
        $region80: #{tpu_custom_call.1} parent=71 // pred_fallthru
          _
        // Predicated region
        $region81: #{tpu_custom_call.1} parent=71 // pred_check
          %p632 = pneg %p123
        $region82: #{tpu_custom_call.1} parent=71 // pred_check_branch
          %634 = sbr.rel (%p632) target = $region84
        $region83: #{tpu_custom_call.1} parent=71 // pred_region
          %s635 = smul.u32 32, %s30
          %p636 = scmp.lt.s32.totalorder %s635, 63
          %s637 = scalar_select %p636, %s635, 63
          %s638 = smul.addr %s637, 8
          %s639 = scalar_lea.vmem %s3, %s638
          %s640 = smul.u32 32, %s30
        $region84: #{tpu_custom_call.1} parent=71 // pred_fallthru
          _
        // Predicated region
        $region85: #{tpu_custom_call.1} parent=71 // pred_check
          %p641 = pneg %p149
        $region86: #{tpu_custom_call.1} parent=71 // pred_check_branch
          %643 = sbr.rel (%p641) target = $region88
        $region87: #{tpu_custom_call.1} parent=71 // pred_region
          %s644 = smul.u32 32, %s30
          %p645 = scmp.lt.s32.totalorder %s644, 63
          %s646 = scalar_select %p645, %s644, 63
          %s647 = smul.addr %s646, 8
          %s648 = scalar_lea.vmem %s4, %s647
          %s649 = smul.u32 32, %s30
        $region88: #{tpu_custom_call.1} parent=71 // pred_fallthru
          _
        // Predicated region
        $region89: #{tpu_custom_call.1} parent=71 // pred_check
          %p650 = pneg %p175
        $region90: #{tpu_custom_call.1} parent=71 // pred_check_branch
          %652 = sbr.rel (%p650) target = $region92
        $region91: #{tpu_custom_call.1} parent=71 // pred_region
          %s653 = smul.u32 32, %s30
          %p654 = scmp.lt.s32.totalorder %s653, 63
          %s655 = scalar_select %p654, %s653, 63
          %s656 = smul.addr %s655, 4
          %s657 = scalar_lea.vmem %s5, %s656
          %s658 = smul.u32 32, %s30
        $region92: #{tpu_custom_call.1} parent=71 // pred_fallthru
          _
        // Predicated region
        $region93: #{tpu_custom_call.1} parent=71 // pred_check
          %p659 = pneg %p201
        $region94: #{tpu_custom_call.1} parent=71 // pred_check_branch
          %661 = sbr.rel (%p659) target = $region96
        $region95: #{tpu_custom_call.1} parent=71 // pred_region
          %s662 = smul.u32 32, %s30
          %p663 = scmp.lt.s32.totalorder %s662, 63
          %s664 = scalar_select %p663, %s662, 63
          %s665 = smul.addr %s664, 4
          %s666 = scalar_lea.vmem %s6, %s665
          %s667 = smul.u32 32, %s30
        $region96: #{tpu_custom_call.1} parent=71 // pred_fallthru
          _
        // Predicated region
        $region97: #{tpu_custom_call.1} parent=71 // pred_check
          %p668 = pneg %p500
        $region98: #{tpu_custom_call.1} parent=71 // pred_check_branch
          %670 = sbr.rel (%p668) target = $region100
        $region99: #{tpu_custom_call.1} parent=71 // pred_region
          %s671 = smul.u32 32, %s30
          %p672 = scmp.lt.s32.totalorder %s671, 63
          %s673 = scalar_select %p672, %s671, 63
          %s674 = smul.addr %s673, 8
          %s675 = scalar_lea.vmem %s20, %s674
          %s676 = smul.u32 32, %s30
        $region100: #{tpu_custom_call.1} parent=71 // pred_fallthru
          _
        // Predicated region
        $region101: #{tpu_custom_call.1} parent=71 // pred_check
          %p677 = pneg %p526
        $region102: #{tpu_custom_call.1} parent=71 // pred_check_branch
          %679 = sbr.rel (%p677) target = $region104
        $region103: #{tpu_custom_call.1} parent=71 // pred_region
          %s680 = smul.u32 32, %s30
          %p681 = scmp.lt.s32.totalorder %s680, 63
          %s682 = scalar_select %p681, %s680, 63
          %s683 = smul.addr %s682, 8
          %s684 = scalar_lea.vmem %s21, %s683
          %s685 = smul.u32 32, %s30
        $region104: #{tpu_custom_call.1} parent=71 // pred_fallthru
          _
      $region72: #{tpu_custom_call.1} parent=5 // pred_fallthru
        _
      %p686 = scmp.le.s32.totalorder 1, %s30
      %p687 = scmp.lt.s32.totalorder %s30, 3
      %p688 = pnand %p686, %p687
      %p689 = pneg %p688
      // Predicated region
      $region105: #{tpu_custom_call.1} parent=5 // pred_check
        _
      $region106: #{tpu_custom_call.1} parent=5 // pred_check_branch
        %691 = sbr.rel (%p688) target = $region108
      $region107: #{tpu_custom_call.1} parent=5 // pred_region
        %s692 = ssub.s32 %s30, 1
        %p693 = pneg %p51
        %p694 = pneg %p48
        %s695 = smul.u32 32, %s35
        %p696 = scmp.lt.s32.totalorder %s695, 63
        %s697 = scalar_select %p696, %s695, 63
        %s698 = smul.addr %s697, 8
        %s699 = scalar_lea.vmem %s1, %s698
        %p700 = pneg %p77
        %p701 = pneg %p74
        %s702 = smul.u32 32, %s35
        %p703 = scmp.lt.s32.totalorder %s702, 63
        %s704 = scalar_select %p703, %s702, 63
        %s705 = smul.addr %s704, 8
        %s706 = scalar_lea.vmem %s2, %s705
        %p707 = pneg %p103
        %p708 = pneg %p100
        %s709 = smul.u32 32, %s35
        %p710 = scmp.lt.s32.totalorder %s709, 63
        %s711 = scalar_select %p710, %s709, 63
        %s712 = smul.addr %s711, 8
        %s713 = scalar_lea.vmem %s3, %s712
        %p714 = pneg %p129
        %p715 = pneg %p126
        %s716 = smul.u32 32, %s35
        %p717 = scmp.lt.s32.totalorder %s716, 63
        %s718 = scalar_select %p717, %s716, 63
        %s719 = smul.addr %s718, 8
        %s720 = scalar_lea.vmem %s4, %s719
        %p721 = pneg %p155
        %p722 = pneg %p152
        %s723 = smul.u32 32, %s35
        %p724 = scmp.lt.s32.totalorder %s723, 63
        %s725 = scalar_select %p724, %s723, 63
        %s726 = smul.addr %s725, 4
        %s727 = scalar_lea.vmem %s5, %s726
        %p728 = pneg %p181
        %p729 = pneg %p178
        %s730 = smul.u32 32, %s35
        %p731 = scmp.lt.s32.totalorder %s730, 63
        %s732 = scalar_select %p731, %s730, 63
        %s733 = smul.addr %s732, 4
        %s734 = scalar_lea.vmem %s6, %s733
        %p735 = pneg %p207
        %p736 = pneg %p204
        %p737 = pneg %p228
        %p738 = pneg %p225
        %p739 = pneg %p249
        %p740 = pneg %p246
        %p741 = pneg %p270
        %p742 = pneg %p267
        %p743 = pneg %p291
        %p744 = pneg %p288
        %p745 = pneg %p312
        %p746 = pneg %p309
        %p747 = pneg %p333
        %p748 = pneg %p330
        %p749 = pneg %p354
        %p750 = pneg %p351
        %p751 = pneg %p375
        %p752 = pneg %p372
        %p753 = pneg %p396
        %p754 = pneg %p393
        %p755 = pneg %p417
        %p756 = pneg %p414
        %p757 = pneg %p438
        %p758 = pneg %p435
        %p759 = pneg %p459
        %p760 = pneg %p456
        %p761 = pneg %p480
        %p762 = pneg %p477
        %s763 = smul.u32 32, %s35
        %p764 = scmp.lt.s32.totalorder %s763, 63
        %s765 = scalar_select %p764, %s763, 63
        %s766 = smul.addr %s765, 8
        %s767 = scalar_lea.vmem %s20, %s766
        %p768 = pneg %p506
        %p769 = pneg %p503
        %s770 = smul.u32 32, %s35
        %p771 = scmp.lt.s32.totalorder %s770, 63
        %s772 = scalar_select %p771, %s770, 63
        %s773 = smul.addr %s772, 8
        %s774 = scalar_lea.vmem %s21, %s773
        %p775 = pneg %p532
        %p776 = pneg %p529
        %p777 = pneg %p553
        %p778 = pneg %p550
        %s779 = smul.u32 32, %s35
        %p780 = scmp.lt.s32.totalorder %s779, 63
        %s781 = scalar_select %p780, %s779, 63
        %s782 = smul.addr %s781, 8
        %s783 = scalar_lea.vmem %s1, %s782
        %s784 = smul.u32 32, %s35
        %s785 = smul.u32 32, %s35
        %p786 = scmp.lt.s32.totalorder %s785, 63
        %s787 = scalar_select %p786, %s785, 63
        %s788 = smul.addr %s787, 8
        %s789 = scalar_lea.vmem %s2, %s788
        %s790 = smul.u32 32, %s35
        %s791 = smul.u32 32, %s35
        %p792 = scmp.lt.s32.totalorder %s791, 63
        %s793 = scalar_select %p792, %s791, 63
        %s794 = smul.addr %s793, 8
        %s795 = scalar_lea.vmem %s3, %s794
        %s796 = smul.u32 32, %s35
        %s797 = smul.u32 32, %s35
        %p798 = scmp.lt.s32.totalorder %s797, 63
        %s799 = scalar_select %p798, %s797, 63
        %s800 = smul.addr %s799, 8
        %s801 = scalar_lea.vmem %s4, %s800
        %s802 = smul.u32 32, %s35
        %s803 = smul.u32 32, %s35
        %p804 = scmp.lt.s32.totalorder %s803, 63
        %s805 = scalar_select %p804, %s803, 63
        %s806 = smul.addr %s805, 4
        %s807 = scalar_lea.vmem %s5, %s806
        %s808 = smul.u32 32, %s35
        %s809 = smul.u32 32, %s35
        %p810 = scmp.lt.s32.totalorder %s809, 63
        %s811 = scalar_select %p810, %s809, 63
        %s812 = smul.addr %s811, 4
        %s813 = scalar_lea.vmem %s6, %s812
        %s814 = smul.u32 32, %s35
        %s815 = smul.u32 32, %s35
        %p816 = scmp.lt.s32.totalorder %s815, 63
        %s817 = scalar_select %p816, %s815, 63
        %s818 = smul.addr %s817, 8
        %s819 = scalar_lea.vmem %s20, %s818
        %s820 = smul.u32 32, %s35
        %s821 = smul.u32 32, %s35
        %p822 = scmp.lt.s32.totalorder %s821, 63
        %s823 = scalar_select %p822, %s821, 63
        %s824 = smul.addr %s823, 8
        %s825 = scalar_lea.vmem %s21, %s824
        %s826 = smul.u32 32, %s35
        %p828 = scmp.eq.s32.totalorder %s35, 0
        // Predicated region
        $region109: #{tpu_custom_call.1} parent=107 // pred_check
          %p829 = pneg %p828
        $region110: #{tpu_custom_call.1} parent=107 // pred_check_branch
          %831 = sbr.rel (%p829) target = $region112
        $region111: #{tpu_custom_call.1} parent=107 // pred_region
          %s832 = scalar_lea.smem [#allocation3], 0
          %833 = sst [smem:[%s832]] 0.0
          %s834 = scalar_lea.smem [#allocation3], 1
          %835 = sst [smem:[%s834]] 0.0
          %s836 = scalar_lea.smem [#allocation3], 2
          %837 = sst [smem:[%s836]] 0.0
        $region112: #{tpu_custom_call.1} parent=107 // pred_fallthru
          _
        %v838 = vld [vmem:[%s783] sm:$0xff]
        %v839 = vld [vmem:[%s783 + $0x8] sm:$0xff]
        %v840 = vld [vmem:[%s783 + $0x10] sm:$0xff]
        %v841 = vld [vmem:[%s783 + $0x18] sm:$0xff]
        %v842 = vld [vmem:[%s783 + $0x20] sm:$0xff]
        %v843 = vld [vmem:[%s783 + $0x28] sm:$0xff]
        %v844 = vld [vmem:[%s783 + $0x30] sm:$0xff]
        %v845 = vld [vmem:[%s783 + $0x38] sm:$0xff]
        %v846 = vld [vmem:[%s783 + $0x40] sm:$0xff]
        %v847 = vld [vmem:[%s783 + $0x48] sm:$0xff]
        %v848 = vld [vmem:[%s783 + $0x50] sm:$0xff]
        %v849 = vld [vmem:[%s783 + $0x58] sm:$0xff]
        %v850 = vld [vmem:[%s783 + $0x60] sm:$0xff]
        %v851 = vld [vmem:[%s783 + $0x68] sm:$0xff]
        %v852 = vld [vmem:[%s783 + $0x70] sm:$0xff]
        %v853 = vld [vmem:[%s783 + $0x78] sm:$0xff]
        %v854 = vld [vmem:[%s783 + $0x80] sm:$0xff]
        %v855 = vld [vmem:[%s783 + $0x88] sm:$0xff]
        %v856 = vld [vmem:[%s783 + $0x90] sm:$0xff]
        %v857 = vld [vmem:[%s783 + $0x98] sm:$0xff]
        %v858 = vld [vmem:[%s783 + $0xa0] sm:$0xff]
        %v859 = vld [vmem:[%s783 + $0xa8] sm:$0xff]
        %v860 = vld [vmem:[%s783 + $0xb0] sm:$0xff]
        %v861 = vld [vmem:[%s783 + $0xb8] sm:$0xff]
        %v862 = vld [vmem:[%s783 + $0xc0] sm:$0xff]
        %v863 = vld [vmem:[%s783 + $0xc8] sm:$0xff]
        %v864 = vld [vmem:[%s783 + $0xd0] sm:$0xff]
        %v865 = vld [vmem:[%s783 + $0xd8] sm:$0xff]
        %v866 = vld [vmem:[%s783 + $0xe0] sm:$0xff]
        %v867 = vld [vmem:[%s783 + $0xe8] sm:$0xff]
        %v868 = vld [vmem:[%s783 + $0xf0] sm:$0xff]
        %v869 = vld [vmem:[%s783 + $0xf8] sm:$0xff]
        %v870 = vld [vmem:[%s789] sm:$0xff]
        %v871 = vld [vmem:[%s789 + $0x8] sm:$0xff]
        %v872 = vld [vmem:[%s789 + $0x10] sm:$0xff]
        %v873 = vld [vmem:[%s789 + $0x18] sm:$0xff]
        %v874 = vld [vmem:[%s789 + $0x20] sm:$0xff]
        %v875 = vld [vmem:[%s789 + $0x28] sm:$0xff]
        %v876 = vld [vmem:[%s789 + $0x30] sm:$0xff]
        %v877 = vld [vmem:[%s789 + $0x38] sm:$0xff]
        %v878 = vld [vmem:[%s789 + $0x40] sm:$0xff]
        %v879 = vld [vmem:[%s789 + $0x48] sm:$0xff]
        %v880 = vld [vmem:[%s789 + $0x50] sm:$0xff]
        %v881 = vld [vmem:[%s789 + $0x58] sm:$0xff]
        %v882 = vld [vmem:[%s789 + $0x60] sm:$0xff]
        %v883 = vld [vmem:[%s789 + $0x68] sm:$0xff]
        %v884 = vld [vmem:[%s789 + $0x70] sm:$0xff]
        %v885 = vld [vmem:[%s789 + $0x78] sm:$0xff]
        %v886 = vld [vmem:[%s789 + $0x80] sm:$0xff]
        %v887 = vld [vmem:[%s789 + $0x88] sm:$0xff]
        %v888 = vld [vmem:[%s789 + $0x90] sm:$0xff]
        %v889 = vld [vmem:[%s789 + $0x98] sm:$0xff]
        %v890 = vld [vmem:[%s789 + $0xa0] sm:$0xff]
        %v891 = vld [vmem:[%s789 + $0xa8] sm:$0xff]
        %v892 = vld [vmem:[%s789 + $0xb0] sm:$0xff]
        %v893 = vld [vmem:[%s789 + $0xb8] sm:$0xff]
        %v894 = vld [vmem:[%s789 + $0xc0] sm:$0xff]
        %v895 = vld [vmem:[%s789 + $0xc8] sm:$0xff]
        %v896 = vld [vmem:[%s789 + $0xd0] sm:$0xff]
        %v897 = vld [vmem:[%s789 + $0xd8] sm:$0xff]
        %v898 = vld [vmem:[%s789 + $0xe0] sm:$0xff]
        %v899 = vld [vmem:[%s789 + $0xe8] sm:$0xff]
        %v900 = vld [vmem:[%s789 + $0xf0] sm:$0xff]
        %v901 = vld [vmem:[%s789 + $0xf8] sm:$0xff]
        %v902 = vmul.f32 %v838, %v870
        %v903 = vmul.f32 %v839, %v871
        %v904 = vmul.f32 %v840, %v872
        %v905 = vmul.f32 %v841, %v873
        %v906 = vmul.f32 %v842, %v874
        %v907 = vmul.f32 %v843, %v875
        %v908 = vmul.f32 %v844, %v876
        %v909 = vmul.f32 %v845, %v877
        %v910 = vmul.f32 %v846, %v878
        %v911 = vmul.f32 %v847, %v879
        %v912 = vmul.f32 %v848, %v880
        %v913 = vmul.f32 %v849, %v881
        %v914 = vmul.f32 %v850, %v882
        %v915 = vmul.f32 %v851, %v883
        %v916 = vmul.f32 %v852, %v884
        %v917 = vmul.f32 %v853, %v885
        %v918 = vmul.f32 %v854, %v886
        %v919 = vmul.f32 %v855, %v887
        %v920 = vmul.f32 %v856, %v888
        %v921 = vmul.f32 %v857, %v889
        %v922 = vmul.f32 %v858, %v890
        %v923 = vmul.f32 %v859, %v891
        %v924 = vmul.f32 %v860, %v892
        %v925 = vmul.f32 %v861, %v893
        %v926 = vmul.f32 %v862, %v894
        %v927 = vmul.f32 %v863, %v895
        %v928 = vmul.f32 %v864, %v896
        %v929 = vmul.f32 %v865, %v897
        %v930 = vmul.f32 %v866, %v898
        %v931 = vmul.f32 %v867, %v899
        %v932 = vmul.f32 %v868, %v900
        %v933 = vmul.f32 %v869, %v901
        %vm934 = vcmask 261120
        %v935 = vsel %vm934, %v902, 0.0
        %936 = vadd.xlane.f32.xlu0 %v935
        %v937 = vpop.xlane.xlu0 %936
        %v938 = vsel %vm934, %v903, 0.0
        %939 = vadd.xlane.f32.xlu0 %v938
        %v940 = vpop.xlane.xlu0 %939
        %v941 = vsel %vm934, %v904, 0.0
        %942 = vadd.xlane.f32.xlu0 %v941
        %v943 = vpop.xlane.xlu0 %942
        %v944 = vsel %vm934, %v905, 0.0
        %945 = vadd.xlane.f32.xlu0 %v944
        %v946 = vpop.xlane.xlu0 %945
        %v947 = vsel %vm934, %v906, 0.0
        %948 = vadd.xlane.f32.xlu0 %v947
        %v949 = vpop.xlane.xlu0 %948
        %v950 = vsel %vm934, %v907, 0.0
        %951 = vadd.xlane.f32.xlu0 %v950
        %v952 = vpop.xlane.xlu0 %951
        %v953 = vsel %vm934, %v908, 0.0
        %954 = vadd.xlane.f32.xlu0 %v953
        %v955 = vpop.xlane.xlu0 %954
        %v956 = vsel %vm934, %v909, 0.0
        %957 = vadd.xlane.f32.xlu0 %v956
        %v958 = vpop.xlane.xlu0 %957
        %v959 = vsel %vm934, %v910, 0.0
        %960 = vadd.xlane.f32.xlu0 %v959
        %v961 = vpop.xlane.xlu0 %960
        %v962 = vsel %vm934, %v911, 0.0
        %963 = vadd.xlane.f32.xlu0 %v962
        %v964 = vpop.xlane.xlu0 %963
        %v965 = vsel %vm934, %v912, 0.0
        %966 = vadd.xlane.f32.xlu0 %v965
        %v967 = vpop.xlane.xlu0 %966
        %v968 = vsel %vm934, %v913, 0.0
        %969 = vadd.xlane.f32.xlu0 %v968
        %v970 = vpop.xlane.xlu0 %969
        %v971 = vsel %vm934, %v914, 0.0
        %972 = vadd.xlane.f32.xlu0 %v971
        %v973 = vpop.xlane.xlu0 %972
        %v974 = vsel %vm934, %v915, 0.0
        %975 = vadd.xlane.f32.xlu0 %v974
        %v976 = vpop.xlane.xlu0 %975
        %v977 = vsel %vm934, %v916, 0.0
        %978 = vadd.xlane.f32.xlu0 %v977
        %v979 = vpop.xlane.xlu0 %978
        %v980 = vsel %vm934, %v917, 0.0
        %981 = vadd.xlane.f32.xlu0 %v980
        %v982 = vpop.xlane.xlu0 %981
        %v983 = vsel %vm934, %v918, 0.0
        %984 = vadd.xlane.f32.xlu0 %v983
        %v985 = vpop.xlane.xlu0 %984
        %v986 = vsel %vm934, %v919, 0.0
        %987 = vadd.xlane.f32.xlu0 %v986
        %v988 = vpop.xlane.xlu0 %987
        %v989 = vsel %vm934, %v920, 0.0
        %990 = vadd.xlane.f32.xlu0 %v989
        %v991 = vpop.xlane.xlu0 %990
        %v992 = vsel %vm934, %v921, 0.0
        %993 = vadd.xlane.f32.xlu0 %v992
        %v994 = vpop.xlane.xlu0 %993
        %v995 = vsel %vm934, %v922, 0.0
        %996 = vadd.xlane.f32.xlu0 %v995
        %v997 = vpop.xlane.xlu0 %996
        %v998 = vsel %vm934, %v923, 0.0
        %999 = vadd.xlane.f32.xlu0 %v998
        %v1000 = vpop.xlane.xlu0 %999
        %v1001 = vsel %vm934, %v924, 0.0
        %1002 = vadd.xlane.f32.xlu0 %v1001
        %v1003 = vpop.xlane.xlu0 %1002
        %v1004 = vsel %vm934, %v925, 0.0
        %1005 = vadd.xlane.f32.xlu0 %v1004
        %v1006 = vpop.xlane.xlu0 %1005
        %v1007 = vsel %vm934, %v926, 0.0
        %1008 = vadd.xlane.f32.xlu0 %v1007
        %v1009 = vpop.xlane.xlu0 %1008
        %v1010 = vsel %vm934, %v927, 0.0
        %1011 = vadd.xlane.f32.xlu0 %v1010
        %v1012 = vpop.xlane.xlu0 %1011
        %v1013 = vsel %vm934, %v928, 0.0
        %1014 = vadd.xlane.f32.xlu0 %v1013
        %v1015 = vpop.xlane.xlu0 %1014
        %v1016 = vsel %vm934, %v929, 0.0
        %1017 = vadd.xlane.f32.xlu0 %v1016
        %v1018 = vpop.xlane.xlu0 %1017
        %v1019 = vsel %vm934, %v930, 0.0
        %1020 = vadd.xlane.f32.xlu0 %v1019
        %v1021 = vpop.xlane.xlu0 %1020
        %v1022 = vsel %vm934, %v931, 0.0
        %1023 = vadd.xlane.f32.xlu0 %v1022
        %v1024 = vpop.xlane.xlu0 %1023
        %v1025 = vsel %vm934, %v932, 0.0
        %1026 = vadd.xlane.f32.xlu0 %v1025
        %v1027 = vpop.xlane.xlu0 %1026
        %v1028 = vsel %vm934, %v933, 0.0
        %1029 = vadd.xlane.f32.xlu0 %v1028
        %v1030 = vpop.xlane.xlu0 %1029
        %v1031 = vld [vmem:[%s807] sm:$0xf]
        %v1032 = vld [vmem:[%s807 + $0x4] sm:$0xf]
        %v1033 = vld [vmem:[%s807 + $0x8] sm:$0xf]
        %v1034 = vld [vmem:[%s807 + $0xc] sm:$0xf]
        %v1035 = vld [vmem:[%s807 + $0x10] sm:$0xf]
        %v1036 = vld [vmem:[%s807 + $0x14] sm:$0xf]
        %v1037 = vld [vmem:[%s807 + $0x18] sm:$0xf]
        %v1038 = vld [vmem:[%s807 + $0x1c] sm:$0xf]
        %v1039 = vld [vmem:[%s807 + $0x20] sm:$0xf]
        %v1040 = vld [vmem:[%s807 + $0x24] sm:$0xf]
        %v1041 = vld [vmem:[%s807 + $0x28] sm:$0xf]
        %v1042 = vld [vmem:[%s807 + $0x2c] sm:$0xf]
        %v1043 = vld [vmem:[%s807 + $0x30] sm:$0xf]
        %v1044 = vld [vmem:[%s807 + $0x34] sm:$0xf]
        %v1045 = vld [vmem:[%s807 + $0x38] sm:$0xf]
        %v1046 = vld [vmem:[%s807 + $0x3c] sm:$0xf]
        %v1047 = vld [vmem:[%s807 + $0x40] sm:$0xf]
        %v1048 = vld [vmem:[%s807 + $0x44] sm:$0xf]
        %v1049 = vld [vmem:[%s807 + $0x48] sm:$0xf]
        %v1050 = vld [vmem:[%s807 + $0x4c] sm:$0xf]
        %v1051 = vld [vmem:[%s807 + $0x50] sm:$0xf]
        %v1052 = vld [vmem:[%s807 + $0x54] sm:$0xf]
        %v1053 = vld [vmem:[%s807 + $0x58] sm:$0xf]
        %v1054 = vld [vmem:[%s807 + $0x5c] sm:$0xf]
        %v1055 = vld [vmem:[%s807 + $0x60] sm:$0xf]
        %v1056 = vld [vmem:[%s807 + $0x64] sm:$0xf]
        %v1057 = vld [vmem:[%s807 + $0x68] sm:$0xf]
        %v1058 = vld [vmem:[%s807 + $0x6c] sm:$0xf]
        %v1059 = vld [vmem:[%s807 + $0x70] sm:$0xf]
        %v1060 = vld [vmem:[%s807 + $0x74] sm:$0xf]
        %v1061 = vld [vmem:[%s807 + $0x78] sm:$0xf]
        %v1062 = vld [vmem:[%s807 + $0x7c] sm:$0xf]
        %v1063 = vld [vmem:[%s7] sm:$0xff]
        %v1064 = vld [vmem:[%s7 + $0x8] sm:$0xff]
        %v1065 = vld [vmem:[%s7 + $0x10] sm:$0xff]
        %v1066 = vld [vmem:[%s7 + $0x18] sm:$0xff]
        %v1067 = vld [vmem:[%s7 + $0x20] sm:$0xff]
        %v1068 = vld [vmem:[%s7 + $0x28] sm:$0xff]
        %v1069 = vld [vmem:[%s7 + $0x30] sm:$0xff]
        %v1070 = vld [vmem:[%s7 + $0x38] sm:$0xff]
        %v1071 = vld [vmem:[%s7 + $0x40] sm:$0xff]
        %v1072 = vld [vmem:[%s7 + $0x48] sm:$0xff]
        %v1073 = vld [vmem:[%s7 + $0x50] sm:$0xff]
        %v1074 = vld [vmem:[%s7 + $0x58] sm:$0xff]
        %v1075 = vld [vmem:[%s7 + $0x60] sm:$0xff]
        %v1076 = vld [vmem:[%s7 + $0x68] sm:$0xff]
        %v1077 = vld [vmem:[%s7 + $0x70] sm:$0xff]
        %v1078 = vld [vmem:[%s7 + $0x78] sm:$0xff]
        %v1079 = vld [vmem:[%s7 + $0x80] sm:$0xff]
        %v1080 = vld [vmem:[%s7 + $0x88] sm:$0xff]
        %v1081 = vld [vmem:[%s7 + $0x90] sm:$0xff]
        %v1082 = vld [vmem:[%s7 + $0x98] sm:$0xff]
        %v1083 = vld [vmem:[%s7 + $0xa0] sm:$0xff]
        %v1084 = vld [vmem:[%s7 + $0xa8] sm:$0xff]
        %v1085 = vld [vmem:[%s7 + $0xb0] sm:$0xff]
        %v1086 = vld [vmem:[%s7 + $0xb8] sm:$0xff]
        %v1087 = vld [vmem:[%s8] sm:$0xf]
        %v1089 = vperm.slane %v1087, 0
        %v1090 = vperm.slane %v1087, 1
        %v1091 = vperm.slane %v1087, 2
        %v1092 = vperm.slane %v1087, 3
        %v1129 = vunpack.c.l.b16 %v1031
        %v1130 = vunpack.c.l.b16 %v1032
        %v1131 = vunpack.c.l.b16 %v1033
        %v1132 = vunpack.c.l.b16 %v1034
        %v1133 = vunpack.c.l.b16 %v1035
        %v1134 = vunpack.c.l.b16 %v1036
        %v1135 = vunpack.c.l.b16 %v1037
        %v1136 = vunpack.c.l.b16 %v1038
        %v1137 = vunpack.c.l.b16 %v1039
        %v1138 = vunpack.c.l.b16 %v1040
        %v1139 = vunpack.c.l.b16 %v1041
        %v1140 = vunpack.c.l.b16 %v1042
        %v1141 = vunpack.c.l.b16 %v1043
        %v1142 = vunpack.c.l.b16 %v1044
        %v1143 = vunpack.c.l.b16 %v1045
        %v1144 = vunpack.c.l.b16 %v1046
        %v1145 = vunpack.c.l.b16 %v1047
        %v1146 = vunpack.c.l.b16 %v1048
        %v1147 = vunpack.c.l.b16 %v1049
        %v1148 = vunpack.c.l.b16 %v1050
        %v1149 = vunpack.c.l.b16 %v1051
        %v1150 = vunpack.c.l.b16 %v1052
        %v1151 = vunpack.c.l.b16 %v1053
        %v1152 = vunpack.c.l.b16 %v1054
        %v1153 = vunpack.c.l.b16 %v1055
        %v1154 = vunpack.c.l.b16 %v1056
        %v1155 = vunpack.c.l.b16 %v1057
        %v1156 = vunpack.c.l.b16 %v1058
        %v1157 = vunpack.c.l.b16 %v1059
        %v1158 = vunpack.c.l.b16 %v1060
        %v1159 = vunpack.c.l.b16 %v1061
        %v1160 = vunpack.c.l.b16 %v1062
        %v1161 = vpack.c.b16 %v1130, %v1129
        %v1162 = vpack.c.b16 %v1132, %v1131
        %v1163 = vpack.c.b16 %v1134, %v1133
        %v1164 = vpack.c.b16 %v1136, %v1135
        %v1165 = vpack.c.b16 %v1138, %v1137
        %v1166 = vpack.c.b16 %v1140, %v1139
        %v1167 = vpack.c.b16 %v1142, %v1141
        %v1168 = vpack.c.b16 %v1144, %v1143
        %v1169 = vpack.c.b16 %v1146, %v1145
        %v1170 = vpack.c.b16 %v1148, %v1147
        %v1171 = vpack.c.b16 %v1150, %v1149
        %v1172 = vpack.c.b16 %v1152, %v1151
        %v1173 = vpack.c.b16 %v1154, %v1153
        %v1174 = vpack.c.b16 %v1156, %v1155
        %v1175 = vpack.c.b16 %v1158, %v1157
        %v1176 = vpack.c.b16 %v1160, %v1159
        %v1201 = vunpack.c.l.b16 %v1063
        %v1202 = vunpack.c.h.b16 %v1063
        %v1203 = vunpack.c.l.b16 %v1064
        %v1204 = vunpack.c.h.b16 %v1064
        %v1205 = vunpack.c.l.b16 %v1065
        %v1206 = vunpack.c.h.b16 %v1065
        %v1207 = vunpack.c.l.b16 %v1066
        %v1208 = vunpack.c.h.b16 %v1066
        %v1209 = vunpack.c.l.b16 %v1067
        %v1210 = vunpack.c.h.b16 %v1067
        %v1211 = vunpack.c.l.b16 %v1068
        %v1212 = vunpack.c.h.b16 %v1068
        %v1213 = vunpack.c.l.b16 %v1069
        %v1214 = vunpack.c.h.b16 %v1069
        %v1215 = vunpack.c.l.b16 %v1070
        %v1216 = vunpack.c.h.b16 %v1070
        %v1217 = vunpack.c.l.b16 %v1071
        %v1218 = vunpack.c.h.b16 %v1071
        %v1219 = vunpack.c.l.b16 %v1072
        %v1220 = vunpack.c.h.b16 %v1072
        %v1221 = vunpack.c.l.b16 %v1073
        %v1222 = vunpack.c.h.b16 %v1073
        %v1223 = vunpack.c.l.b16 %v1074
        %v1224 = vunpack.c.h.b16 %v1074
        %v1225 = vunpack.c.l.b16 %v1075
        %v1226 = vunpack.c.h.b16 %v1075
        %v1227 = vunpack.c.l.b16 %v1076
        %v1228 = vunpack.c.h.b16 %v1076
        %v1229 = vunpack.c.l.b16 %v1077
        %v1230 = vunpack.c.h.b16 %v1077
        %v1231 = vunpack.c.l.b16 %v1078
        %v1232 = vunpack.c.h.b16 %v1078
        %v1233 = vunpack.c.l.b16 %v1079
        %v1234 = vunpack.c.h.b16 %v1079
        %v1235 = vunpack.c.l.b16 %v1080
        %v1236 = vunpack.c.h.b16 %v1080
        %v1237 = vunpack.c.l.b16 %v1081
        %v1238 = vunpack.c.h.b16 %v1081
        %v1239 = vunpack.c.l.b16 %v1082
        %v1240 = vunpack.c.h.b16 %v1082
        %v1241 = vunpack.c.l.b16 %v1083
        %v1242 = vunpack.c.h.b16 %v1083
        %v1243 = vunpack.c.l.b16 %v1084
        %v1244 = vunpack.c.h.b16 %v1084
        %v1245 = vunpack.c.l.b16 %v1085
        %v1246 = vunpack.c.h.b16 %v1085
        %v1247 = vunpack.c.l.b16 %v1086
        %v1248 = vunpack.c.h.b16 %v1086
        %v1249 = vpack.c.b16 %v1205, %v1201
        %v1250 = vpack.c.b16 %v1206, %v1202
        %v1251 = vpack.c.b16 %v1207, %v1203
        %v1252 = vpack.c.b16 %v1208, %v1204
        %v1253 = vpack.c.b16 %v1213, %v1209
        %v1254 = vpack.c.b16 %v1214, %v1210
        %v1255 = vpack.c.b16 %v1215, %v1211
        %v1256 = vpack.c.b16 %v1216, %v1212
        %v1257 = vpack.c.b16 %v1221, %v1217
        %v1258 = vpack.c.b16 %v1222, %v1218
        %v1259 = vpack.c.b16 %v1223, %v1219
        %v1260 = vpack.c.b16 %v1224, %v1220
        %v1261 = vpack.c.b16 %v1229, %v1225
        %v1262 = vpack.c.b16 %v1230, %v1226
        %v1263 = vpack.c.b16 %v1231, %v1227
        %v1264 = vpack.c.b16 %v1232, %v1228
        %v1265 = vpack.c.b16 %v1237, %v1233
        %v1266 = vpack.c.b16 %v1238, %v1234
        %v1267 = vpack.c.b16 %v1239, %v1235
        %v1268 = vpack.c.b16 %v1240, %v1236
        %v1269 = vpack.c.b16 %v1245, %v1241
        %v1270 = vpack.c.b16 %v1246, %v1242
        %v1271 = vpack.c.b16 %v1247, %v1243
        %v1272 = vpack.c.b16 %v1248, %v1244
        %vm1297 = vcmask 785408
        %v1299 = vsel %vm1297, %v1161, 0
        %v1302 = vsel %vm1297, %v1162, 0
        %v1305 = vsel %vm1297, %v1163, 0
        %v1308 = vsel %vm1297, %v1164, 0
        %v1311 = vsel %vm1297, %v1165, 0
        %v1314 = vsel %vm1297, %v1166, 0
        %v1317 = vsel %vm1297, %v1167, 0
        %v1320 = vsel %vm1297, %v1168, 0
        %v1323 = vsel %vm1297, %v1169, 0
        %v1326 = vsel %vm1297, %v1170, 0
        %v1329 = vsel %vm1297, %v1171, 0
        %v1332 = vsel %vm1297, %v1172, 0
        %v1335 = vsel %vm1297, %v1173, 0
        %v1338 = vsel %vm1297, %v1174, 0
        %v1341 = vsel %vm1297, %v1175, 0
        %v1344 = vsel %vm1297, %v1176, 0
        %1346 = vmatpush.bf16.msra.mxu0 0
        %1347 = vmatpush.bf16.msra.mxu0 0
        %1348 = vmatpush.bf16.msra.mxu0 %v1269
        %1349 = vmatpush.bf16.msra.mxu0 %v1265
        %1350 = vmatpush.bf16.msra.mxu0 %v1261
        %1351 = vmatpush.bf16.msra.mxu0 %v1257
        %1352 = vmatpush.bf16.msra.mxu0 %v1253
        %1353 = vmatpush.bf16.msra.mxu0 %v1249
        %1354 = vmatmul.bf16.gmra.mxu0 %v1299
        %v1355 = vpop.f32.mrf.mxu0
        %v1356 = vadd.f32 %v1089, %v1355
        %v1357 = vpop.f32.mrf.mxu0
        %v1358 = vadd.f32 %v1089, %v1357
        %1359 = vmatmul.bf16.gmra.mxu0 %v1302
        %v1360 = vpop.f32.mrf.mxu0
        %v1361 = vadd.f32 %v1089, %v1360
        %v1362 = vpop.f32.mrf.mxu0
        %v1363 = vadd.f32 %v1089, %v1362
        %1364 = vmatmul.bf16.gmra.mxu0 %v1305
        %v1365 = vpop.f32.mrf.mxu0
        %v1366 = vadd.f32 %v1089, %v1365
        %v1367 = vpop.f32.mrf.mxu0
        %v1368 = vadd.f32 %v1089, %v1367
        %1369 = vmatmul.bf16.gmra.mxu0 %v1308
        %v1370 = vpop.f32.mrf.mxu0
        %v1371 = vadd.f32 %v1089, %v1370
        %v1372 = vpop.f32.mrf.mxu0
        %v1373 = vadd.f32 %v1089, %v1372
        %1374 = vmatmul.bf16.gmra.mxu0 %v1311
        %v1375 = vpop.f32.mrf.mxu0
        %v1376 = vadd.f32 %v1089, %v1375
        %v1377 = vpop.f32.mrf.mxu0
        %v1378 = vadd.f32 %v1089, %v1377
        %1379 = vmatmul.bf16.gmra.mxu0 %v1314
        %v1380 = vpop.f32.mrf.mxu0
        %v1381 = vadd.f32 %v1089, %v1380
        %v1382 = vpop.f32.mrf.mxu0
        %v1383 = vadd.f32 %v1089, %v1382
        %1384 = vmatmul.bf16.gmra.mxu0 %v1317
        %v1385 = vpop.f32.mrf.mxu0
        %v1386 = vadd.f32 %v1089, %v1385
        %v1387 = vpop.f32.mrf.mxu0
        %v1388 = vadd.f32 %v1089, %v1387
        %1389 = vmatmul.bf16.gmra.mxu0 %v1320
        %v1390 = vpop.f32.mrf.mxu0
        %v1391 = vadd.f32 %v1089, %v1390
        %v1392 = vpop.f32.mrf.mxu0
        %v1393 = vadd.f32 %v1089, %v1392
        %1394 = vmatmul.bf16.gmra.mxu0 %v1323
        %v1395 = vpop.f32.mrf.mxu0
        %v1396 = vadd.f32 %v1089, %v1395
        %v1397 = vpop.f32.mrf.mxu0
        %v1398 = vadd.f32 %v1089, %v1397
        %1399 = vmatmul.bf16.gmra.mxu0 %v1326
        %v1400 = vpop.f32.mrf.mxu0
        %v1401 = vadd.f32 %v1089, %v1400
        %v1402 = vpop.f32.mrf.mxu0
        %v1403 = vadd.f32 %v1089, %v1402
        %1404 = vmatmul.bf16.gmra.mxu0 %v1329
        %v1405 = vpop.f32.mrf.mxu0
        %v1406 = vadd.f32 %v1089, %v1405
        %v1407 = vpop.f32.mrf.mxu0
        %v1408 = vadd.f32 %v1089, %v1407
        %1409 = vmatmul.bf16.gmra.mxu0 %v1332
        %v1410 = vpop.f32.mrf.mxu0
        %v1411 = vadd.f32 %v1089, %v1410
        %v1412 = vpop.f32.mrf.mxu0
        %v1413 = vadd.f32 %v1089, %v1412
        %1414 = vmatmul.bf16.gmra.mxu0 %v1335
        %v1415 = vpop.f32.mrf.mxu0
        %v1416 = vadd.f32 %v1089, %v1415
        %v1417 = vpop.f32.mrf.mxu0
        %v1418 = vadd.f32 %v1089, %v1417
        %1419 = vmatmul.bf16.gmra.mxu0 %v1338
        %v1420 = vpop.f32.mrf.mxu0
        %v1421 = vadd.f32 %v1089, %v1420
        %v1422 = vpop.f32.mrf.mxu0
        %v1423 = vadd.f32 %v1089, %v1422
        %1424 = vmatmul.bf16.gmra.mxu0 %v1341
        %v1425 = vpop.f32.mrf.mxu0
        %v1426 = vadd.f32 %v1089, %v1425
        %v1427 = vpop.f32.mrf.mxu0
        %v1428 = vadd.f32 %v1089, %v1427
        %1429 = vmatmul.bf16.gmra.mxu0 %v1344
        %v1430 = vpop.f32.mrf.mxu0
        %v1431 = vadd.f32 %v1089, %v1430
        %v1432 = vpop.f32.mrf.mxu0
        %v1433 = vadd.f32 %v1089, %v1432
        %1434 = vdwg.mxu0
        %1435 = vmatpush.bf16.msra.mxu0 0
        %1436 = vmatpush.bf16.msra.mxu0 0
        %1437 = vmatpush.bf16.msra.mxu0 %v1270
        %1438 = vmatpush.bf16.msra.mxu0 %v1266
        %1439 = vmatpush.bf16.msra.mxu0 %v1262
        %1440 = vmatpush.bf16.msra.mxu0 %v1258
        %1441 = vmatpush.bf16.msra.mxu0 %v1254
        %1442 = vmatpush.bf16.msra.mxu0 %v1250
        %1443 = vmatmul.bf16.gmra.mxu0 %v1299
        %v1444 = vpop.f32.mrf.mxu0
        %v1445 = vadd.f32 %v1090, %v1444
        %v1446 = vpop.f32.mrf.mxu0
        %v1447 = vadd.f32 %v1090, %v1446
        %1448 = vmatmul.bf16.gmra.mxu0 %v1302
        %v1449 = vpop.f32.mrf.mxu0
        %v1450 = vadd.f32 %v1090, %v1449
        %v1451 = vpop.f32.mrf.mxu0
        %v1452 = vadd.f32 %v1090, %v1451
        %1453 = vmatmul.bf16.gmra.mxu0 %v1305
        %v1454 = vpop.f32.mrf.mxu0
        %v1455 = vadd.f32 %v1090, %v1454
        %v1456 = vpop.f32.mrf.mxu0
        %v1457 = vadd.f32 %v1090, %v1456
        %1458 = vmatmul.bf16.gmra.mxu0 %v1308
        %v1459 = vpop.f32.mrf.mxu0
        %v1460 = vadd.f32 %v1090, %v1459
        %v1461 = vpop.f32.mrf.mxu0
        %v1462 = vadd.f32 %v1090, %v1461
        %1463 = vmatmul.bf16.gmra.mxu0 %v1311
        %v1464 = vpop.f32.mrf.mxu0
        %v1465 = vadd.f32 %v1090, %v1464
        %v1466 = vpop.f32.mrf.mxu0
        %v1467 = vadd.f32 %v1090, %v1466
        %1468 = vmatmul.bf16.gmra.mxu0 %v1314
        %v1469 = vpop.f32.mrf.mxu0
        %v1470 = vadd.f32 %v1090, %v1469
        %v1471 = vpop.f32.mrf.mxu0
        %v1472 = vadd.f32 %v1090, %v1471
        %1473 = vmatmul.bf16.gmra.mxu0 %v1317
        %v1474 = vpop.f32.mrf.mxu0
        %v1475 = vadd.f32 %v1090, %v1474
        %v1476 = vpop.f32.mrf.mxu0
        %v1477 = vadd.f32 %v1090, %v1476
        %1478 = vmatmul.bf16.gmra.mxu0 %v1320
        %v1479 = vpop.f32.mrf.mxu0
        %v1480 = vadd.f32 %v1090, %v1479
        %v1481 = vpop.f32.mrf.mxu0
        %v1482 = vadd.f32 %v1090, %v1481
        %1483 = vmatmul.bf16.gmra.mxu0 %v1323
        %v1484 = vpop.f32.mrf.mxu0
        %v1485 = vadd.f32 %v1090, %v1484
        %v1486 = vpop.f32.mrf.mxu0
        %v1487 = vadd.f32 %v1090, %v1486
        %1488 = vmatmul.bf16.gmra.mxu0 %v1326
        %v1489 = vpop.f32.mrf.mxu0
        %v1490 = vadd.f32 %v1090, %v1489
        %v1491 = vpop.f32.mrf.mxu0
        %v1492 = vadd.f32 %v1090, %v1491
        %1493 = vmatmul.bf16.gmra.mxu0 %v1329
        %v1494 = vpop.f32.mrf.mxu0
        %v1495 = vadd.f32 %v1090, %v1494
        %v1496 = vpop.f32.mrf.mxu0
        %v1497 = vadd.f32 %v1090, %v1496
        %1498 = vmatmul.bf16.gmra.mxu0 %v1332
        %v1499 = vpop.f32.mrf.mxu0
        %v1500 = vadd.f32 %v1090, %v1499
        %v1501 = vpop.f32.mrf.mxu0
        %v1502 = vadd.f32 %v1090, %v1501
        %1503 = vmatmul.bf16.gmra.mxu0 %v1335
        %v1504 = vpop.f32.mrf.mxu0
        %v1505 = vadd.f32 %v1090, %v1504
        %v1506 = vpop.f32.mrf.mxu0
        %v1507 = vadd.f32 %v1090, %v1506
        %1508 = vmatmul.bf16.gmra.mxu0 %v1338
        %v1509 = vpop.f32.mrf.mxu0
        %v1510 = vadd.f32 %v1090, %v1509
        %v1511 = vpop.f32.mrf.mxu0
        %v1512 = vadd.f32 %v1090, %v1511
        %1513 = vmatmul.bf16.gmra.mxu0 %v1341
        %v1514 = vpop.f32.mrf.mxu0
        %v1515 = vadd.f32 %v1090, %v1514
        %v1516 = vpop.f32.mrf.mxu0
        %v1517 = vadd.f32 %v1090, %v1516
        %1518 = vmatmul.bf16.gmra.mxu0 %v1344
        %v1519 = vpop.f32.mrf.mxu0
        %v1520 = vadd.f32 %v1090, %v1519
        %v1521 = vpop.f32.mrf.mxu0
        %v1522 = vadd.f32 %v1090, %v1521
        %1523 = vdwg.mxu0
        %1524 = vmatpush.bf16.msra.mxu0 0
        %1525 = vmatpush.bf16.msra.mxu0 0
        %1526 = vmatpush.bf16.msra.mxu0 %v1271
        %1527 = vmatpush.bf16.msra.mxu0 %v1267
        %1528 = vmatpush.bf16.msra.mxu0 %v1263
        %1529 = vmatpush.bf16.msra.mxu0 %v1259
        %1530 = vmatpush.bf16.msra.mxu0 %v1255
        %1531 = vmatpush.bf16.msra.mxu0 %v1251
        %1532 = vmatmul.bf16.gmra.mxu0 %v1299
        %v1533 = vpop.f32.mrf.mxu0
        %v1534 = vadd.f32 %v1091, %v1533
        %v1535 = vpop.f32.mrf.mxu0
        %v1536 = vadd.f32 %v1091, %v1535
        %1537 = vmatmul.bf16.gmra.mxu0 %v1302
        %v1538 = vpop.f32.mrf.mxu0
        %v1539 = vadd.f32 %v1091, %v1538
        %v1540 = vpop.f32.mrf.mxu0
        %v1541 = vadd.f32 %v1091, %v1540
        %1542 = vmatmul.bf16.gmra.mxu0 %v1305
        %v1543 = vpop.f32.mrf.mxu0
        %v1544 = vadd.f32 %v1091, %v1543
        %v1545 = vpop.f32.mrf.mxu0
        %v1546 = vadd.f32 %v1091, %v1545
        %1547 = vmatmul.bf16.gmra.mxu0 %v1308
        %v1548 = vpop.f32.mrf.mxu0
        %v1549 = vadd.f32 %v1091, %v1548
        %v1550 = vpop.f32.mrf.mxu0
        %v1551 = vadd.f32 %v1091, %v1550
        %1552 = vmatmul.bf16.gmra.mxu0 %v1311
        %v1553 = vpop.f32.mrf.mxu0
        %v1554 = vadd.f32 %v1091, %v1553
        %v1555 = vpop.f32.mrf.mxu0
        %v1556 = vadd.f32 %v1091, %v1555
        %1557 = vmatmul.bf16.gmra.mxu0 %v1314
        %v1558 = vpop.f32.mrf.mxu0
        %v1559 = vadd.f32 %v1091, %v1558
        %v1560 = vpop.f32.mrf.mxu0
        %v1561 = vadd.f32 %v1091, %v1560
        %1562 = vmatmul.bf16.gmra.mxu0 %v1317
        %v1563 = vpop.f32.mrf.mxu0
        %v1564 = vadd.f32 %v1091, %v1563
        %v1565 = vpop.f32.mrf.mxu0
        %v1566 = vadd.f32 %v1091, %v1565
        %1567 = vmatmul.bf16.gmra.mxu0 %v1320
        %v1568 = vpop.f32.mrf.mxu0
        %v1569 = vadd.f32 %v1091, %v1568
        %v1570 = vpop.f32.mrf.mxu0
        %v1571 = vadd.f32 %v1091, %v1570
        %1572 = vmatmul.bf16.gmra.mxu0 %v1323
        %v1573 = vpop.f32.mrf.mxu0
        %v1574 = vadd.f32 %v1091, %v1573
        %v1575 = vpop.f32.mrf.mxu0
        %v1576 = vadd.f32 %v1091, %v1575
        %1577 = vmatmul.bf16.gmra.mxu0 %v1326
        %v1578 = vpop.f32.mrf.mxu0
        %v1579 = vadd.f32 %v1091, %v1578
        %v1580 = vpop.f32.mrf.mxu0
        %v1581 = vadd.f32 %v1091, %v1580
        %1582 = vmatmul.bf16.gmra.mxu0 %v1329
        %v1583 = vpop.f32.mrf.mxu0
        %v1584 = vadd.f32 %v1091, %v1583
        %v1585 = vpop.f32.mrf.mxu0
        %v1586 = vadd.f32 %v1091, %v1585
        %1587 = vmatmul.bf16.gmra.mxu0 %v1332
        %v1588 = vpop.f32.mrf.mxu0
        %v1589 = vadd.f32 %v1091, %v1588
        %v1590 = vpop.f32.mrf.mxu0
        %v1591 = vadd.f32 %v1091, %v1590
        %1592 = vmatmul.bf16.gmra.mxu0 %v1335
        %v1593 = vpop.f32.mrf.mxu0
        %v1594 = vadd.f32 %v1091, %v1593
        %v1595 = vpop.f32.mrf.mxu0
        %v1596 = vadd.f32 %v1091, %v1595
        %1597 = vmatmul.bf16.gmra.mxu0 %v1338
        %v1598 = vpop.f32.mrf.mxu0
        %v1599 = vadd.f32 %v1091, %v1598
        %v1600 = vpop.f32.mrf.mxu0
        %v1601 = vadd.f32 %v1091, %v1600
        %1602 = vmatmul.bf16.gmra.mxu0 %v1341
        %v1603 = vpop.f32.mrf.mxu0
        %v1604 = vadd.f32 %v1091, %v1603
        %v1605 = vpop.f32.mrf.mxu0
        %v1606 = vadd.f32 %v1091, %v1605
        %1607 = vmatmul.bf16.gmra.mxu0 %v1344
        %v1608 = vpop.f32.mrf.mxu0
        %v1609 = vadd.f32 %v1091, %v1608
        %v1610 = vpop.f32.mrf.mxu0
        %v1611 = vadd.f32 %v1091, %v1610
        %1612 = vdwg.mxu0
        %1613 = vmatpush.bf16.msra.mxu0 0
        %1614 = vmatpush.bf16.msra.mxu0 0
        %1615 = vmatpush.bf16.msra.mxu0 %v1272
        %1616 = vmatpush.bf16.msra.mxu0 %v1268
        %1617 = vmatpush.bf16.msra.mxu0 %v1264
        %1618 = vmatpush.bf16.msra.mxu0 %v1260
        %1619 = vmatpush.bf16.msra.mxu0 %v1256
        %1620 = vmatpush.bf16.msra.mxu0 %v1252
        %1621 = vmatmul.bf16.gmra.mxu0 %v1299
        %v1622 = vpop.f32.mrf.mxu0
        %v1623 = vadd.f32 %v1092, %v1622
        %v1624 = vpop.f32.mrf.mxu0
        %v1625 = vadd.f32 %v1092, %v1624
        %1626 = vmatmul.bf16.gmra.mxu0 %v1302
        %v1627 = vpop.f32.mrf.mxu0
        %v1628 = vadd.f32 %v1092, %v1627
        %v1629 = vpop.f32.mrf.mxu0
        %v1630 = vadd.f32 %v1092, %v1629
        %1631 = vmatmul.bf16.gmra.mxu0 %v1305
        %v1632 = vpop.f32.mrf.mxu0
        %v1633 = vadd.f32 %v1092, %v1632
        %v1634 = vpop.f32.mrf.mxu0
        %v1635 = vadd.f32 %v1092, %v1634
        %1636 = vmatmul.bf16.gmra.mxu0 %v1308
        %v1637 = vpop.f32.mrf.mxu0
        %v1638 = vadd.f32 %v1092, %v1637
        %v1639 = vpop.f32.mrf.mxu0
        %v1640 = vadd.f32 %v1092, %v1639
        %1641 = vmatmul.bf16.gmra.mxu0 %v1311
        %v1642 = vpop.f32.mrf.mxu0
        %v1643 = vadd.f32 %v1092, %v1642
        %v1644 = vpop.f32.mrf.mxu0
        %v1645 = vadd.f32 %v1092, %v1644
        %1646 = vmatmul.bf16.gmra.mxu0 %v1314
        %v1647 = vpop.f32.mrf.mxu0
        %v1648 = vadd.f32 %v1092, %v1647
        %v1649 = vpop.f32.mrf.mxu0
        %v1650 = vadd.f32 %v1092, %v1649
        %1651 = vmatmul.bf16.gmra.mxu0 %v1317
        %v1652 = vpop.f32.mrf.mxu0
        %v1653 = vadd.f32 %v1092, %v1652
        %v1654 = vpop.f32.mrf.mxu0
        %v1655 = vadd.f32 %v1092, %v1654
        %1656 = vmatmul.bf16.gmra.mxu0 %v1320
        %v1657 = vpop.f32.mrf.mxu0
        %v1658 = vadd.f32 %v1092, %v1657
        %v1659 = vpop.f32.mrf.mxu0
        %v1660 = vadd.f32 %v1092, %v1659
        %1661 = vmatmul.bf16.gmra.mxu0 %v1323
        %v1662 = vpop.f32.mrf.mxu0
        %v1663 = vadd.f32 %v1092, %v1662
        %v1664 = vpop.f32.mrf.mxu0
        %v1665 = vadd.f32 %v1092, %v1664
        %1666 = vmatmul.bf16.gmra.mxu0 %v1326
        %v1667 = vpop.f32.mrf.mxu0
        %v1668 = vadd.f32 %v1092, %v1667
        %v1669 = vpop.f32.mrf.mxu0
        %v1670 = vadd.f32 %v1092, %v1669
        %1671 = vmatmul.bf16.gmra.mxu0 %v1329
        %v1672 = vpop.f32.mrf.mxu0
        %v1673 = vadd.f32 %v1092, %v1672
        %v1674 = vpop.f32.mrf.mxu0
        %v1675 = vadd.f32 %v1092, %v1674
        %1676 = vmatmul.bf16.gmra.mxu0 %v1332
        %v1677 = vpop.f32.mrf.mxu0
        %v1678 = vadd.f32 %v1092, %v1677
        %v1679 = vpop.f32.mrf.mxu0
        %v1680 = vadd.f32 %v1092, %v1679
        %1681 = vmatmul.bf16.gmra.mxu0 %v1335
        %v1682 = vpop.f32.mrf.mxu0
        %v1683 = vadd.f32 %v1092, %v1682
        %v1684 = vpop.f32.mrf.mxu0
        %v1685 = vadd.f32 %v1092, %v1684
        %1686 = vmatmul.bf16.gmra.mxu0 %v1338
        %v1687 = vpop.f32.mrf.mxu0
        %v1688 = vadd.f32 %v1092, %v1687
        %v1689 = vpop.f32.mrf.mxu0
        %v1690 = vadd.f32 %v1092, %v1689
        %1691 = vmatmul.bf16.gmra.mxu0 %v1341
        %v1692 = vpop.f32.mrf.mxu0
        %v1693 = vadd.f32 %v1092, %v1692
        %v1694 = vpop.f32.mrf.mxu0
        %v1695 = vadd.f32 %v1092, %v1694
        %1696 = vmatmul.bf16.gmra.mxu0 %v1344
        %v1697 = vpop.f32.mrf.mxu0
        %v1698 = vadd.f32 %v1092, %v1697
        %v1699 = vpop.f32.mrf.mxu0
        %v1700 = vadd.f32 %v1092, %v1699
        %1701 = vdwg.mxu0
        %v1702 = vmax.f32 %v1356, 0.0
        %v1703 = vmax.f32 %v1445, 0.0
        %v1704 = vmax.f32 %v1534, 0.0
        %v1705 = vmax.f32 %v1623, 0.0
        %v1706 = vmax.f32 %v1358, 0.0
        %v1707 = vmax.f32 %v1447, 0.0
        %v1708 = vmax.f32 %v1536, 0.0
        %v1709 = vmax.f32 %v1625, 0.0
        %v1710 = vmax.f32 %v1361, 0.0
        %v1711 = vmax.f32 %v1450, 0.0
        %v1712 = vmax.f32 %v1539, 0.0
        %v1713 = vmax.f32 %v1628, 0.0
        %v1714 = vmax.f32 %v1363, 0.0
        %v1715 = vmax.f32 %v1452, 0.0
        %v1716 = vmax.f32 %v1541, 0.0
        %v1717 = vmax.f32 %v1630, 0.0
        %v1718 = vmax.f32 %v1366, 0.0
        %v1719 = vmax.f32 %v1455, 0.0
        %v1720 = vmax.f32 %v1544, 0.0
        %v1721 = vmax.f32 %v1633, 0.0
        %v1722 = vmax.f32 %v1368, 0.0
        %v1723 = vmax.f32 %v1457, 0.0
        %v1724 = vmax.f32 %v1546, 0.0
        %v1725 = vmax.f32 %v1635, 0.0
        %v1726 = vmax.f32 %v1371, 0.0
        %v1727 = vmax.f32 %v1460, 0.0
        %v1728 = vmax.f32 %v1549, 0.0
        %v1729 = vmax.f32 %v1638, 0.0
        %v1730 = vmax.f32 %v1373, 0.0
        %v1731 = vmax.f32 %v1462, 0.0
        %v1732 = vmax.f32 %v1551, 0.0
        %v1733 = vmax.f32 %v1640, 0.0
        %v1734 = vmax.f32 %v1376, 0.0
        %v1735 = vmax.f32 %v1465, 0.0
        %v1736 = vmax.f32 %v1554, 0.0
        %v1737 = vmax.f32 %v1643, 0.0
        %v1738 = vmax.f32 %v1378, 0.0
        %v1739 = vmax.f32 %v1467, 0.0
        %v1740 = vmax.f32 %v1556, 0.0
        %v1741 = vmax.f32 %v1645, 0.0
        %v1742 = vmax.f32 %v1381, 0.0
        %v1743 = vmax.f32 %v1470, 0.0
        %v1744 = vmax.f32 %v1559, 0.0
        %v1745 = vmax.f32 %v1648, 0.0
        %v1746 = vmax.f32 %v1383, 0.0
        %v1747 = vmax.f32 %v1472, 0.0
        %v1748 = vmax.f32 %v1561, 0.0
        %v1749 = vmax.f32 %v1650, 0.0
        %v1750 = vmax.f32 %v1386, 0.0
        %v1751 = vmax.f32 %v1475, 0.0
        %v1752 = vmax.f32 %v1564, 0.0
        %v1753 = vmax.f32 %v1653, 0.0
        %v1754 = vmax.f32 %v1388, 0.0
        %v1755 = vmax.f32 %v1477, 0.0
        %v1756 = vmax.f32 %v1566, 0.0
        %v1757 = vmax.f32 %v1655, 0.0
        %v1758 = vmax.f32 %v1391, 0.0
        %v1759 = vmax.f32 %v1480, 0.0
        %v1760 = vmax.f32 %v1569, 0.0
        %v1761 = vmax.f32 %v1658, 0.0
        %v1762 = vmax.f32 %v1393, 0.0
        %v1763 = vmax.f32 %v1482, 0.0
        %v1764 = vmax.f32 %v1571, 0.0
        %v1765 = vmax.f32 %v1660, 0.0
        %v1766 = vmax.f32 %v1396, 0.0
        %v1767 = vmax.f32 %v1485, 0.0
        %v1768 = vmax.f32 %v1574, 0.0
        %v1769 = vmax.f32 %v1663, 0.0
        %v1770 = vmax.f32 %v1398, 0.0
        %v1771 = vmax.f32 %v1487, 0.0
        %v1772 = vmax.f32 %v1576, 0.0
        %v1773 = vmax.f32 %v1665, 0.0
        %v1774 = vmax.f32 %v1401, 0.0
        %v1775 = vmax.f32 %v1490, 0.0
        %v1776 = vmax.f32 %v1579, 0.0
        %v1777 = vmax.f32 %v1668, 0.0
        %v1778 = vmax.f32 %v1403, 0.0
        %v1779 = vmax.f32 %v1492, 0.0
        %v1780 = vmax.f32 %v1581, 0.0
        %v1781 = vmax.f32 %v1670, 0.0
        %v1782 = vmax.f32 %v1406, 0.0
        %v1783 = vmax.f32 %v1495, 0.0
        %v1784 = vmax.f32 %v1584, 0.0
        %v1785 = vmax.f32 %v1673, 0.0
        %v1786 = vmax.f32 %v1408, 0.0
        %v1787 = vmax.f32 %v1497, 0.0
        %v1788 = vmax.f32 %v1586, 0.0
        %v1789 = vmax.f32 %v1675, 0.0
        %v1790 = vmax.f32 %v1411, 0.0
        %v1791 = vmax.f32 %v1500, 0.0
        %v1792 = vmax.f32 %v1589, 0.0
        %v1793 = vmax.f32 %v1678, 0.0
        %v1794 = vmax.f32 %v1413, 0.0
        %v1795 = vmax.f32 %v1502, 0.0
        %v1796 = vmax.f32 %v1591, 0.0
        %v1797 = vmax.f32 %v1680, 0.0
        %v1798 = vmax.f32 %v1416, 0.0
        %v1799 = vmax.f32 %v1505, 0.0
        %v1800 = vmax.f32 %v1594, 0.0
        %v1801 = vmax.f32 %v1683, 0.0
        %v1802 = vmax.f32 %v1418, 0.0
        %v1803 = vmax.f32 %v1507, 0.0
        %v1804 = vmax.f32 %v1596, 0.0
        %v1805 = vmax.f32 %v1685, 0.0
        %v1806 = vmax.f32 %v1421, 0.0
        %v1807 = vmax.f32 %v1510, 0.0
        %v1808 = vmax.f32 %v1599, 0.0
        %v1809 = vmax.f32 %v1688, 0.0
        %v1810 = vmax.f32 %v1423, 0.0
        %v1811 = vmax.f32 %v1512, 0.0
        %v1812 = vmax.f32 %v1601, 0.0
        %v1813 = vmax.f32 %v1690, 0.0
        %v1814 = vmax.f32 %v1426, 0.0
        %v1815 = vmax.f32 %v1515, 0.0
        %v1816 = vmax.f32 %v1604, 0.0
        %v1817 = vmax.f32 %v1693, 0.0
        %v1818 = vmax.f32 %v1428, 0.0
        %v1819 = vmax.f32 %v1517, 0.0
        %v1820 = vmax.f32 %v1606, 0.0
        %v1821 = vmax.f32 %v1695, 0.0
        %v1822 = vmax.f32 %v1431, 0.0
        %v1823 = vmax.f32 %v1520, 0.0
        %v1824 = vmax.f32 %v1609, 0.0
        %v1825 = vmax.f32 %v1698, 0.0
        %v1826 = vmax.f32 %v1433, 0.0
        %v1827 = vmax.f32 %v1522, 0.0
        %v1828 = vmax.f32 %v1611, 0.0
        %v1829 = vmax.f32 %v1700, 0.0
        %v1830 = vpack.c.bf16 %v1706, %v1702
        %v1831 = vpack.c.bf16 %v1707, %v1703
        %v1832 = vpack.c.bf16 %v1708, %v1704
        %v1833 = vpack.c.bf16 %v1709, %v1705
        %v1834 = vpack.c.bf16 %v1714, %v1710
        %v1835 = vpack.c.bf16 %v1715, %v1711
        %v1836 = vpack.c.bf16 %v1716, %v1712
        %v1837 = vpack.c.bf16 %v1717, %v1713
        %v1838 = vpack.c.bf16 %v1722, %v1718
        %v1839 = vpack.c.bf16 %v1723, %v1719
        %v1840 = vpack.c.bf16 %v1724, %v1720
        %v1841 = vpack.c.bf16 %v1725, %v1721
        %v1842 = vpack.c.bf16 %v1730, %v1726
        %v1843 = vpack.c.bf16 %v1731, %v1727
        %v1844 = vpack.c.bf16 %v1732, %v1728
        %v1845 = vpack.c.bf16 %v1733, %v1729
        %v1846 = vpack.c.bf16 %v1738, %v1734
        %v1847 = vpack.c.bf16 %v1739, %v1735
        %v1848 = vpack.c.bf16 %v1740, %v1736
        %v1849 = vpack.c.bf16 %v1741, %v1737
        %v1850 = vpack.c.bf16 %v1746, %v1742
        %v1851 = vpack.c.bf16 %v1747, %v1743
        %v1852 = vpack.c.bf16 %v1748, %v1744
        %v1853 = vpack.c.bf16 %v1749, %v1745
        %v1854 = vpack.c.bf16 %v1754, %v1750
        %v1855 = vpack.c.bf16 %v1755, %v1751
        %v1856 = vpack.c.bf16 %v1756, %v1752
        %v1857 = vpack.c.bf16 %v1757, %v1753
        %v1858 = vpack.c.bf16 %v1762, %v1758
        %v1859 = vpack.c.bf16 %v1763, %v1759
        %v1860 = vpack.c.bf16 %v1764, %v1760
        %v1861 = vpack.c.bf16 %v1765, %v1761
        %v1862 = vpack.c.bf16 %v1770, %v1766
        %v1863 = vpack.c.bf16 %v1771, %v1767
        %v1864 = vpack.c.bf16 %v1772, %v1768
        %v1865 = vpack.c.bf16 %v1773, %v1769
        %v1866 = vpack.c.bf16 %v1778, %v1774
        %v1867 = vpack.c.bf16 %v1779, %v1775
        %v1868 = vpack.c.bf16 %v1780, %v1776
        %v1869 = vpack.c.bf16 %v1781, %v1777
        %v1870 = vpack.c.bf16 %v1786, %v1782
        %v1871 = vpack.c.bf16 %v1787, %v1783
        %v1872 = vpack.c.bf16 %v1788, %v1784
        %v1873 = vpack.c.bf16 %v1789, %v1785
        %v1874 = vpack.c.bf16 %v1794, %v1790
        %v1875 = vpack.c.bf16 %v1795, %v1791
        %v1876 = vpack.c.bf16 %v1796, %v1792
        %v1877 = vpack.c.bf16 %v1797, %v1793
        %v1878 = vpack.c.bf16 %v1802, %v1798
        %v1879 = vpack.c.bf16 %v1803, %v1799
        %v1880 = vpack.c.bf16 %v1804, %v1800
        %v1881 = vpack.c.bf16 %v1805, %v1801
        %v1882 = vpack.c.bf16 %v1810, %v1806
        %v1883 = vpack.c.bf16 %v1811, %v1807
        %v1884 = vpack.c.bf16 %v1812, %v1808
        %v1885 = vpack.c.bf16 %v1813, %v1809
        %v1886 = vpack.c.bf16 %v1818, %v1814
        %v1887 = vpack.c.bf16 %v1819, %v1815
        %v1888 = vpack.c.bf16 %v1820, %v1816
        %v1889 = vpack.c.bf16 %v1821, %v1817
        %v1890 = vpack.c.bf16 %v1826, %v1822
        %v1891 = vpack.c.bf16 %v1827, %v1823
        %v1892 = vpack.c.bf16 %v1828, %v1824
        %v1893 = vpack.c.bf16 %v1829, %v1825
        %v1894 = vld [vmem:[%s9] sm:$0xf]
        %v1895 = vld [vmem:[%s9 + $0x4] sm:$0xf]
        %v1896 = vld [vmem:[%s9 + $0x8] sm:$0xf]
        %v1897 = vld [vmem:[%s9 + $0xc] sm:$0xf]
        %v1898 = vld [vmem:[%s9 + $0x10] sm:$0xf]
        %v1899 = vld [vmem:[%s9 + $0x14] sm:$0xf]
        %v1900 = vld [vmem:[%s9 + $0x18] sm:$0xf]
        %v1901 = vld [vmem:[%s9 + $0x1c] sm:$0xf]
        %v1902 = vld [vmem:[%s9 + $0x20] sm:$0xf]
        %v1903 = vld [vmem:[%s9 + $0x24] sm:$0xf]
        %v1904 = vld [vmem:[%s9 + $0x28] sm:$0xf]
        %v1905 = vld [vmem:[%s9 + $0x2c] sm:$0xf]
        %v1906 = vld [vmem:[%s9 + $0x30] sm:$0xf]
        %v1907 = vld [vmem:[%s9 + $0x34] sm:$0xf]
        %v1908 = vld [vmem:[%s9 + $0x38] sm:$0xf]
        %v1909 = vld [vmem:[%s9 + $0x3c] sm:$0xf]
        %v1910 = vld [vmem:[%s9 + $0x40] sm:$0xf]
        %v1911 = vld [vmem:[%s9 + $0x44] sm:$0xf]
        %v1912 = vld [vmem:[%s9 + $0x48] sm:$0xf]
        %v1913 = vld [vmem:[%s9 + $0x4c] sm:$0xf]
        %v1914 = vld [vmem:[%s9 + $0x50] sm:$0xf]
        %v1915 = vld [vmem:[%s9 + $0x54] sm:$0xf]
        %v1916 = vld [vmem:[%s9 + $0x58] sm:$0xf]
        %v1917 = vld [vmem:[%s9 + $0x5c] sm:$0xf]
        %v1918 = vld [vmem:[%s9 + $0x60] sm:$0xf]
        %v1919 = vld [vmem:[%s9 + $0x64] sm:$0xf]
        %v1920 = vld [vmem:[%s9 + $0x68] sm:$0xf]
        %v1921 = vld [vmem:[%s9 + $0x6c] sm:$0xf]
        %v1922 = vld [vmem:[%s9 + $0x70] sm:$0xf]
        %v1923 = vld [vmem:[%s9 + $0x74] sm:$0xf]
        %v1924 = vld [vmem:[%s9 + $0x78] sm:$0xf]
        %v1925 = vld [vmem:[%s9 + $0x7c] sm:$0xf]
        %v1926 = vld [vmem:[%s9 + $0x80] sm:$0xf]
        %v1927 = vld [vmem:[%s9 + $0x84] sm:$0xf]
        %v1928 = vld [vmem:[%s9 + $0x88] sm:$0xf]
        %v1929 = vld [vmem:[%s9 + $0x8c] sm:$0xf]
        %v1930 = vld [vmem:[%s9 + $0x90] sm:$0xf]
        %v1931 = vld [vmem:[%s9 + $0x94] sm:$0xf]
        %v1932 = vld [vmem:[%s9 + $0x98] sm:$0xf]
        %v1933 = vld [vmem:[%s9 + $0x9c] sm:$0xf]
        %v1934 = vld [vmem:[%s9 + $0xa0] sm:$0xf]
        %v1935 = vld [vmem:[%s9 + $0xa4] sm:$0xf]
        %v1936 = vld [vmem:[%s9 + $0xa8] sm:$0xf]
        %v1937 = vld [vmem:[%s9 + $0xac] sm:$0xf]
        %v1938 = vld [vmem:[%s9 + $0xb0] sm:$0xf]
        %v1939 = vld [vmem:[%s9 + $0xb4] sm:$0xf]
        %v1940 = vld [vmem:[%s9 + $0xb8] sm:$0xf]
        %v1941 = vld [vmem:[%s9 + $0xbc] sm:$0xf]
        %v1942 = vld [vmem:[%s9 + $0xc0] sm:$0xf]
        %v1943 = vld [vmem:[%s9 + $0xc4] sm:$0xf]
        %v1944 = vld [vmem:[%s9 + $0xc8] sm:$0xf]
        %v1945 = vld [vmem:[%s9 + $0xcc] sm:$0xf]
        %v1946 = vld [vmem:[%s9 + $0xd0] sm:$0xf]
        %v1947 = vld [vmem:[%s9 + $0xd4] sm:$0xf]
        %v1948 = vld [vmem:[%s9 + $0xd8] sm:$0xf]
        %v1949 = vld [vmem:[%s9 + $0xdc] sm:$0xf]
        %v1950 = vld [vmem:[%s9 + $0xe0] sm:$0xf]
        %v1951 = vld [vmem:[%s9 + $0xe4] sm:$0xf]
        %v1952 = vld [vmem:[%s9 + $0xe8] sm:$0xf]
        %v1953 = vld [vmem:[%s9 + $0xec] sm:$0xf]
        %v1954 = vld [vmem:[%s9 + $0xf0] sm:$0xf]
        %v1955 = vld [vmem:[%s9 + $0xf4] sm:$0xf]
        %v1956 = vld [vmem:[%s9 + $0xf8] sm:$0xf]
        %v1957 = vld [vmem:[%s9 + $0xfc] sm:$0xf]
        %v1958 = vld [vmem:[%s10] sm:$0x1]
        %v1960 = vperm.slane %v1958, 0
        %v2026 = vunpack.c.l.b16 %v1894
        %v2027 = vunpack.c.l.b16 %v1895
        %v2028 = vunpack.c.l.b16 %v1896
        %v2029 = vunpack.c.l.b16 %v1897
        %v2030 = vunpack.c.l.b16 %v1898
        %v2031 = vunpack.c.l.b16 %v1899
        %v2032 = vunpack.c.l.b16 %v1900
        %v2033 = vunpack.c.l.b16 %v1901
        %v2034 = vunpack.c.l.b16 %v1902
        %v2035 = vunpack.c.l.b16 %v1903
        %v2036 = vunpack.c.l.b16 %v1904
        %v2037 = vunpack.c.l.b16 %v1905
        %v2038 = vunpack.c.l.b16 %v1906
        %v2039 = vunpack.c.l.b16 %v1907
        %v2040 = vunpack.c.l.b16 %v1908
        %v2041 = vunpack.c.l.b16 %v1909
        %v2042 = vunpack.c.l.b16 %v1910
        %v2043 = vunpack.c.l.b16 %v1911
        %v2044 = vunpack.c.l.b16 %v1912
        %v2045 = vunpack.c.l.b16 %v1913
        %v2046 = vunpack.c.l.b16 %v1914
        %v2047 = vunpack.c.l.b16 %v1915
        %v2048 = vunpack.c.l.b16 %v1916
        %v2049 = vunpack.c.l.b16 %v1917
        %v2050 = vunpack.c.l.b16 %v1918
        %v2051 = vunpack.c.l.b16 %v1919
        %v2052 = vunpack.c.l.b16 %v1920
        %v2053 = vunpack.c.l.b16 %v1921
        %v2054 = vunpack.c.l.b16 %v1922
        %v2055 = vunpack.c.l.b16 %v1923
        %v2056 = vunpack.c.l.b16 %v1924
        %v2057 = vunpack.c.l.b16 %v1925
        %v2058 = vunpack.c.l.b16 %v1926
        %v2059 = vunpack.c.l.b16 %v1927
        %v2060 = vunpack.c.l.b16 %v1928
        %v2061 = vunpack.c.l.b16 %v1929
        %v2062 = vunpack.c.l.b16 %v1930
        %v2063 = vunpack.c.l.b16 %v1931
        %v2064 = vunpack.c.l.b16 %v1932
        %v2065 = vunpack.c.l.b16 %v1933
        %v2066 = vunpack.c.l.b16 %v1934
        %v2067 = vunpack.c.l.b16 %v1935
        %v2068 = vunpack.c.l.b16 %v1936
        %v2069 = vunpack.c.l.b16 %v1937
        %v2070 = vunpack.c.l.b16 %v1938
        %v2071 = vunpack.c.l.b16 %v1939
        %v2072 = vunpack.c.l.b16 %v1940
        %v2073 = vunpack.c.l.b16 %v1941
        %v2074 = vunpack.c.l.b16 %v1942
        %v2075 = vunpack.c.l.b16 %v1943
        %v2076 = vunpack.c.l.b16 %v1944
        %v2077 = vunpack.c.l.b16 %v1945
        %v2078 = vunpack.c.l.b16 %v1946
        %v2079 = vunpack.c.l.b16 %v1947
        %v2080 = vunpack.c.l.b16 %v1948
        %v2081 = vunpack.c.l.b16 %v1949
        %v2082 = vunpack.c.l.b16 %v1950
        %v2083 = vunpack.c.l.b16 %v1951
        %v2084 = vunpack.c.l.b16 %v1952
        %v2085 = vunpack.c.l.b16 %v1953
        %v2086 = vunpack.c.l.b16 %v1954
        %v2087 = vunpack.c.l.b16 %v1955
        %v2088 = vunpack.c.l.b16 %v1956
        %v2089 = vunpack.c.l.b16 %v1957
        %v2090 = vpack.c.b16 %v2027, %v2026
        %v2091 = vpack.c.b16 %v2029, %v2028
        %v2092 = vpack.c.b16 %v2031, %v2030
        %v2093 = vpack.c.b16 %v2033, %v2032
        %v2094 = vpack.c.b16 %v2035, %v2034
        %v2095 = vpack.c.b16 %v2037, %v2036
        %v2096 = vpack.c.b16 %v2039, %v2038
        %v2097 = vpack.c.b16 %v2041, %v2040
        %v2098 = vpack.c.b16 %v2043, %v2042
        %v2099 = vpack.c.b16 %v2045, %v2044
        %v2100 = vpack.c.b16 %v2047, %v2046
        %v2101 = vpack.c.b16 %v2049, %v2048
        %v2102 = vpack.c.b16 %v2051, %v2050
        %v2103 = vpack.c.b16 %v2053, %v2052
        %v2104 = vpack.c.b16 %v2055, %v2054
        %v2105 = vpack.c.b16 %v2057, %v2056
        %v2106 = vpack.c.b16 %v2059, %v2058
        %v2107 = vpack.c.b16 %v2061, %v2060
        %v2108 = vpack.c.b16 %v2063, %v2062
        %v2109 = vpack.c.b16 %v2065, %v2064
        %v2110 = vpack.c.b16 %v2067, %v2066
        %v2111 = vpack.c.b16 %v2069, %v2068
        %v2112 = vpack.c.b16 %v2071, %v2070
        %v2113 = vpack.c.b16 %v2073, %v2072
        %v2114 = vpack.c.b16 %v2075, %v2074
        %v2115 = vpack.c.b16 %v2077, %v2076
        %v2116 = vpack.c.b16 %v2079, %v2078
        %v2117 = vpack.c.b16 %v2081, %v2080
        %v2118 = vpack.c.b16 %v2083, %v2082
        %v2119 = vpack.c.b16 %v2085, %v2084
        %v2120 = vpack.c.b16 %v2087, %v2086
        %v2121 = vpack.c.b16 %v2089, %v2088
        %2154 = vmatpush.bf16.msra.mxu0 %v2097
        %2155 = vmatpush.bf16.msra.mxu0 %v2096
        %2156 = vmatpush.bf16.msra.mxu0 %v2095
        %2157 = vmatpush.bf16.msra.mxu0 %v2094
        %2158 = vmatpush.bf16.msra.mxu0 %v2093
        %2159 = vmatpush.bf16.msra.mxu0 %v2092
        %2160 = vmatpush.bf16.msra.mxu0 %v2091
        %2161 = vmatpush.bf16.msra.mxu0 %v2090
        %2162 = vmatmul.bf16.gmra.mxu0 %v1830
        %v2163 = vpop.f32.mrf.mxu0
        %v2164 = vadd.f32 %v1960, %v2163
        %v2165 = vpop.f32.mrf.mxu0
        %v2166 = vadd.f32 %v1960, %v2165
        %2167 = vmatmul.bf16.gmra.mxu0 %v1834
        %v2168 = vpop.f32.mrf.mxu0
        %v2169 = vadd.f32 %v1960, %v2168
        %v2170 = vpop.f32.mrf.mxu0
        %v2171 = vadd.f32 %v1960, %v2170
        %2172 = vmatmul.bf16.gmra.mxu0 %v1838
        %v2173 = vpop.f32.mrf.mxu0
        %v2174 = vadd.f32 %v1960, %v2173
        %v2175 = vpop.f32.mrf.mxu0
        %v2176 = vadd.f32 %v1960, %v2175
        %2177 = vmatmul.bf16.gmra.mxu0 %v1842
        %v2178 = vpop.f32.mrf.mxu0
        %v2179 = vadd.f32 %v1960, %v2178
        %v2180 = vpop.f32.mrf.mxu0
        %v2181 = vadd.f32 %v1960, %v2180
        %2182 = vmatmul.bf16.gmra.mxu0 %v1846
        %v2183 = vpop.f32.mrf.mxu0
        %v2184 = vadd.f32 %v1960, %v2183
        %v2185 = vpop.f32.mrf.mxu0
        %v2186 = vadd.f32 %v1960, %v2185
        %2187 = vmatmul.bf16.gmra.mxu0 %v1850
        %v2188 = vpop.f32.mrf.mxu0
        %v2189 = vadd.f32 %v1960, %v2188
        %v2190 = vpop.f32.mrf.mxu0
        %v2191 = vadd.f32 %v1960, %v2190
        %2192 = vmatmul.bf16.gmra.mxu0 %v1854
        %v2193 = vpop.f32.mrf.mxu0
        %v2194 = vadd.f32 %v1960, %v2193
        %v2195 = vpop.f32.mrf.mxu0
        %v2196 = vadd.f32 %v1960, %v2195
        %2197 = vmatmul.bf16.gmra.mxu0 %v1858
        %v2198 = vpop.f32.mrf.mxu0
        %v2199 = vadd.f32 %v1960, %v2198
        %v2200 = vpop.f32.mrf.mxu0
        %v2201 = vadd.f32 %v1960, %v2200
        %2202 = vmatmul.bf16.gmra.mxu0 %v1862
        %v2203 = vpop.f32.mrf.mxu0
        %v2204 = vadd.f32 %v1960, %v2203
        %v2205 = vpop.f32.mrf.mxu0
        %v2206 = vadd.f32 %v1960, %v2205
        %2207 = vmatmul.bf16.gmra.mxu0 %v1866
        %v2208 = vpop.f32.mrf.mxu0
        %v2209 = vadd.f32 %v1960, %v2208
        %v2210 = vpop.f32.mrf.mxu0
        %v2211 = vadd.f32 %v1960, %v2210
        %2212 = vmatmul.bf16.gmra.mxu0 %v1870
        %v2213 = vpop.f32.mrf.mxu0
        %v2214 = vadd.f32 %v1960, %v2213
        %v2215 = vpop.f32.mrf.mxu0
        %v2216 = vadd.f32 %v1960, %v2215
        %2217 = vmatmul.bf16.gmra.mxu0 %v1874
        %v2218 = vpop.f32.mrf.mxu0
        %v2219 = vadd.f32 %v1960, %v2218
        %v2220 = vpop.f32.mrf.mxu0
        %v2221 = vadd.f32 %v1960, %v2220
        %2222 = vmatmul.bf16.gmra.mxu0 %v1878
        %v2223 = vpop.f32.mrf.mxu0
        %v2224 = vadd.f32 %v1960, %v2223
        %v2225 = vpop.f32.mrf.mxu0
        %v2226 = vadd.f32 %v1960, %v2225
        %2227 = vmatmul.bf16.gmra.mxu0 %v1882
        %v2228 = vpop.f32.mrf.mxu0
        %v2229 = vadd.f32 %v1960, %v2228
        %v2230 = vpop.f32.mrf.mxu0
        %v2231 = vadd.f32 %v1960, %v2230
        %2232 = vmatmul.bf16.gmra.mxu0 %v1886
        %v2233 = vpop.f32.mrf.mxu0
        %v2234 = vadd.f32 %v1960, %v2233
        %v2235 = vpop.f32.mrf.mxu0
        %v2236 = vadd.f32 %v1960, %v2235
        %2237 = vmatmul.bf16.gmra.mxu0 %v1890
        %v2238 = vpop.f32.mrf.mxu0
        %v2239 = vadd.f32 %v1960, %v2238
        %v2240 = vpop.f32.mrf.mxu0
        %v2241 = vadd.f32 %v1960, %v2240
        %2242 = vdwg.mxu0
        %2243 = vmatpush.bf16.msra.mxu0 %v2105
        %2244 = vmatpush.bf16.msra.mxu0 %v2104
        %2245 = vmatpush.bf16.msra.mxu0 %v2103
        %2246 = vmatpush.bf16.msra.mxu0 %v2102
        %2247 = vmatpush.bf16.msra.mxu0 %v2101
        %2248 = vmatpush.bf16.msra.mxu0 %v2100
        %2249 = vmatpush.bf16.msra.mxu0 %v2099
        %2250 = vmatpush.bf16.msra.mxu0 %v2098
        %2251 = vmatmul.bf16.gmra.mxu0 %v1831
        %v2252 = vpop.f32.mrf.mxu0
        %v2253 = vadd.f32 %v2164, %v2252
        %v2254 = vpop.f32.mrf.mxu0
        %v2255 = vadd.f32 %v2166, %v2254
        %2256 = vmatmul.bf16.gmra.mxu0 %v1835
        %v2257 = vpop.f32.mrf.mxu0
        %v2258 = vadd.f32 %v2169, %v2257
        %v2259 = vpop.f32.mrf.mxu0
        %v2260 = vadd.f32 %v2171, %v2259
        %2261 = vmatmul.bf16.gmra.mxu0 %v1839
        %v2262 = vpop.f32.mrf.mxu0
        %v2263 = vadd.f32 %v2174, %v2262
        %v2264 = vpop.f32.mrf.mxu0
        %v2265 = vadd.f32 %v2176, %v2264
        %2266 = vmatmul.bf16.gmra.mxu0 %v1843
        %v2267 = vpop.f32.mrf.mxu0
        %v2268 = vadd.f32 %v2179, %v2267
        %v2269 = vpop.f32.mrf.mxu0
        %v2270 = vadd.f32 %v2181, %v2269
        %2271 = vmatmul.bf16.gmra.mxu0 %v1847
        %v2272 = vpop.f32.mrf.mxu0
        %v2273 = vadd.f32 %v2184, %v2272
        %v2274 = vpop.f32.mrf.mxu0
        %v2275 = vadd.f32 %v2186, %v2274
        %2276 = vmatmul.bf16.gmra.mxu0 %v1851
        %v2277 = vpop.f32.mrf.mxu0
        %v2278 = vadd.f32 %v2189, %v2277
        %v2279 = vpop.f32.mrf.mxu0
        %v2280 = vadd.f32 %v2191, %v2279
        %2281 = vmatmul.bf16.gmra.mxu0 %v1855
        %v2282 = vpop.f32.mrf.mxu0
        %v2283 = vadd.f32 %v2194, %v2282
        %v2284 = vpop.f32.mrf.mxu0
        %v2285 = vadd.f32 %v2196, %v2284
        %2286 = vmatmul.bf16.gmra.mxu0 %v1859
        %v2287 = vpop.f32.mrf.mxu0
        %v2288 = vadd.f32 %v2199, %v2287
        %v2289 = vpop.f32.mrf.mxu0
        %v2290 = vadd.f32 %v2201, %v2289
        %2291 = vmatmul.bf16.gmra.mxu0 %v1863
        %v2292 = vpop.f32.mrf.mxu0
        %v2293 = vadd.f32 %v2204, %v2292
        %v2294 = vpop.f32.mrf.mxu0
        %v2295 = vadd.f32 %v2206, %v2294
        %2296 = vmatmul.bf16.gmra.mxu0 %v1867
        %v2297 = vpop.f32.mrf.mxu0
        %v2298 = vadd.f32 %v2209, %v2297
        %v2299 = vpop.f32.mrf.mxu0
        %v2300 = vadd.f32 %v2211, %v2299
        %2301 = vmatmul.bf16.gmra.mxu0 %v1871
        %v2302 = vpop.f32.mrf.mxu0
        %v2303 = vadd.f32 %v2214, %v2302
        %v2304 = vpop.f32.mrf.mxu0
        %v2305 = vadd.f32 %v2216, %v2304
        %2306 = vmatmul.bf16.gmra.mxu0 %v1875
        %v2307 = vpop.f32.mrf.mxu0
        %v2308 = vadd.f32 %v2219, %v2307
        %v2309 = vpop.f32.mrf.mxu0
        %v2310 = vadd.f32 %v2221, %v2309
        %2311 = vmatmul.bf16.gmra.mxu0 %v1879
        %v2312 = vpop.f32.mrf.mxu0
        %v2313 = vadd.f32 %v2224, %v2312
        %v2314 = vpop.f32.mrf.mxu0
        %v2315 = vadd.f32 %v2226, %v2314
        %2316 = vmatmul.bf16.gmra.mxu0 %v1883
        %v2317 = vpop.f32.mrf.mxu0
        %v2318 = vadd.f32 %v2229, %v2317
        %v2319 = vpop.f32.mrf.mxu0
        %v2320 = vadd.f32 %v2231, %v2319
        %2321 = vmatmul.bf16.gmra.mxu0 %v1887
        %v2322 = vpop.f32.mrf.mxu0
        %v2323 = vadd.f32 %v2234, %v2322
        %v2324 = vpop.f32.mrf.mxu0
        %v2325 = vadd.f32 %v2236, %v2324
        %2326 = vmatmul.bf16.gmra.mxu0 %v1891
        %v2327 = vpop.f32.mrf.mxu0
        %v2328 = vadd.f32 %v2239, %v2327
        %v2329 = vpop.f32.mrf.mxu0
        %v2330 = vadd.f32 %v2241, %v2329
        %2331 = vdwg.mxu0
        %2332 = vmatpush.bf16.msra.mxu0 %v2113
        %2333 = vmatpush.bf16.msra.mxu0 %v2112
        %2334 = vmatpush.bf16.msra.mxu0 %v2111
        %2335 = vmatpush.bf16.msra.mxu0 %v2110
        %2336 = vmatpush.bf16.msra.mxu0 %v2109
        %2337 = vmatpush.bf16.msra.mxu0 %v2108
        %2338 = vmatpush.bf16.msra.mxu0 %v2107
        %2339 = vmatpush.bf16.msra.mxu0 %v2106
        %2340 = vmatmul.bf16.gmra.mxu0 %v1832
        %v2341 = vpop.f32.mrf.mxu0
        %v2342 = vadd.f32 %v2253, %v2341
        %v2343 = vpop.f32.mrf.mxu0
        %v2344 = vadd.f32 %v2255, %v2343
        %2345 = vmatmul.bf16.gmra.mxu0 %v1836
        %v2346 = vpop.f32.mrf.mxu0
        %v2347 = vadd.f32 %v2258, %v2346
        %v2348 = vpop.f32.mrf.mxu0
        %v2349 = vadd.f32 %v2260, %v2348
        %2350 = vmatmul.bf16.gmra.mxu0 %v1840
        %v2351 = vpop.f32.mrf.mxu0
        %v2352 = vadd.f32 %v2263, %v2351
        %v2353 = vpop.f32.mrf.mxu0
        %v2354 = vadd.f32 %v2265, %v2353
        %2355 = vmatmul.bf16.gmra.mxu0 %v1844
        %v2356 = vpop.f32.mrf.mxu0
        %v2357 = vadd.f32 %v2268, %v2356
        %v2358 = vpop.f32.mrf.mxu0
        %v2359 = vadd.f32 %v2270, %v2358
        %2360 = vmatmul.bf16.gmra.mxu0 %v1848
        %v2361 = vpop.f32.mrf.mxu0
        %v2362 = vadd.f32 %v2273, %v2361
        %v2363 = vpop.f32.mrf.mxu0
        %v2364 = vadd.f32 %v2275, %v2363
        %2365 = vmatmul.bf16.gmra.mxu0 %v1852
        %v2366 = vpop.f32.mrf.mxu0
        %v2367 = vadd.f32 %v2278, %v2366
        %v2368 = vpop.f32.mrf.mxu0
        %v2369 = vadd.f32 %v2280, %v2368
        %2370 = vmatmul.bf16.gmra.mxu0 %v1856
        %v2371 = vpop.f32.mrf.mxu0
        %v2372 = vadd.f32 %v2283, %v2371
        %v2373 = vpop.f32.mrf.mxu0
        %v2374 = vadd.f32 %v2285, %v2373
        %2375 = vmatmul.bf16.gmra.mxu0 %v1860
        %v2376 = vpop.f32.mrf.mxu0
        %v2377 = vadd.f32 %v2288, %v2376
        %v2378 = vpop.f32.mrf.mxu0
        %v2379 = vadd.f32 %v2290, %v2378
        %2380 = vmatmul.bf16.gmra.mxu0 %v1864
        %v2381 = vpop.f32.mrf.mxu0
        %v2382 = vadd.f32 %v2293, %v2381
        %v2383 = vpop.f32.mrf.mxu0
        %v2384 = vadd.f32 %v2295, %v2383
        %2385 = vmatmul.bf16.gmra.mxu0 %v1868
        %v2386 = vpop.f32.mrf.mxu0
        %v2387 = vadd.f32 %v2298, %v2386
        %v2388 = vpop.f32.mrf.mxu0
        %v2389 = vadd.f32 %v2300, %v2388
        %2390 = vmatmul.bf16.gmra.mxu0 %v1872
        %v2391 = vpop.f32.mrf.mxu0
        %v2392 = vadd.f32 %v2303, %v2391
        %v2393 = vpop.f32.mrf.mxu0
        %v2394 = vadd.f32 %v2305, %v2393
        %2395 = vmatmul.bf16.gmra.mxu0 %v1876
        %v2396 = vpop.f32.mrf.mxu0
        %v2397 = vadd.f32 %v2308, %v2396
        %v2398 = vpop.f32.mrf.mxu0
        %v2399 = vadd.f32 %v2310, %v2398
        %2400 = vmatmul.bf16.gmra.mxu0 %v1880
        %v2401 = vpop.f32.mrf.mxu0
        %v2402 = vadd.f32 %v2313, %v2401
        %v2403 = vpop.f32.mrf.mxu0
        %v2404 = vadd.f32 %v2315, %v2403
        %2405 = vmatmul.bf16.gmra.mxu0 %v1884
        %v2406 = vpop.f32.mrf.mxu0
        %v2407 = vadd.f32 %v2318, %v2406
        %v2408 = vpop.f32.mrf.mxu0
        %v2409 = vadd.f32 %v2320, %v2408
        %2410 = vmatmul.bf16.gmra.mxu0 %v1888
        %v2411 = vpop.f32.mrf.mxu0
        %v2412 = vadd.f32 %v2323, %v2411
        %v2413 = vpop.f32.mrf.mxu0
        %v2414 = vadd.f32 %v2325, %v2413
        %2415 = vmatmul.bf16.gmra.mxu0 %v1892
        %v2416 = vpop.f32.mrf.mxu0
        %v2417 = vadd.f32 %v2328, %v2416
        %v2418 = vpop.f32.mrf.mxu0
        %v2419 = vadd.f32 %v2330, %v2418
        %2420 = vdwg.mxu0
        %2421 = vmatpush.bf16.msra.mxu0 %v2121
        %2422 = vmatpush.bf16.msra.mxu0 %v2120
        %2423 = vmatpush.bf16.msra.mxu0 %v2119
        %2424 = vmatpush.bf16.msra.mxu0 %v2118
        %2425 = vmatpush.bf16.msra.mxu0 %v2117
        %2426 = vmatpush.bf16.msra.mxu0 %v2116
        %2427 = vmatpush.bf16.msra.mxu0 %v2115
        %2428 = vmatpush.bf16.msra.mxu0 %v2114
        %2429 = vmatmul.bf16.gmra.mxu0 %v1833
        %v2430 = vpop.f32.mrf.mxu0
        %v2431 = vadd.f32 %v2342, %v2430
        %v2432 = vpop.f32.mrf.mxu0
        %v2433 = vadd.f32 %v2344, %v2432
        %2434 = vmatmul.bf16.gmra.mxu0 %v1837
        %v2435 = vpop.f32.mrf.mxu0
        %v2436 = vadd.f32 %v2347, %v2435
        %v2437 = vpop.f32.mrf.mxu0
        %v2438 = vadd.f32 %v2349, %v2437
        %2439 = vmatmul.bf16.gmra.mxu0 %v1841
        %v2440 = vpop.f32.mrf.mxu0
        %v2441 = vadd.f32 %v2352, %v2440
        %v2442 = vpop.f32.mrf.mxu0
        %v2443 = vadd.f32 %v2354, %v2442
        %2444 = vmatmul.bf16.gmra.mxu0 %v1845
        %v2445 = vpop.f32.mrf.mxu0
        %v2446 = vadd.f32 %v2357, %v2445
        %v2447 = vpop.f32.mrf.mxu0
        %v2448 = vadd.f32 %v2359, %v2447
        %2449 = vmatmul.bf16.gmra.mxu0 %v1849
        %v2450 = vpop.f32.mrf.mxu0
        %v2451 = vadd.f32 %v2362, %v2450
        %v2452 = vpop.f32.mrf.mxu0
        %v2453 = vadd.f32 %v2364, %v2452
        %2454 = vmatmul.bf16.gmra.mxu0 %v1853
        %v2455 = vpop.f32.mrf.mxu0
        %v2456 = vadd.f32 %v2367, %v2455
        %v2457 = vpop.f32.mrf.mxu0
        %v2458 = vadd.f32 %v2369, %v2457
        %2459 = vmatmul.bf16.gmra.mxu0 %v1857
        %v2460 = vpop.f32.mrf.mxu0
        %v2461 = vadd.f32 %v2372, %v2460
        %v2462 = vpop.f32.mrf.mxu0
        %v2463 = vadd.f32 %v2374, %v2462
        %2464 = vmatmul.bf16.gmra.mxu0 %v1861
        %v2465 = vpop.f32.mrf.mxu0
        %v2466 = vadd.f32 %v2377, %v2465
        %v2467 = vpop.f32.mrf.mxu0
        %v2468 = vadd.f32 %v2379, %v2467
        %2469 = vmatmul.bf16.gmra.mxu0 %v1865
        %v2470 = vpop.f32.mrf.mxu0
        %v2471 = vadd.f32 %v2382, %v2470
        %v2472 = vpop.f32.mrf.mxu0
        %v2473 = vadd.f32 %v2384, %v2472
        %2474 = vmatmul.bf16.gmra.mxu0 %v1869
        %v2475 = vpop.f32.mrf.mxu0
        %v2476 = vadd.f32 %v2387, %v2475
        %v2477 = vpop.f32.mrf.mxu0
        %v2478 = vadd.f32 %v2389, %v2477
        %2479 = vmatmul.bf16.gmra.mxu0 %v1873
        %v2480 = vpop.f32.mrf.mxu0
        %v2481 = vadd.f32 %v2392, %v2480
        %v2482 = vpop.f32.mrf.mxu0
        %v2483 = vadd.f32 %v2394, %v2482
        %2484 = vmatmul.bf16.gmra.mxu0 %v1877
        %v2485 = vpop.f32.mrf.mxu0
        %v2486 = vadd.f32 %v2397, %v2485
        %v2487 = vpop.f32.mrf.mxu0
        %v2488 = vadd.f32 %v2399, %v2487
        %2489 = vmatmul.bf16.gmra.mxu0 %v1881
        %v2490 = vpop.f32.mrf.mxu0
        %v2491 = vadd.f32 %v2402, %v2490
        %v2492 = vpop.f32.mrf.mxu0
        %v2493 = vadd.f32 %v2404, %v2492
        %2494 = vmatmul.bf16.gmra.mxu0 %v1885
        %v2495 = vpop.f32.mrf.mxu0
        %v2496 = vadd.f32 %v2407, %v2495
        %v2497 = vpop.f32.mrf.mxu0
        %v2498 = vadd.f32 %v2409, %v2497
        %2499 = vmatmul.bf16.gmra.mxu0 %v1889
        %v2500 = vpop.f32.mrf.mxu0
        %v2501 = vadd.f32 %v2412, %v2500
        %v2502 = vpop.f32.mrf.mxu0
        %v2503 = vadd.f32 %v2414, %v2502
        %2504 = vmatmul.bf16.gmra.mxu0 %v1893
        %v2505 = vpop.f32.mrf.mxu0
        %v2506 = vadd.f32 %v2417, %v2505
        %v2507 = vpop.f32.mrf.mxu0
        %v2508 = vadd.f32 %v2419, %v2507
        %2509 = vdwg.mxu0
        %v2510 = vmax.f32 %v2431, 0.0
        %v2511 = vmax.f32 %v2433, 0.0
        %v2512 = vmax.f32 %v2436, 0.0
        %v2513 = vmax.f32 %v2438, 0.0
        %v2514 = vmax.f32 %v2441, 0.0
        %v2515 = vmax.f32 %v2443, 0.0
        %v2516 = vmax.f32 %v2446, 0.0
        %v2517 = vmax.f32 %v2448, 0.0
        %v2518 = vmax.f32 %v2451, 0.0
        %v2519 = vmax.f32 %v2453, 0.0
        %v2520 = vmax.f32 %v2456, 0.0
        %v2521 = vmax.f32 %v2458, 0.0
        %v2522 = vmax.f32 %v2461, 0.0
        %v2523 = vmax.f32 %v2463, 0.0
        %v2524 = vmax.f32 %v2466, 0.0
        %v2525 = vmax.f32 %v2468, 0.0
        %v2526 = vmax.f32 %v2471, 0.0
        %v2527 = vmax.f32 %v2473, 0.0
        %v2528 = vmax.f32 %v2476, 0.0
        %v2529 = vmax.f32 %v2478, 0.0
        %v2530 = vmax.f32 %v2481, 0.0
        %v2531 = vmax.f32 %v2483, 0.0
        %v2532 = vmax.f32 %v2486, 0.0
        %v2533 = vmax.f32 %v2488, 0.0
        %v2534 = vmax.f32 %v2491, 0.0
        %v2535 = vmax.f32 %v2493, 0.0
        %v2536 = vmax.f32 %v2496, 0.0
        %v2537 = vmax.f32 %v2498, 0.0
        %v2538 = vmax.f32 %v2501, 0.0
        %v2539 = vmax.f32 %v2503, 0.0
        %v2540 = vmax.f32 %v2506, 0.0
        %v2541 = vmax.f32 %v2508, 0.0
        %v2542 = vpack.c.bf16 %v2511, %v2510
        %v2543 = vpack.c.bf16 %v2513, %v2512
        %v2544 = vpack.c.bf16 %v2515, %v2514
        %v2545 = vpack.c.bf16 %v2517, %v2516
        %v2546 = vpack.c.bf16 %v2519, %v2518
        %v2547 = vpack.c.bf16 %v2521, %v2520
        %v2548 = vpack.c.bf16 %v2523, %v2522
        %v2549 = vpack.c.bf16 %v2525, %v2524
        %v2550 = vpack.c.bf16 %v2527, %v2526
        %v2551 = vpack.c.bf16 %v2529, %v2528
        %v2552 = vpack.c.bf16 %v2531, %v2530
        %v2553 = vpack.c.bf16 %v2533, %v2532
        %v2554 = vpack.c.bf16 %v2535, %v2534
        %v2555 = vpack.c.bf16 %v2537, %v2536
        %v2556 = vpack.c.bf16 %v2539, %v2538
        %v2557 = vpack.c.bf16 %v2541, %v2540
        %v2558 = vld [vmem:[%s11] sm:$0xf]
        %v2559 = vld [vmem:[%s11 + $0x4] sm:$0xf]
        %v2560 = vld [vmem:[%s11 + $0x8] sm:$0xf]
        %v2561 = vld [vmem:[%s11 + $0xc] sm:$0xf]
        %v2562 = vld [vmem:[%s11 + $0x10] sm:$0xf]
        %v2563 = vld [vmem:[%s11 + $0x14] sm:$0xf]
        %v2564 = vld [vmem:[%s11 + $0x18] sm:$0xf]
        %v2565 = vld [vmem:[%s11 + $0x1c] sm:$0xf]
        %v2566 = vld [vmem:[%s12] sm:$0x1]
        %v2568 = vperm.slane %v2566, 0
        %v2578 = vunpack.c.l.b16 %v2558
        %v2579 = vunpack.c.l.b16 %v2559
        %v2580 = vunpack.c.l.b16 %v2560
        %v2581 = vunpack.c.l.b16 %v2561
        %v2582 = vunpack.c.l.b16 %v2562
        %v2583 = vunpack.c.l.b16 %v2563
        %v2584 = vunpack.c.l.b16 %v2564
        %v2585 = vunpack.c.l.b16 %v2565
        %v2586 = vpack.c.b16 %v2579, %v2578
        %v2587 = vpack.c.b16 %v2581, %v2580
        %v2588 = vpack.c.b16 %v2583, %v2582
        %v2589 = vpack.c.b16 %v2585, %v2584
        %vm2594 = vcmask 523264
        %v2596 = vsel %vm2594, %v2542, 0
        %v2599 = vsel %vm2594, %v2543, 0
        %v2602 = vsel %vm2594, %v2544, 0
        %v2605 = vsel %vm2594, %v2545, 0
        %v2608 = vsel %vm2594, %v2546, 0
        %v2611 = vsel %vm2594, %v2547, 0
        %v2614 = vsel %vm2594, %v2548, 0
        %v2617 = vsel %vm2594, %v2549, 0
        %v2620 = vsel %vm2594, %v2550, 0
        %v2623 = vsel %vm2594, %v2551, 0
        %v2626 = vsel %vm2594, %v2552, 0
        %v2629 = vsel %vm2594, %v2553, 0
        %v2632 = vsel %vm2594, %v2554, 0
        %v2635 = vsel %vm2594, %v2555, 0
        %v2638 = vsel %vm2594, %v2556, 0
        %v2641 = vsel %vm2594, %v2557, 0
        %2643 = vmatpush.bf16.msra.mxu0 0
        %2644 = vmatpush.bf16.msra.mxu0 0
        %2645 = vmatpush.bf16.msra.mxu0 0
        %2646 = vmatpush.bf16.msra.mxu0 0
        %2647 = vmatpush.bf16.msra.mxu0 %v2589
        %2648 = vmatpush.bf16.msra.mxu0 %v2588
        %2649 = vmatpush.bf16.msra.mxu0 %v2587
        %2650 = vmatpush.bf16.msra.mxu0 %v2586
        %2651 = vmatmul.bf16.gmra.mxu0 %v2596
        %v2652 = vpop.f32.mrf.mxu0
        %v2653 = vadd.f32 %v2568, %v2652
        %v2654 = vpop.f32.mrf.mxu0
        %v2655 = vadd.f32 %v2568, %v2654
        %2656 = vmatmul.bf16.gmra.mxu0 %v2599
        %v2657 = vpop.f32.mrf.mxu0
        %v2658 = vadd.f32 %v2568, %v2657
        %v2659 = vpop.f32.mrf.mxu0
        %v2660 = vadd.f32 %v2568, %v2659
        %2661 = vmatmul.bf16.gmra.mxu0 %v2602
        %v2662 = vpop.f32.mrf.mxu0
        %v2663 = vadd.f32 %v2568, %v2662
        %v2664 = vpop.f32.mrf.mxu0
        %v2665 = vadd.f32 %v2568, %v2664
        %2666 = vmatmul.bf16.gmra.mxu0 %v2605
        %v2667 = vpop.f32.mrf.mxu0
        %v2668 = vadd.f32 %v2568, %v2667
        %v2669 = vpop.f32.mrf.mxu0
        %v2670 = vadd.f32 %v2568, %v2669
        %2671 = vmatmul.bf16.gmra.mxu0 %v2608
        %v2672 = vpop.f32.mrf.mxu0
        %v2673 = vadd.f32 %v2568, %v2672
        %v2674 = vpop.f32.mrf.mxu0
        %v2675 = vadd.f32 %v2568, %v2674
        %2676 = vmatmul.bf16.gmra.mxu0 %v2611
        %v2677 = vpop.f32.mrf.mxu0
        %v2678 = vadd.f32 %v2568, %v2677
        %v2679 = vpop.f32.mrf.mxu0
        %v2680 = vadd.f32 %v2568, %v2679
        %2681 = vmatmul.bf16.gmra.mxu0 %v2614
        %v2682 = vpop.f32.mrf.mxu0
        %v2683 = vadd.f32 %v2568, %v2682
        %v2684 = vpop.f32.mrf.mxu0
        %v2685 = vadd.f32 %v2568, %v2684
        %2686 = vmatmul.bf16.gmra.mxu0 %v2617
        %v2687 = vpop.f32.mrf.mxu0
        %v2688 = vadd.f32 %v2568, %v2687
        %v2689 = vpop.f32.mrf.mxu0
        %v2690 = vadd.f32 %v2568, %v2689
        %2691 = vmatmul.bf16.gmra.mxu0 %v2620
        %v2692 = vpop.f32.mrf.mxu0
        %v2693 = vadd.f32 %v2568, %v2692
        %v2694 = vpop.f32.mrf.mxu0
        %v2695 = vadd.f32 %v2568, %v2694
        %2696 = vmatmul.bf16.gmra.mxu0 %v2623
        %v2697 = vpop.f32.mrf.mxu0
        %v2698 = vadd.f32 %v2568, %v2697
        %v2699 = vpop.f32.mrf.mxu0
        %v2700 = vadd.f32 %v2568, %v2699
        %2701 = vmatmul.bf16.gmra.mxu0 %v2626
        %v2702 = vpop.f32.mrf.mxu0
        %v2703 = vadd.f32 %v2568, %v2702
        %v2704 = vpop.f32.mrf.mxu0
        %v2705 = vadd.f32 %v2568, %v2704
        %2706 = vmatmul.bf16.gmra.mxu0 %v2629
        %v2707 = vpop.f32.mrf.mxu0
        %v2708 = vadd.f32 %v2568, %v2707
        %v2709 = vpop.f32.mrf.mxu0
        %v2710 = vadd.f32 %v2568, %v2709
        %2711 = vmatmul.bf16.gmra.mxu0 %v2632
        %v2712 = vpop.f32.mrf.mxu0
        %v2713 = vadd.f32 %v2568, %v2712
        %v2714 = vpop.f32.mrf.mxu0
        %v2715 = vadd.f32 %v2568, %v2714
        %2716 = vmatmul.bf16.gmra.mxu0 %v2635
        %v2717 = vpop.f32.mrf.mxu0
        %v2718 = vadd.f32 %v2568, %v2717
        %v2719 = vpop.f32.mrf.mxu0
        %v2720 = vadd.f32 %v2568, %v2719
        %2721 = vmatmul.bf16.gmra.mxu0 %v2638
        %v2722 = vpop.f32.mrf.mxu0
        %v2723 = vadd.f32 %v2568, %v2722
        %v2724 = vpop.f32.mrf.mxu0
        %v2725 = vadd.f32 %v2568, %v2724
        %2726 = vmatmul.bf16.gmra.mxu0 %v2641
        %v2727 = vpop.f32.mrf.mxu0
        %v2728 = vadd.f32 %v2568, %v2727
        %v2729 = vpop.f32.mrf.mxu0
        %v2730 = vadd.f32 %v2568, %v2729
        %2731 = vdwg.mxu0
        %v2732 = vld [vmem:[%s813] sm:$0xf]
        %v2733 = vld [vmem:[%s813 + $0x4] sm:$0xf]
        %v2734 = vld [vmem:[%s813 + $0x8] sm:$0xf]
        %v2735 = vld [vmem:[%s813 + $0xc] sm:$0xf]
        %v2736 = vld [vmem:[%s813 + $0x10] sm:$0xf]
        %v2737 = vld [vmem:[%s813 + $0x14] sm:$0xf]
        %v2738 = vld [vmem:[%s813 + $0x18] sm:$0xf]
        %v2739 = vld [vmem:[%s813 + $0x1c] sm:$0xf]
        %v2740 = vld [vmem:[%s813 + $0x20] sm:$0xf]
        %v2741 = vld [vmem:[%s813 + $0x24] sm:$0xf]
        %v2742 = vld [vmem:[%s813 + $0x28] sm:$0xf]
        %v2743 = vld [vmem:[%s813 + $0x2c] sm:$0xf]
        %v2744 = vld [vmem:[%s813 + $0x30] sm:$0xf]
        %v2745 = vld [vmem:[%s813 + $0x34] sm:$0xf]
        %v2746 = vld [vmem:[%s813 + $0x38] sm:$0xf]
        %v2747 = vld [vmem:[%s813 + $0x3c] sm:$0xf]
        %v2748 = vld [vmem:[%s813 + $0x40] sm:$0xf]
        %v2749 = vld [vmem:[%s813 + $0x44] sm:$0xf]
        %v2750 = vld [vmem:[%s813 + $0x48] sm:$0xf]
        %v2751 = vld [vmem:[%s813 + $0x4c] sm:$0xf]
        %v2752 = vld [vmem:[%s813 + $0x50] sm:$0xf]
        %v2753 = vld [vmem:[%s813 + $0x54] sm:$0xf]
        %v2754 = vld [vmem:[%s813 + $0x58] sm:$0xf]
        %v2755 = vld [vmem:[%s813 + $0x5c] sm:$0xf]
        %v2756 = vld [vmem:[%s813 + $0x60] sm:$0xf]
        %v2757 = vld [vmem:[%s813 + $0x64] sm:$0xf]
        %v2758 = vld [vmem:[%s813 + $0x68] sm:$0xf]
        %v2759 = vld [vmem:[%s813 + $0x6c] sm:$0xf]
        %v2760 = vld [vmem:[%s813 + $0x70] sm:$0xf]
        %v2761 = vld [vmem:[%s813 + $0x74] sm:$0xf]
        %v2762 = vld [vmem:[%s813 + $0x78] sm:$0xf]
        %v2763 = vld [vmem:[%s813 + $0x7c] sm:$0xf]
        %v2764 = vld [vmem:[%s13] sm:$0xff]
        %v2765 = vld [vmem:[%s13 + $0x8] sm:$0xff]
        %v2766 = vld [vmem:[%s13 + $0x10] sm:$0xff]
        %v2767 = vld [vmem:[%s13 + $0x18] sm:$0xff]
        %v2768 = vld [vmem:[%s13 + $0x20] sm:$0xff]
        %v2769 = vld [vmem:[%s13 + $0x28] sm:$0xff]
        %v2770 = vld [vmem:[%s13 + $0x30] sm:$0xff]
        %v2771 = vld [vmem:[%s13 + $0x38] sm:$0xff]
        %v2772 = vld [vmem:[%s13 + $0x40] sm:$0xff]
        %v2773 = vld [vmem:[%s13 + $0x48] sm:$0xff]
        %v2774 = vld [vmem:[%s13 + $0x50] sm:$0xff]
        %v2775 = vld [vmem:[%s13 + $0x58] sm:$0xff]
        %v2776 = vld [vmem:[%s13 + $0x60] sm:$0xff]
        %v2777 = vld [vmem:[%s13 + $0x68] sm:$0xff]
        %v2778 = vld [vmem:[%s13 + $0x70] sm:$0xff]
        %v2779 = vld [vmem:[%s13 + $0x78] sm:$0xff]
        %v2780 = vld [vmem:[%s13 + $0x80] sm:$0xff]
        %v2781 = vld [vmem:[%s13 + $0x88] sm:$0xff]
        %v2782 = vld [vmem:[%s13 + $0x90] sm:$0xff]
        %v2783 = vld [vmem:[%s13 + $0x98] sm:$0xff]
        %v2784 = vld [vmem:[%s13 + $0xa0] sm:$0xff]
        %v2785 = vld [vmem:[%s13 + $0xa8] sm:$0xff]
        %v2786 = vld [vmem:[%s13 + $0xb0] sm:$0xff]
        %v2787 = vld [vmem:[%s13 + $0xb8] sm:$0xff]
        %v2788 = vld [vmem:[%s13 + $0xc0] sm:$0xff]
        %v2789 = vld [vmem:[%s13 + $0xc8] sm:$0xff]
        %v2790 = vld [vmem:[%s13 + $0xd0] sm:$0xff]
        %v2791 = vld [vmem:[%s13 + $0xd8] sm:$0xff]
        %v2792 = vld [vmem:[%s13 + $0xe0] sm:$0xff]
        %v2793 = vld [vmem:[%s13 + $0xe8] sm:$0xff]
        %v2794 = vld [vmem:[%s13 + $0xf0] sm:$0xff]
        %v2795 = vld [vmem:[%s13 + $0xf8] sm:$0xff]
        %v2796 = vld [vmem:[%s14] sm:$0xf]
        %v2798 = vperm.slane %v2796, 0
        %v2799 = vperm.slane %v2796, 1
        %v2800 = vperm.slane %v2796, 2
        %v2801 = vperm.slane %v2796, 3
        %v2838 = vunpack.c.l.b16 %v2732
        %v2839 = vunpack.c.l.b16 %v2733
        %v2840 = vunpack.c.l.b16 %v2734
        %v2841 = vunpack.c.l.b16 %v2735
        %v2842 = vunpack.c.l.b16 %v2736
        %v2843 = vunpack.c.l.b16 %v2737
        %v2844 = vunpack.c.l.b16 %v2738
        %v2845 = vunpack.c.l.b16 %v2739
        %v2846 = vunpack.c.l.b16 %v2740
        %v2847 = vunpack.c.l.b16 %v2741
        %v2848 = vunpack.c.l.b16 %v2742
        %v2849 = vunpack.c.l.b16 %v2743
        %v2850 = vunpack.c.l.b16 %v2744
        %v2851 = vunpack.c.l.b16 %v2745
        %v2852 = vunpack.c.l.b16 %v2746
        %v2853 = vunpack.c.l.b16 %v2747
        %v2854 = vunpack.c.l.b16 %v2748
        %v2855 = vunpack.c.l.b16 %v2749
        %v2856 = vunpack.c.l.b16 %v2750
        %v2857 = vunpack.c.l.b16 %v2751
        %v2858 = vunpack.c.l.b16 %v2752
        %v2859 = vunpack.c.l.b16 %v2753
        %v2860 = vunpack.c.l.b16 %v2754
        %v2861 = vunpack.c.l.b16 %v2755
        %v2862 = vunpack.c.l.b16 %v2756
        %v2863 = vunpack.c.l.b16 %v2757
        %v2864 = vunpack.c.l.b16 %v2758
        %v2865 = vunpack.c.l.b16 %v2759
        %v2866 = vunpack.c.l.b16 %v2760
        %v2867 = vunpack.c.l.b16 %v2761
        %v2868 = vunpack.c.l.b16 %v2762
        %v2869 = vunpack.c.l.b16 %v2763
        %v2870 = vpack.c.b16 %v2839, %v2838
        %v2871 = vpack.c.b16 %v2841, %v2840
        %v2872 = vpack.c.b16 %v2843, %v2842
        %v2873 = vpack.c.b16 %v2845, %v2844
        %v2874 = vpack.c.b16 %v2847, %v2846
        %v2875 = vpack.c.b16 %v2849, %v2848
        %v2876 = vpack.c.b16 %v2851, %v2850
        %v2877 = vpack.c.b16 %v2853, %v2852
        %v2878 = vpack.c.b16 %v2855, %v2854
        %v2879 = vpack.c.b16 %v2857, %v2856
        %v2880 = vpack.c.b16 %v2859, %v2858
        %v2881 = vpack.c.b16 %v2861, %v2860
        %v2882 = vpack.c.b16 %v2863, %v2862
        %v2883 = vpack.c.b16 %v2865, %v2864
        %v2884 = vpack.c.b16 %v2867, %v2866
        %v2885 = vpack.c.b16 %v2869, %v2868
        %v2934 = vunpack.c.l.b16 %v2764
        %v2935 = vunpack.c.h.b16 %v2764
        %v2936 = vunpack.c.l.b16 %v2765
        %v2937 = vunpack.c.h.b16 %v2765
        %v2938 = vunpack.c.l.b16 %v2766
        %v2939 = vunpack.c.h.b16 %v2766
        %v2940 = vunpack.c.l.b16 %v2767
        %v2941 = vunpack.c.h.b16 %v2767
        %v2942 = vunpack.c.l.b16 %v2768
        %v2943 = vunpack.c.h.b16 %v2768
        %v2944 = vunpack.c.l.b16 %v2769
        %v2945 = vunpack.c.h.b16 %v2769
        %v2946 = vunpack.c.l.b16 %v2770
        %v2947 = vunpack.c.h.b16 %v2770
        %v2948 = vunpack.c.l.b16 %v2771
        %v2949 = vunpack.c.h.b16 %v2771
        %v2950 = vunpack.c.l.b16 %v2772
        %v2951 = vunpack.c.h.b16 %v2772
        %v2952 = vunpack.c.l.b16 %v2773
        %v2953 = vunpack.c.h.b16 %v2773
        %v2954 = vunpack.c.l.b16 %v2774
        %v2955 = vunpack.c.h.b16 %v2774
        %v2956 = vunpack.c.l.b16 %v2775
        %v2957 = vunpack.c.h.b16 %v2775
        %v2958 = vunpack.c.l.b16 %v2776
        %v2959 = vunpack.c.h.b16 %v2776
        %v2960 = vunpack.c.l.b16 %v2777
        %v2961 = vunpack.c.h.b16 %v2777
        %v2962 = vunpack.c.l.b16 %v2778
        %v2963 = vunpack.c.h.b16 %v2778
        %v2964 = vunpack.c.l.b16 %v2779
        %v2965 = vunpack.c.h.b16 %v2779
        %v2966 = vunpack.c.l.b16 %v2780
        %v2967 = vunpack.c.h.b16 %v2780
        %v2968 = vunpack.c.l.b16 %v2781
        %v2969 = vunpack.c.h.b16 %v2781
        %v2970 = vunpack.c.l.b16 %v2782
        %v2971 = vunpack.c.h.b16 %v2782
        %v2972 = vunpack.c.l.b16 %v2783
        %v2973 = vunpack.c.h.b16 %v2783
        %v2974 = vunpack.c.l.b16 %v2784
        %v2975 = vunpack.c.h.b16 %v2784
        %v2976 = vunpack.c.l.b16 %v2785
        %v2977 = vunpack.c.h.b16 %v2785
        %v2978 = vunpack.c.l.b16 %v2786
        %v2979 = vunpack.c.h.b16 %v2786
        %v2980 = vunpack.c.l.b16 %v2787
        %v2981 = vunpack.c.h.b16 %v2787
        %v2982 = vunpack.c.l.b16 %v2788
        %v2983 = vunpack.c.h.b16 %v2788
        %v2984 = vunpack.c.l.b16 %v2789
        %v2985 = vunpack.c.h.b16 %v2789
        %v2986 = vunpack.c.l.b16 %v2790
        %v2987 = vunpack.c.h.b16 %v2790
        %v2988 = vunpack.c.l.b16 %v2791
        %v2989 = vunpack.c.h.b16 %v2791
        %v2990 = vunpack.c.l.b16 %v2792
        %v2991 = vunpack.c.h.b16 %v2792
        %v2992 = vunpack.c.l.b16 %v2793
        %v2993 = vunpack.c.h.b16 %v2793
        %v2994 = vunpack.c.l.b16 %v2794
        %v2995 = vunpack.c.h.b16 %v2794
        %v2996 = vunpack.c.l.b16 %v2795
        %v2997 = vunpack.c.h.b16 %v2795
        %v2998 = vpack.c.b16 %v2938, %v2934
        %v2999 = vpack.c.b16 %v2939, %v2935
        %v3000 = vpack.c.b16 %v2940, %v2936
        %v3001 = vpack.c.b16 %v2941, %v2937
        %v3002 = vpack.c.b16 %v2946, %v2942
        %v3003 = vpack.c.b16 %v2947, %v2943
        %v3004 = vpack.c.b16 %v2948, %v2944
        %v3005 = vpack.c.b16 %v2949, %v2945
        %v3006 = vpack.c.b16 %v2954, %v2950
        %v3007 = vpack.c.b16 %v2955, %v2951
        %v3008 = vpack.c.b16 %v2956, %v2952
        %v3009 = vpack.c.b16 %v2957, %v2953
        %v3010 = vpack.c.b16 %v2962, %v2958
        %v3011 = vpack.c.b16 %v2963, %v2959
        %v3012 = vpack.c.b16 %v2964, %v2960
        %v3013 = vpack.c.b16 %v2965, %v2961
        %v3014 = vpack.c.b16 %v2970, %v2966
        %v3015 = vpack.c.b16 %v2971, %v2967
        %v3016 = vpack.c.b16 %v2972, %v2968
        %v3017 = vpack.c.b16 %v2973, %v2969
        %v3018 = vpack.c.b16 %v2978, %v2974
        %v3019 = vpack.c.b16 %v2979, %v2975
        %v3020 = vpack.c.b16 %v2980, %v2976
        %v3021 = vpack.c.b16 %v2981, %v2977
        %v3022 = vpack.c.b16 %v2986, %v2982
        %v3023 = vpack.c.b16 %v2987, %v2983
        %v3024 = vpack.c.b16 %v2988, %v2984
        %v3025 = vpack.c.b16 %v2989, %v2985
        %v3026 = vpack.c.b16 %v2994, %v2990
        %v3027 = vpack.c.b16 %v2995, %v2991
        %v3028 = vpack.c.b16 %v2996, %v2992
        %v3029 = vpack.c.b16 %v2997, %v2993
        %3062 = vmatpush.bf16.msra.mxu0 %v3026
        %3063 = vmatpush.bf16.msra.mxu0 %v3022
        %3064 = vmatpush.bf16.msra.mxu0 %v3018
        %3065 = vmatpush.bf16.msra.mxu0 %v3014
        %3066 = vmatpush.bf16.msra.mxu0 %v3010
        %3067 = vmatpush.bf16.msra.mxu0 %v3006
        %3068 = vmatpush.bf16.msra.mxu0 %v3002
        %3069 = vmatpush.bf16.msra.mxu0 %v2998
        %3070 = vmatmul.bf16.gmra.mxu0 %v2870
        %v3071 = vpop.f32.mrf.mxu0
        %v3072 = vadd.f32 %v2798, %v3071
        %v3073 = vpop.f32.mrf.mxu0
        %v3074 = vadd.f32 %v2798, %v3073
        %3075 = vmatmul.bf16.gmra.mxu0 %v2871
        %v3076 = vpop.f32.mrf.mxu0
        %v3077 = vadd.f32 %v2798, %v3076
        %v3078 = vpop.f32.mrf.mxu0
        %v3079 = vadd.f32 %v2798, %v3078
        %3080 = vmatmul.bf16.gmra.mxu0 %v2872
        %v3081 = vpop.f32.mrf.mxu0
        %v3082 = vadd.f32 %v2798, %v3081
        %v3083 = vpop.f32.mrf.mxu0
        %v3084 = vadd.f32 %v2798, %v3083
        %3085 = vmatmul.bf16.gmra.mxu0 %v2873
        %v3086 = vpop.f32.mrf.mxu0
        %v3087 = vadd.f32 %v2798, %v3086
        %v3088 = vpop.f32.mrf.mxu0
        %v3089 = vadd.f32 %v2798, %v3088
        %3090 = vmatmul.bf16.gmra.mxu0 %v2874
        %v3091 = vpop.f32.mrf.mxu0
        %v3092 = vadd.f32 %v2798, %v3091
        %v3093 = vpop.f32.mrf.mxu0
        %v3094 = vadd.f32 %v2798, %v3093
        %3095 = vmatmul.bf16.gmra.mxu0 %v2875
        %v3096 = vpop.f32.mrf.mxu0
        %v3097 = vadd.f32 %v2798, %v3096
        %v3098 = vpop.f32.mrf.mxu0
        %v3099 = vadd.f32 %v2798, %v3098
        %3100 = vmatmul.bf16.gmra.mxu0 %v2876
        %v3101 = vpop.f32.mrf.mxu0
        %v3102 = vadd.f32 %v2798, %v3101
        %v3103 = vpop.f32.mrf.mxu0
        %v3104 = vadd.f32 %v2798, %v3103
        %3105 = vmatmul.bf16.gmra.mxu0 %v2877
        %v3106 = vpop.f32.mrf.mxu0
        %v3107 = vadd.f32 %v2798, %v3106
        %v3108 = vpop.f32.mrf.mxu0
        %v3109 = vadd.f32 %v2798, %v3108
        %3110 = vmatmul.bf16.gmra.mxu0 %v2878
        %v3111 = vpop.f32.mrf.mxu0
        %v3112 = vadd.f32 %v2798, %v3111
        %v3113 = vpop.f32.mrf.mxu0
        %v3114 = vadd.f32 %v2798, %v3113
        %3115 = vmatmul.bf16.gmra.mxu0 %v2879
        %v3116 = vpop.f32.mrf.mxu0
        %v3117 = vadd.f32 %v2798, %v3116
        %v3118 = vpop.f32.mrf.mxu0
        %v3119 = vadd.f32 %v2798, %v3118
        %3120 = vmatmul.bf16.gmra.mxu0 %v2880
        %v3121 = vpop.f32.mrf.mxu0
        %v3122 = vadd.f32 %v2798, %v3121
        %v3123 = vpop.f32.mrf.mxu0
        %v3124 = vadd.f32 %v2798, %v3123
        %3125 = vmatmul.bf16.gmra.mxu0 %v2881
        %v3126 = vpop.f32.mrf.mxu0
        %v3127 = vadd.f32 %v2798, %v3126
        %v3128 = vpop.f32.mrf.mxu0
        %v3129 = vadd.f32 %v2798, %v3128
        %3130 = vmatmul.bf16.gmra.mxu0 %v2882
        %v3131 = vpop.f32.mrf.mxu0
        %v3132 = vadd.f32 %v2798, %v3131
        %v3133 = vpop.f32.mrf.mxu0
        %v3134 = vadd.f32 %v2798, %v3133
        %3135 = vmatmul.bf16.gmra.mxu0 %v2883
        %v3136 = vpop.f32.mrf.mxu0
        %v3137 = vadd.f32 %v2798, %v3136
        %v3138 = vpop.f32.mrf.mxu0
        %v3139 = vadd.f32 %v2798, %v3138
        %3140 = vmatmul.bf16.gmra.mxu0 %v2884
        %v3141 = vpop.f32.mrf.mxu0
        %v3142 = vadd.f32 %v2798, %v3141
        %v3143 = vpop.f32.mrf.mxu0
        %v3144 = vadd.f32 %v2798, %v3143
        %3145 = vmatmul.bf16.gmra.mxu0 %v2885
        %v3146 = vpop.f32.mrf.mxu0
        %v3147 = vadd.f32 %v2798, %v3146
        %v3148 = vpop.f32.mrf.mxu0
        %v3149 = vadd.f32 %v2798, %v3148
        %3150 = vdwg.mxu0
        %3151 = vmatpush.bf16.msra.mxu0 %v3027
        %3152 = vmatpush.bf16.msra.mxu0 %v3023
        %3153 = vmatpush.bf16.msra.mxu0 %v3019
        %3154 = vmatpush.bf16.msra.mxu0 %v3015
        %3155 = vmatpush.bf16.msra.mxu0 %v3011
        %3156 = vmatpush.bf16.msra.mxu0 %v3007
        %3157 = vmatpush.bf16.msra.mxu0 %v3003
        %3158 = vmatpush.bf16.msra.mxu0 %v2999
        %3159 = vmatmul.bf16.gmra.mxu0 %v2870
        %v3160 = vpop.f32.mrf.mxu0
        %v3161 = vadd.f32 %v2799, %v3160
        %v3162 = vpop.f32.mrf.mxu0
        %v3163 = vadd.f32 %v2799, %v3162
        %3164 = vmatmul.bf16.gmra.mxu0 %v2871
        %v3165 = vpop.f32.mrf.mxu0
        %v3166 = vadd.f32 %v2799, %v3165
        %v3167 = vpop.f32.mrf.mxu0
        %v3168 = vadd.f32 %v2799, %v3167
        %3169 = vmatmul.bf16.gmra.mxu0 %v2872
        %v3170 = vpop.f32.mrf.mxu0
        %v3171 = vadd.f32 %v2799, %v3170
        %v3172 = vpop.f32.mrf.mxu0
        %v3173 = vadd.f32 %v2799, %v3172
        %3174 = vmatmul.bf16.gmra.mxu0 %v2873
        %v3175 = vpop.f32.mrf.mxu0
        %v3176 = vadd.f32 %v2799, %v3175
        %v3177 = vpop.f32.mrf.mxu0
        %v3178 = vadd.f32 %v2799, %v3177
        %3179 = vmatmul.bf16.gmra.mxu0 %v2874
        %v3180 = vpop.f32.mrf.mxu0
        %v3181 = vadd.f32 %v2799, %v3180
        %v3182 = vpop.f32.mrf.mxu0
        %v3183 = vadd.f32 %v2799, %v3182
        %3184 = vmatmul.bf16.gmra.mxu0 %v2875
        %v3185 = vpop.f32.mrf.mxu0
        %v3186 = vadd.f32 %v2799, %v3185
        %v3187 = vpop.f32.mrf.mxu0
        %v3188 = vadd.f32 %v2799, %v3187
        %3189 = vmatmul.bf16.gmra.mxu0 %v2876
        %v3190 = vpop.f32.mrf.mxu0
        %v3191 = vadd.f32 %v2799, %v3190
        %v3192 = vpop.f32.mrf.mxu0
        %v3193 = vadd.f32 %v2799, %v3192
        %3194 = vmatmul.bf16.gmra.mxu0 %v2877
        %v3195 = vpop.f32.mrf.mxu0
        %v3196 = vadd.f32 %v2799, %v3195
        %v3197 = vpop.f32.mrf.mxu0
        %v3198 = vadd.f32 %v2799, %v3197
        %3199 = vmatmul.bf16.gmra.mxu0 %v2878
        %v3200 = vpop.f32.mrf.mxu0
        %v3201 = vadd.f32 %v2799, %v3200
        %v3202 = vpop.f32.mrf.mxu0
        %v3203 = vadd.f32 %v2799, %v3202
        %3204 = vmatmul.bf16.gmra.mxu0 %v2879
        %v3205 = vpop.f32.mrf.mxu0
        %v3206 = vadd.f32 %v2799, %v3205
        %v3207 = vpop.f32.mrf.mxu0
        %v3208 = vadd.f32 %v2799, %v3207
        %3209 = vmatmul.bf16.gmra.mxu0 %v2880
        %v3210 = vpop.f32.mrf.mxu0
        %v3211 = vadd.f32 %v2799, %v3210
        %v3212 = vpop.f32.mrf.mxu0
        %v3213 = vadd.f32 %v2799, %v3212
        %3214 = vmatmul.bf16.gmra.mxu0 %v2881
        %v3215 = vpop.f32.mrf.mxu0
        %v3216 = vadd.f32 %v2799, %v3215
        %v3217 = vpop.f32.mrf.mxu0
        %v3218 = vadd.f32 %v2799, %v3217
        %3219 = vmatmul.bf16.gmra.mxu0 %v2882
        %v3220 = vpop.f32.mrf.mxu0
        %v3221 = vadd.f32 %v2799, %v3220
        %v3222 = vpop.f32.mrf.mxu0
        %v3223 = vadd.f32 %v2799, %v3222
        %3224 = vmatmul.bf16.gmra.mxu0 %v2883
        %v3225 = vpop.f32.mrf.mxu0
        %v3226 = vadd.f32 %v2799, %v3225
        %v3227 = vpop.f32.mrf.mxu0
        %v3228 = vadd.f32 %v2799, %v3227
        %3229 = vmatmul.bf16.gmra.mxu0 %v2884
        %v3230 = vpop.f32.mrf.mxu0
        %v3231 = vadd.f32 %v2799, %v3230
        %v3232 = vpop.f32.mrf.mxu0
        %v3233 = vadd.f32 %v2799, %v3232
        %3234 = vmatmul.bf16.gmra.mxu0 %v2885
        %v3235 = vpop.f32.mrf.mxu0
        %v3236 = vadd.f32 %v2799, %v3235
        %v3237 = vpop.f32.mrf.mxu0
        %v3238 = vadd.f32 %v2799, %v3237
        %3239 = vdwg.mxu0
        %3240 = vmatpush.bf16.msra.mxu0 %v3028
        %3241 = vmatpush.bf16.msra.mxu0 %v3024
        %3242 = vmatpush.bf16.msra.mxu0 %v3020
        %3243 = vmatpush.bf16.msra.mxu0 %v3016
        %3244 = vmatpush.bf16.msra.mxu0 %v3012
        %3245 = vmatpush.bf16.msra.mxu0 %v3008
        %3246 = vmatpush.bf16.msra.mxu0 %v3004
        %3247 = vmatpush.bf16.msra.mxu0 %v3000
        %3248 = vmatmul.bf16.gmra.mxu0 %v2870
        %v3249 = vpop.f32.mrf.mxu0
        %v3250 = vadd.f32 %v2800, %v3249
        %v3251 = vpop.f32.mrf.mxu0
        %v3252 = vadd.f32 %v2800, %v3251
        %3253 = vmatmul.bf16.gmra.mxu0 %v2871
        %v3254 = vpop.f32.mrf.mxu0
        %v3255 = vadd.f32 %v2800, %v3254
        %v3256 = vpop.f32.mrf.mxu0
        %v3257 = vadd.f32 %v2800, %v3256
        %3258 = vmatmul.bf16.gmra.mxu0 %v2872
        %v3259 = vpop.f32.mrf.mxu0
        %v3260 = vadd.f32 %v2800, %v3259
        %v3261 = vpop.f32.mrf.mxu0
        %v3262 = vadd.f32 %v2800, %v3261
        %3263 = vmatmul.bf16.gmra.mxu0 %v2873
        %v3264 = vpop.f32.mrf.mxu0
        %v3265 = vadd.f32 %v2800, %v3264
        %v3266 = vpop.f32.mrf.mxu0
        %v3267 = vadd.f32 %v2800, %v3266
        %3268 = vmatmul.bf16.gmra.mxu0 %v2874
        %v3269 = vpop.f32.mrf.mxu0
        %v3270 = vadd.f32 %v2800, %v3269
        %v3271 = vpop.f32.mrf.mxu0
        %v3272 = vadd.f32 %v2800, %v3271
        %3273 = vmatmul.bf16.gmra.mxu0 %v2875
        %v3274 = vpop.f32.mrf.mxu0
        %v3275 = vadd.f32 %v2800, %v3274
        %v3276 = vpop.f32.mrf.mxu0
        %v3277 = vadd.f32 %v2800, %v3276
        %3278 = vmatmul.bf16.gmra.mxu0 %v2876
        %v3279 = vpop.f32.mrf.mxu0
        %v3280 = vadd.f32 %v2800, %v3279
        %v3281 = vpop.f32.mrf.mxu0
        %v3282 = vadd.f32 %v2800, %v3281
        %3283 = vmatmul.bf16.gmra.mxu0 %v2877
        %v3284 = vpop.f32.mrf.mxu0
        %v3285 = vadd.f32 %v2800, %v3284
        %v3286 = vpop.f32.mrf.mxu0
        %v3287 = vadd.f32 %v2800, %v3286
        %3288 = vmatmul.bf16.gmra.mxu0 %v2878
        %v3289 = vpop.f32.mrf.mxu0
        %v3290 = vadd.f32 %v2800, %v3289
        %v3291 = vpop.f32.mrf.mxu0
        %v3292 = vadd.f32 %v2800, %v3291
        %3293 = vmatmul.bf16.gmra.mxu0 %v2879
        %v3294 = vpop.f32.mrf.mxu0
        %v3295 = vadd.f32 %v2800, %v3294
        %v3296 = vpop.f32.mrf.mxu0
        %v3297 = vadd.f32 %v2800, %v3296
        %3298 = vmatmul.bf16.gmra.mxu0 %v2880
        %v3299 = vpop.f32.mrf.mxu0
        %v3300 = vadd.f32 %v2800, %v3299
        %v3301 = vpop.f32.mrf.mxu0
        %v3302 = vadd.f32 %v2800, %v3301
        %3303 = vmatmul.bf16.gmra.mxu0 %v2881
        %v3304 = vpop.f32.mrf.mxu0
        %v3305 = vadd.f32 %v2800, %v3304
        %v3306 = vpop.f32.mrf.mxu0
        %v3307 = vadd.f32 %v2800, %v3306
        %3308 = vmatmul.bf16.gmra.mxu0 %v2882
        %v3309 = vpop.f32.mrf.mxu0
        %v3310 = vadd.f32 %v2800, %v3309
        %v3311 = vpop.f32.mrf.mxu0
        %v3312 = vadd.f32 %v2800, %v3311
        %3313 = vmatmul.bf16.gmra.mxu0 %v2883
        %v3314 = vpop.f32.mrf.mxu0
        %v3315 = vadd.f32 %v2800, %v3314
        %v3316 = vpop.f32.mrf.mxu0
        %v3317 = vadd.f32 %v2800, %v3316
        %3318 = vmatmul.bf16.gmra.mxu0 %v2884
        %v3319 = vpop.f32.mrf.mxu0
        %v3320 = vadd.f32 %v2800, %v3319
        %v3321 = vpop.f32.mrf.mxu0
        %v3322 = vadd.f32 %v2800, %v3321
        %3323 = vmatmul.bf16.gmra.mxu0 %v2885
        %v3324 = vpop.f32.mrf.mxu0
        %v3325 = vadd.f32 %v2800, %v3324
        %v3326 = vpop.f32.mrf.mxu0
        %v3327 = vadd.f32 %v2800, %v3326
        %3328 = vdwg.mxu0
        %3329 = vmatpush.bf16.msra.mxu0 %v3029
        %3330 = vmatpush.bf16.msra.mxu0 %v3025
        %3331 = vmatpush.bf16.msra.mxu0 %v3021
        %3332 = vmatpush.bf16.msra.mxu0 %v3017
        %3333 = vmatpush.bf16.msra.mxu0 %v3013
        %3334 = vmatpush.bf16.msra.mxu0 %v3009
        %3335 = vmatpush.bf16.msra.mxu0 %v3005
        %3336 = vmatpush.bf16.msra.mxu0 %v3001
        %3337 = vmatmul.bf16.gmra.mxu0 %v2870
        %v3338 = vpop.f32.mrf.mxu0
        %v3339 = vadd.f32 %v2801, %v3338
        %v3340 = vpop.f32.mrf.mxu0
        %v3341 = vadd.f32 %v2801, %v3340
        %3342 = vmatmul.bf16.gmra.mxu0 %v2871
        %v3343 = vpop.f32.mrf.mxu0
        %v3344 = vadd.f32 %v2801, %v3343
        %v3345 = vpop.f32.mrf.mxu0
        %v3346 = vadd.f32 %v2801, %v3345
        %3347 = vmatmul.bf16.gmra.mxu0 %v2872
        %v3348 = vpop.f32.mrf.mxu0
        %v3349 = vadd.f32 %v2801, %v3348
        %v3350 = vpop.f32.mrf.mxu0
        %v3351 = vadd.f32 %v2801, %v3350
        %3352 = vmatmul.bf16.gmra.mxu0 %v2873
        %v3353 = vpop.f32.mrf.mxu0
        %v3354 = vadd.f32 %v2801, %v3353
        %v3355 = vpop.f32.mrf.mxu0
        %v3356 = vadd.f32 %v2801, %v3355
        %3357 = vmatmul.bf16.gmra.mxu0 %v2874
        %v3358 = vpop.f32.mrf.mxu0
        %v3359 = vadd.f32 %v2801, %v3358
        %v3360 = vpop.f32.mrf.mxu0
        %v3361 = vadd.f32 %v2801, %v3360
        %3362 = vmatmul.bf16.gmra.mxu0 %v2875
        %v3363 = vpop.f32.mrf.mxu0
        %v3364 = vadd.f32 %v2801, %v3363
        %v3365 = vpop.f32.mrf.mxu0
        %v3366 = vadd.f32 %v2801, %v3365
        %3367 = vmatmul.bf16.gmra.mxu0 %v2876
        %v3368 = vpop.f32.mrf.mxu0
        %v3369 = vadd.f32 %v2801, %v3368
        %v3370 = vpop.f32.mrf.mxu0
        %v3371 = vadd.f32 %v2801, %v3370
        %3372 = vmatmul.bf16.gmra.mxu0 %v2877
        %v3373 = vpop.f32.mrf.mxu0
        %v3374 = vadd.f32 %v2801, %v3373
        %v3375 = vpop.f32.mrf.mxu0
        %v3376 = vadd.f32 %v2801, %v3375
        %3377 = vmatmul.bf16.gmra.mxu0 %v2878
        %v3378 = vpop.f32.mrf.mxu0
        %v3379 = vadd.f32 %v2801, %v3378
        %v3380 = vpop.f32.mrf.mxu0
        %v3381 = vadd.f32 %v2801, %v3380
        %3382 = vmatmul.bf16.gmra.mxu0 %v2879
        %v3383 = vpop.f32.mrf.mxu0
        %v3384 = vadd.f32 %v2801, %v3383
        %v3385 = vpop.f32.mrf.mxu0
        %v3386 = vadd.f32 %v2801, %v3385
        %3387 = vmatmul.bf16.gmra.mxu0 %v2880
        %v3388 = vpop.f32.mrf.mxu0
        %v3389 = vadd.f32 %v2801, %v3388
        %v3390 = vpop.f32.mrf.mxu0
        %v3391 = vadd.f32 %v2801, %v3390
        %3392 = vmatmul.bf16.gmra.mxu0 %v2881
        %v3393 = vpop.f32.mrf.mxu0
        %v3394 = vadd.f32 %v2801, %v3393
        %v3395 = vpop.f32.mrf.mxu0
        %v3396 = vadd.f32 %v2801, %v3395
        %3397 = vmatmul.bf16.gmra.mxu0 %v2882
        %v3398 = vpop.f32.mrf.mxu0
        %v3399 = vadd.f32 %v2801, %v3398
        %v3400 = vpop.f32.mrf.mxu0
        %v3401 = vadd.f32 %v2801, %v3400
        %3402 = vmatmul.bf16.gmra.mxu0 %v2883
        %v3403 = vpop.f32.mrf.mxu0
        %v3404 = vadd.f32 %v2801, %v3403
        %v3405 = vpop.f32.mrf.mxu0
        %v3406 = vadd.f32 %v2801, %v3405
        %3407 = vmatmul.bf16.gmra.mxu0 %v2884
        %v3408 = vpop.f32.mrf.mxu0
        %v3409 = vadd.f32 %v2801, %v3408
        %v3410 = vpop.f32.mrf.mxu0
        %v3411 = vadd.f32 %v2801, %v3410
        %3412 = vmatmul.bf16.gmra.mxu0 %v2885
        %v3413 = vpop.f32.mrf.mxu0
        %v3414 = vadd.f32 %v2801, %v3413
        %v3415 = vpop.f32.mrf.mxu0
        %v3416 = vadd.f32 %v2801, %v3415
        %3417 = vdwg.mxu0
        %v3418 = vmax.f32 %v3072, 0.0
        %v3419 = vmax.f32 %v3161, 0.0
        %v3420 = vmax.f32 %v3250, 0.0
        %v3421 = vmax.f32 %v3339, 0.0
        %v3422 = vmax.f32 %v3074, 0.0
        %v3423 = vmax.f32 %v3163, 0.0
        %v3424 = vmax.f32 %v3252, 0.0
        %v3425 = vmax.f32 %v3341, 0.0
        %v3426 = vmax.f32 %v3077, 0.0
        %v3427 = vmax.f32 %v3166, 0.0
        %v3428 = vmax.f32 %v3255, 0.0
        %v3429 = vmax.f32 %v3344, 0.0
        %v3430 = vmax.f32 %v3079, 0.0
        %v3431 = vmax.f32 %v3168, 0.0
        %v3432 = vmax.f32 %v3257, 0.0
        %v3433 = vmax.f32 %v3346, 0.0
        %v3434 = vmax.f32 %v3082, 0.0
        %v3435 = vmax.f32 %v3171, 0.0
        %v3436 = vmax.f32 %v3260, 0.0
        %v3437 = vmax.f32 %v3349, 0.0
        %v3438 = vmax.f32 %v3084, 0.0
        %v3439 = vmax.f32 %v3173, 0.0
        %v3440 = vmax.f32 %v3262, 0.0
        %v3441 = vmax.f32 %v3351, 0.0
        %v3442 = vmax.f32 %v3087, 0.0
        %v3443 = vmax.f32 %v3176, 0.0
        %v3444 = vmax.f32 %v3265, 0.0
        %v3445 = vmax.f32 %v3354, 0.0
        %v3446 = vmax.f32 %v3089, 0.0
        %v3447 = vmax.f32 %v3178, 0.0
        %v3448 = vmax.f32 %v3267, 0.0
        %v3449 = vmax.f32 %v3356, 0.0
        %v3450 = vmax.f32 %v3092, 0.0
        %v3451 = vmax.f32 %v3181, 0.0
        %v3452 = vmax.f32 %v3270, 0.0
        %v3453 = vmax.f32 %v3359, 0.0
        %v3454 = vmax.f32 %v3094, 0.0
        %v3455 = vmax.f32 %v3183, 0.0
        %v3456 = vmax.f32 %v3272, 0.0
        %v3457 = vmax.f32 %v3361, 0.0
        %v3458 = vmax.f32 %v3097, 0.0
        %v3459 = vmax.f32 %v3186, 0.0
        %v3460 = vmax.f32 %v3275, 0.0
        %v3461 = vmax.f32 %v3364, 0.0
        %v3462 = vmax.f32 %v3099, 0.0
        %v3463 = vmax.f32 %v3188, 0.0
        %v3464 = vmax.f32 %v3277, 0.0
        %v3465 = vmax.f32 %v3366, 0.0
        %v3466 = vmax.f32 %v3102, 0.0
        %v3467 = vmax.f32 %v3191, 0.0
        %v3468 = vmax.f32 %v3280, 0.0
        %v3469 = vmax.f32 %v3369, 0.0
        %v3470 = vmax.f32 %v3104, 0.0
        %v3471 = vmax.f32 %v3193, 0.0
        %v3472 = vmax.f32 %v3282, 0.0
        %v3473 = vmax.f32 %v3371, 0.0
        %v3474 = vmax.f32 %v3107, 0.0
        %v3475 = vmax.f32 %v3196, 0.0
        %v3476 = vmax.f32 %v3285, 0.0
        %v3477 = vmax.f32 %v3374, 0.0
        %v3478 = vmax.f32 %v3109, 0.0
        %v3479 = vmax.f32 %v3198, 0.0
        %v3480 = vmax.f32 %v3287, 0.0
        %v3481 = vmax.f32 %v3376, 0.0
        %v3482 = vmax.f32 %v3112, 0.0
        %v3483 = vmax.f32 %v3201, 0.0
        %v3484 = vmax.f32 %v3290, 0.0
        %v3485 = vmax.f32 %v3379, 0.0
        %v3486 = vmax.f32 %v3114, 0.0
        %v3487 = vmax.f32 %v3203, 0.0
        %v3488 = vmax.f32 %v3292, 0.0
        %v3489 = vmax.f32 %v3381, 0.0
        %v3490 = vmax.f32 %v3117, 0.0
        %v3491 = vmax.f32 %v3206, 0.0
        %v3492 = vmax.f32 %v3295, 0.0
        %v3493 = vmax.f32 %v3384, 0.0
        %v3494 = vmax.f32 %v3119, 0.0
        %v3495 = vmax.f32 %v3208, 0.0
        %v3496 = vmax.f32 %v3297, 0.0
        %v3497 = vmax.f32 %v3386, 0.0
        %v3498 = vmax.f32 %v3122, 0.0
        %v3499 = vmax.f32 %v3211, 0.0
        %v3500 = vmax.f32 %v3300, 0.0
        %v3501 = vmax.f32 %v3389, 0.0
        %v3502 = vmax.f32 %v3124, 0.0
        %v3503 = vmax.f32 %v3213, 0.0
        %v3504 = vmax.f32 %v3302, 0.0
        %v3505 = vmax.f32 %v3391, 0.0
        %v3506 = vmax.f32 %v3127, 0.0
        %v3507 = vmax.f32 %v3216, 0.0
        %v3508 = vmax.f32 %v3305, 0.0
        %v3509 = vmax.f32 %v3394, 0.0
        %v3510 = vmax.f32 %v3129, 0.0
        %v3511 = vmax.f32 %v3218, 0.0
        %v3512 = vmax.f32 %v3307, 0.0
        %v3513 = vmax.f32 %v3396, 0.0
        %v3514 = vmax.f32 %v3132, 0.0
        %v3515 = vmax.f32 %v3221, 0.0
        %v3516 = vmax.f32 %v3310, 0.0
        %v3517 = vmax.f32 %v3399, 0.0
        %v3518 = vmax.f32 %v3134, 0.0
        %v3519 = vmax.f32 %v3223, 0.0
        %v3520 = vmax.f32 %v3312, 0.0
        %v3521 = vmax.f32 %v3401, 0.0
        %v3522 = vmax.f32 %v3137, 0.0
        %v3523 = vmax.f32 %v3226, 0.0
        %v3524 = vmax.f32 %v3315, 0.0
        %v3525 = vmax.f32 %v3404, 0.0
        %v3526 = vmax.f32 %v3139, 0.0
        %v3527 = vmax.f32 %v3228, 0.0
        %v3528 = vmax.f32 %v3317, 0.0
        %v3529 = vmax.f32 %v3406, 0.0
        %v3530 = vmax.f32 %v3142, 0.0
        %v3531 = vmax.f32 %v3231, 0.0
        %v3532 = vmax.f32 %v3320, 0.0
        %v3533 = vmax.f32 %v3409, 0.0
        %v3534 = vmax.f32 %v3144, 0.0
        %v3535 = vmax.f32 %v3233, 0.0
        %v3536 = vmax.f32 %v3322, 0.0
        %v3537 = vmax.f32 %v3411, 0.0
        %v3538 = vmax.f32 %v3147, 0.0
        %v3539 = vmax.f32 %v3236, 0.0
        %v3540 = vmax.f32 %v3325, 0.0
        %v3541 = vmax.f32 %v3414, 0.0
        %v3542 = vmax.f32 %v3149, 0.0
        %v3543 = vmax.f32 %v3238, 0.0
        %v3544 = vmax.f32 %v3327, 0.0
        %v3545 = vmax.f32 %v3416, 0.0
        %v3546 = vpack.c.bf16 %v3422, %v3418
        %v3547 = vpack.c.bf16 %v3423, %v3419
        %v3548 = vpack.c.bf16 %v3424, %v3420
        %v3549 = vpack.c.bf16 %v3425, %v3421
        %v3550 = vpack.c.bf16 %v3430, %v3426
        %v3551 = vpack.c.bf16 %v3431, %v3427
        %v3552 = vpack.c.bf16 %v3432, %v3428
        %v3553 = vpack.c.bf16 %v3433, %v3429
        %v3554 = vpack.c.bf16 %v3438, %v3434
        %v3555 = vpack.c.bf16 %v3439, %v3435
        %v3556 = vpack.c.bf16 %v3440, %v3436
        %v3557 = vpack.c.bf16 %v3441, %v3437
        %v3558 = vpack.c.bf16 %v3446, %v3442
        %v3559 = vpack.c.bf16 %v3447, %v3443
        %v3560 = vpack.c.bf16 %v3448, %v3444
        %v3561 = vpack.c.bf16 %v3449, %v3445
        %v3562 = vpack.c.bf16 %v3454, %v3450
        %v3563 = vpack.c.bf16 %v3455, %v3451
        %v3564 = vpack.c.bf16 %v3456, %v3452
        %v3565 = vpack.c.bf16 %v3457, %v3453
        %v3566 = vpack.c.bf16 %v3462, %v3458
        %v3567 = vpack.c.bf16 %v3463, %v3459
        %v3568 = vpack.c.bf16 %v3464, %v3460
        %v3569 = vpack.c.bf16 %v3465, %v3461
        %v3570 = vpack.c.bf16 %v3470, %v3466
        %v3571 = vpack.c.bf16 %v3471, %v3467
        %v3572 = vpack.c.bf16 %v3472, %v3468
        %v3573 = vpack.c.bf16 %v3473, %v3469
        %v3574 = vpack.c.bf16 %v3478, %v3474
        %v3575 = vpack.c.bf16 %v3479, %v3475
        %v3576 = vpack.c.bf16 %v3480, %v3476
        %v3577 = vpack.c.bf16 %v3481, %v3477
        %v3578 = vpack.c.bf16 %v3486, %v3482
        %v3579 = vpack.c.bf16 %v3487, %v3483
        %v3580 = vpack.c.bf16 %v3488, %v3484
        %v3581 = vpack.c.bf16 %v3489, %v3485
        %v3582 = vpack.c.bf16 %v3494, %v3490
        %v3583 = vpack.c.bf16 %v3495, %v3491
        %v3584 = vpack.c.bf16 %v3496, %v3492
        %v3585 = vpack.c.bf16 %v3497, %v3493
        %v3586 = vpack.c.bf16 %v3502, %v3498
        %v3587 = vpack.c.bf16 %v3503, %v3499
        %v3588 = vpack.c.bf16 %v3504, %v3500
        %v3589 = vpack.c.bf16 %v3505, %v3501
        %v3590 = vpack.c.bf16 %v3510, %v3506
        %v3591 = vpack.c.bf16 %v3511, %v3507
        %v3592 = vpack.c.bf16 %v3512, %v3508
        %v3593 = vpack.c.bf16 %v3513, %v3509
        %v3594 = vpack.c.bf16 %v3518, %v3514
        %v3595 = vpack.c.bf16 %v3519, %v3515
        %v3596 = vpack.c.bf16 %v3520, %v3516
        %v3597 = vpack.c.bf16 %v3521, %v3517
        %v3598 = vpack.c.bf16 %v3526, %v3522
        %v3599 = vpack.c.bf16 %v3527, %v3523
        %v3600 = vpack.c.bf16 %v3528, %v3524
        %v3601 = vpack.c.bf16 %v3529, %v3525
        %v3602 = vpack.c.bf16 %v3534, %v3530
        %v3603 = vpack.c.bf16 %v3535, %v3531
        %v3604 = vpack.c.bf16 %v3536, %v3532
        %v3605 = vpack.c.bf16 %v3537, %v3533
        %v3606 = vpack.c.bf16 %v3542, %v3538
        %v3607 = vpack.c.bf16 %v3543, %v3539
        %v3608 = vpack.c.bf16 %v3544, %v3540
        %v3609 = vpack.c.bf16 %v3545, %v3541
        %v3610 = vld [vmem:[%s15] sm:$0xf]
        %v3611 = vld [vmem:[%s15 + $0x4] sm:$0xf]
        %v3612 = vld [vmem:[%s15 + $0x8] sm:$0xf]
        %v3613 = vld [vmem:[%s15 + $0xc] sm:$0xf]
        %v3614 = vld [vmem:[%s15 + $0x10] sm:$0xf]
        %v3615 = vld [vmem:[%s15 + $0x14] sm:$0xf]
        %v3616 = vld [vmem:[%s15 + $0x18] sm:$0xf]
        %v3617 = vld [vmem:[%s15 + $0x1c] sm:$0xf]
        %v3618 = vld [vmem:[%s15 + $0x20] sm:$0xf]
        %v3619 = vld [vmem:[%s15 + $0x24] sm:$0xf]
        %v3620 = vld [vmem:[%s15 + $0x28] sm:$0xf]
        %v3621 = vld [vmem:[%s15 + $0x2c] sm:$0xf]
        %v3622 = vld [vmem:[%s15 + $0x30] sm:$0xf]
        %v3623 = vld [vmem:[%s15 + $0x34] sm:$0xf]
        %v3624 = vld [vmem:[%s15 + $0x38] sm:$0xf]
        %v3625 = vld [vmem:[%s15 + $0x3c] sm:$0xf]
        %v3626 = vld [vmem:[%s15 + $0x40] sm:$0xf]
        %v3627 = vld [vmem:[%s15 + $0x44] sm:$0xf]
        %v3628 = vld [vmem:[%s15 + $0x48] sm:$0xf]
        %v3629 = vld [vmem:[%s15 + $0x4c] sm:$0xf]
        %v3630 = vld [vmem:[%s15 + $0x50] sm:$0xf]
        %v3631 = vld [vmem:[%s15 + $0x54] sm:$0xf]
        %v3632 = vld [vmem:[%s15 + $0x58] sm:$0xf]
        %v3633 = vld [vmem:[%s15 + $0x5c] sm:$0xf]
        %v3634 = vld [vmem:[%s15 + $0x60] sm:$0xf]
        %v3635 = vld [vmem:[%s15 + $0x64] sm:$0xf]
        %v3636 = vld [vmem:[%s15 + $0x68] sm:$0xf]
        %v3637 = vld [vmem:[%s15 + $0x6c] sm:$0xf]
        %v3638 = vld [vmem:[%s15 + $0x70] sm:$0xf]
        %v3639 = vld [vmem:[%s15 + $0x74] sm:$0xf]
        %v3640 = vld [vmem:[%s15 + $0x78] sm:$0xf]
        %v3641 = vld [vmem:[%s15 + $0x7c] sm:$0xf]
        %v3642 = vld [vmem:[%s15 + $0x80] sm:$0xf]
        %v3643 = vld [vmem:[%s15 + $0x84] sm:$0xf]
        %v3644 = vld [vmem:[%s15 + $0x88] sm:$0xf]
        %v3645 = vld [vmem:[%s15 + $0x8c] sm:$0xf]
        %v3646 = vld [vmem:[%s15 + $0x90] sm:$0xf]
        %v3647 = vld [vmem:[%s15 + $0x94] sm:$0xf]
        %v3648 = vld [vmem:[%s15 + $0x98] sm:$0xf]
        %v3649 = vld [vmem:[%s15 + $0x9c] sm:$0xf]
        %v3650 = vld [vmem:[%s15 + $0xa0] sm:$0xf]
        %v3651 = vld [vmem:[%s15 + $0xa4] sm:$0xf]
        %v3652 = vld [vmem:[%s15 + $0xa8] sm:$0xf]
        %v3653 = vld [vmem:[%s15 + $0xac] sm:$0xf]
        %v3654 = vld [vmem:[%s15 + $0xb0] sm:$0xf]
        %v3655 = vld [vmem:[%s15 + $0xb4] sm:$0xf]
        %v3656 = vld [vmem:[%s15 + $0xb8] sm:$0xf]
        %v3657 = vld [vmem:[%s15 + $0xbc] sm:$0xf]
        %v3658 = vld [vmem:[%s15 + $0xc0] sm:$0xf]
        %v3659 = vld [vmem:[%s15 + $0xc4] sm:$0xf]
        %v3660 = vld [vmem:[%s15 + $0xc8] sm:$0xf]
        %v3661 = vld [vmem:[%s15 + $0xcc] sm:$0xf]
        %v3662 = vld [vmem:[%s15 + $0xd0] sm:$0xf]
        %v3663 = vld [vmem:[%s15 + $0xd4] sm:$0xf]
        %v3664 = vld [vmem:[%s15 + $0xd8] sm:$0xf]
        %v3665 = vld [vmem:[%s15 + $0xdc] sm:$0xf]
        %v3666 = vld [vmem:[%s15 + $0xe0] sm:$0xf]
        %v3667 = vld [vmem:[%s15 + $0xe4] sm:$0xf]
        %v3668 = vld [vmem:[%s15 + $0xe8] sm:$0xf]
        %v3669 = vld [vmem:[%s15 + $0xec] sm:$0xf]
        %v3670 = vld [vmem:[%s15 + $0xf0] sm:$0xf]
        %v3671 = vld [vmem:[%s15 + $0xf4] sm:$0xf]
        %v3672 = vld [vmem:[%s15 + $0xf8] sm:$0xf]
        %v3673 = vld [vmem:[%s15 + $0xfc] sm:$0xf]
        %v3674 = vld [vmem:[%s16] sm:$0x1]
        %v3676 = vperm.slane %v3674, 0
        %v3742 = vunpack.c.l.b16 %v3610
        %v3743 = vunpack.c.l.b16 %v3611
        %v3744 = vunpack.c.l.b16 %v3612
        %v3745 = vunpack.c.l.b16 %v3613
        %v3746 = vunpack.c.l.b16 %v3614
        %v3747 = vunpack.c.l.b16 %v3615
        %v3748 = vunpack.c.l.b16 %v3616
        %v3749 = vunpack.c.l.b16 %v3617
        %v3750 = vunpack.c.l.b16 %v3618
        %v3751 = vunpack.c.l.b16 %v3619
        %v3752 = vunpack.c.l.b16 %v3620
        %v3753 = vunpack.c.l.b16 %v3621
        %v3754 = vunpack.c.l.b16 %v3622
        %v3755 = vunpack.c.l.b16 %v3623
        %v3756 = vunpack.c.l.b16 %v3624
        %v3757 = vunpack.c.l.b16 %v3625
        %v3758 = vunpack.c.l.b16 %v3626
        %v3759 = vunpack.c.l.b16 %v3627
        %v3760 = vunpack.c.l.b16 %v3628
        %v3761 = vunpack.c.l.b16 %v3629
        %v3762 = vunpack.c.l.b16 %v3630
        %v3763 = vunpack.c.l.b16 %v3631
        %v3764 = vunpack.c.l.b16 %v3632
        %v3765 = vunpack.c.l.b16 %v3633
        %v3766 = vunpack.c.l.b16 %v3634
        %v3767 = vunpack.c.l.b16 %v3635
        %v3768 = vunpack.c.l.b16 %v3636
        %v3769 = vunpack.c.l.b16 %v3637
        %v3770 = vunpack.c.l.b16 %v3638
        %v3771 = vunpack.c.l.b16 %v3639
        %v3772 = vunpack.c.l.b16 %v3640
        %v3773 = vunpack.c.l.b16 %v3641
        %v3774 = vunpack.c.l.b16 %v3642
        %v3775 = vunpack.c.l.b16 %v3643
        %v3776 = vunpack.c.l.b16 %v3644
        %v3777 = vunpack.c.l.b16 %v3645
        %v3778 = vunpack.c.l.b16 %v3646
        %v3779 = vunpack.c.l.b16 %v3647
        %v3780 = vunpack.c.l.b16 %v3648
        %v3781 = vunpack.c.l.b16 %v3649
        %v3782 = vunpack.c.l.b16 %v3650
        %v3783 = vunpack.c.l.b16 %v3651
        %v3784 = vunpack.c.l.b16 %v3652
        %v3785 = vunpack.c.l.b16 %v3653
        %v3786 = vunpack.c.l.b16 %v3654
        %v3787 = vunpack.c.l.b16 %v3655
        %v3788 = vunpack.c.l.b16 %v3656
        %v3789 = vunpack.c.l.b16 %v3657
        %v3790 = vunpack.c.l.b16 %v3658
        %v3791 = vunpack.c.l.b16 %v3659
        %v3792 = vunpack.c.l.b16 %v3660
        %v3793 = vunpack.c.l.b16 %v3661
        %v3794 = vunpack.c.l.b16 %v3662
        %v3795 = vunpack.c.l.b16 %v3663
        %v3796 = vunpack.c.l.b16 %v3664
        %v3797 = vunpack.c.l.b16 %v3665
        %v3798 = vunpack.c.l.b16 %v3666
        %v3799 = vunpack.c.l.b16 %v3667
        %v3800 = vunpack.c.l.b16 %v3668
        %v3801 = vunpack.c.l.b16 %v3669
        %v3802 = vunpack.c.l.b16 %v3670
        %v3803 = vunpack.c.l.b16 %v3671
        %v3804 = vunpack.c.l.b16 %v3672
        %v3805 = vunpack.c.l.b16 %v3673
        %v3806 = vpack.c.b16 %v3743, %v3742
        %v3807 = vpack.c.b16 %v3745, %v3744
        %v3808 = vpack.c.b16 %v3747, %v3746
        %v3809 = vpack.c.b16 %v3749, %v3748
        %v3810 = vpack.c.b16 %v3751, %v3750
        %v3811 = vpack.c.b16 %v3753, %v3752
        %v3812 = vpack.c.b16 %v3755, %v3754
        %v3813 = vpack.c.b16 %v3757, %v3756
        %v3814 = vpack.c.b16 %v3759, %v3758
        %v3815 = vpack.c.b16 %v3761, %v3760
        %v3816 = vpack.c.b16 %v3763, %v3762
        %v3817 = vpack.c.b16 %v3765, %v3764
        %v3818 = vpack.c.b16 %v3767, %v3766
        %v3819 = vpack.c.b16 %v3769, %v3768
        %v3820 = vpack.c.b16 %v3771, %v3770
        %v3821 = vpack.c.b16 %v3773, %v3772
        %v3822 = vpack.c.b16 %v3775, %v3774
        %v3823 = vpack.c.b16 %v3777, %v3776
        %v3824 = vpack.c.b16 %v3779, %v3778
        %v3825 = vpack.c.b16 %v3781, %v3780
        %v3826 = vpack.c.b16 %v3783, %v3782
        %v3827 = vpack.c.b16 %v3785, %v3784
        %v3828 = vpack.c.b16 %v3787, %v3786
        %v3829 = vpack.c.b16 %v3789, %v3788
        %v3830 = vpack.c.b16 %v3791, %v3790
        %v3831 = vpack.c.b16 %v3793, %v3792
        %v3832 = vpack.c.b16 %v3795, %v3794
        %v3833 = vpack.c.b16 %v3797, %v3796
        %v3834 = vpack.c.b16 %v3799, %v3798
        %v3835 = vpack.c.b16 %v3801, %v3800
        %v3836 = vpack.c.b16 %v3803, %v3802
        %v3837 = vpack.c.b16 %v3805, %v3804
        %3870 = vmatpush.bf16.msra.mxu0 %v3813
        %3871 = vmatpush.bf16.msra.mxu0 %v3812
        %3872 = vmatpush.bf16.msra.mxu0 %v3811
        %3873 = vmatpush.bf16.msra.mxu0 %v3810
        %3874 = vmatpush.bf16.msra.mxu0 %v3809
        %3875 = vmatpush.bf16.msra.mxu0 %v3808
        %3876 = vmatpush.bf16.msra.mxu0 %v3807
        %3877 = vmatpush.bf16.msra.mxu0 %v3806
        %3878 = vmatmul.bf16.gmra.mxu0 %v3546
        %v3879 = vpop.f32.mrf.mxu0
        %v3880 = vadd.f32 %v3676, %v3879
        %v3881 = vpop.f32.mrf.mxu0
        %v3882 = vadd.f32 %v3676, %v3881
        %3883 = vmatmul.bf16.gmra.mxu0 %v3550
        %v3884 = vpop.f32.mrf.mxu0
        %v3885 = vadd.f32 %v3676, %v3884
        %v3886 = vpop.f32.mrf.mxu0
        %v3887 = vadd.f32 %v3676, %v3886
        %3888 = vmatmul.bf16.gmra.mxu0 %v3554
        %v3889 = vpop.f32.mrf.mxu0
        %v3890 = vadd.f32 %v3676, %v3889
        %v3891 = vpop.f32.mrf.mxu0
        %v3892 = vadd.f32 %v3676, %v3891
        %3893 = vmatmul.bf16.gmra.mxu0 %v3558
        %v3894 = vpop.f32.mrf.mxu0
        %v3895 = vadd.f32 %v3676, %v3894
        %v3896 = vpop.f32.mrf.mxu0
        %v3897 = vadd.f32 %v3676, %v3896
        %3898 = vmatmul.bf16.gmra.mxu0 %v3562
        %v3899 = vpop.f32.mrf.mxu0
        %v3900 = vadd.f32 %v3676, %v3899
        %v3901 = vpop.f32.mrf.mxu0
        %v3902 = vadd.f32 %v3676, %v3901
        %3903 = vmatmul.bf16.gmra.mxu0 %v3566
        %v3904 = vpop.f32.mrf.mxu0
        %v3905 = vadd.f32 %v3676, %v3904
        %v3906 = vpop.f32.mrf.mxu0
        %v3907 = vadd.f32 %v3676, %v3906
        %3908 = vmatmul.bf16.gmra.mxu0 %v3570
        %v3909 = vpop.f32.mrf.mxu0
        %v3910 = vadd.f32 %v3676, %v3909
        %v3911 = vpop.f32.mrf.mxu0
        %v3912 = vadd.f32 %v3676, %v3911
        %3913 = vmatmul.bf16.gmra.mxu0 %v3574
        %v3914 = vpop.f32.mrf.mxu0
        %v3915 = vadd.f32 %v3676, %v3914
        %v3916 = vpop.f32.mrf.mxu0
        %v3917 = vadd.f32 %v3676, %v3916
        %3918 = vmatmul.bf16.gmra.mxu0 %v3578
        %v3919 = vpop.f32.mrf.mxu0
        %v3920 = vadd.f32 %v3676, %v3919
        %v3921 = vpop.f32.mrf.mxu0
        %v3922 = vadd.f32 %v3676, %v3921
        %3923 = vmatmul.bf16.gmra.mxu0 %v3582
        %v3924 = vpop.f32.mrf.mxu0
        %v3925 = vadd.f32 %v3676, %v3924
        %v3926 = vpop.f32.mrf.mxu0
        %v3927 = vadd.f32 %v3676, %v3926
        %3928 = vmatmul.bf16.gmra.mxu0 %v3586
        %v3929 = vpop.f32.mrf.mxu0
        %v3930 = vadd.f32 %v3676, %v3929
        %v3931 = vpop.f32.mrf.mxu0
        %v3932 = vadd.f32 %v3676, %v3931
        %3933 = vmatmul.bf16.gmra.mxu0 %v3590
        %v3934 = vpop.f32.mrf.mxu0
        %v3935 = vadd.f32 %v3676, %v3934
        %v3936 = vpop.f32.mrf.mxu0
        %v3937 = vadd.f32 %v3676, %v3936
        %3938 = vmatmul.bf16.gmra.mxu0 %v3594
        %v3939 = vpop.f32.mrf.mxu0
        %v3940 = vadd.f32 %v3676, %v3939
        %v3941 = vpop.f32.mrf.mxu0
        %v3942 = vadd.f32 %v3676, %v3941
        %3943 = vmatmul.bf16.gmra.mxu0 %v3598
        %v3944 = vpop.f32.mrf.mxu0
        %v3945 = vadd.f32 %v3676, %v3944
        %v3946 = vpop.f32.mrf.mxu0
        %v3947 = vadd.f32 %v3676, %v3946
        %3948 = vmatmul.bf16.gmra.mxu0 %v3602
        %v3949 = vpop.f32.mrf.mxu0
        %v3950 = vadd.f32 %v3676, %v3949
        %v3951 = vpop.f32.mrf.mxu0
        %v3952 = vadd.f32 %v3676, %v3951
        %3953 = vmatmul.bf16.gmra.mxu0 %v3606
        %v3954 = vpop.f32.mrf.mxu0
        %v3955 = vadd.f32 %v3676, %v3954
        %v3956 = vpop.f32.mrf.mxu0
        %v3957 = vadd.f32 %v3676, %v3956
        %3958 = vdwg.mxu0
        %3959 = vmatpush.bf16.msra.mxu0 %v3821
        %3960 = vmatpush.bf16.msra.mxu0 %v3820
        %3961 = vmatpush.bf16.msra.mxu0 %v3819
        %3962 = vmatpush.bf16.msra.mxu0 %v3818
        %3963 = vmatpush.bf16.msra.mxu0 %v3817
        %3964 = vmatpush.bf16.msra.mxu0 %v3816
        %3965 = vmatpush.bf16.msra.mxu0 %v3815
        %3966 = vmatpush.bf16.msra.mxu0 %v3814
        %3967 = vmatmul.bf16.gmra.mxu0 %v3547
        %v3968 = vpop.f32.mrf.mxu0
        %v3969 = vadd.f32 %v3880, %v3968
        %v3970 = vpop.f32.mrf.mxu0
        %v3971 = vadd.f32 %v3882, %v3970
        %3972 = vmatmul.bf16.gmra.mxu0 %v3551
        %v3973 = vpop.f32.mrf.mxu0
        %v3974 = vadd.f32 %v3885, %v3973
        %v3975 = vpop.f32.mrf.mxu0
        %v3976 = vadd.f32 %v3887, %v3975
        %3977 = vmatmul.bf16.gmra.mxu0 %v3555
        %v3978 = vpop.f32.mrf.mxu0
        %v3979 = vadd.f32 %v3890, %v3978
        %v3980 = vpop.f32.mrf.mxu0
        %v3981 = vadd.f32 %v3892, %v3980
        %3982 = vmatmul.bf16.gmra.mxu0 %v3559
        %v3983 = vpop.f32.mrf.mxu0
        %v3984 = vadd.f32 %v3895, %v3983
        %v3985 = vpop.f32.mrf.mxu0
        %v3986 = vadd.f32 %v3897, %v3985
        %3987 = vmatmul.bf16.gmra.mxu0 %v3563
        %v3988 = vpop.f32.mrf.mxu0
        %v3989 = vadd.f32 %v3900, %v3988
        %v3990 = vpop.f32.mrf.mxu0
        %v3991 = vadd.f32 %v3902, %v3990
        %3992 = vmatmul.bf16.gmra.mxu0 %v3567
        %v3993 = vpop.f32.mrf.mxu0
        %v3994 = vadd.f32 %v3905, %v3993
        %v3995 = vpop.f32.mrf.mxu0
        %v3996 = vadd.f32 %v3907, %v3995
        %3997 = vmatmul.bf16.gmra.mxu0 %v3571
        %v3998 = vpop.f32.mrf.mxu0
        %v3999 = vadd.f32 %v3910, %v3998
        %v4000 = vpop.f32.mrf.mxu0
        %v4001 = vadd.f32 %v3912, %v4000
        %4002 = vmatmul.bf16.gmra.mxu0 %v3575
        %v4003 = vpop.f32.mrf.mxu0
        %v4004 = vadd.f32 %v3915, %v4003
        %v4005 = vpop.f32.mrf.mxu0
        %v4006 = vadd.f32 %v3917, %v4005
        %4007 = vmatmul.bf16.gmra.mxu0 %v3579
        %v4008 = vpop.f32.mrf.mxu0
        %v4009 = vadd.f32 %v3920, %v4008
        %v4010 = vpop.f32.mrf.mxu0
        %v4011 = vadd.f32 %v3922, %v4010
        %4012 = vmatmul.bf16.gmra.mxu0 %v3583
        %v4013 = vpop.f32.mrf.mxu0
        %v4014 = vadd.f32 %v3925, %v4013
        %v4015 = vpop.f32.mrf.mxu0
        %v4016 = vadd.f32 %v3927, %v4015
        %4017 = vmatmul.bf16.gmra.mxu0 %v3587
        %v4018 = vpop.f32.mrf.mxu0
        %v4019 = vadd.f32 %v3930, %v4018
        %v4020 = vpop.f32.mrf.mxu0
        %v4021 = vadd.f32 %v3932, %v4020
        %4022 = vmatmul.bf16.gmra.mxu0 %v3591
        %v4023 = vpop.f32.mrf.mxu0
        %v4024 = vadd.f32 %v3935, %v4023
        %v4025 = vpop.f32.mrf.mxu0
        %v4026 = vadd.f32 %v3937, %v4025
        %4027 = vmatmul.bf16.gmra.mxu0 %v3595
        %v4028 = vpop.f32.mrf.mxu0
        %v4029 = vadd.f32 %v3940, %v4028
        %v4030 = vpop.f32.mrf.mxu0
        %v4031 = vadd.f32 %v3942, %v4030
        %4032 = vmatmul.bf16.gmra.mxu0 %v3599
        %v4033 = vpop.f32.mrf.mxu0
        %v4034 = vadd.f32 %v3945, %v4033
        %v4035 = vpop.f32.mrf.mxu0
        %v4036 = vadd.f32 %v3947, %v4035
        %4037 = vmatmul.bf16.gmra.mxu0 %v3603
        %v4038 = vpop.f32.mrf.mxu0
        %v4039 = vadd.f32 %v3950, %v4038
        %v4040 = vpop.f32.mrf.mxu0
        %v4041 = vadd.f32 %v3952, %v4040
        %4042 = vmatmul.bf16.gmra.mxu0 %v3607
        %v4043 = vpop.f32.mrf.mxu0
        %v4044 = vadd.f32 %v3955, %v4043
        %v4045 = vpop.f32.mrf.mxu0
        %v4046 = vadd.f32 %v3957, %v4045
        %4047 = vdwg.mxu0
        %4048 = vmatpush.bf16.msra.mxu0 %v3829
        %4049 = vmatpush.bf16.msra.mxu0 %v3828
        %4050 = vmatpush.bf16.msra.mxu0 %v3827
        %4051 = vmatpush.bf16.msra.mxu0 %v3826
        %4052 = vmatpush.bf16.msra.mxu0 %v3825
        %4053 = vmatpush.bf16.msra.mxu0 %v3824
        %4054 = vmatpush.bf16.msra.mxu0 %v3823
        %4055 = vmatpush.bf16.msra.mxu0 %v3822
        %4056 = vmatmul.bf16.gmra.mxu0 %v3548
        %v4057 = vpop.f32.mrf.mxu0
        %v4058 = vadd.f32 %v3969, %v4057
        %v4059 = vpop.f32.mrf.mxu0
        %v4060 = vadd.f32 %v3971, %v4059
        %4061 = vmatmul.bf16.gmra.mxu0 %v3552
        %v4062 = vpop.f32.mrf.mxu0
        %v4063 = vadd.f32 %v3974, %v4062
        %v4064 = vpop.f32.mrf.mxu0
        %v4065 = vadd.f32 %v3976, %v4064
        %4066 = vmatmul.bf16.gmra.mxu0 %v3556
        %v4067 = vpop.f32.mrf.mxu0
        %v4068 = vadd.f32 %v3979, %v4067
        %v4069 = vpop.f32.mrf.mxu0
        %v4070 = vadd.f32 %v3981, %v4069
        %4071 = vmatmul.bf16.gmra.mxu0 %v3560
        %v4072 = vpop.f32.mrf.mxu0
        %v4073 = vadd.f32 %v3984, %v4072
        %v4074 = vpop.f32.mrf.mxu0
        %v4075 = vadd.f32 %v3986, %v4074
        %4076 = vmatmul.bf16.gmra.mxu0 %v3564
        %v4077 = vpop.f32.mrf.mxu0
        %v4078 = vadd.f32 %v3989, %v4077
        %v4079 = vpop.f32.mrf.mxu0
        %v4080 = vadd.f32 %v3991, %v4079
        %4081 = vmatmul.bf16.gmra.mxu0 %v3568
        %v4082 = vpop.f32.mrf.mxu0
        %v4083 = vadd.f32 %v3994, %v4082
        %v4084 = vpop.f32.mrf.mxu0
        %v4085 = vadd.f32 %v3996, %v4084
        %4086 = vmatmul.bf16.gmra.mxu0 %v3572
        %v4087 = vpop.f32.mrf.mxu0
        %v4088 = vadd.f32 %v3999, %v4087
        %v4089 = vpop.f32.mrf.mxu0
        %v4090 = vadd.f32 %v4001, %v4089
        %4091 = vmatmul.bf16.gmra.mxu0 %v3576
        %v4092 = vpop.f32.mrf.mxu0
        %v4093 = vadd.f32 %v4004, %v4092
        %v4094 = vpop.f32.mrf.mxu0
        %v4095 = vadd.f32 %v4006, %v4094
        %4096 = vmatmul.bf16.gmra.mxu0 %v3580
        %v4097 = vpop.f32.mrf.mxu0
        %v4098 = vadd.f32 %v4009, %v4097
        %v4099 = vpop.f32.mrf.mxu0
        %v4100 = vadd.f32 %v4011, %v4099
        %4101 = vmatmul.bf16.gmra.mxu0 %v3584
        %v4102 = vpop.f32.mrf.mxu0
        %v4103 = vadd.f32 %v4014, %v4102
        %v4104 = vpop.f32.mrf.mxu0
        %v4105 = vadd.f32 %v4016, %v4104
        %4106 = vmatmul.bf16.gmra.mxu0 %v3588
        %v4107 = vpop.f32.mrf.mxu0
        %v4108 = vadd.f32 %v4019, %v4107
        %v4109 = vpop.f32.mrf.mxu0
        %v4110 = vadd.f32 %v4021, %v4109
        %4111 = vmatmul.bf16.gmra.mxu0 %v3592
        %v4112 = vpop.f32.mrf.mxu0
        %v4113 = vadd.f32 %v4024, %v4112
        %v4114 = vpop.f32.mrf.mxu0
        %v4115 = vadd.f32 %v4026, %v4114
        %4116 = vmatmul.bf16.gmra.mxu0 %v3596
        %v4117 = vpop.f32.mrf.mxu0
        %v4118 = vadd.f32 %v4029, %v4117
        %v4119 = vpop.f32.mrf.mxu0
        %v4120 = vadd.f32 %v4031, %v4119
        %4121 = vmatmul.bf16.gmra.mxu0 %v3600
        %v4122 = vpop.f32.mrf.mxu0
        %v4123 = vadd.f32 %v4034, %v4122
        %v4124 = vpop.f32.mrf.mxu0
        %v4125 = vadd.f32 %v4036, %v4124
        %4126 = vmatmul.bf16.gmra.mxu0 %v3604
        %v4127 = vpop.f32.mrf.mxu0
        %v4128 = vadd.f32 %v4039, %v4127
        %v4129 = vpop.f32.mrf.mxu0
        %v4130 = vadd.f32 %v4041, %v4129
        %4131 = vmatmul.bf16.gmra.mxu0 %v3608
        %v4132 = vpop.f32.mrf.mxu0
        %v4133 = vadd.f32 %v4044, %v4132
        %v4134 = vpop.f32.mrf.mxu0
        %v4135 = vadd.f32 %v4046, %v4134
        %4136 = vdwg.mxu0
        %4137 = vmatpush.bf16.msra.mxu0 %v3837
        %4138 = vmatpush.bf16.msra.mxu0 %v3836
        %4139 = vmatpush.bf16.msra.mxu0 %v3835
        %4140 = vmatpush.bf16.msra.mxu0 %v3834
        %4141 = vmatpush.bf16.msra.mxu0 %v3833
        %4142 = vmatpush.bf16.msra.mxu0 %v3832
        %4143 = vmatpush.bf16.msra.mxu0 %v3831
        %4144 = vmatpush.bf16.msra.mxu0 %v3830
        %4145 = vmatmul.bf16.gmra.mxu0 %v3549
        %v4146 = vpop.f32.mrf.mxu0
        %v4147 = vadd.f32 %v4058, %v4146
        %v4148 = vpop.f32.mrf.mxu0
        %v4149 = vadd.f32 %v4060, %v4148
        %4150 = vmatmul.bf16.gmra.mxu0 %v3553
        %v4151 = vpop.f32.mrf.mxu0
        %v4152 = vadd.f32 %v4063, %v4151
        %v4153 = vpop.f32.mrf.mxu0
        %v4154 = vadd.f32 %v4065, %v4153
        %4155 = vmatmul.bf16.gmra.mxu0 %v3557
        %v4156 = vpop.f32.mrf.mxu0
        %v4157 = vadd.f32 %v4068, %v4156
        %v4158 = vpop.f32.mrf.mxu0
        %v4159 = vadd.f32 %v4070, %v4158
        %4160 = vmatmul.bf16.gmra.mxu0 %v3561
        %v4161 = vpop.f32.mrf.mxu0
        %v4162 = vadd.f32 %v4073, %v4161
        %v4163 = vpop.f32.mrf.mxu0
        %v4164 = vadd.f32 %v4075, %v4163
        %4165 = vmatmul.bf16.gmra.mxu0 %v3565
        %v4166 = vpop.f32.mrf.mxu0
        %v4167 = vadd.f32 %v4078, %v4166
        %v4168 = vpop.f32.mrf.mxu0
        %v4169 = vadd.f32 %v4080, %v4168
        %4170 = vmatmul.bf16.gmra.mxu0 %v3569
        %v4171 = vpop.f32.mrf.mxu0
        %v4172 = vadd.f32 %v4083, %v4171
        %v4173 = vpop.f32.mrf.mxu0
        %v4174 = vadd.f32 %v4085, %v4173
        %4175 = vmatmul.bf16.gmra.mxu0 %v3573
        %v4176 = vpop.f32.mrf.mxu0
        %v4177 = vadd.f32 %v4088, %v4176
        %v4178 = vpop.f32.mrf.mxu0
        %v4179 = vadd.f32 %v4090, %v4178
        %4180 = vmatmul.bf16.gmra.mxu0 %v3577
        %v4181 = vpop.f32.mrf.mxu0
        %v4182 = vadd.f32 %v4093, %v4181
        %v4183 = vpop.f32.mrf.mxu0
        %v4184 = vadd.f32 %v4095, %v4183
        %4185 = vmatmul.bf16.gmra.mxu0 %v3581
        %v4186 = vpop.f32.mrf.mxu0
        %v4187 = vadd.f32 %v4098, %v4186
        %v4188 = vpop.f32.mrf.mxu0
        %v4189 = vadd.f32 %v4100, %v4188
        %4190 = vmatmul.bf16.gmra.mxu0 %v3585
        %v4191 = vpop.f32.mrf.mxu0
        %v4192 = vadd.f32 %v4103, %v4191
        %v4193 = vpop.f32.mrf.mxu0
        %v4194 = vadd.f32 %v4105, %v4193
        %4195 = vmatmul.bf16.gmra.mxu0 %v3589
        %v4196 = vpop.f32.mrf.mxu0
        %v4197 = vadd.f32 %v4108, %v4196
        %v4198 = vpop.f32.mrf.mxu0
        %v4199 = vadd.f32 %v4110, %v4198
        %4200 = vmatmul.bf16.gmra.mxu0 %v3593
        %v4201 = vpop.f32.mrf.mxu0
        %v4202 = vadd.f32 %v4113, %v4201
        %v4203 = vpop.f32.mrf.mxu0
        %v4204 = vadd.f32 %v4115, %v4203
        %4205 = vmatmul.bf16.gmra.mxu0 %v3597
        %v4206 = vpop.f32.mrf.mxu0
        %v4207 = vadd.f32 %v4118, %v4206
        %v4208 = vpop.f32.mrf.mxu0
        %v4209 = vadd.f32 %v4120, %v4208
        %4210 = vmatmul.bf16.gmra.mxu0 %v3601
        %v4211 = vpop.f32.mrf.mxu0
        %v4212 = vadd.f32 %v4123, %v4211
        %v4213 = vpop.f32.mrf.mxu0
        %v4214 = vadd.f32 %v4125, %v4213
        %4215 = vmatmul.bf16.gmra.mxu0 %v3605
        %v4216 = vpop.f32.mrf.mxu0
        %v4217 = vadd.f32 %v4128, %v4216
        %v4218 = vpop.f32.mrf.mxu0
        %v4219 = vadd.f32 %v4130, %v4218
        %4220 = vmatmul.bf16.gmra.mxu0 %v3609
        %v4221 = vpop.f32.mrf.mxu0
        %v4222 = vadd.f32 %v4133, %v4221
        %v4223 = vpop.f32.mrf.mxu0
        %v4224 = vadd.f32 %v4135, %v4223
        %4225 = vdwg.mxu0
        %v4226 = vmax.f32 %v4147, 0.0
        %v4227 = vmax.f32 %v4149, 0.0
        %v4228 = vmax.f32 %v4152, 0.0
        %v4229 = vmax.f32 %v4154, 0.0
        %v4230 = vmax.f32 %v4157, 0.0
        %v4231 = vmax.f32 %v4159, 0.0
        %v4232 = vmax.f32 %v4162, 0.0
        %v4233 = vmax.f32 %v4164, 0.0
        %v4234 = vmax.f32 %v4167, 0.0
        %v4235 = vmax.f32 %v4169, 0.0
        %v4236 = vmax.f32 %v4172, 0.0
        %v4237 = vmax.f32 %v4174, 0.0
        %v4238 = vmax.f32 %v4177, 0.0
        %v4239 = vmax.f32 %v4179, 0.0
        %v4240 = vmax.f32 %v4182, 0.0
        %v4241 = vmax.f32 %v4184, 0.0
        %v4242 = vmax.f32 %v4187, 0.0
        %v4243 = vmax.f32 %v4189, 0.0
        %v4244 = vmax.f32 %v4192, 0.0
        %v4245 = vmax.f32 %v4194, 0.0
        %v4246 = vmax.f32 %v4197, 0.0
        %v4247 = vmax.f32 %v4199, 0.0
        %v4248 = vmax.f32 %v4202, 0.0
        %v4249 = vmax.f32 %v4204, 0.0
        %v4250 = vmax.f32 %v4207, 0.0
        %v4251 = vmax.f32 %v4209, 0.0
        %v4252 = vmax.f32 %v4212, 0.0
        %v4253 = vmax.f32 %v4214, 0.0
        %v4254 = vmax.f32 %v4217, 0.0
        %v4255 = vmax.f32 %v4219, 0.0
        %v4256 = vmax.f32 %v4222, 0.0
        %v4257 = vmax.f32 %v4224, 0.0
        %v4258 = vpack.c.bf16 %v4227, %v4226
        %v4259 = vpack.c.bf16 %v4229, %v4228
        %v4260 = vpack.c.bf16 %v4231, %v4230
        %v4261 = vpack.c.bf16 %v4233, %v4232
        %v4262 = vpack.c.bf16 %v4235, %v4234
        %v4263 = vpack.c.bf16 %v4237, %v4236
        %v4264 = vpack.c.bf16 %v4239, %v4238
        %v4265 = vpack.c.bf16 %v4241, %v4240
        %v4266 = vpack.c.bf16 %v4243, %v4242
        %v4267 = vpack.c.bf16 %v4245, %v4244
        %v4268 = vpack.c.bf16 %v4247, %v4246
        %v4269 = vpack.c.bf16 %v4249, %v4248
        %v4270 = vpack.c.bf16 %v4251, %v4250
        %v4271 = vpack.c.bf16 %v4253, %v4252
        %v4272 = vpack.c.bf16 %v4255, %v4254
        %v4273 = vpack.c.bf16 %v4257, %v4256
        %v4274 = vld [vmem:[%s17] sm:$0xf]
        %v4275 = vld [vmem:[%s17 + $0x4] sm:$0xf]
        %v4276 = vld [vmem:[%s17 + $0x8] sm:$0xf]
        %v4277 = vld [vmem:[%s17 + $0xc] sm:$0xf]
        %v4278 = vld [vmem:[%s17 + $0x10] sm:$0xf]
        %v4279 = vld [vmem:[%s17 + $0x14] sm:$0xf]
        %v4280 = vld [vmem:[%s17 + $0x18] sm:$0xf]
        %v4281 = vld [vmem:[%s17 + $0x1c] sm:$0xf]
        %v4282 = vld [vmem:[%s18] sm:$0x1]
        %v4284 = vperm.slane %v4282, 0
        %v4294 = vunpack.c.l.b16 %v4274
        %v4295 = vunpack.c.l.b16 %v4275
        %v4296 = vunpack.c.l.b16 %v4276
        %v4297 = vunpack.c.l.b16 %v4277
        %v4298 = vunpack.c.l.b16 %v4278
        %v4299 = vunpack.c.l.b16 %v4279
        %v4300 = vunpack.c.l.b16 %v4280
        %v4301 = vunpack.c.l.b16 %v4281
        %v4302 = vpack.c.b16 %v4295, %v4294
        %v4303 = vpack.c.b16 %v4297, %v4296
        %v4304 = vpack.c.b16 %v4299, %v4298
        %v4305 = vpack.c.b16 %v4301, %v4300
        %v4311 = vsel %vm2594, %v4258, 0
        %v4314 = vsel %vm2594, %v4259, 0
        %v4317 = vsel %vm2594, %v4260, 0
        %v4320 = vsel %vm2594, %v4261, 0
        %v4323 = vsel %vm2594, %v4262, 0
        %v4326 = vsel %vm2594, %v4263, 0
        %v4329 = vsel %vm2594, %v4264, 0
        %v4332 = vsel %vm2594, %v4265, 0
        %v4335 = vsel %vm2594, %v4266, 0
        %v4338 = vsel %vm2594, %v4267, 0
        %v4341 = vsel %vm2594, %v4268, 0
        %v4344 = vsel %vm2594, %v4269, 0
        %v4347 = vsel %vm2594, %v4270, 0
        %v4350 = vsel %vm2594, %v4271, 0
        %v4353 = vsel %vm2594, %v4272, 0
        %v4356 = vsel %vm2594, %v4273, 0
        %4358 = vmatpush.bf16.msra.mxu0 0
        %4359 = vmatpush.bf16.msra.mxu0 0
        %4360 = vmatpush.bf16.msra.mxu0 0
        %4361 = vmatpush.bf16.msra.mxu0 0
        %4362 = vmatpush.bf16.msra.mxu0 %v4305
        %4363 = vmatpush.bf16.msra.mxu0 %v4304
        %4364 = vmatpush.bf16.msra.mxu0 %v4303
        %4365 = vmatpush.bf16.msra.mxu0 %v4302
        %4366 = vmatmul.bf16.gmra.mxu0 %v4311
        %v4367 = vpop.f32.mrf.mxu0
        %v4368 = vadd.f32 %v4284, %v4367
        %v4369 = vpop.f32.mrf.mxu0
        %v4370 = vadd.f32 %v4284, %v4369
        %4371 = vmatmul.bf16.gmra.mxu0 %v4314
        %v4372 = vpop.f32.mrf.mxu0
        %v4373 = vadd.f32 %v4284, %v4372
        %v4374 = vpop.f32.mrf.mxu0
        %v4375 = vadd.f32 %v4284, %v4374
        %4376 = vmatmul.bf16.gmra.mxu0 %v4317
        %v4377 = vpop.f32.mrf.mxu0
        %v4378 = vadd.f32 %v4284, %v4377
        %v4379 = vpop.f32.mrf.mxu0
        %v4380 = vadd.f32 %v4284, %v4379
        %4381 = vmatmul.bf16.gmra.mxu0 %v4320
        %v4382 = vpop.f32.mrf.mxu0
        %v4383 = vadd.f32 %v4284, %v4382
        %v4384 = vpop.f32.mrf.mxu0
        %v4385 = vadd.f32 %v4284, %v4384
        %4386 = vmatmul.bf16.gmra.mxu0 %v4323
        %v4387 = vpop.f32.mrf.mxu0
        %v4388 = vadd.f32 %v4284, %v4387
        %v4389 = vpop.f32.mrf.mxu0
        %v4390 = vadd.f32 %v4284, %v4389
        %4391 = vmatmul.bf16.gmra.mxu0 %v4326
        %v4392 = vpop.f32.mrf.mxu0
        %v4393 = vadd.f32 %v4284, %v4392
        %v4394 = vpop.f32.mrf.mxu0
        %v4395 = vadd.f32 %v4284, %v4394
        %4396 = vmatmul.bf16.gmra.mxu0 %v4329
        %v4397 = vpop.f32.mrf.mxu0
        %v4398 = vadd.f32 %v4284, %v4397
        %v4399 = vpop.f32.mrf.mxu0
        %v4400 = vadd.f32 %v4284, %v4399
        %4401 = vmatmul.bf16.gmra.mxu0 %v4332
        %v4402 = vpop.f32.mrf.mxu0
        %v4403 = vadd.f32 %v4284, %v4402
        %v4404 = vpop.f32.mrf.mxu0
        %v4405 = vadd.f32 %v4284, %v4404
        %4406 = vmatmul.bf16.gmra.mxu0 %v4335
        %v4407 = vpop.f32.mrf.mxu0
        %v4408 = vadd.f32 %v4284, %v4407
        %v4409 = vpop.f32.mrf.mxu0
        %v4410 = vadd.f32 %v4284, %v4409
        %4411 = vmatmul.bf16.gmra.mxu0 %v4338
        %v4412 = vpop.f32.mrf.mxu0
        %v4413 = vadd.f32 %v4284, %v4412
        %v4414 = vpop.f32.mrf.mxu0
        %v4415 = vadd.f32 %v4284, %v4414
        %4416 = vmatmul.bf16.gmra.mxu0 %v4341
        %v4417 = vpop.f32.mrf.mxu0
        %v4418 = vadd.f32 %v4284, %v4417
        %v4419 = vpop.f32.mrf.mxu0
        %v4420 = vadd.f32 %v4284, %v4419
        %4421 = vmatmul.bf16.gmra.mxu0 %v4344
        %v4422 = vpop.f32.mrf.mxu0
        %v4423 = vadd.f32 %v4284, %v4422
        %v4424 = vpop.f32.mrf.mxu0
        %v4425 = vadd.f32 %v4284, %v4424
        %4426 = vmatmul.bf16.gmra.mxu0 %v4347
        %v4427 = vpop.f32.mrf.mxu0
        %v4428 = vadd.f32 %v4284, %v4427
        %v4429 = vpop.f32.mrf.mxu0
        %v4430 = vadd.f32 %v4284, %v4429
        %4431 = vmatmul.bf16.gmra.mxu0 %v4350
        %v4432 = vpop.f32.mrf.mxu0
        %v4433 = vadd.f32 %v4284, %v4432
        %v4434 = vpop.f32.mrf.mxu0
        %v4435 = vadd.f32 %v4284, %v4434
        %4436 = vmatmul.bf16.gmra.mxu0 %v4353
        %v4437 = vpop.f32.mrf.mxu0
        %v4438 = vadd.f32 %v4284, %v4437
        %v4439 = vpop.f32.mrf.mxu0
        %v4440 = vadd.f32 %v4284, %v4439
        %4441 = vmatmul.bf16.gmra.mxu0 %v4356
        %v4442 = vpop.f32.mrf.mxu0
        %v4443 = vadd.f32 %v4284, %v4442
        %v4444 = vpop.f32.mrf.mxu0
        %v4445 = vadd.f32 %v4284, %v4444
        %4446 = vdwg.mxu0
        %v4447 = vmul.f32 %v2653, %v4368
        %v4448 = vmul.f32 %v2655, %v4370
        %v4449 = vmul.f32 %v2658, %v4373
        %v4450 = vmul.f32 %v2660, %v4375
        %v4451 = vmul.f32 %v2663, %v4378
        %v4452 = vmul.f32 %v2665, %v4380
        %v4453 = vmul.f32 %v2668, %v4383
        %v4454 = vmul.f32 %v2670, %v4385
        %v4455 = vmul.f32 %v2673, %v4388
        %v4456 = vmul.f32 %v2675, %v4390
        %v4457 = vmul.f32 %v2678, %v4393
        %v4458 = vmul.f32 %v2680, %v4395
        %v4459 = vmul.f32 %v2683, %v4398
        %v4460 = vmul.f32 %v2685, %v4400
        %v4461 = vmul.f32 %v2688, %v4403
        %v4462 = vmul.f32 %v2690, %v4405
        %v4463 = vmul.f32 %v2693, %v4408
        %v4464 = vmul.f32 %v2695, %v4410
        %v4465 = vmul.f32 %v2698, %v4413
        %v4466 = vmul.f32 %v2700, %v4415
        %v4467 = vmul.f32 %v2703, %v4418
        %v4468 = vmul.f32 %v2705, %v4420
        %v4469 = vmul.f32 %v2708, %v4423
        %v4470 = vmul.f32 %v2710, %v4425
        %v4471 = vmul.f32 %v2713, %v4428
        %v4472 = vmul.f32 %v2715, %v4430
        %v4473 = vmul.f32 %v2718, %v4433
        %v4474 = vmul.f32 %v2720, %v4435
        %v4475 = vmul.f32 %v2723, %v4438
        %v4476 = vmul.f32 %v2725, %v4440
        %v4477 = vmul.f32 %v2728, %v4443
        %v4478 = vmul.f32 %v2730, %v4445
        %v4479 = vsel %vm934, %v4447, 0.0
        %4480 = vadd.xlane.f32.xlu0 %v4479
        %v4481 = vpop.xlane.xlu0 %4480
        %v4482 = vsel %vm934, %v4448, 0.0
        %4483 = vadd.xlane.f32.xlu0 %v4482
        %v4484 = vpop.xlane.xlu0 %4483
        %v4485 = vsel %vm934, %v4449, 0.0
        %4486 = vadd.xlane.f32.xlu0 %v4485
        %v4487 = vpop.xlane.xlu0 %4486
        %v4488 = vsel %vm934, %v4450, 0.0
        %4489 = vadd.xlane.f32.xlu0 %v4488
        %v4490 = vpop.xlane.xlu0 %4489
        %v4491 = vsel %vm934, %v4451, 0.0
        %4492 = vadd.xlane.f32.xlu0 %v4491
        %v4493 = vpop.xlane.xlu0 %4492
        %v4494 = vsel %vm934, %v4452, 0.0
        %4495 = vadd.xlane.f32.xlu0 %v4494
        %v4496 = vpop.xlane.xlu0 %4495
        %v4497 = vsel %vm934, %v4453, 0.0
        %4498 = vadd.xlane.f32.xlu0 %v4497
        %v4499 = vpop.xlane.xlu0 %4498
        %v4500 = vsel %vm934, %v4454, 0.0
        %4501 = vadd.xlane.f32.xlu0 %v4500
        %v4502 = vpop.xlane.xlu0 %4501
        %v4503 = vsel %vm934, %v4455, 0.0
        %4504 = vadd.xlane.f32.xlu0 %v4503
        %v4505 = vpop.xlane.xlu0 %4504
        %v4506 = vsel %vm934, %v4456, 0.0
        %4507 = vadd.xlane.f32.xlu0 %v4506
        %v4508 = vpop.xlane.xlu0 %4507
        %v4509 = vsel %vm934, %v4457, 0.0
        %4510 = vadd.xlane.f32.xlu0 %v4509
        %v4511 = vpop.xlane.xlu0 %4510
        %v4512 = vsel %vm934, %v4458, 0.0
        %4513 = vadd.xlane.f32.xlu0 %v4512
        %v4514 = vpop.xlane.xlu0 %4513
        %v4515 = vsel %vm934, %v4459, 0.0
        %4516 = vadd.xlane.f32.xlu0 %v4515
        %v4517 = vpop.xlane.xlu0 %4516
        %v4518 = vsel %vm934, %v4460, 0.0
        %4519 = vadd.xlane.f32.xlu0 %v4518
        %v4520 = vpop.xlane.xlu0 %4519
        %v4521 = vsel %vm934, %v4461, 0.0
        %4522 = vadd.xlane.f32.xlu0 %v4521
        %v4523 = vpop.xlane.xlu0 %4522
        %v4524 = vsel %vm934, %v4462, 0.0
        %4525 = vadd.xlane.f32.xlu0 %v4524
        %v4526 = vpop.xlane.xlu0 %4525
        %v4527 = vsel %vm934, %v4463, 0.0
        %4528 = vadd.xlane.f32.xlu0 %v4527
        %v4529 = vpop.xlane.xlu0 %4528
        %v4530 = vsel %vm934, %v4464, 0.0
        %4531 = vadd.xlane.f32.xlu0 %v4530
        %v4532 = vpop.xlane.xlu0 %4531
        %v4533 = vsel %vm934, %v4465, 0.0
        %4534 = vadd.xlane.f32.xlu0 %v4533
        %v4535 = vpop.xlane.xlu0 %4534
        %v4536 = vsel %vm934, %v4466, 0.0
        %4537 = vadd.xlane.f32.xlu0 %v4536
        %v4538 = vpop.xlane.xlu0 %4537
        %v4539 = vsel %vm934, %v4467, 0.0
        %4540 = vadd.xlane.f32.xlu0 %v4539
        %v4541 = vpop.xlane.xlu0 %4540
        %v4542 = vsel %vm934, %v4468, 0.0
        %4543 = vadd.xlane.f32.xlu0 %v4542
        %v4544 = vpop.xlane.xlu0 %4543
        %v4545 = vsel %vm934, %v4469, 0.0
        %4546 = vadd.xlane.f32.xlu0 %v4545
        %v4547 = vpop.xlane.xlu0 %4546
        %v4548 = vsel %vm934, %v4470, 0.0
        %4549 = vadd.xlane.f32.xlu0 %v4548
        %v4550 = vpop.xlane.xlu0 %4549
        %v4551 = vsel %vm934, %v4471, 0.0
        %4552 = vadd.xlane.f32.xlu0 %v4551
        %v4553 = vpop.xlane.xlu0 %4552
        %v4554 = vsel %vm934, %v4472, 0.0
        %4555 = vadd.xlane.f32.xlu0 %v4554
        %v4556 = vpop.xlane.xlu0 %4555
        %v4557 = vsel %vm934, %v4473, 0.0
        %4558 = vadd.xlane.f32.xlu0 %v4557
        %v4559 = vpop.xlane.xlu0 %4558
        %v4560 = vsel %vm934, %v4474, 0.0
        %4561 = vadd.xlane.f32.xlu0 %v4560
        %v4562 = vpop.xlane.xlu0 %4561
        %v4563 = vsel %vm934, %v4475, 0.0
        %4564 = vadd.xlane.f32.xlu0 %v4563
        %v4565 = vpop.xlane.xlu0 %4564
        %v4566 = vsel %vm934, %v4476, 0.0
        %4567 = vadd.xlane.f32.xlu0 %v4566
        %v4568 = vpop.xlane.xlu0 %4567
        %v4569 = vsel %vm934, %v4477, 0.0
        %4570 = vadd.xlane.f32.xlu0 %v4569
        %v4571 = vpop.xlane.xlu0 %4570
        %v4572 = vsel %vm934, %v4478, 0.0
        %4573 = vadd.xlane.f32.xlu0 %v4572
        %v4574 = vpop.xlane.xlu0 %4573
        %v4575 = vld [vmem:[%s19] sm:$0x1]
        %v4577 = vperm.slane %v4575, 0
        %v4579 = vmul.f32 %v838, %v4577
        %v4580 = vmul.f32 %v839, %v4577
        %v4581 = vmul.f32 %v840, %v4577
        %v4582 = vmul.f32 %v841, %v4577
        %v4583 = vmul.f32 %v842, %v4577
        %v4584 = vmul.f32 %v843, %v4577
        %v4585 = vmul.f32 %v844, %v4577
        %v4586 = vmul.f32 %v845, %v4577
        %v4587 = vmul.f32 %v846, %v4577
        %v4588 = vmul.f32 %v847, %v4577
        %v4589 = vmul.f32 %v848, %v4577
        %v4590 = vmul.f32 %v849, %v4577
        %v4591 = vmul.f32 %v850, %v4577
        %v4592 = vmul.f32 %v851, %v4577
        %v4593 = vmul.f32 %v852, %v4577
        %v4594 = vmul.f32 %v853, %v4577
        %v4595 = vmul.f32 %v854, %v4577
        %v4596 = vmul.f32 %v855, %v4577
        %v4597 = vmul.f32 %v856, %v4577
        %v4598 = vmul.f32 %v857, %v4577
        %v4599 = vmul.f32 %v858, %v4577
        %v4600 = vmul.f32 %v859, %v4577
        %v4601 = vmul.f32 %v860, %v4577
        %v4602 = vmul.f32 %v861, %v4577
        %v4603 = vmul.f32 %v862, %v4577
        %v4604 = vmul.f32 %v863, %v4577
        %v4605 = vmul.f32 %v864, %v4577
        %v4606 = vmul.f32 %v865, %v4577
        %v4607 = vmul.f32 %v866, %v4577
        %v4608 = vmul.f32 %v867, %v4577
        %v4609 = vmul.f32 %v868, %v4577
        %v4610 = vmul.f32 %v869, %v4577
        %v4611 = vsel %vm934, %v4579, 0.0
        %4612 = vadd.xlane.f32.xlu0 %v4611
        %v4613 = vpop.xlane.xlu0 %4612
        %v4614 = vsel %vm934, %v4580, 0.0
        %4615 = vadd.xlane.f32.xlu0 %v4614
        %v4616 = vpop.xlane.xlu0 %4615
        %v4617 = vsel %vm934, %v4581, 0.0
        %4618 = vadd.xlane.f32.xlu0 %v4617
        %v4619 = vpop.xlane.xlu0 %4618
        %v4620 = vsel %vm934, %v4582, 0.0
        %4621 = vadd.xlane.f32.xlu0 %v4620
        %v4622 = vpop.xlane.xlu0 %4621
        %v4623 = vsel %vm934, %v4583, 0.0
        %4624 = vadd.xlane.f32.xlu0 %v4623
        %v4625 = vpop.xlane.xlu0 %4624
        %v4626 = vsel %vm934, %v4584, 0.0
        %4627 = vadd.xlane.f32.xlu0 %v4626
        %v4628 = vpop.xlane.xlu0 %4627
        %v4629 = vsel %vm934, %v4585, 0.0
        %4630 = vadd.xlane.f32.xlu0 %v4629
        %v4631 = vpop.xlane.xlu0 %4630
        %v4632 = vsel %vm934, %v4586, 0.0
        %4633 = vadd.xlane.f32.xlu0 %v4632
        %v4634 = vpop.xlane.xlu0 %4633
        %v4635 = vsel %vm934, %v4587, 0.0
        %4636 = vadd.xlane.f32.xlu0 %v4635
        %v4637 = vpop.xlane.xlu0 %4636
        %v4638 = vsel %vm934, %v4588, 0.0
        %4639 = vadd.xlane.f32.xlu0 %v4638
        %v4640 = vpop.xlane.xlu0 %4639
        %v4641 = vsel %vm934, %v4589, 0.0
        %4642 = vadd.xlane.f32.xlu0 %v4641
        %v4643 = vpop.xlane.xlu0 %4642
        %v4644 = vsel %vm934, %v4590, 0.0
        %4645 = vadd.xlane.f32.xlu0 %v4644
        %v4646 = vpop.xlane.xlu0 %4645
        %v4647 = vsel %vm934, %v4591, 0.0
        %4648 = vadd.xlane.f32.xlu0 %v4647
        %v4649 = vpop.xlane.xlu0 %4648
        %v4650 = vsel %vm934, %v4592, 0.0
        %4651 = vadd.xlane.f32.xlu0 %v4650
        %v4652 = vpop.xlane.xlu0 %4651
        %v4653 = vsel %vm934, %v4593, 0.0
        %4654 = vadd.xlane.f32.xlu0 %v4653
        %v4655 = vpop.xlane.xlu0 %4654
        %v4656 = vsel %vm934, %v4594, 0.0
        %4657 = vadd.xlane.f32.xlu0 %v4656
        %v4658 = vpop.xlane.xlu0 %4657
        %v4659 = vsel %vm934, %v4595, 0.0
        %4660 = vadd.xlane.f32.xlu0 %v4659
        %v4661 = vpop.xlane.xlu0 %4660
        %v4662 = vsel %vm934, %v4596, 0.0
        %4663 = vadd.xlane.f32.xlu0 %v4662
        %v4664 = vpop.xlane.xlu0 %4663
        %v4665 = vsel %vm934, %v4597, 0.0
        %4666 = vadd.xlane.f32.xlu0 %v4665
        %v4667 = vpop.xlane.xlu0 %4666
        %v4668 = vsel %vm934, %v4598, 0.0
        %4669 = vadd.xlane.f32.xlu0 %v4668
        %v4670 = vpop.xlane.xlu0 %4669
        %v4671 = vsel %vm934, %v4599, 0.0
        %4672 = vadd.xlane.f32.xlu0 %v4671
        %v4673 = vpop.xlane.xlu0 %4672
        %v4674 = vsel %vm934, %v4600, 0.0
        %4675 = vadd.xlane.f32.xlu0 %v4674
        %v4676 = vpop.xlane.xlu0 %4675
        %v4677 = vsel %vm934, %v4601, 0.0
        %4678 = vadd.xlane.f32.xlu0 %v4677
        %v4679 = vpop.xlane.xlu0 %4678
        %v4680 = vsel %vm934, %v4602, 0.0
        %4681 = vadd.xlane.f32.xlu0 %v4680
        %v4682 = vpop.xlane.xlu0 %4681
        %v4683 = vsel %vm934, %v4603, 0.0
        %4684 = vadd.xlane.f32.xlu0 %v4683
        %v4685 = vpop.xlane.xlu0 %4684
        %v4686 = vsel %vm934, %v4604, 0.0
        %4687 = vadd.xlane.f32.xlu0 %v4686
        %v4688 = vpop.xlane.xlu0 %4687
        %v4689 = vsel %vm934, %v4605, 0.0
        %4690 = vadd.xlane.f32.xlu0 %v4689
        %v4691 = vpop.xlane.xlu0 %4690
        %v4692 = vsel %vm934, %v4606, 0.0
        %4693 = vadd.xlane.f32.xlu0 %v4692
        %v4694 = vpop.xlane.xlu0 %4693
        %v4695 = vsel %vm934, %v4607, 0.0
        %4696 = vadd.xlane.f32.xlu0 %v4695
        %v4697 = vpop.xlane.xlu0 %4696
        %v4698 = vsel %vm934, %v4608, 0.0
        %4699 = vadd.xlane.f32.xlu0 %v4698
        %v4700 = vpop.xlane.xlu0 %4699
        %v4701 = vsel %vm934, %v4609, 0.0
        %4702 = vadd.xlane.f32.xlu0 %v4701
        %v4703 = vpop.xlane.xlu0 %4702
        %v4704 = vsel %vm934, %v4610, 0.0
        %4705 = vadd.xlane.f32.xlu0 %v4704
        %v4706 = vpop.xlane.xlu0 %4705
        %v4707 = vmul.f32 %v2653, %v4577
        %v4708 = vmul.f32 %v2655, %v4577
        %v4709 = vmul.f32 %v2658, %v4577
        %v4710 = vmul.f32 %v2660, %v4577
        %v4711 = vmul.f32 %v2663, %v4577
        %v4712 = vmul.f32 %v2665, %v4577
        %v4713 = vmul.f32 %v2668, %v4577
        %v4714 = vmul.f32 %v2670, %v4577
        %v4715 = vmul.f32 %v2673, %v4577
        %v4716 = vmul.f32 %v2675, %v4577
        %v4717 = vmul.f32 %v2678, %v4577
        %v4718 = vmul.f32 %v2680, %v4577
        %v4719 = vmul.f32 %v2683, %v4577
        %v4720 = vmul.f32 %v2685, %v4577
        %v4721 = vmul.f32 %v2688, %v4577
        %v4722 = vmul.f32 %v2690, %v4577
        %v4723 = vmul.f32 %v2693, %v4577
        %v4724 = vmul.f32 %v2695, %v4577
        %v4725 = vmul.f32 %v2698, %v4577
        %v4726 = vmul.f32 %v2700, %v4577
        %v4727 = vmul.f32 %v2703, %v4577
        %v4728 = vmul.f32 %v2705, %v4577
        %v4729 = vmul.f32 %v2708, %v4577
        %v4730 = vmul.f32 %v2710, %v4577
        %v4731 = vmul.f32 %v2713, %v4577
        %v4732 = vmul.f32 %v2715, %v4577
        %v4733 = vmul.f32 %v2718, %v4577
        %v4734 = vmul.f32 %v2720, %v4577
        %v4735 = vmul.f32 %v2723, %v4577
        %v4736 = vmul.f32 %v2725, %v4577
        %v4737 = vmul.f32 %v2728, %v4577
        %v4738 = vmul.f32 %v2730, %v4577
        %v4739 = vsel %vm934, %v4707, 0.0
        %4740 = vadd.xlane.f32.xlu0 %v4739
        %v4741 = vpop.xlane.xlu0 %4740
        %v4742 = vsel %vm934, %v4708, 0.0
        %4743 = vadd.xlane.f32.xlu0 %v4742
        %v4744 = vpop.xlane.xlu0 %4743
        %v4745 = vsel %vm934, %v4709, 0.0
        %4746 = vadd.xlane.f32.xlu0 %v4745
        %v4747 = vpop.xlane.xlu0 %4746
        %v4748 = vsel %vm934, %v4710, 0.0
        %4749 = vadd.xlane.f32.xlu0 %v4748
        %v4750 = vpop.xlane.xlu0 %4749
        %v4751 = vsel %vm934, %v4711, 0.0
        %4752 = vadd.xlane.f32.xlu0 %v4751
        %v4753 = vpop.xlane.xlu0 %4752
        %v4754 = vsel %vm934, %v4712, 0.0
        %4755 = vadd.xlane.f32.xlu0 %v4754
        %v4756 = vpop.xlane.xlu0 %4755
        %v4757 = vsel %vm934, %v4713, 0.0
        %4758 = vadd.xlane.f32.xlu0 %v4757
        %v4759 = vpop.xlane.xlu0 %4758
        %v4760 = vsel %vm934, %v4714, 0.0
        %4761 = vadd.xlane.f32.xlu0 %v4760
        %v4762 = vpop.xlane.xlu0 %4761
        %v4763 = vsel %vm934, %v4715, 0.0
        %4764 = vadd.xlane.f32.xlu0 %v4763
        %v4765 = vpop.xlane.xlu0 %4764
        %v4766 = vsel %vm934, %v4716, 0.0
        %4767 = vadd.xlane.f32.xlu0 %v4766
        %v4768 = vpop.xlane.xlu0 %4767
        %v4769 = vsel %vm934, %v4717, 0.0
        %4770 = vadd.xlane.f32.xlu0 %v4769
        %v4771 = vpop.xlane.xlu0 %4770
        %v4772 = vsel %vm934, %v4718, 0.0
        %4773 = vadd.xlane.f32.xlu0 %v4772
        %v4774 = vpop.xlane.xlu0 %4773
        %v4775 = vsel %vm934, %v4719, 0.0
        %4776 = vadd.xlane.f32.xlu0 %v4775
        %v4777 = vpop.xlane.xlu0 %4776
        %v4778 = vsel %vm934, %v4720, 0.0
        %4779 = vadd.xlane.f32.xlu0 %v4778
        %v4780 = vpop.xlane.xlu0 %4779
        %v4781 = vsel %vm934, %v4721, 0.0
        %4782 = vadd.xlane.f32.xlu0 %v4781
        %v4783 = vpop.xlane.xlu0 %4782
        %v4784 = vsel %vm934, %v4722, 0.0
        %4785 = vadd.xlane.f32.xlu0 %v4784
        %v4786 = vpop.xlane.xlu0 %4785
        %v4787 = vsel %vm934, %v4723, 0.0
        %4788 = vadd.xlane.f32.xlu0 %v4787
        %v4789 = vpop.xlane.xlu0 %4788
        %v4790 = vsel %vm934, %v4724, 0.0
        %4791 = vadd.xlane.f32.xlu0 %v4790
        %v4792 = vpop.xlane.xlu0 %4791
        %v4793 = vsel %vm934, %v4725, 0.0
        %4794 = vadd.xlane.f32.xlu0 %v4793
        %v4795 = vpop.xlane.xlu0 %4794
        %v4796 = vsel %vm934, %v4726, 0.0
        %4797 = vadd.xlane.f32.xlu0 %v4796
        %v4798 = vpop.xlane.xlu0 %4797
        %v4799 = vsel %vm934, %v4727, 0.0
        %4800 = vadd.xlane.f32.xlu0 %v4799
        %v4801 = vpop.xlane.xlu0 %4800
        %v4802 = vsel %vm934, %v4728, 0.0
        %4803 = vadd.xlane.f32.xlu0 %v4802
        %v4804 = vpop.xlane.xlu0 %4803
        %v4805 = vsel %vm934, %v4729, 0.0
        %4806 = vadd.xlane.f32.xlu0 %v4805
        %v4807 = vpop.xlane.xlu0 %4806
        %v4808 = vsel %vm934, %v4730, 0.0
        %4809 = vadd.xlane.f32.xlu0 %v4808
        %v4810 = vpop.xlane.xlu0 %4809
        %v4811 = vsel %vm934, %v4731, 0.0
        %4812 = vadd.xlane.f32.xlu0 %v4811
        %v4813 = vpop.xlane.xlu0 %4812
        %v4814 = vsel %vm934, %v4732, 0.0
        %4815 = vadd.xlane.f32.xlu0 %v4814
        %v4816 = vpop.xlane.xlu0 %4815
        %v4817 = vsel %vm934, %v4733, 0.0
        %4818 = vadd.xlane.f32.xlu0 %v4817
        %v4819 = vpop.xlane.xlu0 %4818
        %v4820 = vsel %vm934, %v4734, 0.0
        %4821 = vadd.xlane.f32.xlu0 %v4820
        %v4822 = vpop.xlane.xlu0 %4821
        %v4823 = vsel %vm934, %v4735, 0.0
        %4824 = vadd.xlane.f32.xlu0 %v4823
        %v4825 = vpop.xlane.xlu0 %4824
        %v4826 = vsel %vm934, %v4736, 0.0
        %4827 = vadd.xlane.f32.xlu0 %v4826
        %v4828 = vpop.xlane.xlu0 %4827
        %v4829 = vsel %vm934, %v4737, 0.0
        %4830 = vadd.xlane.f32.xlu0 %v4829
        %v4831 = vpop.xlane.xlu0 %4830
        %v4832 = vsel %vm934, %v4738, 0.0
        %4833 = vadd.xlane.f32.xlu0 %v4832
        %v4834 = vpop.xlane.xlu0 %4833
        %v4835 = vsub.f32 %v4613, %v4741
        %v4836 = vsub.f32 %v4616, %v4744
        %v4837 = vsub.f32 %v4619, %v4747
        %v4838 = vsub.f32 %v4622, %v4750
        %v4839 = vsub.f32 %v4625, %v4753
        %v4840 = vsub.f32 %v4628, %v4756
        %v4841 = vsub.f32 %v4631, %v4759
        %v4842 = vsub.f32 %v4634, %v4762
        %v4843 = vsub.f32 %v4637, %v4765
        %v4844 = vsub.f32 %v4640, %v4768
        %v4845 = vsub.f32 %v4643, %v4771
        %v4846 = vsub.f32 %v4646, %v4774
        %v4847 = vsub.f32 %v4649, %v4777
        %v4848 = vsub.f32 %v4652, %v4780
        %v4849 = vsub.f32 %v4655, %v4783
        %v4850 = vsub.f32 %v4658, %v4786
        %v4851 = vsub.f32 %v4661, %v4789
        %v4852 = vsub.f32 %v4664, %v4792
        %v4853 = vsub.f32 %v4667, %v4795
        %v4854 = vsub.f32 %v4670, %v4798
        %v4855 = vsub.f32 %v4673, %v4801
        %v4856 = vsub.f32 %v4676, %v4804
        %v4857 = vsub.f32 %v4679, %v4807
        %v4858 = vsub.f32 %v4682, %v4810
        %v4859 = vsub.f32 %v4685, %v4813
        %v4860 = vsub.f32 %v4688, %v4816
        %v4861 = vsub.f32 %v4691, %v4819
        %v4862 = vsub.f32 %v4694, %v4822
        %v4863 = vsub.f32 %v4697, %v4825
        %v4864 = vsub.f32 %v4700, %v4828
        %v4865 = vsub.f32 %v4703, %v4831
        %v4866 = vsub.f32 %v4706, %v4834
        %v4867 = vxor.u32 %v4835, 2147483648
        %v4868 = vxor.u32 %v4836, 2147483648
        %v4869 = vxor.u32 %v4837, 2147483648
        %v4870 = vxor.u32 %v4838, 2147483648
        %v4871 = vxor.u32 %v4839, 2147483648
        %v4872 = vxor.u32 %v4840, 2147483648
        %v4873 = vxor.u32 %v4841, 2147483648
        %v4874 = vxor.u32 %v4842, 2147483648
        %v4875 = vxor.u32 %v4843, 2147483648
        %v4876 = vxor.u32 %v4844, 2147483648
        %v4877 = vxor.u32 %v4845, 2147483648
        %v4878 = vxor.u32 %v4846, 2147483648
        %v4879 = vxor.u32 %v4847, 2147483648
        %v4880 = vxor.u32 %v4848, 2147483648
        %v4881 = vxor.u32 %v4849, 2147483648
        %v4882 = vxor.u32 %v4850, 2147483648
        %v4883 = vxor.u32 %v4851, 2147483648
        %v4884 = vxor.u32 %v4852, 2147483648
        %v4885 = vxor.u32 %v4853, 2147483648
        %v4886 = vxor.u32 %v4854, 2147483648
        %v4887 = vxor.u32 %v4855, 2147483648
        %v4888 = vxor.u32 %v4856, 2147483648
        %v4889 = vxor.u32 %v4857, 2147483648
        %v4890 = vxor.u32 %v4858, 2147483648
        %v4891 = vxor.u32 %v4859, 2147483648
        %v4892 = vxor.u32 %v4860, 2147483648
        %v4893 = vxor.u32 %v4861, 2147483648
        %v4894 = vxor.u32 %v4862, 2147483648
        %v4895 = vxor.u32 %v4863, 2147483648
        %v4896 = vxor.u32 %v4864, 2147483648
        %v4897 = vxor.u32 %v4865, 2147483648
        %v4898 = vxor.u32 %v4866, 2147483648
        %v4899 = vmul.f32 %v4867, 1.442695
        %v4900 = vpow.pop %v4899
        %v4901 = vmul.f32 %v4868, 1.442695
        %v4902 = vpow.pop %v4901
        %v4903 = vmul.f32 %v4869, 1.442695
        %v4904 = vpow.pop %v4903
        %v4905 = vmul.f32 %v4870, 1.442695
        %v4906 = vpow.pop %v4905
        %v4907 = vmul.f32 %v4871, 1.442695
        %v4908 = vpow.pop %v4907
        %v4909 = vmul.f32 %v4872, 1.442695
        %v4910 = vpow.pop %v4909
        %v4911 = vmul.f32 %v4873, 1.442695
        %v4912 = vpow.pop %v4911
        %v4913 = vmul.f32 %v4874, 1.442695
        %v4914 = vpow.pop %v4913
        %v4915 = vmul.f32 %v4875, 1.442695
        %v4916 = vpow.pop %v4915
        %v4917 = vmul.f32 %v4876, 1.442695
        %v4918 = vpow.pop %v4917
        %v4919 = vmul.f32 %v4877, 1.442695
        %v4920 = vpow.pop %v4919
        %v4921 = vmul.f32 %v4878, 1.442695
        %v4922 = vpow.pop %v4921
        %v4923 = vmul.f32 %v4879, 1.442695
        %v4924 = vpow.pop %v4923
        %v4925 = vmul.f32 %v4880, 1.442695
        %v4926 = vpow.pop %v4925
        %v4927 = vmul.f32 %v4881, 1.442695
        %v4928 = vpow.pop %v4927
        %v4929 = vmul.f32 %v4882, 1.442695
        %v4930 = vpow.pop %v4929
        %v4931 = vmul.f32 %v4883, 1.442695
        %v4932 = vpow.pop %v4931
        %v4933 = vmul.f32 %v4884, 1.442695
        %v4934 = vpow.pop %v4933
        %v4935 = vmul.f32 %v4885, 1.442695
        %v4936 = vpow.pop %v4935
        %v4937 = vmul.f32 %v4886, 1.442695
        %v4938 = vpow.pop %v4937
        %v4939 = vmul.f32 %v4887, 1.442695
        %v4940 = vpow.pop %v4939
        %v4941 = vmul.f32 %v4888, 1.442695
        %v4942 = vpow.pop %v4941
        %v4943 = vmul.f32 %v4889, 1.442695
        %v4944 = vpow.pop %v4943
        %v4945 = vmul.f32 %v4890, 1.442695
        %v4946 = vpow.pop %v4945
        %v4947 = vmul.f32 %v4891, 1.442695
        %v4948 = vpow.pop %v4947
        %v4949 = vmul.f32 %v4892, 1.442695
        %v4950 = vpow.pop %v4949
        %v4951 = vmul.f32 %v4893, 1.442695
        %v4952 = vpow.pop %v4951
        %v4953 = vmul.f32 %v4894, 1.442695
        %v4954 = vpow.pop %v4953
        %v4955 = vmul.f32 %v4895, 1.442695
        %v4956 = vpow.pop %v4955
        %v4957 = vmul.f32 %v4896, 1.442695
        %v4958 = vpow.pop %v4957
        %v4959 = vmul.f32 %v4897, 1.442695
        %v4960 = vpow.pop %v4959
        %v4961 = vmul.f32 %v4898, 1.442695
        %v4962 = vpow.pop %v4961
        %v4963 = vadd.f32 %v4900, 1.0
        %v4964 = vadd.f32 %v4902, 1.0
        %v4965 = vadd.f32 %v4904, 1.0
        %v4966 = vadd.f32 %v4906, 1.0
        %v4967 = vadd.f32 %v4908, 1.0
        %v4968 = vadd.f32 %v4910, 1.0
        %v4969 = vadd.f32 %v4912, 1.0
        %v4970 = vadd.f32 %v4914, 1.0
        %v4971 = vadd.f32 %v4916, 1.0
        %v4972 = vadd.f32 %v4918, 1.0
        %v4973 = vadd.f32 %v4920, 1.0
        %v4974 = vadd.f32 %v4922, 1.0
        %v4975 = vadd.f32 %v4924, 1.0
        %v4976 = vadd.f32 %v4926, 1.0
        %v4977 = vadd.f32 %v4928, 1.0
        %v4978 = vadd.f32 %v4930, 1.0
        %v4979 = vadd.f32 %v4932, 1.0
        %v4980 = vadd.f32 %v4934, 1.0
        %v4981 = vadd.f32 %v4936, 1.0
        %v4982 = vadd.f32 %v4938, 1.0
        %v4983 = vadd.f32 %v4940, 1.0
        %v4984 = vadd.f32 %v4942, 1.0
        %v4985 = vadd.f32 %v4944, 1.0
        %v4986 = vadd.f32 %v4946, 1.0
        %v4987 = vadd.f32 %v4948, 1.0
        %v4988 = vadd.f32 %v4950, 1.0
        %v4989 = vadd.f32 %v4952, 1.0
        %v4990 = vadd.f32 %v4954, 1.0
        %v4991 = vadd.f32 %v4956, 1.0
        %v4992 = vadd.f32 %v4958, 1.0
        %v4993 = vadd.f32 %v4960, 1.0
        %v4994 = vadd.f32 %v4962, 1.0
        %v4995 = vrcp.pop %v4963
        %v4996 = vmul.f32 %v4963, %v4995
        %v4997 = vsub.f32 1.0, %v4996
        %v4998 = vmul.f32 %v4995, %v4997
        %v4999 = vadd.f32 %v4995, %v4998
        %vm5000 = vweird.f32 %v4963
        %vm5001 = vweird.f32 %v4995
        %vm5002 = vmor %vm5000, %vm5001
        %v5003 = vsel %vm5002, %v4995, %v4999
        %v5004 = vand.u32 2147483647, %v4963
        %vm5005 = vcmp.eq.f32.partialorder %v5004, 8.507059e+37
        %v5006 = vand.u32 %v4963, 2147483648
        %v5007 = vor.u32 1.1754944e-38, %v5006
        %v5008 = vsel %vm5005, %v5007, %v5003
        %v5009 = vmul.f32 1.0, %v5008
        %v5010 = vrcp.pop %v4964
        %v5011 = vmul.f32 %v4964, %v5010
        %v5012 = vsub.f32 1.0, %v5011
        %v5013 = vmul.f32 %v5010, %v5012
        %v5014 = vadd.f32 %v5010, %v5013
        %vm5015 = vweird.f32 %v4964
        %vm5016 = vweird.f32 %v5010
        %vm5017 = vmor %vm5015, %vm5016
        %v5018 = vsel %vm5017, %v5010, %v5014
        %v5019 = vand.u32 2147483647, %v4964
        %vm5020 = vcmp.eq.f32.partialorder %v5019, 8.507059e+37
        %v5021 = vand.u32 %v4964, 2147483648
        %v5022 = vor.u32 1.1754944e-38, %v5021
        %v5023 = vsel %vm5020, %v5022, %v5018
        %v5024 = vmul.f32 1.0, %v5023
        %v5025 = vrcp.pop %v4965
        %v5026 = vmul.f32 %v4965, %v5025
        %v5027 = vsub.f32 1.0, %v5026
        %v5028 = vmul.f32 %v5025, %v5027
        %v5029 = vadd.f32 %v5025, %v5028
        %vm5030 = vweird.f32 %v4965
        %vm5031 = vweird.f32 %v5025
        %vm5032 = vmor %vm5030, %vm5031
        %v5033 = vsel %vm5032, %v5025, %v5029
        %v5034 = vand.u32 2147483647, %v4965
        %vm5035 = vcmp.eq.f32.partialorder %v5034, 8.507059e+37
        %v5036 = vand.u32 %v4965, 2147483648
        %v5037 = vor.u32 1.1754944e-38, %v5036
        %v5038 = vsel %vm5035, %v5037, %v5033
        %v5039 = vmul.f32 1.0, %v5038
        %v5040 = vrcp.pop %v4966
        %v5041 = vmul.f32 %v4966, %v5040
        %v5042 = vsub.f32 1.0, %v5041
        %v5043 = vmul.f32 %v5040, %v5042
        %v5044 = vadd.f32 %v5040, %v5043
        %vm5045 = vweird.f32 %v4966
        %vm5046 = vweird.f32 %v5040
        %vm5047 = vmor %vm5045, %vm5046
        %v5048 = vsel %vm5047, %v5040, %v5044
        %v5049 = vand.u32 2147483647, %v4966
        %vm5050 = vcmp.eq.f32.partialorder %v5049, 8.507059e+37
        %v5051 = vand.u32 %v4966, 2147483648
        %v5052 = vor.u32 1.1754944e-38, %v5051
        %v5053 = vsel %vm5050, %v5052, %v5048
        %v5054 = vmul.f32 1.0, %v5053
        %v5055 = vrcp.pop %v4967
        %v5056 = vmul.f32 %v4967, %v5055
        %v5057 = vsub.f32 1.0, %v5056
        %v5058 = vmul.f32 %v5055, %v5057
        %v5059 = vadd.f32 %v5055, %v5058
        %vm5060 = vweird.f32 %v4967
        %vm5061 = vweird.f32 %v5055
        %vm5062 = vmor %vm5060, %vm5061
        %v5063 = vsel %vm5062, %v5055, %v5059
        %v5064 = vand.u32 2147483647, %v4967
        %vm5065 = vcmp.eq.f32.partialorder %v5064, 8.507059e+37
        %v5066 = vand.u32 %v4967, 2147483648
        %v5067 = vor.u32 1.1754944e-38, %v5066
        %v5068 = vsel %vm5065, %v5067, %v5063
        %v5069 = vmul.f32 1.0, %v5068
        %v5070 = vrcp.pop %v4968
        %v5071 = vmul.f32 %v4968, %v5070
        %v5072 = vsub.f32 1.0, %v5071
        %v5073 = vmul.f32 %v5070, %v5072
        %v5074 = vadd.f32 %v5070, %v5073
        %vm5075 = vweird.f32 %v4968
        %vm5076 = vweird.f32 %v5070
        %vm5077 = vmor %vm5075, %vm5076
        %v5078 = vsel %vm5077, %v5070, %v5074
        %v5079 = vand.u32 2147483647, %v4968
        %vm5080 = vcmp.eq.f32.partialorder %v5079, 8.507059e+37
        %v5081 = vand.u32 %v4968, 2147483648
        %v5082 = vor.u32 1.1754944e-38, %v5081
        %v5083 = vsel %vm5080, %v5082, %v5078
        %v5084 = vmul.f32 1.0, %v5083
        %v5085 = vrcp.pop %v4969
        %v5086 = vmul.f32 %v4969, %v5085
        %v5087 = vsub.f32 1.0, %v5086
        %v5088 = vmul.f32 %v5085, %v5087
        %v5089 = vadd.f32 %v5085, %v5088
        %vm5090 = vweird.f32 %v4969
        %vm5091 = vweird.f32 %v5085
        %vm5092 = vmor %vm5090, %vm5091
        %v5093 = vsel %vm5092, %v5085, %v5089
        %v5094 = vand.u32 2147483647, %v4969
        %vm5095 = vcmp.eq.f32.partialorder %v5094, 8.507059e+37
        %v5096 = vand.u32 %v4969, 2147483648
        %v5097 = vor.u32 1.1754944e-38, %v5096
        %v5098 = vsel %vm5095, %v5097, %v5093
        %v5099 = vmul.f32 1.0, %v5098
        %v5100 = vrcp.pop %v4970
        %v5101 = vmul.f32 %v4970, %v5100
        %v5102 = vsub.f32 1.0, %v5101
        %v5103 = vmul.f32 %v5100, %v5102
        %v5104 = vadd.f32 %v5100, %v5103
        %vm5105 = vweird.f32 %v4970
        %vm5106 = vweird.f32 %v5100
        %vm5107 = vmor %vm5105, %vm5106
        %v5108 = vsel %vm5107, %v5100, %v5104
        %v5109 = vand.u32 2147483647, %v4970
        %vm5110 = vcmp.eq.f32.partialorder %v5109, 8.507059e+37
        %v5111 = vand.u32 %v4970, 2147483648
        %v5112 = vor.u32 1.1754944e-38, %v5111
        %v5113 = vsel %vm5110, %v5112, %v5108
        %v5114 = vmul.f32 1.0, %v5113
        %v5115 = vrcp.pop %v4971
        %v5116 = vmul.f32 %v4971, %v5115
        %v5117 = vsub.f32 1.0, %v5116
        %v5118 = vmul.f32 %v5115, %v5117
        %v5119 = vadd.f32 %v5115, %v5118
        %vm5120 = vweird.f32 %v4971
        %vm5121 = vweird.f32 %v5115
        %vm5122 = vmor %vm5120, %vm5121
        %v5123 = vsel %vm5122, %v5115, %v5119
        %v5124 = vand.u32 2147483647, %v4971
        %vm5125 = vcmp.eq.f32.partialorder %v5124, 8.507059e+37
        %v5126 = vand.u32 %v4971, 2147483648
        %v5127 = vor.u32 1.1754944e-38, %v5126
        %v5128 = vsel %vm5125, %v5127, %v5123
        %v5129 = vmul.f32 1.0, %v5128
        %v5130 = vrcp.pop %v4972
        %v5131 = vmul.f32 %v4972, %v5130
        %v5132 = vsub.f32 1.0, %v5131
        %v5133 = vmul.f32 %v5130, %v5132
        %v5134 = vadd.f32 %v5130, %v5133
        %vm5135 = vweird.f32 %v4972
        %vm5136 = vweird.f32 %v5130
        %vm5137 = vmor %vm5135, %vm5136
        %v5138 = vsel %vm5137, %v5130, %v5134
        %v5139 = vand.u32 2147483647, %v4972
        %vm5140 = vcmp.eq.f32.partialorder %v5139, 8.507059e+37
        %v5141 = vand.u32 %v4972, 2147483648
        %v5142 = vor.u32 1.1754944e-38, %v5141
        %v5143 = vsel %vm5140, %v5142, %v5138
        %v5144 = vmul.f32 1.0, %v5143
        %v5145 = vrcp.pop %v4973
        %v5146 = vmul.f32 %v4973, %v5145
        %v5147 = vsub.f32 1.0, %v5146
        %v5148 = vmul.f32 %v5145, %v5147
        %v5149 = vadd.f32 %v5145, %v5148
        %vm5150 = vweird.f32 %v4973
        %vm5151 = vweird.f32 %v5145
        %vm5152 = vmor %vm5150, %vm5151
        %v5153 = vsel %vm5152, %v5145, %v5149
        %v5154 = vand.u32 2147483647, %v4973
        %vm5155 = vcmp.eq.f32.partialorder %v5154, 8.507059e+37
        %v5156 = vand.u32 %v4973, 2147483648
        %v5157 = vor.u32 1.1754944e-38, %v5156
        %v5158 = vsel %vm5155, %v5157, %v5153
        %v5159 = vmul.f32 1.0, %v5158
        %v5160 = vrcp.pop %v4974
        %v5161 = vmul.f32 %v4974, %v5160
        %v5162 = vsub.f32 1.0, %v5161
        %v5163 = vmul.f32 %v5160, %v5162
        %v5164 = vadd.f32 %v5160, %v5163
        %vm5165 = vweird.f32 %v4974
        %vm5166 = vweird.f32 %v5160
        %vm5167 = vmor %vm5165, %vm5166
        %v5168 = vsel %vm5167, %v5160, %v5164
        %v5169 = vand.u32 2147483647, %v4974
        %vm5170 = vcmp.eq.f32.partialorder %v5169, 8.507059e+37
        %v5171 = vand.u32 %v4974, 2147483648
        %v5172 = vor.u32 1.1754944e-38, %v5171
        %v5173 = vsel %vm5170, %v5172, %v5168
        %v5174 = vmul.f32 1.0, %v5173
        %v5175 = vrcp.pop %v4975
        %v5176 = vmul.f32 %v4975, %v5175
        %v5177 = vsub.f32 1.0, %v5176
        %v5178 = vmul.f32 %v5175, %v5177
        %v5179 = vadd.f32 %v5175, %v5178
        %vm5180 = vweird.f32 %v4975
        %vm5181 = vweird.f32 %v5175
        %vm5182 = vmor %vm5180, %vm5181
        %v5183 = vsel %vm5182, %v5175, %v5179
        %v5184 = vand.u32 2147483647, %v4975
        %vm5185 = vcmp.eq.f32.partialorder %v5184, 8.507059e+37
        %v5186 = vand.u32 %v4975, 2147483648
        %v5187 = vor.u32 1.1754944e-38, %v5186
        %v5188 = vsel %vm5185, %v5187, %v5183
        %v5189 = vmul.f32 1.0, %v5188
        %v5190 = vrcp.pop %v4976
        %v5191 = vmul.f32 %v4976, %v5190
        %v5192 = vsub.f32 1.0, %v5191
        %v5193 = vmul.f32 %v5190, %v5192
        %v5194 = vadd.f32 %v5190, %v5193
        %vm5195 = vweird.f32 %v4976
        %vm5196 = vweird.f32 %v5190
        %vm5197 = vmor %vm5195, %vm5196
        %v5198 = vsel %vm5197, %v5190, %v5194
        %v5199 = vand.u32 2147483647, %v4976
        %vm5200 = vcmp.eq.f32.partialorder %v5199, 8.507059e+37
        %v5201 = vand.u32 %v4976, 2147483648
        %v5202 = vor.u32 1.1754944e-38, %v5201
        %v5203 = vsel %vm5200, %v5202, %v5198
        %v5204 = vmul.f32 1.0, %v5203
        %v5205 = vrcp.pop %v4977
        %v5206 = vmul.f32 %v4977, %v5205
        %v5207 = vsub.f32 1.0, %v5206
        %v5208 = vmul.f32 %v5205, %v5207
        %v5209 = vadd.f32 %v5205, %v5208
        %vm5210 = vweird.f32 %v4977
        %vm5211 = vweird.f32 %v5205
        %vm5212 = vmor %vm5210, %vm5211
        %v5213 = vsel %vm5212, %v5205, %v5209
        %v5214 = vand.u32 2147483647, %v4977
        %vm5215 = vcmp.eq.f32.partialorder %v5214, 8.507059e+37
        %v5216 = vand.u32 %v4977, 2147483648
        %v5217 = vor.u32 1.1754944e-38, %v5216
        %v5218 = vsel %vm5215, %v5217, %v5213
        %v5219 = vmul.f32 1.0, %v5218
        %v5220 = vrcp.pop %v4978
        %v5221 = vmul.f32 %v4978, %v5220
        %v5222 = vsub.f32 1.0, %v5221
        %v5223 = vmul.f32 %v5220, %v5222
        %v5224 = vadd.f32 %v5220, %v5223
        %vm5225 = vweird.f32 %v4978
        %vm5226 = vweird.f32 %v5220
        %vm5227 = vmor %vm5225, %vm5226
        %v5228 = vsel %vm5227, %v5220, %v5224
        %v5229 = vand.u32 2147483647, %v4978
        %vm5230 = vcmp.eq.f32.partialorder %v5229, 8.507059e+37
        %v5231 = vand.u32 %v4978, 2147483648
        %v5232 = vor.u32 1.1754944e-38, %v5231
        %v5233 = vsel %vm5230, %v5232, %v5228
        %v5234 = vmul.f32 1.0, %v5233
        %v5235 = vrcp.pop %v4979
        %v5236 = vmul.f32 %v4979, %v5235
        %v5237 = vsub.f32 1.0, %v5236
        %v5238 = vmul.f32 %v5235, %v5237
        %v5239 = vadd.f32 %v5235, %v5238
        %vm5240 = vweird.f32 %v4979
        %vm5241 = vweird.f32 %v5235
        %vm5242 = vmor %vm5240, %vm5241
        %v5243 = vsel %vm5242, %v5235, %v5239
        %v5244 = vand.u32 2147483647, %v4979
        %vm5245 = vcmp.eq.f32.partialorder %v5244, 8.507059e+37
        %v5246 = vand.u32 %v4979, 2147483648
        %v5247 = vor.u32 1.1754944e-38, %v5246
        %v5248 = vsel %vm5245, %v5247, %v5243
        %v5249 = vmul.f32 1.0, %v5248
        %v5250 = vrcp.pop %v4980
        %v5251 = vmul.f32 %v4980, %v5250
        %v5252 = vsub.f32 1.0, %v5251
        %v5253 = vmul.f32 %v5250, %v5252
        %v5254 = vadd.f32 %v5250, %v5253
        %vm5255 = vweird.f32 %v4980
        %vm5256 = vweird.f32 %v5250
        %vm5257 = vmor %vm5255, %vm5256
        %v5258 = vsel %vm5257, %v5250, %v5254
        %v5259 = vand.u32 2147483647, %v4980
        %vm5260 = vcmp.eq.f32.partialorder %v5259, 8.507059e+37
        %v5261 = vand.u32 %v4980, 2147483648
        %v5262 = vor.u32 1.1754944e-38, %v5261
        %v5263 = vsel %vm5260, %v5262, %v5258
        %v5264 = vmul.f32 1.0, %v5263
        %v5265 = vrcp.pop %v4981
        %v5266 = vmul.f32 %v4981, %v5265
        %v5267 = vsub.f32 1.0, %v5266
        %v5268 = vmul.f32 %v5265, %v5267
        %v5269 = vadd.f32 %v5265, %v5268
        %vm5270 = vweird.f32 %v4981
        %vm5271 = vweird.f32 %v5265
        %vm5272 = vmor %vm5270, %vm5271
        %v5273 = vsel %vm5272, %v5265, %v5269
        %v5274 = vand.u32 2147483647, %v4981
        %vm5275 = vcmp.eq.f32.partialorder %v5274, 8.507059e+37
        %v5276 = vand.u32 %v4981, 2147483648
        %v5277 = vor.u32 1.1754944e-38, %v5276
        %v5278 = vsel %vm5275, %v5277, %v5273
        %v5279 = vmul.f32 1.0, %v5278
        %v5280 = vrcp.pop %v4982
        %v5281 = vmul.f32 %v4982, %v5280
        %v5282 = vsub.f32 1.0, %v5281
        %v5283 = vmul.f32 %v5280, %v5282
        %v5284 = vadd.f32 %v5280, %v5283
        %vm5285 = vweird.f32 %v4982
        %vm5286 = vweird.f32 %v5280
        %vm5287 = vmor %vm5285, %vm5286
        %v5288 = vsel %vm5287, %v5280, %v5284
        %v5289 = vand.u32 2147483647, %v4982
        %vm5290 = vcmp.eq.f32.partialorder %v5289, 8.507059e+37
        %v5291 = vand.u32 %v4982, 2147483648
        %v5292 = vor.u32 1.1754944e-38, %v5291
        %v5293 = vsel %vm5290, %v5292, %v5288
        %v5294 = vmul.f32 1.0, %v5293
        %v5295 = vrcp.pop %v4983
        %v5296 = vmul.f32 %v4983, %v5295
        %v5297 = vsub.f32 1.0, %v5296
        %v5298 = vmul.f32 %v5295, %v5297
        %v5299 = vadd.f32 %v5295, %v5298
        %vm5300 = vweird.f32 %v4983
        %vm5301 = vweird.f32 %v5295
        %vm5302 = vmor %vm5300, %vm5301
        %v5303 = vsel %vm5302, %v5295, %v5299
        %v5304 = vand.u32 2147483647, %v4983
        %vm5305 = vcmp.eq.f32.partialorder %v5304, 8.507059e+37
        %v5306 = vand.u32 %v4983, 2147483648
        %v5307 = vor.u32 1.1754944e-38, %v5306
        %v5308 = vsel %vm5305, %v5307, %v5303
        %v5309 = vmul.f32 1.0, %v5308
        %v5310 = vrcp.pop %v4984
        %v5311 = vmul.f32 %v4984, %v5310
        %v5312 = vsub.f32 1.0, %v5311
        %v5313 = vmul.f32 %v5310, %v5312
        %v5314 = vadd.f32 %v5310, %v5313
        %vm5315 = vweird.f32 %v4984
        %vm5316 = vweird.f32 %v5310
        %vm5317 = vmor %vm5315, %vm5316
        %v5318 = vsel %vm5317, %v5310, %v5314
        %v5319 = vand.u32 2147483647, %v4984
        %vm5320 = vcmp.eq.f32.partialorder %v5319, 8.507059e+37
        %v5321 = vand.u32 %v4984, 2147483648
        %v5322 = vor.u32 1.1754944e-38, %v5321
        %v5323 = vsel %vm5320, %v5322, %v5318
        %v5324 = vmul.f32 1.0, %v5323
        %v5325 = vrcp.pop %v4985
        %v5326 = vmul.f32 %v4985, %v5325
        %v5327 = vsub.f32 1.0, %v5326
        %v5328 = vmul.f32 %v5325, %v5327
        %v5329 = vadd.f32 %v5325, %v5328
        %vm5330 = vweird.f32 %v4985
        %vm5331 = vweird.f32 %v5325
        %vm5332 = vmor %vm5330, %vm5331
        %v5333 = vsel %vm5332, %v5325, %v5329
        %v5334 = vand.u32 2147483647, %v4985
        %vm5335 = vcmp.eq.f32.partialorder %v5334, 8.507059e+37
        %v5336 = vand.u32 %v4985, 2147483648
        %v5337 = vor.u32 1.1754944e-38, %v5336
        %v5338 = vsel %vm5335, %v5337, %v5333
        %v5339 = vmul.f32 1.0, %v5338
        %v5340 = vrcp.pop %v4986
        %v5341 = vmul.f32 %v4986, %v5340
        %v5342 = vsub.f32 1.0, %v5341
        %v5343 = vmul.f32 %v5340, %v5342
        %v5344 = vadd.f32 %v5340, %v5343
        %vm5345 = vweird.f32 %v4986
        %vm5346 = vweird.f32 %v5340
        %vm5347 = vmor %vm5345, %vm5346
        %v5348 = vsel %vm5347, %v5340, %v5344
        %v5349 = vand.u32 2147483647, %v4986
        %vm5350 = vcmp.eq.f32.partialorder %v5349, 8.507059e+37
        %v5351 = vand.u32 %v4986, 2147483648
        %v5352 = vor.u32 1.1754944e-38, %v5351
        %v5353 = vsel %vm5350, %v5352, %v5348
        %v5354 = vmul.f32 1.0, %v5353
        %v5355 = vrcp.pop %v4987
        %v5356 = vmul.f32 %v4987, %v5355
        %v5357 = vsub.f32 1.0, %v5356
        %v5358 = vmul.f32 %v5355, %v5357
        %v5359 = vadd.f32 %v5355, %v5358
        %vm5360 = vweird.f32 %v4987
        %vm5361 = vweird.f32 %v5355
        %vm5362 = vmor %vm5360, %vm5361
        %v5363 = vsel %vm5362, %v5355, %v5359
        %v5364 = vand.u32 2147483647, %v4987
        %vm5365 = vcmp.eq.f32.partialorder %v5364, 8.507059e+37
        %v5366 = vand.u32 %v4987, 2147483648
        %v5367 = vor.u32 1.1754944e-38, %v5366
        %v5368 = vsel %vm5365, %v5367, %v5363
        %v5369 = vmul.f32 1.0, %v5368
        %v5370 = vrcp.pop %v4988
        %v5371 = vmul.f32 %v4988, %v5370
        %v5372 = vsub.f32 1.0, %v5371
        %v5373 = vmul.f32 %v5370, %v5372
        %v5374 = vadd.f32 %v5370, %v5373
        %vm5375 = vweird.f32 %v4988
        %vm5376 = vweird.f32 %v5370
        %vm5377 = vmor %vm5375, %vm5376
        %v5378 = vsel %vm5377, %v5370, %v5374
        %v5379 = vand.u32 2147483647, %v4988
        %vm5380 = vcmp.eq.f32.partialorder %v5379, 8.507059e+37
        %v5381 = vand.u32 %v4988, 2147483648
        %v5382 = vor.u32 1.1754944e-38, %v5381
        %v5383 = vsel %vm5380, %v5382, %v5378
        %v5384 = vmul.f32 1.0, %v5383
        %v5385 = vrcp.pop %v4989
        %v5386 = vmul.f32 %v4989, %v5385
        %v5387 = vsub.f32 1.0, %v5386
        %v5388 = vmul.f32 %v5385, %v5387
        %v5389 = vadd.f32 %v5385, %v5388
        %vm5390 = vweird.f32 %v4989
        %vm5391 = vweird.f32 %v5385
        %vm5392 = vmor %vm5390, %vm5391
        %v5393 = vsel %vm5392, %v5385, %v5389
        %v5394 = vand.u32 2147483647, %v4989
        %vm5395 = vcmp.eq.f32.partialorder %v5394, 8.507059e+37
        %v5396 = vand.u32 %v4989, 2147483648
        %v5397 = vor.u32 1.1754944e-38, %v5396
        %v5398 = vsel %vm5395, %v5397, %v5393
        %v5399 = vmul.f32 1.0, %v5398
        %v5400 = vrcp.pop %v4990
        %v5401 = vmul.f32 %v4990, %v5400
        %v5402 = vsub.f32 1.0, %v5401
        %v5403 = vmul.f32 %v5400, %v5402
        %v5404 = vadd.f32 %v5400, %v5403
        %vm5405 = vweird.f32 %v4990
        %vm5406 = vweird.f32 %v5400
        %vm5407 = vmor %vm5405, %vm5406
        %v5408 = vsel %vm5407, %v5400, %v5404
        %v5409 = vand.u32 2147483647, %v4990
        %vm5410 = vcmp.eq.f32.partialorder %v5409, 8.507059e+37
        %v5411 = vand.u32 %v4990, 2147483648
        %v5412 = vor.u32 1.1754944e-38, %v5411
        %v5413 = vsel %vm5410, %v5412, %v5408
        %v5414 = vmul.f32 1.0, %v5413
        %v5415 = vrcp.pop %v4991
        %v5416 = vmul.f32 %v4991, %v5415
        %v5417 = vsub.f32 1.0, %v5416
        %v5418 = vmul.f32 %v5415, %v5417
        %v5419 = vadd.f32 %v5415, %v5418
        %vm5420 = vweird.f32 %v4991
        %vm5421 = vweird.f32 %v5415
        %vm5422 = vmor %vm5420, %vm5421
        %v5423 = vsel %vm5422, %v5415, %v5419
        %v5424 = vand.u32 2147483647, %v4991
        %vm5425 = vcmp.eq.f32.partialorder %v5424, 8.507059e+37
        %v5426 = vand.u32 %v4991, 2147483648
        %v5427 = vor.u32 1.1754944e-38, %v5426
        %v5428 = vsel %vm5425, %v5427, %v5423
        %v5429 = vmul.f32 1.0, %v5428
        %v5430 = vrcp.pop %v4992
        %v5431 = vmul.f32 %v4992, %v5430
        %v5432 = vsub.f32 1.0, %v5431
        %v5433 = vmul.f32 %v5430, %v5432
        %v5434 = vadd.f32 %v5430, %v5433
        %vm5435 = vweird.f32 %v4992
        %vm5436 = vweird.f32 %v5430
        %vm5437 = vmor %vm5435, %vm5436
        %v5438 = vsel %vm5437, %v5430, %v5434
        %v5439 = vand.u32 2147483647, %v4992
        %vm5440 = vcmp.eq.f32.partialorder %v5439, 8.507059e+37
        %v5441 = vand.u32 %v4992, 2147483648
        %v5442 = vor.u32 1.1754944e-38, %v5441
        %v5443 = vsel %vm5440, %v5442, %v5438
        %v5444 = vmul.f32 1.0, %v5443
        %v5445 = vrcp.pop %v4993
        %v5446 = vmul.f32 %v4993, %v5445
        %v5447 = vsub.f32 1.0, %v5446
        %v5448 = vmul.f32 %v5445, %v5447
        %v5449 = vadd.f32 %v5445, %v5448
        %vm5450 = vweird.f32 %v4993
        %vm5451 = vweird.f32 %v5445
        %vm5452 = vmor %vm5450, %vm5451
        %v5453 = vsel %vm5452, %v5445, %v5449
        %v5454 = vand.u32 2147483647, %v4993
        %vm5455 = vcmp.eq.f32.partialorder %v5454, 8.507059e+37
        %v5456 = vand.u32 %v4993, 2147483648
        %v5457 = vor.u32 1.1754944e-38, %v5456
        %v5458 = vsel %vm5455, %v5457, %v5453
        %v5459 = vmul.f32 1.0, %v5458
        %v5460 = vrcp.pop %v4994
        %v5461 = vmul.f32 %v4994, %v5460
        %v5462 = vsub.f32 1.0, %v5461
        %v5463 = vmul.f32 %v5460, %v5462
        %v5464 = vadd.f32 %v5460, %v5463
        %vm5465 = vweird.f32 %v4994
        %vm5466 = vweird.f32 %v5460
        %vm5467 = vmor %vm5465, %vm5466
        %v5468 = vsel %vm5467, %v5460, %v5464
        %v5469 = vand.u32 2147483647, %v4994
        %vm5470 = vcmp.eq.f32.partialorder %v5469, 8.507059e+37
        %v5471 = vand.u32 %v4994, 2147483648
        %v5472 = vor.u32 1.1754944e-38, %v5471
        %v5473 = vsel %vm5470, %v5472, %v5468
        %v5474 = vmul.f32 1.0, %v5473
        %v5475 = vmul.f32 %v5009, %v838
        %v5476 = vmul.f32 %v5024, %v839
        %v5477 = vmul.f32 %v5039, %v840
        %v5478 = vmul.f32 %v5054, %v841
        %v5479 = vmul.f32 %v5069, %v842
        %v5480 = vmul.f32 %v5084, %v843
        %v5481 = vmul.f32 %v5099, %v844
        %v5482 = vmul.f32 %v5114, %v845
        %v5483 = vmul.f32 %v5129, %v846
        %v5484 = vmul.f32 %v5144, %v847
        %v5485 = vmul.f32 %v5159, %v848
        %v5486 = vmul.f32 %v5174, %v849
        %v5487 = vmul.f32 %v5189, %v850
        %v5488 = vmul.f32 %v5204, %v851
        %v5489 = vmul.f32 %v5219, %v852
        %v5490 = vmul.f32 %v5234, %v853
        %v5491 = vmul.f32 %v5249, %v854
        %v5492 = vmul.f32 %v5264, %v855
        %v5493 = vmul.f32 %v5279, %v856
        %v5494 = vmul.f32 %v5294, %v857
        %v5495 = vmul.f32 %v5309, %v858
        %v5496 = vmul.f32 %v5324, %v859
        %v5497 = vmul.f32 %v5339, %v860
        %v5498 = vmul.f32 %v5354, %v861
        %v5499 = vmul.f32 %v5369, %v862
        %v5500 = vmul.f32 %v5384, %v863
        %v5501 = vmul.f32 %v5399, %v864
        %v5502 = vmul.f32 %v5414, %v865
        %v5503 = vmul.f32 %v5429, %v866
        %v5504 = vmul.f32 %v5444, %v867
        %v5505 = vmul.f32 %v5459, %v868
        %v5506 = vmul.f32 %v5474, %v869
        %v5507 = vsub.f32 1.0, %v5009
        %v5508 = vsub.f32 1.0, %v5024
        %v5509 = vsub.f32 1.0, %v5039
        %v5510 = vsub.f32 1.0, %v5054
        %v5511 = vsub.f32 1.0, %v5069
        %v5512 = vsub.f32 1.0, %v5084
        %v5513 = vsub.f32 1.0, %v5099
        %v5514 = vsub.f32 1.0, %v5114
        %v5515 = vsub.f32 1.0, %v5129
        %v5516 = vsub.f32 1.0, %v5144
        %v5517 = vsub.f32 1.0, %v5159
        %v5518 = vsub.f32 1.0, %v5174
        %v5519 = vsub.f32 1.0, %v5189
        %v5520 = vsub.f32 1.0, %v5204
        %v5521 = vsub.f32 1.0, %v5219
        %v5522 = vsub.f32 1.0, %v5234
        %v5523 = vsub.f32 1.0, %v5249
        %v5524 = vsub.f32 1.0, %v5264
        %v5525 = vsub.f32 1.0, %v5279
        %v5526 = vsub.f32 1.0, %v5294
        %v5527 = vsub.f32 1.0, %v5309
        %v5528 = vsub.f32 1.0, %v5324
        %v5529 = vsub.f32 1.0, %v5339
        %v5530 = vsub.f32 1.0, %v5354
        %v5531 = vsub.f32 1.0, %v5369
        %v5532 = vsub.f32 1.0, %v5384
        %v5533 = vsub.f32 1.0, %v5399
        %v5534 = vsub.f32 1.0, %v5414
        %v5535 = vsub.f32 1.0, %v5429
        %v5536 = vsub.f32 1.0, %v5444
        %v5537 = vsub.f32 1.0, %v5459
        %v5538 = vsub.f32 1.0, %v5474
        %v5539 = vmul.f32 %v5507, %v2653
        %v5540 = vmul.f32 %v5508, %v2655
        %v5541 = vmul.f32 %v5509, %v2658
        %v5542 = vmul.f32 %v5510, %v2660
        %v5543 = vmul.f32 %v5511, %v2663
        %v5544 = vmul.f32 %v5512, %v2665
        %v5545 = vmul.f32 %v5513, %v2668
        %v5546 = vmul.f32 %v5514, %v2670
        %v5547 = vmul.f32 %v5515, %v2673
        %v5548 = vmul.f32 %v5516, %v2675
        %v5549 = vmul.f32 %v5517, %v2678
        %v5550 = vmul.f32 %v5518, %v2680
        %v5551 = vmul.f32 %v5519, %v2683
        %v5552 = vmul.f32 %v5520, %v2685
        %v5553 = vmul.f32 %v5521, %v2688
        %v5554 = vmul.f32 %v5522, %v2690
        %v5555 = vmul.f32 %v5523, %v2693
        %v5556 = vmul.f32 %v5524, %v2695
        %v5557 = vmul.f32 %v5525, %v2698
        %v5558 = vmul.f32 %v5526, %v2700
        %v5559 = vmul.f32 %v5527, %v2703
        %v5560 = vmul.f32 %v5528, %v2705
        %v5561 = vmul.f32 %v5529, %v2708
        %v5562 = vmul.f32 %v5530, %v2710
        %v5563 = vmul.f32 %v5531, %v2713
        %v5564 = vmul.f32 %v5532, %v2715
        %v5565 = vmul.f32 %v5533, %v2718
        %v5566 = vmul.f32 %v5534, %v2720
        %v5567 = vmul.f32 %v5535, %v2723
        %v5568 = vmul.f32 %v5536, %v2725
        %v5569 = vmul.f32 %v5537, %v2728
        %v5570 = vmul.f32 %v5538, %v2730
        %v5571 = vadd.f32 %v5475, %v5539
        %v5572 = vadd.f32 %v5476, %v5540
        %v5573 = vadd.f32 %v5477, %v5541
        %v5574 = vadd.f32 %v5478, %v5542
        %v5575 = vadd.f32 %v5479, %v5543
        %v5576 = vadd.f32 %v5480, %v5544
        %v5577 = vadd.f32 %v5481, %v5545
        %v5578 = vadd.f32 %v5482, %v5546
        %v5579 = vadd.f32 %v5483, %v5547
        %v5580 = vadd.f32 %v5484, %v5548
        %v5581 = vadd.f32 %v5485, %v5549
        %v5582 = vadd.f32 %v5486, %v5550
        %v5583 = vadd.f32 %v5487, %v5551
        %v5584 = vadd.f32 %v5488, %v5552
        %v5585 = vadd.f32 %v5489, %v5553
        %v5586 = vadd.f32 %v5490, %v5554
        %v5587 = vadd.f32 %v5491, %v5555
        %v5588 = vadd.f32 %v5492, %v5556
        %v5589 = vadd.f32 %v5493, %v5557
        %v5590 = vadd.f32 %v5494, %v5558
        %v5591 = vadd.f32 %v5495, %v5559
        %v5592 = vadd.f32 %v5496, %v5560
        %v5593 = vadd.f32 %v5497, %v5561
        %v5594 = vadd.f32 %v5498, %v5562
        %v5595 = vadd.f32 %v5499, %v5563
        %v5596 = vadd.f32 %v5500, %v5564
        %v5597 = vadd.f32 %v5501, %v5565
        %v5598 = vadd.f32 %v5502, %v5566
        %v5599 = vadd.f32 %v5503, %v5567
        %v5600 = vadd.f32 %v5504, %v5568
        %v5601 = vadd.f32 %v5505, %v5569
        %v5602 = vadd.f32 %v5506, %v5570
        %v5603 = vmul.f32 %v870, %v4577
        %v5604 = vmul.f32 %v871, %v4577
        %v5605 = vmul.f32 %v872, %v4577
        %v5606 = vmul.f32 %v873, %v4577
        %v5607 = vmul.f32 %v874, %v4577
        %v5608 = vmul.f32 %v875, %v4577
        %v5609 = vmul.f32 %v876, %v4577
        %v5610 = vmul.f32 %v877, %v4577
        %v5611 = vmul.f32 %v878, %v4577
        %v5612 = vmul.f32 %v879, %v4577
        %v5613 = vmul.f32 %v880, %v4577
        %v5614 = vmul.f32 %v881, %v4577
        %v5615 = vmul.f32 %v882, %v4577
        %v5616 = vmul.f32 %v883, %v4577
        %v5617 = vmul.f32 %v884, %v4577
        %v5618 = vmul.f32 %v885, %v4577
        %v5619 = vmul.f32 %v886, %v4577
        %v5620 = vmul.f32 %v887, %v4577
        %v5621 = vmul.f32 %v888, %v4577
        %v5622 = vmul.f32 %v889, %v4577
        %v5623 = vmul.f32 %v890, %v4577
        %v5624 = vmul.f32 %v891, %v4577
        %v5625 = vmul.f32 %v892, %v4577
        %v5626 = vmul.f32 %v893, %v4577
        %v5627 = vmul.f32 %v894, %v4577
        %v5628 = vmul.f32 %v895, %v4577
        %v5629 = vmul.f32 %v896, %v4577
        %v5630 = vmul.f32 %v897, %v4577
        %v5631 = vmul.f32 %v898, %v4577
        %v5632 = vmul.f32 %v899, %v4577
        %v5633 = vmul.f32 %v900, %v4577
        %v5634 = vmul.f32 %v901, %v4577
        %v5635 = vsel %vm934, %v5603, 0.0
        %5636 = vadd.xlane.f32.xlu0 %v5635
        %v5637 = vpop.xlane.xlu0 %5636
        %v5638 = vsel %vm934, %v5604, 0.0
        %5639 = vadd.xlane.f32.xlu0 %v5638
        %v5640 = vpop.xlane.xlu0 %5639
        %v5641 = vsel %vm934, %v5605, 0.0
        %5642 = vadd.xlane.f32.xlu0 %v5641
        %v5643 = vpop.xlane.xlu0 %5642
        %v5644 = vsel %vm934, %v5606, 0.0
        %5645 = vadd.xlane.f32.xlu0 %v5644
        %v5646 = vpop.xlane.xlu0 %5645
        %v5647 = vsel %vm934, %v5607, 0.0
        %5648 = vadd.xlane.f32.xlu0 %v5647
        %v5649 = vpop.xlane.xlu0 %5648
        %v5650 = vsel %vm934, %v5608, 0.0
        %5651 = vadd.xlane.f32.xlu0 %v5650
        %v5652 = vpop.xlane.xlu0 %5651
        %v5653 = vsel %vm934, %v5609, 0.0
        %5654 = vadd.xlane.f32.xlu0 %v5653
        %v5655 = vpop.xlane.xlu0 %5654
        %v5656 = vsel %vm934, %v5610, 0.0
        %5657 = vadd.xlane.f32.xlu0 %v5656
        %v5658 = vpop.xlane.xlu0 %5657
        %v5659 = vsel %vm934, %v5611, 0.0
        %5660 = vadd.xlane.f32.xlu0 %v5659
        %v5661 = vpop.xlane.xlu0 %5660
        %v5662 = vsel %vm934, %v5612, 0.0
        %5663 = vadd.xlane.f32.xlu0 %v5662
        %v5664 = vpop.xlane.xlu0 %5663
        %v5665 = vsel %vm934, %v5613, 0.0
        %5666 = vadd.xlane.f32.xlu0 %v5665
        %v5667 = vpop.xlane.xlu0 %5666
        %v5668 = vsel %vm934, %v5614, 0.0
        %5669 = vadd.xlane.f32.xlu0 %v5668
        %v5670 = vpop.xlane.xlu0 %5669
        %v5671 = vsel %vm934, %v5615, 0.0
        %5672 = vadd.xlane.f32.xlu0 %v5671
        %v5673 = vpop.xlane.xlu0 %5672
        %v5674 = vsel %vm934, %v5616, 0.0
        %5675 = vadd.xlane.f32.xlu0 %v5674
        %v5676 = vpop.xlane.xlu0 %5675
        %v5677 = vsel %vm934, %v5617, 0.0
        %5678 = vadd.xlane.f32.xlu0 %v5677
        %v5679 = vpop.xlane.xlu0 %5678
        %v5680 = vsel %vm934, %v5618, 0.0
        %5681 = vadd.xlane.f32.xlu0 %v5680
        %v5682 = vpop.xlane.xlu0 %5681
        %v5683 = vsel %vm934, %v5619, 0.0
        %5684 = vadd.xlane.f32.xlu0 %v5683
        %v5685 = vpop.xlane.xlu0 %5684
        %v5686 = vsel %vm934, %v5620, 0.0
        %5687 = vadd.xlane.f32.xlu0 %v5686
        %v5688 = vpop.xlane.xlu0 %5687
        %v5689 = vsel %vm934, %v5621, 0.0
        %5690 = vadd.xlane.f32.xlu0 %v5689
        %v5691 = vpop.xlane.xlu0 %5690
        %v5692 = vsel %vm934, %v5622, 0.0
        %5693 = vadd.xlane.f32.xlu0 %v5692
        %v5694 = vpop.xlane.xlu0 %5693
        %v5695 = vsel %vm934, %v5623, 0.0
        %5696 = vadd.xlane.f32.xlu0 %v5695
        %v5697 = vpop.xlane.xlu0 %5696
        %v5698 = vsel %vm934, %v5624, 0.0
        %5699 = vadd.xlane.f32.xlu0 %v5698
        %v5700 = vpop.xlane.xlu0 %5699
        %v5701 = vsel %vm934, %v5625, 0.0
        %5702 = vadd.xlane.f32.xlu0 %v5701
        %v5703 = vpop.xlane.xlu0 %5702
        %v5704 = vsel %vm934, %v5626, 0.0
        %5705 = vadd.xlane.f32.xlu0 %v5704
        %v5706 = vpop.xlane.xlu0 %5705
        %v5707 = vsel %vm934, %v5627, 0.0
        %5708 = vadd.xlane.f32.xlu0 %v5707
        %v5709 = vpop.xlane.xlu0 %5708
        %v5710 = vsel %vm934, %v5628, 0.0
        %5711 = vadd.xlane.f32.xlu0 %v5710
        %v5712 = vpop.xlane.xlu0 %5711
        %v5713 = vsel %vm934, %v5629, 0.0
        %5714 = vadd.xlane.f32.xlu0 %v5713
        %v5715 = vpop.xlane.xlu0 %5714
        %v5716 = vsel %vm934, %v5630, 0.0
        %5717 = vadd.xlane.f32.xlu0 %v5716
        %v5718 = vpop.xlane.xlu0 %5717
        %v5719 = vsel %vm934, %v5631, 0.0
        %5720 = vadd.xlane.f32.xlu0 %v5719
        %v5721 = vpop.xlane.xlu0 %5720
        %v5722 = vsel %vm934, %v5632, 0.0
        %5723 = vadd.xlane.f32.xlu0 %v5722
        %v5724 = vpop.xlane.xlu0 %5723
        %v5725 = vsel %vm934, %v5633, 0.0
        %5726 = vadd.xlane.f32.xlu0 %v5725
        %v5727 = vpop.xlane.xlu0 %5726
        %v5728 = vsel %vm934, %v5634, 0.0
        %5729 = vadd.xlane.f32.xlu0 %v5728
        %v5730 = vpop.xlane.xlu0 %5729
        %v5731 = vmul.f32 %v4368, %v4577
        %v5732 = vmul.f32 %v4370, %v4577
        %v5733 = vmul.f32 %v4373, %v4577
        %v5734 = vmul.f32 %v4375, %v4577
        %v5735 = vmul.f32 %v4378, %v4577
        %v5736 = vmul.f32 %v4380, %v4577
        %v5737 = vmul.f32 %v4383, %v4577
        %v5738 = vmul.f32 %v4385, %v4577
        %v5739 = vmul.f32 %v4388, %v4577
        %v5740 = vmul.f32 %v4390, %v4577
        %v5741 = vmul.f32 %v4393, %v4577
        %v5742 = vmul.f32 %v4395, %v4577
        %v5743 = vmul.f32 %v4398, %v4577
        %v5744 = vmul.f32 %v4400, %v4577
        %v5745 = vmul.f32 %v4403, %v4577
        %v5746 = vmul.f32 %v4405, %v4577
        %v5747 = vmul.f32 %v4408, %v4577
        %v5748 = vmul.f32 %v4410, %v4577
        %v5749 = vmul.f32 %v4413, %v4577
        %v5750 = vmul.f32 %v4415, %v4577
        %v5751 = vmul.f32 %v4418, %v4577
        %v5752 = vmul.f32 %v4420, %v4577
        %v5753 = vmul.f32 %v4423, %v4577
        %v5754 = vmul.f32 %v4425, %v4577
        %v5755 = vmul.f32 %v4428, %v4577
        %v5756 = vmul.f32 %v4430, %v4577
        %v5757 = vmul.f32 %v4433, %v4577
        %v5758 = vmul.f32 %v4435, %v4577
        %v5759 = vmul.f32 %v4438, %v4577
        %v5760 = vmul.f32 %v4440, %v4577
        %v5761 = vmul.f32 %v4443, %v4577
        %v5762 = vmul.f32 %v4445, %v4577
        %v5763 = vsel %vm934, %v5731, 0.0
        %5764 = vadd.xlane.f32.xlu0 %v5763
        %v5765 = vpop.xlane.xlu0 %5764
        %v5766 = vsel %vm934, %v5732, 0.0
        %5767 = vadd.xlane.f32.xlu0 %v5766
        %v5768 = vpop.xlane.xlu0 %5767
        %v5769 = vsel %vm934, %v5733, 0.0
        %5770 = vadd.xlane.f32.xlu0 %v5769
        %v5771 = vpop.xlane.xlu0 %5770
        %v5772 = vsel %vm934, %v5734, 0.0
        %5773 = vadd.xlane.f32.xlu0 %v5772
        %v5774 = vpop.xlane.xlu0 %5773
        %v5775 = vsel %vm934, %v5735, 0.0
        %5776 = vadd.xlane.f32.xlu0 %v5775
        %v5777 = vpop.xlane.xlu0 %5776
        %v5778 = vsel %vm934, %v5736, 0.0
        %5779 = vadd.xlane.f32.xlu0 %v5778
        %v5780 = vpop.xlane.xlu0 %5779
        %v5781 = vsel %vm934, %v5737, 0.0
        %5782 = vadd.xlane.f32.xlu0 %v5781
        %v5783 = vpop.xlane.xlu0 %5782
        %v5784 = vsel %vm934, %v5738, 0.0
        %5785 = vadd.xlane.f32.xlu0 %v5784
        %v5786 = vpop.xlane.xlu0 %5785
        %v5787 = vsel %vm934, %v5739, 0.0
        %5788 = vadd.xlane.f32.xlu0 %v5787
        %v5789 = vpop.xlane.xlu0 %5788
        %v5790 = vsel %vm934, %v5740, 0.0
        %5791 = vadd.xlane.f32.xlu0 %v5790
        %v5792 = vpop.xlane.xlu0 %5791
        %v5793 = vsel %vm934, %v5741, 0.0
        %5794 = vadd.xlane.f32.xlu0 %v5793
        %v5795 = vpop.xlane.xlu0 %5794
        %v5796 = vsel %vm934, %v5742, 0.0
        %5797 = vadd.xlane.f32.xlu0 %v5796
        %v5798 = vpop.xlane.xlu0 %5797
        %v5799 = vsel %vm934, %v5743, 0.0
        %5800 = vadd.xlane.f32.xlu0 %v5799
        %v5801 = vpop.xlane.xlu0 %5800
        %v5802 = vsel %vm934, %v5744, 0.0
        %5803 = vadd.xlane.f32.xlu0 %v5802
        %v5804 = vpop.xlane.xlu0 %5803
        %v5805 = vsel %vm934, %v5745, 0.0
        %5806 = vadd.xlane.f32.xlu0 %v5805
        %v5807 = vpop.xlane.xlu0 %5806
        %v5808 = vsel %vm934, %v5746, 0.0
        %5809 = vadd.xlane.f32.xlu0 %v5808
        %v5810 = vpop.xlane.xlu0 %5809
        %v5811 = vsel %vm934, %v5747, 0.0
        %5812 = vadd.xlane.f32.xlu0 %v5811
        %v5813 = vpop.xlane.xlu0 %5812
        %v5814 = vsel %vm934, %v5748, 0.0
        %5815 = vadd.xlane.f32.xlu0 %v5814
        %v5816 = vpop.xlane.xlu0 %5815
        %v5817 = vsel %vm934, %v5749, 0.0
        %5818 = vadd.xlane.f32.xlu0 %v5817
        %v5819 = vpop.xlane.xlu0 %5818
        %v5820 = vsel %vm934, %v5750, 0.0
        %5821 = vadd.xlane.f32.xlu0 %v5820
        %v5822 = vpop.xlane.xlu0 %5821
        %v5823 = vsel %vm934, %v5751, 0.0
        %5824 = vadd.xlane.f32.xlu0 %v5823
        %v5825 = vpop.xlane.xlu0 %5824
        %v5826 = vsel %vm934, %v5752, 0.0
        %5827 = vadd.xlane.f32.xlu0 %v5826
        %v5828 = vpop.xlane.xlu0 %5827
        %v5829 = vsel %vm934, %v5753, 0.0
        %5830 = vadd.xlane.f32.xlu0 %v5829
        %v5831 = vpop.xlane.xlu0 %5830
        %v5832 = vsel %vm934, %v5754, 0.0
        %5833 = vadd.xlane.f32.xlu0 %v5832
        %v5834 = vpop.xlane.xlu0 %5833
        %v5835 = vsel %vm934, %v5755, 0.0
        %5836 = vadd.xlane.f32.xlu0 %v5835
        %v5837 = vpop.xlane.xlu0 %5836
        %v5838 = vsel %vm934, %v5756, 0.0
        %5839 = vadd.xlane.f32.xlu0 %v5838
        %v5840 = vpop.xlane.xlu0 %5839
        %v5841 = vsel %vm934, %v5757, 0.0
        %5842 = vadd.xlane.f32.xlu0 %v5841
        %v5843 = vpop.xlane.xlu0 %5842
        %v5844 = vsel %vm934, %v5758, 0.0
        %5845 = vadd.xlane.f32.xlu0 %v5844
        %v5846 = vpop.xlane.xlu0 %5845
        %v5847 = vsel %vm934, %v5759, 0.0
        %5848 = vadd.xlane.f32.xlu0 %v5847
        %v5849 = vpop.xlane.xlu0 %5848
        %v5850 = vsel %vm934, %v5760, 0.0
        %5851 = vadd.xlane.f32.xlu0 %v5850
        %v5852 = vpop.xlane.xlu0 %5851
        %v5853 = vsel %vm934, %v5761, 0.0
        %5854 = vadd.xlane.f32.xlu0 %v5853
        %v5855 = vpop.xlane.xlu0 %5854
        %v5856 = vsel %vm934, %v5762, 0.0
        %5857 = vadd.xlane.f32.xlu0 %v5856
        %v5858 = vpop.xlane.xlu0 %5857
        %v5859 = vsub.f32 %v5637, %v5765
        %v5860 = vsub.f32 %v5640, %v5768
        %v5861 = vsub.f32 %v5643, %v5771
        %v5862 = vsub.f32 %v5646, %v5774
        %v5863 = vsub.f32 %v5649, %v5777
        %v5864 = vsub.f32 %v5652, %v5780
        %v5865 = vsub.f32 %v5655, %v5783
        %v5866 = vsub.f32 %v5658, %v5786
        %v5867 = vsub.f32 %v5661, %v5789
        %v5868 = vsub.f32 %v5664, %v5792
        %v5869 = vsub.f32 %v5667, %v5795
        %v5870 = vsub.f32 %v5670, %v5798
        %v5871 = vsub.f32 %v5673, %v5801
        %v5872 = vsub.f32 %v5676, %v5804
        %v5873 = vsub.f32 %v5679, %v5807
        %v5874 = vsub.f32 %v5682, %v5810
        %v5875 = vsub.f32 %v5685, %v5813
        %v5876 = vsub.f32 %v5688, %v5816
        %v5877 = vsub.f32 %v5691, %v5819
        %v5878 = vsub.f32 %v5694, %v5822
        %v5879 = vsub.f32 %v5697, %v5825
        %v5880 = vsub.f32 %v5700, %v5828
        %v5881 = vsub.f32 %v5703, %v5831
        %v5882 = vsub.f32 %v5706, %v5834
        %v5883 = vsub.f32 %v5709, %v5837
        %v5884 = vsub.f32 %v5712, %v5840
        %v5885 = vsub.f32 %v5715, %v5843
        %v5886 = vsub.f32 %v5718, %v5846
        %v5887 = vsub.f32 %v5721, %v5849
        %v5888 = vsub.f32 %v5724, %v5852
        %v5889 = vsub.f32 %v5727, %v5855
        %v5890 = vsub.f32 %v5730, %v5858
        %v5891 = vxor.u32 %v5859, 2147483648
        %v5892 = vxor.u32 %v5860, 2147483648
        %v5893 = vxor.u32 %v5861, 2147483648
        %v5894 = vxor.u32 %v5862, 2147483648
        %v5895 = vxor.u32 %v5863, 2147483648
        %v5896 = vxor.u32 %v5864, 2147483648
        %v5897 = vxor.u32 %v5865, 2147483648
        %v5898 = vxor.u32 %v5866, 2147483648
        %v5899 = vxor.u32 %v5867, 2147483648
        %v5900 = vxor.u32 %v5868, 2147483648
        %v5901 = vxor.u32 %v5869, 2147483648
        %v5902 = vxor.u32 %v5870, 2147483648
        %v5903 = vxor.u32 %v5871, 2147483648
        %v5904 = vxor.u32 %v5872, 2147483648
        %v5905 = vxor.u32 %v5873, 2147483648
        %v5906 = vxor.u32 %v5874, 2147483648
        %v5907 = vxor.u32 %v5875, 2147483648
        %v5908 = vxor.u32 %v5876, 2147483648
        %v5909 = vxor.u32 %v5877, 2147483648
        %v5910 = vxor.u32 %v5878, 2147483648
        %v5911 = vxor.u32 %v5879, 2147483648
        %v5912 = vxor.u32 %v5880, 2147483648
        %v5913 = vxor.u32 %v5881, 2147483648
        %v5914 = vxor.u32 %v5882, 2147483648
        %v5915 = vxor.u32 %v5883, 2147483648
        %v5916 = vxor.u32 %v5884, 2147483648
        %v5917 = vxor.u32 %v5885, 2147483648
        %v5918 = vxor.u32 %v5886, 2147483648
        %v5919 = vxor.u32 %v5887, 2147483648
        %v5920 = vxor.u32 %v5888, 2147483648
        %v5921 = vxor.u32 %v5889, 2147483648
        %v5922 = vxor.u32 %v5890, 2147483648
        %v5923 = vmul.f32 %v5891, 1.442695
        %v5924 = vpow.pop %v5923
        %v5925 = vmul.f32 %v5892, 1.442695
        %v5926 = vpow.pop %v5925
        %v5927 = vmul.f32 %v5893, 1.442695
        %v5928 = vpow.pop %v5927
        %v5929 = vmul.f32 %v5894, 1.442695
        %v5930 = vpow.pop %v5929
        %v5931 = vmul.f32 %v5895, 1.442695
        %v5932 = vpow.pop %v5931
        %v5933 = vmul.f32 %v5896, 1.442695
        %v5934 = vpow.pop %v5933
        %v5935 = vmul.f32 %v5897, 1.442695
        %v5936 = vpow.pop %v5935
        %v5937 = vmul.f32 %v5898, 1.442695
        %v5938 = vpow.pop %v5937
        %v5939 = vmul.f32 %v5899, 1.442695
        %v5940 = vpow.pop %v5939
        %v5941 = vmul.f32 %v5900, 1.442695
        %v5942 = vpow.pop %v5941
        %v5943 = vmul.f32 %v5901, 1.442695
        %v5944 = vpow.pop %v5943
        %v5945 = vmul.f32 %v5902, 1.442695
        %v5946 = vpow.pop %v5945
        %v5947 = vmul.f32 %v5903, 1.442695
        %v5948 = vpow.pop %v5947
        %v5949 = vmul.f32 %v5904, 1.442695
        %v5950 = vpow.pop %v5949
        %v5951 = vmul.f32 %v5905, 1.442695
        %v5952 = vpow.pop %v5951
        %v5953 = vmul.f32 %v5906, 1.442695
        %v5954 = vpow.pop %v5953
        %v5955 = vmul.f32 %v5907, 1.442695
        %v5956 = vpow.pop %v5955
        %v5957 = vmul.f32 %v5908, 1.442695
        %v5958 = vpow.pop %v5957
        %v5959 = vmul.f32 %v5909, 1.442695
        %v5960 = vpow.pop %v5959
        %v5961 = vmul.f32 %v5910, 1.442695
        %v5962 = vpow.pop %v5961
        %v5963 = vmul.f32 %v5911, 1.442695
        %v5964 = vpow.pop %v5963
        %v5965 = vmul.f32 %v5912, 1.442695
        %v5966 = vpow.pop %v5965
        %v5967 = vmul.f32 %v5913, 1.442695
        %v5968 = vpow.pop %v5967
        %v5969 = vmul.f32 %v5914, 1.442695
        %v5970 = vpow.pop %v5969
        %v5971 = vmul.f32 %v5915, 1.442695
        %v5972 = vpow.pop %v5971
        %v5973 = vmul.f32 %v5916, 1.442695
        %v5974 = vpow.pop %v5973
        %v5975 = vmul.f32 %v5917, 1.442695
        %v5976 = vpow.pop %v5975
        %v5977 = vmul.f32 %v5918, 1.442695
        %v5978 = vpow.pop %v5977
        %v5979 = vmul.f32 %v5919, 1.442695
        %v5980 = vpow.pop %v5979
        %v5981 = vmul.f32 %v5920, 1.442695
        %v5982 = vpow.pop %v5981
        %v5983 = vmul.f32 %v5921, 1.442695
        %v5984 = vpow.pop %v5983
        %v5985 = vmul.f32 %v5922, 1.442695
        %v5986 = vpow.pop %v5985
        %v5987 = vadd.f32 %v5924, 1.0
        %v5988 = vadd.f32 %v5926, 1.0
        %v5989 = vadd.f32 %v5928, 1.0
        %v5990 = vadd.f32 %v5930, 1.0
        %v5991 = vadd.f32 %v5932, 1.0
        %v5992 = vadd.f32 %v5934, 1.0
        %v5993 = vadd.f32 %v5936, 1.0
        %v5994 = vadd.f32 %v5938, 1.0
        %v5995 = vadd.f32 %v5940, 1.0
        %v5996 = vadd.f32 %v5942, 1.0
        %v5997 = vadd.f32 %v5944, 1.0
        %v5998 = vadd.f32 %v5946, 1.0
        %v5999 = vadd.f32 %v5948, 1.0
        %v6000 = vadd.f32 %v5950, 1.0
        %v6001 = vadd.f32 %v5952, 1.0
        %v6002 = vadd.f32 %v5954, 1.0
        %v6003 = vadd.f32 %v5956, 1.0
        %v6004 = vadd.f32 %v5958, 1.0
        %v6005 = vadd.f32 %v5960, 1.0
        %v6006 = vadd.f32 %v5962, 1.0
        %v6007 = vadd.f32 %v5964, 1.0
        %v6008 = vadd.f32 %v5966, 1.0
        %v6009 = vadd.f32 %v5968, 1.0
        %v6010 = vadd.f32 %v5970, 1.0
        %v6011 = vadd.f32 %v5972, 1.0
        %v6012 = vadd.f32 %v5974, 1.0
        %v6013 = vadd.f32 %v5976, 1.0
        %v6014 = vadd.f32 %v5978, 1.0
        %v6015 = vadd.f32 %v5980, 1.0
        %v6016 = vadd.f32 %v5982, 1.0
        %v6017 = vadd.f32 %v5984, 1.0
        %v6018 = vadd.f32 %v5986, 1.0
        %v6019 = vrcp.pop %v5987
        %v6020 = vmul.f32 %v5987, %v6019
        %v6021 = vsub.f32 1.0, %v6020
        %v6022 = vmul.f32 %v6019, %v6021
        %v6023 = vadd.f32 %v6019, %v6022
        %vm6024 = vweird.f32 %v5987
        %vm6025 = vweird.f32 %v6019
        %vm6026 = vmor %vm6024, %vm6025
        %v6027 = vsel %vm6026, %v6019, %v6023
        %v6028 = vand.u32 2147483647, %v5987
        %vm6029 = vcmp.eq.f32.partialorder %v6028, 8.507059e+37
        %v6030 = vand.u32 %v5987, 2147483648
        %v6031 = vor.u32 1.1754944e-38, %v6030
        %v6032 = vsel %vm6029, %v6031, %v6027
        %v6033 = vmul.f32 1.0, %v6032
        %v6034 = vrcp.pop %v5988
        %v6035 = vmul.f32 %v5988, %v6034
        %v6036 = vsub.f32 1.0, %v6035
        %v6037 = vmul.f32 %v6034, %v6036
        %v6038 = vadd.f32 %v6034, %v6037
        %vm6039 = vweird.f32 %v5988
        %vm6040 = vweird.f32 %v6034
        %vm6041 = vmor %vm6039, %vm6040
        %v6042 = vsel %vm6041, %v6034, %v6038
        %v6043 = vand.u32 2147483647, %v5988
        %vm6044 = vcmp.eq.f32.partialorder %v6043, 8.507059e+37
        %v6045 = vand.u32 %v5988, 2147483648
        %v6046 = vor.u32 1.1754944e-38, %v6045
        %v6047 = vsel %vm6044, %v6046, %v6042
        %v6048 = vmul.f32 1.0, %v6047
        %v6049 = vrcp.pop %v5989
        %v6050 = vmul.f32 %v5989, %v6049
        %v6051 = vsub.f32 1.0, %v6050
        %v6052 = vmul.f32 %v6049, %v6051
        %v6053 = vadd.f32 %v6049, %v6052
        %vm6054 = vweird.f32 %v5989
        %vm6055 = vweird.f32 %v6049
        %vm6056 = vmor %vm6054, %vm6055
        %v6057 = vsel %vm6056, %v6049, %v6053
        %v6058 = vand.u32 2147483647, %v5989
        %vm6059 = vcmp.eq.f32.partialorder %v6058, 8.507059e+37
        %v6060 = vand.u32 %v5989, 2147483648
        %v6061 = vor.u32 1.1754944e-38, %v6060
        %v6062 = vsel %vm6059, %v6061, %v6057
        %v6063 = vmul.f32 1.0, %v6062
        %v6064 = vrcp.pop %v5990
        %v6065 = vmul.f32 %v5990, %v6064
        %v6066 = vsub.f32 1.0, %v6065
        %v6067 = vmul.f32 %v6064, %v6066
        %v6068 = vadd.f32 %v6064, %v6067
        %vm6069 = vweird.f32 %v5990
        %vm6070 = vweird.f32 %v6064
        %vm6071 = vmor %vm6069, %vm6070
        %v6072 = vsel %vm6071, %v6064, %v6068
        %v6073 = vand.u32 2147483647, %v5990
        %vm6074 = vcmp.eq.f32.partialorder %v6073, 8.507059e+37
        %v6075 = vand.u32 %v5990, 2147483648
        %v6076 = vor.u32 1.1754944e-38, %v6075
        %v6077 = vsel %vm6074, %v6076, %v6072
        %v6078 = vmul.f32 1.0, %v6077
        %v6079 = vrcp.pop %v5991
        %v6080 = vmul.f32 %v5991, %v6079
        %v6081 = vsub.f32 1.0, %v6080
        %v6082 = vmul.f32 %v6079, %v6081
        %v6083 = vadd.f32 %v6079, %v6082
        %vm6084 = vweird.f32 %v5991
        %vm6085 = vweird.f32 %v6079
        %vm6086 = vmor %vm6084, %vm6085
        %v6087 = vsel %vm6086, %v6079, %v6083
        %v6088 = vand.u32 2147483647, %v5991
        %vm6089 = vcmp.eq.f32.partialorder %v6088, 8.507059e+37
        %v6090 = vand.u32 %v5991, 2147483648
        %v6091 = vor.u32 1.1754944e-38, %v6090
        %v6092 = vsel %vm6089, %v6091, %v6087
        %v6093 = vmul.f32 1.0, %v6092
        %v6094 = vrcp.pop %v5992
        %v6095 = vmul.f32 %v5992, %v6094
        %v6096 = vsub.f32 1.0, %v6095
        %v6097 = vmul.f32 %v6094, %v6096
        %v6098 = vadd.f32 %v6094, %v6097
        %vm6099 = vweird.f32 %v5992
        %vm6100 = vweird.f32 %v6094
        %vm6101 = vmor %vm6099, %vm6100
        %v6102 = vsel %vm6101, %v6094, %v6098
        %v6103 = vand.u32 2147483647, %v5992
        %vm6104 = vcmp.eq.f32.partialorder %v6103, 8.507059e+37
        %v6105 = vand.u32 %v5992, 2147483648
        %v6106 = vor.u32 1.1754944e-38, %v6105
        %v6107 = vsel %vm6104, %v6106, %v6102
        %v6108 = vmul.f32 1.0, %v6107
        %v6109 = vrcp.pop %v5993
        %v6110 = vmul.f32 %v5993, %v6109
        %v6111 = vsub.f32 1.0, %v6110
        %v6112 = vmul.f32 %v6109, %v6111
        %v6113 = vadd.f32 %v6109, %v6112
        %vm6114 = vweird.f32 %v5993
        %vm6115 = vweird.f32 %v6109
        %vm6116 = vmor %vm6114, %vm6115
        %v6117 = vsel %vm6116, %v6109, %v6113
        %v6118 = vand.u32 2147483647, %v5993
        %vm6119 = vcmp.eq.f32.partialorder %v6118, 8.507059e+37
        %v6120 = vand.u32 %v5993, 2147483648
        %v6121 = vor.u32 1.1754944e-38, %v6120
        %v6122 = vsel %vm6119, %v6121, %v6117
        %v6123 = vmul.f32 1.0, %v6122
        %v6124 = vrcp.pop %v5994
        %v6125 = vmul.f32 %v5994, %v6124
        %v6126 = vsub.f32 1.0, %v6125
        %v6127 = vmul.f32 %v6124, %v6126
        %v6128 = vadd.f32 %v6124, %v6127
        %vm6129 = vweird.f32 %v5994
        %vm6130 = vweird.f32 %v6124
        %vm6131 = vmor %vm6129, %vm6130
        %v6132 = vsel %vm6131, %v6124, %v6128
        %v6133 = vand.u32 2147483647, %v5994
        %vm6134 = vcmp.eq.f32.partialorder %v6133, 8.507059e+37
        %v6135 = vand.u32 %v5994, 2147483648
        %v6136 = vor.u32 1.1754944e-38, %v6135
        %v6137 = vsel %vm6134, %v6136, %v6132
        %v6138 = vmul.f32 1.0, %v6137
        %v6139 = vrcp.pop %v5995
        %v6140 = vmul.f32 %v5995, %v6139
        %v6141 = vsub.f32 1.0, %v6140
        %v6142 = vmul.f32 %v6139, %v6141
        %v6143 = vadd.f32 %v6139, %v6142
        %vm6144 = vweird.f32 %v5995
        %vm6145 = vweird.f32 %v6139
        %vm6146 = vmor %vm6144, %vm6145
        %v6147 = vsel %vm6146, %v6139, %v6143
        %v6148 = vand.u32 2147483647, %v5995
        %vm6149 = vcmp.eq.f32.partialorder %v6148, 8.507059e+37
        %v6150 = vand.u32 %v5995, 2147483648
        %v6151 = vor.u32 1.1754944e-38, %v6150
        %v6152 = vsel %vm6149, %v6151, %v6147
        %v6153 = vmul.f32 1.0, %v6152
        %v6154 = vrcp.pop %v5996
        %v6155 = vmul.f32 %v5996, %v6154
        %v6156 = vsub.f32 1.0, %v6155
        %v6157 = vmul.f32 %v6154, %v6156
        %v6158 = vadd.f32 %v6154, %v6157
        %vm6159 = vweird.f32 %v5996
        %vm6160 = vweird.f32 %v6154
        %vm6161 = vmor %vm6159, %vm6160
        %v6162 = vsel %vm6161, %v6154, %v6158
        %v6163 = vand.u32 2147483647, %v5996
        %vm6164 = vcmp.eq.f32.partialorder %v6163, 8.507059e+37
        %v6165 = vand.u32 %v5996, 2147483648
        %v6166 = vor.u32 1.1754944e-38, %v6165
        %v6167 = vsel %vm6164, %v6166, %v6162
        %v6168 = vmul.f32 1.0, %v6167
        %v6169 = vrcp.pop %v5997
        %v6170 = vmul.f32 %v5997, %v6169
        %v6171 = vsub.f32 1.0, %v6170
        %v6172 = vmul.f32 %v6169, %v6171
        %v6173 = vadd.f32 %v6169, %v6172
        %vm6174 = vweird.f32 %v5997
        %vm6175 = vweird.f32 %v6169
        %vm6176 = vmor %vm6174, %vm6175
        %v6177 = vsel %vm6176, %v6169, %v6173
        %v6178 = vand.u32 2147483647, %v5997
        %vm6179 = vcmp.eq.f32.partialorder %v6178, 8.507059e+37
        %v6180 = vand.u32 %v5997, 2147483648
        %v6181 = vor.u32 1.1754944e-38, %v6180
        %v6182 = vsel %vm6179, %v6181, %v6177
        %v6183 = vmul.f32 1.0, %v6182
        %v6184 = vrcp.pop %v5998
        %v6185 = vmul.f32 %v5998, %v6184
        %v6186 = vsub.f32 1.0, %v6185
        %v6187 = vmul.f32 %v6184, %v6186
        %v6188 = vadd.f32 %v6184, %v6187
        %vm6189 = vweird.f32 %v5998
        %vm6190 = vweird.f32 %v6184
        %vm6191 = vmor %vm6189, %vm6190
        %v6192 = vsel %vm6191, %v6184, %v6188
        %v6193 = vand.u32 2147483647, %v5998
        %vm6194 = vcmp.eq.f32.partialorder %v6193, 8.507059e+37
        %v6195 = vand.u32 %v5998, 2147483648
        %v6196 = vor.u32 1.1754944e-38, %v6195
        %v6197 = vsel %vm6194, %v6196, %v6192
        %v6198 = vmul.f32 1.0, %v6197
        %v6199 = vrcp.pop %v5999
        %v6200 = vmul.f32 %v5999, %v6199
        %v6201 = vsub.f32 1.0, %v6200
        %v6202 = vmul.f32 %v6199, %v6201
        %v6203 = vadd.f32 %v6199, %v6202
        %vm6204 = vweird.f32 %v5999
        %vm6205 = vweird.f32 %v6199
        %vm6206 = vmor %vm6204, %vm6205
        %v6207 = vsel %vm6206, %v6199, %v6203
        %v6208 = vand.u32 2147483647, %v5999
        %vm6209 = vcmp.eq.f32.partialorder %v6208, 8.507059e+37
        %v6210 = vand.u32 %v5999, 2147483648
        %v6211 = vor.u32 1.1754944e-38, %v6210
        %v6212 = vsel %vm6209, %v6211, %v6207
        %v6213 = vmul.f32 1.0, %v6212
        %v6214 = vrcp.pop %v6000
        %v6215 = vmul.f32 %v6000, %v6214
        %v6216 = vsub.f32 1.0, %v6215
        %v6217 = vmul.f32 %v6214, %v6216
        %v6218 = vadd.f32 %v6214, %v6217
        %vm6219 = vweird.f32 %v6000
        %vm6220 = vweird.f32 %v6214
        %vm6221 = vmor %vm6219, %vm6220
        %v6222 = vsel %vm6221, %v6214, %v6218
        %v6223 = vand.u32 2147483647, %v6000
        %vm6224 = vcmp.eq.f32.partialorder %v6223, 8.507059e+37
        %v6225 = vand.u32 %v6000, 2147483648
        %v6226 = vor.u32 1.1754944e-38, %v6225
        %v6227 = vsel %vm6224, %v6226, %v6222
        %v6228 = vmul.f32 1.0, %v6227
        %v6229 = vrcp.pop %v6001
        %v6230 = vmul.f32 %v6001, %v6229
        %v6231 = vsub.f32 1.0, %v6230
        %v6232 = vmul.f32 %v6229, %v6231
        %v6233 = vadd.f32 %v6229, %v6232
        %vm6234 = vweird.f32 %v6001
        %vm6235 = vweird.f32 %v6229
        %vm6236 = vmor %vm6234, %vm6235
        %v6237 = vsel %vm6236, %v6229, %v6233
        %v6238 = vand.u32 2147483647, %v6001
        %vm6239 = vcmp.eq.f32.partialorder %v6238, 8.507059e+37
        %v6240 = vand.u32 %v6001, 2147483648
        %v6241 = vor.u32 1.1754944e-38, %v6240
        %v6242 = vsel %vm6239, %v6241, %v6237
        %v6243 = vmul.f32 1.0, %v6242
        %v6244 = vrcp.pop %v6002
        %v6245 = vmul.f32 %v6002, %v6244
        %v6246 = vsub.f32 1.0, %v6245
        %v6247 = vmul.f32 %v6244, %v6246
        %v6248 = vadd.f32 %v6244, %v6247
        %vm6249 = vweird.f32 %v6002
        %vm6250 = vweird.f32 %v6244
        %vm6251 = vmor %vm6249, %vm6250
        %v6252 = vsel %vm6251, %v6244, %v6248
        %v6253 = vand.u32 2147483647, %v6002
        %vm6254 = vcmp.eq.f32.partialorder %v6253, 8.507059e+37
        %v6255 = vand.u32 %v6002, 2147483648
        %v6256 = vor.u32 1.1754944e-38, %v6255
        %v6257 = vsel %vm6254, %v6256, %v6252
        %v6258 = vmul.f32 1.0, %v6257
        %v6259 = vrcp.pop %v6003
        %v6260 = vmul.f32 %v6003, %v6259
        %v6261 = vsub.f32 1.0, %v6260
        %v6262 = vmul.f32 %v6259, %v6261
        %v6263 = vadd.f32 %v6259, %v6262
        %vm6264 = vweird.f32 %v6003
        %vm6265 = vweird.f32 %v6259
        %vm6266 = vmor %vm6264, %vm6265
        %v6267 = vsel %vm6266, %v6259, %v6263
        %v6268 = vand.u32 2147483647, %v6003
        %vm6269 = vcmp.eq.f32.partialorder %v6268, 8.507059e+37
        %v6270 = vand.u32 %v6003, 2147483648
        %v6271 = vor.u32 1.1754944e-38, %v6270
        %v6272 = vsel %vm6269, %v6271, %v6267
        %v6273 = vmul.f32 1.0, %v6272
        %v6274 = vrcp.pop %v6004
        %v6275 = vmul.f32 %v6004, %v6274
        %v6276 = vsub.f32 1.0, %v6275
        %v6277 = vmul.f32 %v6274, %v6276
        %v6278 = vadd.f32 %v6274, %v6277
        %vm6279 = vweird.f32 %v6004
        %vm6280 = vweird.f32 %v6274
        %vm6281 = vmor %vm6279, %vm6280
        %v6282 = vsel %vm6281, %v6274, %v6278
        %v6283 = vand.u32 2147483647, %v6004
        %vm6284 = vcmp.eq.f32.partialorder %v6283, 8.507059e+37
        %v6285 = vand.u32 %v6004, 2147483648
        %v6286 = vor.u32 1.1754944e-38, %v6285
        %v6287 = vsel %vm6284, %v6286, %v6282
        %v6288 = vmul.f32 1.0, %v6287
        %v6289 = vrcp.pop %v6005
        %v6290 = vmul.f32 %v6005, %v6289
        %v6291 = vsub.f32 1.0, %v6290
        %v6292 = vmul.f32 %v6289, %v6291
        %v6293 = vadd.f32 %v6289, %v6292
        %vm6294 = vweird.f32 %v6005
        %vm6295 = vweird.f32 %v6289
        %vm6296 = vmor %vm6294, %vm6295
        %v6297 = vsel %vm6296, %v6289, %v6293
        %v6298 = vand.u32 2147483647, %v6005
        %vm6299 = vcmp.eq.f32.partialorder %v6298, 8.507059e+37
        %v6300 = vand.u32 %v6005, 2147483648
        %v6301 = vor.u32 1.1754944e-38, %v6300
        %v6302 = vsel %vm6299, %v6301, %v6297
        %v6303 = vmul.f32 1.0, %v6302
        %v6304 = vrcp.pop %v6006
        %v6305 = vmul.f32 %v6006, %v6304
        %v6306 = vsub.f32 1.0, %v6305
        %v6307 = vmul.f32 %v6304, %v6306
        %v6308 = vadd.f32 %v6304, %v6307
        %vm6309 = vweird.f32 %v6006
        %vm6310 = vweird.f32 %v6304
        %vm6311 = vmor %vm6309, %vm6310
        %v6312 = vsel %vm6311, %v6304, %v6308
        %v6313 = vand.u32 2147483647, %v6006
        %vm6314 = vcmp.eq.f32.partialorder %v6313, 8.507059e+37
        %v6315 = vand.u32 %v6006, 2147483648
        %v6316 = vor.u32 1.1754944e-38, %v6315
        %v6317 = vsel %vm6314, %v6316, %v6312
        %v6318 = vmul.f32 1.0, %v6317
        %v6319 = vrcp.pop %v6007
        %v6320 = vmul.f32 %v6007, %v6319
        %v6321 = vsub.f32 1.0, %v6320
        %v6322 = vmul.f32 %v6319, %v6321
        %v6323 = vadd.f32 %v6319, %v6322
        %vm6324 = vweird.f32 %v6007
        %vm6325 = vweird.f32 %v6319
        %vm6326 = vmor %vm6324, %vm6325
        %v6327 = vsel %vm6326, %v6319, %v6323
        %v6328 = vand.u32 2147483647, %v6007
        %vm6329 = vcmp.eq.f32.partialorder %v6328, 8.507059e+37
        %v6330 = vand.u32 %v6007, 2147483648
        %v6331 = vor.u32 1.1754944e-38, %v6330
        %v6332 = vsel %vm6329, %v6331, %v6327
        %v6333 = vmul.f32 1.0, %v6332
        %v6334 = vrcp.pop %v6008
        %v6335 = vmul.f32 %v6008, %v6334
        %v6336 = vsub.f32 1.0, %v6335
        %v6337 = vmul.f32 %v6334, %v6336
        %v6338 = vadd.f32 %v6334, %v6337
        %vm6339 = vweird.f32 %v6008
        %vm6340 = vweird.f32 %v6334
        %vm6341 = vmor %vm6339, %vm6340
        %v6342 = vsel %vm6341, %v6334, %v6338
        %v6343 = vand.u32 2147483647, %v6008
        %vm6344 = vcmp.eq.f32.partialorder %v6343, 8.507059e+37
        %v6345 = vand.u32 %v6008, 2147483648
        %v6346 = vor.u32 1.1754944e-38, %v6345
        %v6347 = vsel %vm6344, %v6346, %v6342
        %v6348 = vmul.f32 1.0, %v6347
        %v6349 = vrcp.pop %v6009
        %v6350 = vmul.f32 %v6009, %v6349
        %v6351 = vsub.f32 1.0, %v6350
        %v6352 = vmul.f32 %v6349, %v6351
        %v6353 = vadd.f32 %v6349, %v6352
        %vm6354 = vweird.f32 %v6009
        %vm6355 = vweird.f32 %v6349
        %vm6356 = vmor %vm6354, %vm6355
        %v6357 = vsel %vm6356, %v6349, %v6353
        %v6358 = vand.u32 2147483647, %v6009
        %vm6359 = vcmp.eq.f32.partialorder %v6358, 8.507059e+37
        %v6360 = vand.u32 %v6009, 2147483648
        %v6361 = vor.u32 1.1754944e-38, %v6360
        %v6362 = vsel %vm6359, %v6361, %v6357
        %v6363 = vmul.f32 1.0, %v6362
        %v6364 = vrcp.pop %v6010
        %v6365 = vmul.f32 %v6010, %v6364
        %v6366 = vsub.f32 1.0, %v6365
        %v6367 = vmul.f32 %v6364, %v6366
        %v6368 = vadd.f32 %v6364, %v6367
        %vm6369 = vweird.f32 %v6010
        %vm6370 = vweird.f32 %v6364
        %vm6371 = vmor %vm6369, %vm6370
        %v6372 = vsel %vm6371, %v6364, %v6368
        %v6373 = vand.u32 2147483647, %v6010
        %vm6374 = vcmp.eq.f32.partialorder %v6373, 8.507059e+37
        %v6375 = vand.u32 %v6010, 2147483648
        %v6376 = vor.u32 1.1754944e-38, %v6375
        %v6377 = vsel %vm6374, %v6376, %v6372
        %v6378 = vmul.f32 1.0, %v6377
        %v6379 = vrcp.pop %v6011
        %v6380 = vmul.f32 %v6011, %v6379
        %v6381 = vsub.f32 1.0, %v6380
        %v6382 = vmul.f32 %v6379, %v6381
        %v6383 = vadd.f32 %v6379, %v6382
        %vm6384 = vweird.f32 %v6011
        %vm6385 = vweird.f32 %v6379
        %vm6386 = vmor %vm6384, %vm6385
        %v6387 = vsel %vm6386, %v6379, %v6383
        %v6388 = vand.u32 2147483647, %v6011
        %vm6389 = vcmp.eq.f32.partialorder %v6388, 8.507059e+37
        %v6390 = vand.u32 %v6011, 2147483648
        %v6391 = vor.u32 1.1754944e-38, %v6390
        %v6392 = vsel %vm6389, %v6391, %v6387
        %v6393 = vmul.f32 1.0, %v6392
        %v6394 = vrcp.pop %v6012
        %v6395 = vmul.f32 %v6012, %v6394
        %v6396 = vsub.f32 1.0, %v6395
        %v6397 = vmul.f32 %v6394, %v6396
        %v6398 = vadd.f32 %v6394, %v6397
        %vm6399 = vweird.f32 %v6012
        %vm6400 = vweird.f32 %v6394
        %vm6401 = vmor %vm6399, %vm6400
        %v6402 = vsel %vm6401, %v6394, %v6398
        %v6403 = vand.u32 2147483647, %v6012
        %vm6404 = vcmp.eq.f32.partialorder %v6403, 8.507059e+37
        %v6405 = vand.u32 %v6012, 2147483648
        %v6406 = vor.u32 1.1754944e-38, %v6405
        %v6407 = vsel %vm6404, %v6406, %v6402
        %v6408 = vmul.f32 1.0, %v6407
        %v6409 = vrcp.pop %v6013
        %v6410 = vmul.f32 %v6013, %v6409
        %v6411 = vsub.f32 1.0, %v6410
        %v6412 = vmul.f32 %v6409, %v6411
        %v6413 = vadd.f32 %v6409, %v6412
        %vm6414 = vweird.f32 %v6013
        %vm6415 = vweird.f32 %v6409
        %vm6416 = vmor %vm6414, %vm6415
        %v6417 = vsel %vm6416, %v6409, %v6413
        %v6418 = vand.u32 2147483647, %v6013
        %vm6419 = vcmp.eq.f32.partialorder %v6418, 8.507059e+37
        %v6420 = vand.u32 %v6013, 2147483648
        %v6421 = vor.u32 1.1754944e-38, %v6420
        %v6422 = vsel %vm6419, %v6421, %v6417
        %v6423 = vmul.f32 1.0, %v6422
        %v6424 = vrcp.pop %v6014
        %v6425 = vmul.f32 %v6014, %v6424
        %v6426 = vsub.f32 1.0, %v6425
        %v6427 = vmul.f32 %v6424, %v6426
        %v6428 = vadd.f32 %v6424, %v6427
        %vm6429 = vweird.f32 %v6014
        %vm6430 = vweird.f32 %v6424
        %vm6431 = vmor %vm6429, %vm6430
        %v6432 = vsel %vm6431, %v6424, %v6428
        %v6433 = vand.u32 2147483647, %v6014
        %vm6434 = vcmp.eq.f32.partialorder %v6433, 8.507059e+37
        %v6435 = vand.u32 %v6014, 2147483648
        %v6436 = vor.u32 1.1754944e-38, %v6435
        %v6437 = vsel %vm6434, %v6436, %v6432
        %v6438 = vmul.f32 1.0, %v6437
        %v6439 = vrcp.pop %v6015
        %v6440 = vmul.f32 %v6015, %v6439
        %v6441 = vsub.f32 1.0, %v6440
        %v6442 = vmul.f32 %v6439, %v6441
        %v6443 = vadd.f32 %v6439, %v6442
        %vm6444 = vweird.f32 %v6015
        %vm6445 = vweird.f32 %v6439
        %vm6446 = vmor %vm6444, %vm6445
        %v6447 = vsel %vm6446, %v6439, %v6443
        %v6448 = vand.u32 2147483647, %v6015
        %vm6449 = vcmp.eq.f32.partialorder %v6448, 8.507059e+37
        %v6450 = vand.u32 %v6015, 2147483648
        %v6451 = vor.u32 1.1754944e-38, %v6450
        %v6452 = vsel %vm6449, %v6451, %v6447
        %v6453 = vmul.f32 1.0, %v6452
        %v6454 = vrcp.pop %v6016
        %v6455 = vmul.f32 %v6016, %v6454
        %v6456 = vsub.f32 1.0, %v6455
        %v6457 = vmul.f32 %v6454, %v6456
        %v6458 = vadd.f32 %v6454, %v6457
        %vm6459 = vweird.f32 %v6016
        %vm6460 = vweird.f32 %v6454
        %vm6461 = vmor %vm6459, %vm6460
        %v6462 = vsel %vm6461, %v6454, %v6458
        %v6463 = vand.u32 2147483647, %v6016
        %vm6464 = vcmp.eq.f32.partialorder %v6463, 8.507059e+37
        %v6465 = vand.u32 %v6016, 2147483648
        %v6466 = vor.u32 1.1754944e-38, %v6465
        %v6467 = vsel %vm6464, %v6466, %v6462
        %v6468 = vmul.f32 1.0, %v6467
        %v6469 = vrcp.pop %v6017
        %v6470 = vmul.f32 %v6017, %v6469
        %v6471 = vsub.f32 1.0, %v6470
        %v6472 = vmul.f32 %v6469, %v6471
        %v6473 = vadd.f32 %v6469, %v6472
        %vm6474 = vweird.f32 %v6017
        %vm6475 = vweird.f32 %v6469
        %vm6476 = vmor %vm6474, %vm6475
        %v6477 = vsel %vm6476, %v6469, %v6473
        %v6478 = vand.u32 2147483647, %v6017
        %vm6479 = vcmp.eq.f32.partialorder %v6478, 8.507059e+37
        %v6480 = vand.u32 %v6017, 2147483648
        %v6481 = vor.u32 1.1754944e-38, %v6480
        %v6482 = vsel %vm6479, %v6481, %v6477
        %v6483 = vmul.f32 1.0, %v6482
        %v6484 = vrcp.pop %v6018
        %v6485 = vmul.f32 %v6018, %v6484
        %v6486 = vsub.f32 1.0, %v6485
        %v6487 = vmul.f32 %v6484, %v6486
        %v6488 = vadd.f32 %v6484, %v6487
        %vm6489 = vweird.f32 %v6018
        %vm6490 = vweird.f32 %v6484
        %vm6491 = vmor %vm6489, %vm6490
        %v6492 = vsel %vm6491, %v6484, %v6488
        %v6493 = vand.u32 2147483647, %v6018
        %vm6494 = vcmp.eq.f32.partialorder %v6493, 8.507059e+37
        %v6495 = vand.u32 %v6018, 2147483648
        %v6496 = vor.u32 1.1754944e-38, %v6495
        %v6497 = vsel %vm6494, %v6496, %v6492
        %v6498 = vmul.f32 1.0, %v6497
        %v6499 = vmul.f32 %v6033, %v870
        %v6500 = vmul.f32 %v6048, %v871
        %v6501 = vmul.f32 %v6063, %v872
        %v6502 = vmul.f32 %v6078, %v873
        %v6503 = vmul.f32 %v6093, %v874
        %v6504 = vmul.f32 %v6108, %v875
        %v6505 = vmul.f32 %v6123, %v876
        %v6506 = vmul.f32 %v6138, %v877
        %v6507 = vmul.f32 %v6153, %v878
        %v6508 = vmul.f32 %v6168, %v879
        %v6509 = vmul.f32 %v6183, %v880
        %v6510 = vmul.f32 %v6198, %v881
        %v6511 = vmul.f32 %v6213, %v882
        %v6512 = vmul.f32 %v6228, %v883
        %v6513 = vmul.f32 %v6243, %v884
        %v6514 = vmul.f32 %v6258, %v885
        %v6515 = vmul.f32 %v6273, %v886
        %v6516 = vmul.f32 %v6288, %v887
        %v6517 = vmul.f32 %v6303, %v888
        %v6518 = vmul.f32 %v6318, %v889
        %v6519 = vmul.f32 %v6333, %v890
        %v6520 = vmul.f32 %v6348, %v891
        %v6521 = vmul.f32 %v6363, %v892
        %v6522 = vmul.f32 %v6378, %v893
        %v6523 = vmul.f32 %v6393, %v894
        %v6524 = vmul.f32 %v6408, %v895
        %v6525 = vmul.f32 %v6423, %v896
        %v6526 = vmul.f32 %v6438, %v897
        %v6527 = vmul.f32 %v6453, %v898
        %v6528 = vmul.f32 %v6468, %v899
        %v6529 = vmul.f32 %v6483, %v900
        %v6530 = vmul.f32 %v6498, %v901
        %v6531 = vsub.f32 1.0, %v6033
        %v6532 = vsub.f32 1.0, %v6048
        %v6533 = vsub.f32 1.0, %v6063
        %v6534 = vsub.f32 1.0, %v6078
        %v6535 = vsub.f32 1.0, %v6093
        %v6536 = vsub.f32 1.0, %v6108
        %v6537 = vsub.f32 1.0, %v6123
        %v6538 = vsub.f32 1.0, %v6138
        %v6539 = vsub.f32 1.0, %v6153
        %v6540 = vsub.f32 1.0, %v6168
        %v6541 = vsub.f32 1.0, %v6183
        %v6542 = vsub.f32 1.0, %v6198
        %v6543 = vsub.f32 1.0, %v6213
        %v6544 = vsub.f32 1.0, %v6228
        %v6545 = vsub.f32 1.0, %v6243
        %v6546 = vsub.f32 1.0, %v6258
        %v6547 = vsub.f32 1.0, %v6273
        %v6548 = vsub.f32 1.0, %v6288
        %v6549 = vsub.f32 1.0, %v6303
        %v6550 = vsub.f32 1.0, %v6318
        %v6551 = vsub.f32 1.0, %v6333
        %v6552 = vsub.f32 1.0, %v6348
        %v6553 = vsub.f32 1.0, %v6363
        %v6554 = vsub.f32 1.0, %v6378
        %v6555 = vsub.f32 1.0, %v6393
        %v6556 = vsub.f32 1.0, %v6408
        %v6557 = vsub.f32 1.0, %v6423
        %v6558 = vsub.f32 1.0, %v6438
        %v6559 = vsub.f32 1.0, %v6453
        %v6560 = vsub.f32 1.0, %v6468
        %v6561 = vsub.f32 1.0, %v6483
        %v6562 = vsub.f32 1.0, %v6498
        %v6563 = vmul.f32 %v6531, %v4368
        %v6564 = vmul.f32 %v6532, %v4370
        %v6565 = vmul.f32 %v6533, %v4373
        %v6566 = vmul.f32 %v6534, %v4375
        %v6567 = vmul.f32 %v6535, %v4378
        %v6568 = vmul.f32 %v6536, %v4380
        %v6569 = vmul.f32 %v6537, %v4383
        %v6570 = vmul.f32 %v6538, %v4385
        %v6571 = vmul.f32 %v6539, %v4388
        %v6572 = vmul.f32 %v6540, %v4390
        %v6573 = vmul.f32 %v6541, %v4393
        %v6574 = vmul.f32 %v6542, %v4395
        %v6575 = vmul.f32 %v6543, %v4398
        %v6576 = vmul.f32 %v6544, %v4400
        %v6577 = vmul.f32 %v6545, %v4403
        %v6578 = vmul.f32 %v6546, %v4405
        %v6579 = vmul.f32 %v6547, %v4408
        %v6580 = vmul.f32 %v6548, %v4410
        %v6581 = vmul.f32 %v6549, %v4413
        %v6582 = vmul.f32 %v6550, %v4415
        %v6583 = vmul.f32 %v6551, %v4418
        %v6584 = vmul.f32 %v6552, %v4420
        %v6585 = vmul.f32 %v6553, %v4423
        %v6586 = vmul.f32 %v6554, %v4425
        %v6587 = vmul.f32 %v6555, %v4428
        %v6588 = vmul.f32 %v6556, %v4430
        %v6589 = vmul.f32 %v6557, %v4433
        %v6590 = vmul.f32 %v6558, %v4435
        %v6591 = vmul.f32 %v6559, %v4438
        %v6592 = vmul.f32 %v6560, %v4440
        %v6593 = vmul.f32 %v6561, %v4443
        %v6594 = vmul.f32 %v6562, %v4445
        %v6595 = vadd.f32 %v6499, %v6563
        %v6596 = vadd.f32 %v6500, %v6564
        %v6597 = vadd.f32 %v6501, %v6565
        %v6598 = vadd.f32 %v6502, %v6566
        %v6599 = vadd.f32 %v6503, %v6567
        %v6600 = vadd.f32 %v6504, %v6568
        %v6601 = vadd.f32 %v6505, %v6569
        %v6602 = vadd.f32 %v6506, %v6570
        %v6603 = vadd.f32 %v6507, %v6571
        %v6604 = vadd.f32 %v6508, %v6572
        %v6605 = vadd.f32 %v6509, %v6573
        %v6606 = vadd.f32 %v6510, %v6574
        %v6607 = vadd.f32 %v6511, %v6575
        %v6608 = vadd.f32 %v6512, %v6576
        %v6609 = vadd.f32 %v6513, %v6577
        %v6610 = vadd.f32 %v6514, %v6578
        %v6611 = vadd.f32 %v6515, %v6579
        %v6612 = vadd.f32 %v6516, %v6580
        %v6613 = vadd.f32 %v6517, %v6581
        %v6614 = vadd.f32 %v6518, %v6582
        %v6615 = vadd.f32 %v6519, %v6583
        %v6616 = vadd.f32 %v6520, %v6584
        %v6617 = vadd.f32 %v6521, %v6585
        %v6618 = vadd.f32 %v6522, %v6586
        %v6619 = vadd.f32 %v6523, %v6587
        %v6620 = vadd.f32 %v6524, %v6588
        %v6621 = vadd.f32 %v6525, %v6589
        %v6622 = vadd.f32 %v6526, %v6590
        %v6623 = vadd.f32 %v6527, %v6591
        %v6624 = vadd.f32 %v6528, %v6592
        %v6625 = vadd.f32 %v6529, %v6593
        %v6626 = vadd.f32 %v6530, %v6594
        %v6627 = vmul.f32 %v5571, %v6595
        %v6628 = vmul.f32 %v5572, %v6596
        %v6629 = vmul.f32 %v5573, %v6597
        %v6630 = vmul.f32 %v5574, %v6598
        %v6631 = vmul.f32 %v5575, %v6599
        %v6632 = vmul.f32 %v5576, %v6600
        %v6633 = vmul.f32 %v5577, %v6601
        %v6634 = vmul.f32 %v5578, %v6602
        %v6635 = vmul.f32 %v5579, %v6603
        %v6636 = vmul.f32 %v5580, %v6604
        %v6637 = vmul.f32 %v5581, %v6605
        %v6638 = vmul.f32 %v5582, %v6606
        %v6639 = vmul.f32 %v5583, %v6607
        %v6640 = vmul.f32 %v5584, %v6608
        %v6641 = vmul.f32 %v5585, %v6609
        %v6642 = vmul.f32 %v5586, %v6610
        %v6643 = vmul.f32 %v5587, %v6611
        %v6644 = vmul.f32 %v5588, %v6612
        %v6645 = vmul.f32 %v5589, %v6613
        %v6646 = vmul.f32 %v5590, %v6614
        %v6647 = vmul.f32 %v5591, %v6615
        %v6648 = vmul.f32 %v5592, %v6616
        %v6649 = vmul.f32 %v5593, %v6617
        %v6650 = vmul.f32 %v5594, %v6618
        %v6651 = vmul.f32 %v5595, %v6619
        %v6652 = vmul.f32 %v5596, %v6620
        %v6653 = vmul.f32 %v5597, %v6621
        %v6654 = vmul.f32 %v5598, %v6622
        %v6655 = vmul.f32 %v5599, %v6623
        %v6656 = vmul.f32 %v5600, %v6624
        %v6657 = vmul.f32 %v5601, %v6625
        %v6658 = vmul.f32 %v5602, %v6626
        %v6659 = vsel %vm934, %v6627, 0.0
        %6660 = vadd.xlane.f32.xlu0 %v6659
        %v6661 = vpop.xlane.xlu0 %6660
        %v6662 = vsel %vm934, %v6628, 0.0
        %6663 = vadd.xlane.f32.xlu0 %v6662
        %v6664 = vpop.xlane.xlu0 %6663
        %v6665 = vsel %vm934, %v6629, 0.0
        %6666 = vadd.xlane.f32.xlu0 %v6665
        %v6667 = vpop.xlane.xlu0 %6666
        %v6668 = vsel %vm934, %v6630, 0.0
        %6669 = vadd.xlane.f32.xlu0 %v6668
        %v6670 = vpop.xlane.xlu0 %6669
        %v6671 = vsel %vm934, %v6631, 0.0
        %6672 = vadd.xlane.f32.xlu0 %v6671
        %v6673 = vpop.xlane.xlu0 %6672
        %v6674 = vsel %vm934, %v6632, 0.0
        %6675 = vadd.xlane.f32.xlu0 %v6674
        %v6676 = vpop.xlane.xlu0 %6675
        %v6677 = vsel %vm934, %v6633, 0.0
        %6678 = vadd.xlane.f32.xlu0 %v6677
        %v6679 = vpop.xlane.xlu0 %6678
        %v6680 = vsel %vm934, %v6634, 0.0
        %6681 = vadd.xlane.f32.xlu0 %v6680
        %v6682 = vpop.xlane.xlu0 %6681
        %v6683 = vsel %vm934, %v6635, 0.0
        %6684 = vadd.xlane.f32.xlu0 %v6683
        %v6685 = vpop.xlane.xlu0 %6684
        %v6686 = vsel %vm934, %v6636, 0.0
        %6687 = vadd.xlane.f32.xlu0 %v6686
        %v6688 = vpop.xlane.xlu0 %6687
        %v6689 = vsel %vm934, %v6637, 0.0
        %6690 = vadd.xlane.f32.xlu0 %v6689
        %v6691 = vpop.xlane.xlu0 %6690
        %v6692 = vsel %vm934, %v6638, 0.0
        %6693 = vadd.xlane.f32.xlu0 %v6692
        %v6694 = vpop.xlane.xlu0 %6693
        %v6695 = vsel %vm934, %v6639, 0.0
        %6696 = vadd.xlane.f32.xlu0 %v6695
        %v6697 = vpop.xlane.xlu0 %6696
        %v6698 = vsel %vm934, %v6640, 0.0
        %6699 = vadd.xlane.f32.xlu0 %v6698
        %v6700 = vpop.xlane.xlu0 %6699
        %v6701 = vsel %vm934, %v6641, 0.0
        %6702 = vadd.xlane.f32.xlu0 %v6701
        %v6703 = vpop.xlane.xlu0 %6702
        %v6704 = vsel %vm934, %v6642, 0.0
        %6705 = vadd.xlane.f32.xlu0 %v6704
        %v6706 = vpop.xlane.xlu0 %6705
        %v6707 = vsel %vm934, %v6643, 0.0
        %6708 = vadd.xlane.f32.xlu0 %v6707
        %v6709 = vpop.xlane.xlu0 %6708
        %v6710 = vsel %vm934, %v6644, 0.0
        %6711 = vadd.xlane.f32.xlu0 %v6710
        %v6712 = vpop.xlane.xlu0 %6711
        %v6713 = vsel %vm934, %v6645, 0.0
        %6714 = vadd.xlane.f32.xlu0 %v6713
        %v6715 = vpop.xlane.xlu0 %6714
        %v6716 = vsel %vm934, %v6646, 0.0
        %6717 = vadd.xlane.f32.xlu0 %v6716
        %v6718 = vpop.xlane.xlu0 %6717
        %v6719 = vsel %vm934, %v6647, 0.0
        %6720 = vadd.xlane.f32.xlu0 %v6719
        %v6721 = vpop.xlane.xlu0 %6720
        %v6722 = vsel %vm934, %v6648, 0.0
        %6723 = vadd.xlane.f32.xlu0 %v6722
        %v6724 = vpop.xlane.xlu0 %6723
        %v6725 = vsel %vm934, %v6649, 0.0
        %6726 = vadd.xlane.f32.xlu0 %v6725
        %v6727 = vpop.xlane.xlu0 %6726
        %v6728 = vsel %vm934, %v6650, 0.0
        %6729 = vadd.xlane.f32.xlu0 %v6728
        %v6730 = vpop.xlane.xlu0 %6729
        %v6731 = vsel %vm934, %v6651, 0.0
        %6732 = vadd.xlane.f32.xlu0 %v6731
        %v6733 = vpop.xlane.xlu0 %6732
        %v6734 = vsel %vm934, %v6652, 0.0
        %6735 = vadd.xlane.f32.xlu0 %v6734
        %v6736 = vpop.xlane.xlu0 %6735
        %v6737 = vsel %vm934, %v6653, 0.0
        %6738 = vadd.xlane.f32.xlu0 %v6737
        %v6739 = vpop.xlane.xlu0 %6738
        %v6740 = vsel %vm934, %v6654, 0.0
        %6741 = vadd.xlane.f32.xlu0 %v6740
        %v6742 = vpop.xlane.xlu0 %6741
        %v6743 = vsel %vm934, %v6655, 0.0
        %6744 = vadd.xlane.f32.xlu0 %v6743
        %v6745 = vpop.xlane.xlu0 %6744
        %v6746 = vsel %vm934, %v6656, 0.0
        %6747 = vadd.xlane.f32.xlu0 %v6746
        %v6748 = vpop.xlane.xlu0 %6747
        %v6749 = vsel %vm934, %v6657, 0.0
        %6750 = vadd.xlane.f32.xlu0 %v6749
        %v6751 = vpop.xlane.xlu0 %6750
        %v6752 = vsel %vm934, %v6658, 0.0
        %6753 = vadd.xlane.f32.xlu0 %v6752
        %v6754 = vpop.xlane.xlu0 %6753
        %v6755 = vld [vmem:[%s795] sm:$0xff]
        %v6756 = vld [vmem:[%s795 + $0x8] sm:$0xff]
        %v6757 = vld [vmem:[%s795 + $0x10] sm:$0xff]
        %v6758 = vld [vmem:[%s795 + $0x18] sm:$0xff]
        %v6759 = vld [vmem:[%s795 + $0x20] sm:$0xff]
        %v6760 = vld [vmem:[%s795 + $0x28] sm:$0xff]
        %v6761 = vld [vmem:[%s795 + $0x30] sm:$0xff]
        %v6762 = vld [vmem:[%s795 + $0x38] sm:$0xff]
        %v6763 = vld [vmem:[%s795 + $0x40] sm:$0xff]
        %v6764 = vld [vmem:[%s795 + $0x48] sm:$0xff]
        %v6765 = vld [vmem:[%s795 + $0x50] sm:$0xff]
        %v6766 = vld [vmem:[%s795 + $0x58] sm:$0xff]
        %v6767 = vld [vmem:[%s795 + $0x60] sm:$0xff]
        %v6768 = vld [vmem:[%s795 + $0x68] sm:$0xff]
        %v6769 = vld [vmem:[%s795 + $0x70] sm:$0xff]
        %v6770 = vld [vmem:[%s795 + $0x78] sm:$0xff]
        %v6771 = vld [vmem:[%s795 + $0x80] sm:$0xff]
        %v6772 = vld [vmem:[%s795 + $0x88] sm:$0xff]
        %v6773 = vld [vmem:[%s795 + $0x90] sm:$0xff]
        %v6774 = vld [vmem:[%s795 + $0x98] sm:$0xff]
        %v6775 = vld [vmem:[%s795 + $0xa0] sm:$0xff]
        %v6776 = vld [vmem:[%s795 + $0xa8] sm:$0xff]
        %v6777 = vld [vmem:[%s795 + $0xb0] sm:$0xff]
        %v6778 = vld [vmem:[%s795 + $0xb8] sm:$0xff]
        %v6779 = vld [vmem:[%s795 + $0xc0] sm:$0xff]
        %v6780 = vld [vmem:[%s795 + $0xc8] sm:$0xff]
        %v6781 = vld [vmem:[%s795 + $0xd0] sm:$0xff]
        %v6782 = vld [vmem:[%s795 + $0xd8] sm:$0xff]
        %v6783 = vld [vmem:[%s795 + $0xe0] sm:$0xff]
        %v6784 = vld [vmem:[%s795 + $0xe8] sm:$0xff]
        %v6785 = vld [vmem:[%s795 + $0xf0] sm:$0xff]
        %v6786 = vld [vmem:[%s795 + $0xf8] sm:$0xff]
        %v6787 = vld [vmem:[%s801] sm:$0xff]
        %v6788 = vld [vmem:[%s801 + $0x8] sm:$0xff]
        %v6789 = vld [vmem:[%s801 + $0x10] sm:$0xff]
        %v6790 = vld [vmem:[%s801 + $0x18] sm:$0xff]
        %v6791 = vld [vmem:[%s801 + $0x20] sm:$0xff]
        %v6792 = vld [vmem:[%s801 + $0x28] sm:$0xff]
        %v6793 = vld [vmem:[%s801 + $0x30] sm:$0xff]
        %v6794 = vld [vmem:[%s801 + $0x38] sm:$0xff]
        %v6795 = vld [vmem:[%s801 + $0x40] sm:$0xff]
        %v6796 = vld [vmem:[%s801 + $0x48] sm:$0xff]
        %v6797 = vld [vmem:[%s801 + $0x50] sm:$0xff]
        %v6798 = vld [vmem:[%s801 + $0x58] sm:$0xff]
        %v6799 = vld [vmem:[%s801 + $0x60] sm:$0xff]
        %v6800 = vld [vmem:[%s801 + $0x68] sm:$0xff]
        %v6801 = vld [vmem:[%s801 + $0x70] sm:$0xff]
        %v6802 = vld [vmem:[%s801 + $0x78] sm:$0xff]
        %v6803 = vld [vmem:[%s801 + $0x80] sm:$0xff]
        %v6804 = vld [vmem:[%s801 + $0x88] sm:$0xff]
        %v6805 = vld [vmem:[%s801 + $0x90] sm:$0xff]
        %v6806 = vld [vmem:[%s801 + $0x98] sm:$0xff]
        %v6807 = vld [vmem:[%s801 + $0xa0] sm:$0xff]
        %v6808 = vld [vmem:[%s801 + $0xa8] sm:$0xff]
        %v6809 = vld [vmem:[%s801 + $0xb0] sm:$0xff]
        %v6810 = vld [vmem:[%s801 + $0xb8] sm:$0xff]
        %v6811 = vld [vmem:[%s801 + $0xc0] sm:$0xff]
        %v6812 = vld [vmem:[%s801 + $0xc8] sm:$0xff]
        %v6813 = vld [vmem:[%s801 + $0xd0] sm:$0xff]
        %v6814 = vld [vmem:[%s801 + $0xd8] sm:$0xff]
        %v6815 = vld [vmem:[%s801 + $0xe0] sm:$0xff]
        %v6816 = vld [vmem:[%s801 + $0xe8] sm:$0xff]
        %v6817 = vld [vmem:[%s801 + $0xf0] sm:$0xff]
        %v6818 = vld [vmem:[%s801 + $0xf8] sm:$0xff]
        %v6819 = vadd.f32 %v6755, %v6787
        %v6820 = vadd.f32 %v6756, %v6788
        %v6821 = vadd.f32 %v6757, %v6789
        %v6822 = vadd.f32 %v6758, %v6790
        %v6823 = vadd.f32 %v6759, %v6791
        %v6824 = vadd.f32 %v6760, %v6792
        %v6825 = vadd.f32 %v6761, %v6793
        %v6826 = vadd.f32 %v6762, %v6794
        %v6827 = vadd.f32 %v6763, %v6795
        %v6828 = vadd.f32 %v6764, %v6796
        %v6829 = vadd.f32 %v6765, %v6797
        %v6830 = vadd.f32 %v6766, %v6798
        %v6831 = vadd.f32 %v6767, %v6799
        %v6832 = vadd.f32 %v6768, %v6800
        %v6833 = vadd.f32 %v6769, %v6801
        %v6834 = vadd.f32 %v6770, %v6802
        %v6835 = vadd.f32 %v6771, %v6803
        %v6836 = vadd.f32 %v6772, %v6804
        %v6837 = vadd.f32 %v6773, %v6805
        %v6838 = vadd.f32 %v6774, %v6806
        %v6839 = vadd.f32 %v6775, %v6807
        %v6840 = vadd.f32 %v6776, %v6808
        %v6841 = vadd.f32 %v6777, %v6809
        %v6842 = vadd.f32 %v6778, %v6810
        %v6843 = vadd.f32 %v6779, %v6811
        %v6844 = vadd.f32 %v6780, %v6812
        %v6845 = vadd.f32 %v6781, %v6813
        %v6846 = vadd.f32 %v6782, %v6814
        %v6847 = vadd.f32 %v6783, %v6815
        %v6848 = vadd.f32 %v6784, %v6816
        %v6849 = vadd.f32 %v6785, %v6817
        %v6850 = vadd.f32 %v6786, %v6818
        %s6851 = sld [smem:[#allocation2]]
        %v6852 = vstv %s6851
        %v6853 = vadd.f32 %v6819, %v6852
        %v6854 = vadd.f32 %v6820, %v6852
        %v6855 = vadd.f32 %v6821, %v6852
        %v6856 = vadd.f32 %v6822, %v6852
        %v6857 = vadd.f32 %v6823, %v6852
        %v6858 = vadd.f32 %v6824, %v6852
        %v6859 = vadd.f32 %v6825, %v6852
        %v6860 = vadd.f32 %v6826, %v6852
        %v6861 = vadd.f32 %v6827, %v6852
        %v6862 = vadd.f32 %v6828, %v6852
        %v6863 = vadd.f32 %v6829, %v6852
        %v6864 = vadd.f32 %v6830, %v6852
        %v6865 = vadd.f32 %v6831, %v6852
        %v6866 = vadd.f32 %v6832, %v6852
        %v6867 = vadd.f32 %v6833, %v6852
        %v6868 = vadd.f32 %v6834, %v6852
        %v6869 = vadd.f32 %v6835, %v6852
        %v6870 = vadd.f32 %v6836, %v6852
        %v6871 = vadd.f32 %v6837, %v6852
        %v6872 = vadd.f32 %v6838, %v6852
        %v6873 = vadd.f32 %v6839, %v6852
        %v6874 = vadd.f32 %v6840, %v6852
        %v6875 = vadd.f32 %v6841, %v6852
        %v6876 = vadd.f32 %v6842, %v6852
        %v6877 = vadd.f32 %v6843, %v6852
        %v6878 = vadd.f32 %v6844, %v6852
        %v6879 = vadd.f32 %v6845, %v6852
        %v6880 = vadd.f32 %v6846, %v6852
        %v6881 = vadd.f32 %v6847, %v6852
        %v6882 = vadd.f32 %v6848, %v6852
        %v6883 = vadd.f32 %v6849, %v6852
        %v6884 = vadd.f32 %v6850, %v6852
        %v6885 = vld [vmem:[%s819] sm:$0xff]
        %v6886 = vld [vmem:[%s819 + $0x8] sm:$0xff]
        %v6887 = vld [vmem:[%s819 + $0x10] sm:$0xff]
        %v6888 = vld [vmem:[%s819 + $0x18] sm:$0xff]
        %v6889 = vld [vmem:[%s819 + $0x20] sm:$0xff]
        %v6890 = vld [vmem:[%s819 + $0x28] sm:$0xff]
        %v6891 = vld [vmem:[%s819 + $0x30] sm:$0xff]
        %v6892 = vld [vmem:[%s819 + $0x38] sm:$0xff]
        %v6893 = vld [vmem:[%s819 + $0x40] sm:$0xff]
        %v6894 = vld [vmem:[%s819 + $0x48] sm:$0xff]
        %v6895 = vld [vmem:[%s819 + $0x50] sm:$0xff]
        %v6896 = vld [vmem:[%s819 + $0x58] sm:$0xff]
        %v6897 = vld [vmem:[%s819 + $0x60] sm:$0xff]
        %v6898 = vld [vmem:[%s819 + $0x68] sm:$0xff]
        %v6899 = vld [vmem:[%s819 + $0x70] sm:$0xff]
        %v6900 = vld [vmem:[%s819 + $0x78] sm:$0xff]
        %v6901 = vld [vmem:[%s819 + $0x80] sm:$0xff]
        %v6902 = vld [vmem:[%s819 + $0x88] sm:$0xff]
        %v6903 = vld [vmem:[%s819 + $0x90] sm:$0xff]
        %v6904 = vld [vmem:[%s819 + $0x98] sm:$0xff]
        %v6905 = vld [vmem:[%s819 + $0xa0] sm:$0xff]
        %v6906 = vld [vmem:[%s819 + $0xa8] sm:$0xff]
        %v6907 = vld [vmem:[%s819 + $0xb0] sm:$0xff]
        %v6908 = vld [vmem:[%s819 + $0xb8] sm:$0xff]
        %v6909 = vld [vmem:[%s819 + $0xc0] sm:$0xff]
        %v6910 = vld [vmem:[%s819 + $0xc8] sm:$0xff]
        %v6911 = vld [vmem:[%s819 + $0xd0] sm:$0xff]
        %v6912 = vld [vmem:[%s819 + $0xd8] sm:$0xff]
        %v6913 = vld [vmem:[%s819 + $0xe0] sm:$0xff]
        %v6914 = vld [vmem:[%s819 + $0xe8] sm:$0xff]
        %v6915 = vld [vmem:[%s819 + $0xf0] sm:$0xff]
        %v6916 = vld [vmem:[%s819 + $0xf8] sm:$0xff]
        %v6917 = vsub.f32 %v6853, %v6885
        %v6918 = vsub.f32 %v6854, %v6886
        %v6919 = vsub.f32 %v6855, %v6887
        %v6920 = vsub.f32 %v6856, %v6888
        %v6921 = vsub.f32 %v6857, %v6889
        %v6922 = vsub.f32 %v6858, %v6890
        %v6923 = vsub.f32 %v6859, %v6891
        %v6924 = vsub.f32 %v6860, %v6892
        %v6925 = vsub.f32 %v6861, %v6893
        %v6926 = vsub.f32 %v6862, %v6894
        %v6927 = vsub.f32 %v6863, %v6895
        %v6928 = vsub.f32 %v6864, %v6896
        %v6929 = vsub.f32 %v6865, %v6897
        %v6930 = vsub.f32 %v6866, %v6898
        %v6931 = vsub.f32 %v6867, %v6899
        %v6932 = vsub.f32 %v6868, %v6900
        %v6933 = vsub.f32 %v6869, %v6901
        %v6934 = vsub.f32 %v6870, %v6902
        %v6935 = vsub.f32 %v6871, %v6903
        %v6936 = vsub.f32 %v6872, %v6904
        %v6937 = vsub.f32 %v6873, %v6905
        %v6938 = vsub.f32 %v6874, %v6906
        %v6939 = vsub.f32 %v6875, %v6907
        %v6940 = vsub.f32 %v6876, %v6908
        %v6941 = vsub.f32 %v6877, %v6909
        %v6942 = vsub.f32 %v6878, %v6910
        %v6943 = vsub.f32 %v6879, %v6911
        %v6944 = vsub.f32 %v6880, %v6912
        %v6945 = vsub.f32 %v6881, %v6913
        %v6946 = vsub.f32 %v6882, %v6914
        %v6947 = vsub.f32 %v6883, %v6915
        %v6948 = vsub.f32 %v6884, %v6916
        %v6949 = vld [vmem:[%s825] sm:$0xff]
        %v6950 = vld [vmem:[%s825 + $0x8] sm:$0xff]
        %v6951 = vld [vmem:[%s825 + $0x10] sm:$0xff]
        %v6952 = vld [vmem:[%s825 + $0x18] sm:$0xff]
        %v6953 = vld [vmem:[%s825 + $0x20] sm:$0xff]
        %v6954 = vld [vmem:[%s825 + $0x28] sm:$0xff]
        %v6955 = vld [vmem:[%s825 + $0x30] sm:$0xff]
        %v6956 = vld [vmem:[%s825 + $0x38] sm:$0xff]
        %v6957 = vld [vmem:[%s825 + $0x40] sm:$0xff]
        %v6958 = vld [vmem:[%s825 + $0x48] sm:$0xff]
        %v6959 = vld [vmem:[%s825 + $0x50] sm:$0xff]
        %v6960 = vld [vmem:[%s825 + $0x58] sm:$0xff]
        %v6961 = vld [vmem:[%s825 + $0x60] sm:$0xff]
        %v6962 = vld [vmem:[%s825 + $0x68] sm:$0xff]
        %v6963 = vld [vmem:[%s825 + $0x70] sm:$0xff]
        %v6964 = vld [vmem:[%s825 + $0x78] sm:$0xff]
        %v6965 = vld [vmem:[%s825 + $0x80] sm:$0xff]
        %v6966 = vld [vmem:[%s825 + $0x88] sm:$0xff]
        %v6967 = vld [vmem:[%s825 + $0x90] sm:$0xff]
        %v6968 = vld [vmem:[%s825 + $0x98] sm:$0xff]
        %v6969 = vld [vmem:[%s825 + $0xa0] sm:$0xff]
        %v6970 = vld [vmem:[%s825 + $0xa8] sm:$0xff]
        %v6971 = vld [vmem:[%s825 + $0xb0] sm:$0xff]
        %v6972 = vld [vmem:[%s825 + $0xb8] sm:$0xff]
        %v6973 = vld [vmem:[%s825 + $0xc0] sm:$0xff]
        %v6974 = vld [vmem:[%s825 + $0xc8] sm:$0xff]
        %v6975 = vld [vmem:[%s825 + $0xd0] sm:$0xff]
        %v6976 = vld [vmem:[%s825 + $0xd8] sm:$0xff]
        %v6977 = vld [vmem:[%s825 + $0xe0] sm:$0xff]
        %v6978 = vld [vmem:[%s825 + $0xe8] sm:$0xff]
        %v6979 = vld [vmem:[%s825 + $0xf0] sm:$0xff]
        %v6980 = vld [vmem:[%s825 + $0xf8] sm:$0xff]
        %s6981 = sld [smem:[#allocation3]]
        %v6982 = vadd.f32 %v937, %v6917
        %v6983 = vadd.f32 %v940, %v6918
        %v6984 = vadd.f32 %v943, %v6919
        %v6985 = vadd.f32 %v946, %v6920
        %v6986 = vadd.f32 %v949, %v6921
        %v6987 = vadd.f32 %v952, %v6922
        %v6988 = vadd.f32 %v955, %v6923
        %v6989 = vadd.f32 %v958, %v6924
        %v6990 = vadd.f32 %v961, %v6925
        %v6991 = vadd.f32 %v964, %v6926
        %v6992 = vadd.f32 %v967, %v6927
        %v6993 = vadd.f32 %v970, %v6928
        %v6994 = vadd.f32 %v973, %v6929
        %v6995 = vadd.f32 %v976, %v6930
        %v6996 = vadd.f32 %v979, %v6931
        %v6997 = vadd.f32 %v982, %v6932
        %v6998 = vadd.f32 %v985, %v6933
        %v6999 = vadd.f32 %v988, %v6934
        %v7000 = vadd.f32 %v991, %v6935
        %v7001 = vadd.f32 %v994, %v6936
        %v7002 = vadd.f32 %v997, %v6937
        %v7003 = vadd.f32 %v1000, %v6938
        %v7004 = vadd.f32 %v1003, %v6939
        %v7005 = vadd.f32 %v1006, %v6940
        %v7006 = vadd.f32 %v1009, %v6941
        %v7007 = vadd.f32 %v1012, %v6942
        %v7008 = vadd.f32 %v1015, %v6943
        %v7009 = vadd.f32 %v1018, %v6944
        %v7010 = vadd.f32 %v1021, %v6945
        %v7011 = vadd.f32 %v1024, %v6946
        %v7012 = vadd.f32 %v1027, %v6947
        %v7013 = vadd.f32 %v1030, %v6948
        %v7014 = vmul.f32 %v6982, %v6949
        %v7015 = vmul.f32 %v6983, %v6950
        %v7016 = vmul.f32 %v6984, %v6951
        %v7017 = vmul.f32 %v6985, %v6952
        %v7018 = vmul.f32 %v6986, %v6953
        %v7019 = vmul.f32 %v6987, %v6954
        %v7020 = vmul.f32 %v6988, %v6955
        %v7021 = vmul.f32 %v6989, %v6956
        %v7022 = vmul.f32 %v6990, %v6957
        %v7023 = vmul.f32 %v6991, %v6958
        %v7024 = vmul.f32 %v6992, %v6959
        %v7025 = vmul.f32 %v6993, %v6960
        %v7026 = vmul.f32 %v6994, %v6961
        %v7027 = vmul.f32 %v6995, %v6962
        %v7028 = vmul.f32 %v6996, %v6963
        %v7029 = vmul.f32 %v6997, %v6964
        %v7030 = vmul.f32 %v6998, %v6965
        %v7031 = vmul.f32 %v6999, %v6966
        %v7032 = vmul.f32 %v7000, %v6967
        %v7033 = vmul.f32 %v7001, %v6968
        %v7034 = vmul.f32 %v7002, %v6969
        %v7035 = vmul.f32 %v7003, %v6970
        %v7036 = vmul.f32 %v7004, %v6971
        %v7037 = vmul.f32 %v7005, %v6972
        %v7038 = vmul.f32 %v7006, %v6973
        %v7039 = vmul.f32 %v7007, %v6974
        %v7040 = vmul.f32 %v7008, %v6975
        %v7041 = vmul.f32 %v7009, %v6976
        %v7042 = vmul.f32 %v7010, %v6977
        %v7043 = vmul.f32 %v7011, %v6978
        %v7044 = vmul.f32 %v7012, %v6979
        %v7045 = vmul.f32 %v7013, %v6980
        %v7046 = vmul.f32 %v7014, %v7014
        %v7047 = vmul.f32 %v7015, %v7015
        %v7048 = vmul.f32 %v7016, %v7016
        %v7049 = vmul.f32 %v7017, %v7017
        %v7050 = vmul.f32 %v7018, %v7018
        %v7051 = vmul.f32 %v7019, %v7019
        %v7052 = vmul.f32 %v7020, %v7020
        %v7053 = vmul.f32 %v7021, %v7021
        %v7054 = vmul.f32 %v7022, %v7022
        %v7055 = vmul.f32 %v7023, %v7023
        %v7056 = vmul.f32 %v7024, %v7024
        %v7057 = vmul.f32 %v7025, %v7025
        %v7058 = vmul.f32 %v7026, %v7026
        %v7059 = vmul.f32 %v7027, %v7027
        %v7060 = vmul.f32 %v7028, %v7028
        %v7061 = vmul.f32 %v7029, %v7029
        %v7062 = vmul.f32 %v7030, %v7030
        %v7063 = vmul.f32 %v7031, %v7031
        %v7064 = vmul.f32 %v7032, %v7032
        %v7065 = vmul.f32 %v7033, %v7033
        %v7066 = vmul.f32 %v7034, %v7034
        %v7067 = vmul.f32 %v7035, %v7035
        %v7068 = vmul.f32 %v7036, %v7036
        %v7069 = vmul.f32 %v7037, %v7037
        %v7070 = vmul.f32 %v7038, %v7038
        %v7071 = vmul.f32 %v7039, %v7039
        %v7072 = vmul.f32 %v7040, %v7040
        %v7073 = vmul.f32 %v7041, %v7041
        %v7074 = vmul.f32 %v7042, %v7042
        %v7075 = vmul.f32 %v7043, %v7043
        %v7076 = vmul.f32 %v7044, %v7044
        %v7077 = vmul.f32 %v7045, %v7045
        %vm7078 = vcmask 7168
        %v7079 = vsel %vm7078, %v7046, 0.0
        %v7080 = vsel %vm7078, %v7047, 0.0
        %v7081 = vadd.f32 %v7079, %v7080
        %v7082 = vsel %vm7078, %v7048, 0.0
        %v7083 = vadd.f32 %v7081, %v7082
        %v7084 = vsel %vm7078, %v7049, 0.0
        %v7085 = vadd.f32 %v7083, %v7084
        %v7086 = vsel %vm7078, %v7050, 0.0
        %v7087 = vadd.f32 %v7085, %v7086
        %v7088 = vsel %vm7078, %v7051, 0.0
        %v7089 = vadd.f32 %v7087, %v7088
        %v7090 = vsel %vm7078, %v7052, 0.0
        %v7091 = vadd.f32 %v7089, %v7090
        %v7092 = vsel %vm7078, %v7053, 0.0
        %v7093 = vadd.f32 %v7091, %v7092
        %v7094 = vsel %vm7078, %v7054, 0.0
        %v7095 = vadd.f32 %v7093, %v7094
        %v7096 = vsel %vm7078, %v7055, 0.0
        %v7097 = vadd.f32 %v7095, %v7096
        %v7098 = vsel %vm7078, %v7056, 0.0
        %v7099 = vadd.f32 %v7097, %v7098
        %v7100 = vsel %vm7078, %v7057, 0.0
        %v7101 = vadd.f32 %v7099, %v7100
        %v7102 = vsel %vm7078, %v7058, 0.0
        %v7103 = vadd.f32 %v7101, %v7102
        %v7104 = vsel %vm7078, %v7059, 0.0
        %v7105 = vadd.f32 %v7103, %v7104
        %v7106 = vsel %vm7078, %v7060, 0.0
        %v7107 = vadd.f32 %v7105, %v7106
        %v7108 = vsel %vm7078, %v7061, 0.0
        %v7109 = vadd.f32 %v7107, %v7108
        %v7110 = vsel %vm7078, %v7062, 0.0
        %v7111 = vadd.f32 %v7109, %v7110
        %v7112 = vsel %vm7078, %v7063, 0.0
        %v7113 = vadd.f32 %v7111, %v7112
        %v7114 = vsel %vm7078, %v7064, 0.0
        %v7115 = vadd.f32 %v7113, %v7114
        %v7116 = vsel %vm7078, %v7065, 0.0
        %v7117 = vadd.f32 %v7115, %v7116
        %v7118 = vsel %vm7078, %v7066, 0.0
        %v7119 = vadd.f32 %v7117, %v7118
        %v7120 = vsel %vm7078, %v7067, 0.0
        %v7121 = vadd.f32 %v7119, %v7120
        %v7122 = vsel %vm7078, %v7068, 0.0
        %v7123 = vadd.f32 %v7121, %v7122
        %v7124 = vsel %vm7078, %v7069, 0.0
        %v7125 = vadd.f32 %v7123, %v7124
        %v7126 = vsel %vm7078, %v7070, 0.0
        %v7127 = vadd.f32 %v7125, %v7126
        %v7128 = vsel %vm7078, %v7071, 0.0
        %v7129 = vadd.f32 %v7127, %v7128
        %v7130 = vsel %vm7078, %v7072, 0.0
        %v7131 = vadd.f32 %v7129, %v7130
        %v7132 = vsel %vm7078, %v7073, 0.0
        %v7133 = vadd.f32 %v7131, %v7132
        %v7134 = vsel %vm7078, %v7074, 0.0
        %v7135 = vadd.f32 %v7133, %v7134
        %v7136 = vsel %vm7078, %v7075, 0.0
        %v7137 = vadd.f32 %v7135, %v7136
        %v7138 = vsel %vm7078, %v7076, 0.0
        %v7139 = vadd.f32 %v7137, %v7138
        %v7140 = vsel %vm7078, %v7077, 0.0
        %v7141 = vadd.f32 %v7139, %v7140
        %7142 = vadd.xlane.f32.xlu0 %v7141
        %v7143 = vpop.xlane.xlu0 %7142
        %v7144 = vrot.slane %v7143, 4
        %v7145 = vadd.f32 %v7143, %v7144
        %v7146 = vrot.slane %v7145, 2
        %v7147 = vadd.f32 %v7145, %v7146
        %v7148 = vrot.slane %v7147, 1
        %v7149 = vadd.f32 %v7147, %v7148
        %s7150 = vtos %v7149
        %s7151 = sadd.f32 %s6981, %s7150
        %s7152 = scalar_lea.smem [#allocation3], 0
        %7153 = sst [smem:[%s7152]] %s7151
        %s7154 = sld [smem:[#allocation3 + $0x1]]
        %v7155 = vadd.f32 %v4481, %v6917
        %v7156 = vadd.f32 %v4484, %v6918
        %v7157 = vadd.f32 %v4487, %v6919
        %v7158 = vadd.f32 %v4490, %v6920
        %v7159 = vadd.f32 %v4493, %v6921
        %v7160 = vadd.f32 %v4496, %v6922
        %v7161 = vadd.f32 %v4499, %v6923
        %v7162 = vadd.f32 %v4502, %v6924
        %v7163 = vadd.f32 %v4505, %v6925
        %v7164 = vadd.f32 %v4508, %v6926
        %v7165 = vadd.f32 %v4511, %v6927
        %v7166 = vadd.f32 %v4514, %v6928
        %v7167 = vadd.f32 %v4517, %v6929
        %v7168 = vadd.f32 %v4520, %v6930
        %v7169 = vadd.f32 %v4523, %v6931
        %v7170 = vadd.f32 %v4526, %v6932
        %v7171 = vadd.f32 %v4529, %v6933
        %v7172 = vadd.f32 %v4532, %v6934
        %v7173 = vadd.f32 %v4535, %v6935
        %v7174 = vadd.f32 %v4538, %v6936
        %v7175 = vadd.f32 %v4541, %v6937
        %v7176 = vadd.f32 %v4544, %v6938
        %v7177 = vadd.f32 %v4547, %v6939
        %v7178 = vadd.f32 %v4550, %v6940
        %v7179 = vadd.f32 %v4553, %v6941
        %v7180 = vadd.f32 %v4556, %v6942
        %v7181 = vadd.f32 %v4559, %v6943
        %v7182 = vadd.f32 %v4562, %v6944
        %v7183 = vadd.f32 %v4565, %v6945
        %v7184 = vadd.f32 %v4568, %v6946
        %v7185 = vadd.f32 %v4571, %v6947
        %v7186 = vadd.f32 %v4574, %v6948
        %v7187 = vmul.f32 %v7155, %v6949
        %v7188 = vmul.f32 %v7156, %v6950
        %v7189 = vmul.f32 %v7157, %v6951
        %v7190 = vmul.f32 %v7158, %v6952
        %v7191 = vmul.f32 %v7159, %v6953
        %v7192 = vmul.f32 %v7160, %v6954
        %v7193 = vmul.f32 %v7161, %v6955
        %v7194 = vmul.f32 %v7162, %v6956
        %v7195 = vmul.f32 %v7163, %v6957
        %v7196 = vmul.f32 %v7164, %v6958
        %v7197 = vmul.f32 %v7165, %v6959
        %v7198 = vmul.f32 %v7166, %v6960
        %v7199 = vmul.f32 %v7167, %v6961
        %v7200 = vmul.f32 %v7168, %v6962
        %v7201 = vmul.f32 %v7169, %v6963
        %v7202 = vmul.f32 %v7170, %v6964
        %v7203 = vmul.f32 %v7171, %v6965
        %v7204 = vmul.f32 %v7172, %v6966
        %v7205 = vmul.f32 %v7173, %v6967
        %v7206 = vmul.f32 %v7174, %v6968
        %v7207 = vmul.f32 %v7175, %v6969
        %v7208 = vmul.f32 %v7176, %v6970
        %v7209 = vmul.f32 %v7177, %v6971
        %v7210 = vmul.f32 %v7178, %v6972
        %v7211 = vmul.f32 %v7179, %v6973
        %v7212 = vmul.f32 %v7180, %v6974
        %v7213 = vmul.f32 %v7181, %v6975
        %v7214 = vmul.f32 %v7182, %v6976
        %v7215 = vmul.f32 %v7183, %v6977
        %v7216 = vmul.f32 %v7184, %v6978
        %v7217 = vmul.f32 %v7185, %v6979
        %v7218 = vmul.f32 %v7186, %v6980
        %v7219 = vmul.f32 %v7187, %v7187
        %v7220 = vmul.f32 %v7188, %v7188
        %v7221 = vmul.f32 %v7189, %v7189
        %v7222 = vmul.f32 %v7190, %v7190
        %v7223 = vmul.f32 %v7191, %v7191
        %v7224 = vmul.f32 %v7192, %v7192
        %v7225 = vmul.f32 %v7193, %v7193
        %v7226 = vmul.f32 %v7194, %v7194
        %v7227 = vmul.f32 %v7195, %v7195
        %v7228 = vmul.f32 %v7196, %v7196
        %v7229 = vmul.f32 %v7197, %v7197
        %v7230 = vmul.f32 %v7198, %v7198
        %v7231 = vmul.f32 %v7199, %v7199
        %v7232 = vmul.f32 %v7200, %v7200
        %v7233 = vmul.f32 %v7201, %v7201
        %v7234 = vmul.f32 %v7202, %v7202
        %v7235 = vmul.f32 %v7203, %v7203
        %v7236 = vmul.f32 %v7204, %v7204
        %v7237 = vmul.f32 %v7205, %v7205
        %v7238 = vmul.f32 %v7206, %v7206
        %v7239 = vmul.f32 %v7207, %v7207
        %v7240 = vmul.f32 %v7208, %v7208
        %v7241 = vmul.f32 %v7209, %v7209
        %v7242 = vmul.f32 %v7210, %v7210
        %v7243 = vmul.f32 %v7211, %v7211
        %v7244 = vmul.f32 %v7212, %v7212
        %v7245 = vmul.f32 %v7213, %v7213
        %v7246 = vmul.f32 %v7214, %v7214
        %v7247 = vmul.f32 %v7215, %v7215
        %v7248 = vmul.f32 %v7216, %v7216
        %v7249 = vmul.f32 %v7217, %v7217
        %v7250 = vmul.f32 %v7218, %v7218
        %v7251 = vsel %vm7078, %v7219, 0.0
        %v7252 = vsel %vm7078, %v7220, 0.0
        %v7253 = vadd.f32 %v7251, %v7252
        %v7254 = vsel %vm7078, %v7221, 0.0
        %v7255 = vadd.f32 %v7253, %v7254
        %v7256 = vsel %vm7078, %v7222, 0.0
        %v7257 = vadd.f32 %v7255, %v7256
        %v7258 = vsel %vm7078, %v7223, 0.0
        %v7259 = vadd.f32 %v7257, %v7258
        %v7260 = vsel %vm7078, %v7224, 0.0
        %v7261 = vadd.f32 %v7259, %v7260
        %v7262 = vsel %vm7078, %v7225, 0.0
        %v7263 = vadd.f32 %v7261, %v7262
        %v7264 = vsel %vm7078, %v7226, 0.0
        %v7265 = vadd.f32 %v7263, %v7264
        %v7266 = vsel %vm7078, %v7227, 0.0
        %v7267 = vadd.f32 %v7265, %v7266
        %v7268 = vsel %vm7078, %v7228, 0.0
        %v7269 = vadd.f32 %v7267, %v7268
        %v7270 = vsel %vm7078, %v7229, 0.0
        %v7271 = vadd.f32 %v7269, %v7270
        %v7272 = vsel %vm7078, %v7230, 0.0
        %v7273 = vadd.f32 %v7271, %v7272
        %v7274 = vsel %vm7078, %v7231, 0.0
        %v7275 = vadd.f32 %v7273, %v7274
        %v7276 = vsel %vm7078, %v7232, 0.0
        %v7277 = vadd.f32 %v7275, %v7276
        %v7278 = vsel %vm7078, %v7233, 0.0
        %v7279 = vadd.f32 %v7277, %v7278
        %v7280 = vsel %vm7078, %v7234, 0.0
        %v7281 = vadd.f32 %v7279, %v7280
        %v7282 = vsel %vm7078, %v7235, 0.0
        %v7283 = vadd.f32 %v7281, %v7282
        %v7284 = vsel %vm7078, %v7236, 0.0
        %v7285 = vadd.f32 %v7283, %v7284
        %v7286 = vsel %vm7078, %v7237, 0.0
        %v7287 = vadd.f32 %v7285, %v7286
        %v7288 = vsel %vm7078, %v7238, 0.0
        %v7289 = vadd.f32 %v7287, %v7288
        %v7290 = vsel %vm7078, %v7239, 0.0
        %v7291 = vadd.f32 %v7289, %v7290
        %v7292 = vsel %vm7078, %v7240, 0.0
        %v7293 = vadd.f32 %v7291, %v7292
        %v7294 = vsel %vm7078, %v7241, 0.0
        %v7295 = vadd.f32 %v7293, %v7294
        %v7296 = vsel %vm7078, %v7242, 0.0
        %v7297 = vadd.f32 %v7295, %v7296
        %v7298 = vsel %vm7078, %v7243, 0.0
        %v7299 = vadd.f32 %v7297, %v7298
        %v7300 = vsel %vm7078, %v7244, 0.0
        %v7301 = vadd.f32 %v7299, %v7300
        %v7302 = vsel %vm7078, %v7245, 0.0
        %v7303 = vadd.f32 %v7301, %v7302
        %v7304 = vsel %vm7078, %v7246, 0.0
        %v7305 = vadd.f32 %v7303, %v7304
        %v7306 = vsel %vm7078, %v7247, 0.0
        %v7307 = vadd.f32 %v7305, %v7306
        %v7308 = vsel %vm7078, %v7248, 0.0
        %v7309 = vadd.f32 %v7307, %v7308
        %v7310 = vsel %vm7078, %v7249, 0.0
        %v7311 = vadd.f32 %v7309, %v7310
        %v7312 = vsel %vm7078, %v7250, 0.0
        %v7313 = vadd.f32 %v7311, %v7312
        %7314 = vadd.xlane.f32.xlu0 %v7313
        %v7315 = vpop.xlane.xlu0 %7314
        %v7316 = vrot.slane %v7315, 4
        %v7317 = vadd.f32 %v7315, %v7316
        %v7318 = vrot.slane %v7317, 2
        %v7319 = vadd.f32 %v7317, %v7318
        %v7320 = vrot.slane %v7319, 1
        %v7321 = vadd.f32 %v7319, %v7320
        %s7322 = vtos %v7321
        %s7323 = sadd.f32 %s7154, %s7322
        %s7324 = scalar_lea.smem [#allocation3], 1
        %7325 = sst [smem:[%s7324]] %s7323
        %s7326 = sld [smem:[#allocation3 + $0x2]]
        %v7327 = vadd.f32 %v6661, %v6917
        %v7328 = vadd.f32 %v6664, %v6918
        %v7329 = vadd.f32 %v6667, %v6919
        %v7330 = vadd.f32 %v6670, %v6920
        %v7331 = vadd.f32 %v6673, %v6921
        %v7332 = vadd.f32 %v6676, %v6922
        %v7333 = vadd.f32 %v6679, %v6923
        %v7334 = vadd.f32 %v6682, %v6924
        %v7335 = vadd.f32 %v6685, %v6925
        %v7336 = vadd.f32 %v6688, %v6926
        %v7337 = vadd.f32 %v6691, %v6927
        %v7338 = vadd.f32 %v6694, %v6928
        %v7339 = vadd.f32 %v6697, %v6929
        %v7340 = vadd.f32 %v6700, %v6930
        %v7341 = vadd.f32 %v6703, %v6931
        %v7342 = vadd.f32 %v6706, %v6932
        %v7343 = vadd.f32 %v6709, %v6933
        %v7344 = vadd.f32 %v6712, %v6934
        %v7345 = vadd.f32 %v6715, %v6935
        %v7346 = vadd.f32 %v6718, %v6936
        %v7347 = vadd.f32 %v6721, %v6937
        %v7348 = vadd.f32 %v6724, %v6938
        %v7349 = vadd.f32 %v6727, %v6939
        %v7350 = vadd.f32 %v6730, %v6940
        %v7351 = vadd.f32 %v6733, %v6941
        %v7352 = vadd.f32 %v6736, %v6942
        %v7353 = vadd.f32 %v6739, %v6943
        %v7354 = vadd.f32 %v6742, %v6944
        %v7355 = vadd.f32 %v6745, %v6945
        %v7356 = vadd.f32 %v6748, %v6946
        %v7357 = vadd.f32 %v6751, %v6947
        %v7358 = vadd.f32 %v6754, %v6948
        %v7359 = vmul.f32 %v7327, %v6949
        %v7360 = vmul.f32 %v7328, %v6950
        %v7361 = vmul.f32 %v7329, %v6951
        %v7362 = vmul.f32 %v7330, %v6952
        %v7363 = vmul.f32 %v7331, %v6953
        %v7364 = vmul.f32 %v7332, %v6954
        %v7365 = vmul.f32 %v7333, %v6955
        %v7366 = vmul.f32 %v7334, %v6956
        %v7367 = vmul.f32 %v7335, %v6957
        %v7368 = vmul.f32 %v7336, %v6958
        %v7369 = vmul.f32 %v7337, %v6959
        %v7370 = vmul.f32 %v7338, %v6960
        %v7371 = vmul.f32 %v7339, %v6961
        %v7372 = vmul.f32 %v7340, %v6962
        %v7373 = vmul.f32 %v7341, %v6963
        %v7374 = vmul.f32 %v7342, %v6964
        %v7375 = vmul.f32 %v7343, %v6965
        %v7376 = vmul.f32 %v7344, %v6966
        %v7377 = vmul.f32 %v7345, %v6967
        %v7378 = vmul.f32 %v7346, %v6968
        %v7379 = vmul.f32 %v7347, %v6969
        %v7380 = vmul.f32 %v7348, %v6970
        %v7381 = vmul.f32 %v7349, %v6971
        %v7382 = vmul.f32 %v7350, %v6972
        %v7383 = vmul.f32 %v7351, %v6973
        %v7384 = vmul.f32 %v7352, %v6974
        %v7385 = vmul.f32 %v7353, %v6975
        %v7386 = vmul.f32 %v7354, %v6976
        %v7387 = vmul.f32 %v7355, %v6977
        %v7388 = vmul.f32 %v7356, %v6978
        %v7389 = vmul.f32 %v7357, %v6979
        %v7390 = vmul.f32 %v7358, %v6980
        %v7391 = vmul.f32 %v7359, %v7359
        %v7392 = vmul.f32 %v7360, %v7360
        %v7393 = vmul.f32 %v7361, %v7361
        %v7394 = vmul.f32 %v7362, %v7362
        %v7395 = vmul.f32 %v7363, %v7363
        %v7396 = vmul.f32 %v7364, %v7364
        %v7397 = vmul.f32 %v7365, %v7365
        %v7398 = vmul.f32 %v7366, %v7366
        %v7399 = vmul.f32 %v7367, %v7367
        %v7400 = vmul.f32 %v7368, %v7368
        %v7401 = vmul.f32 %v7369, %v7369
        %v7402 = vmul.f32 %v7370, %v7370
        %v7403 = vmul.f32 %v7371, %v7371
        %v7404 = vmul.f32 %v7372, %v7372
        %v7405 = vmul.f32 %v7373, %v7373
        %v7406 = vmul.f32 %v7374, %v7374
        %v7407 = vmul.f32 %v7375, %v7375
        %v7408 = vmul.f32 %v7376, %v7376
        %v7409 = vmul.f32 %v7377, %v7377
        %v7410 = vmul.f32 %v7378, %v7378
        %v7411 = vmul.f32 %v7379, %v7379
        %v7412 = vmul.f32 %v7380, %v7380
        %v7413 = vmul.f32 %v7381, %v7381
        %v7414 = vmul.f32 %v7382, %v7382
        %v7415 = vmul.f32 %v7383, %v7383
        %v7416 = vmul.f32 %v7384, %v7384
        %v7417 = vmul.f32 %v7385, %v7385
        %v7418 = vmul.f32 %v7386, %v7386
        %v7419 = vmul.f32 %v7387, %v7387
        %v7420 = vmul.f32 %v7388, %v7388
        %v7421 = vmul.f32 %v7389, %v7389
        %v7422 = vmul.f32 %v7390, %v7390
        %v7423 = vsel %vm7078, %v7391, 0.0
        %v7424 = vsel %vm7078, %v7392, 0.0
        %v7425 = vadd.f32 %v7423, %v7424
        %v7426 = vsel %vm7078, %v7393, 0.0
        %v7427 = vadd.f32 %v7425, %v7426
        %v7428 = vsel %vm7078, %v7394, 0.0
        %v7429 = vadd.f32 %v7427, %v7428
        %v7430 = vsel %vm7078, %v7395, 0.0
        %v7431 = vadd.f32 %v7429, %v7430
        %v7432 = vsel %vm7078, %v7396, 0.0
        %v7433 = vadd.f32 %v7431, %v7432
        %v7434 = vsel %vm7078, %v7397, 0.0
        %v7435 = vadd.f32 %v7433, %v7434
        %v7436 = vsel %vm7078, %v7398, 0.0
        %v7437 = vadd.f32 %v7435, %v7436
        %v7438 = vsel %vm7078, %v7399, 0.0
        %v7439 = vadd.f32 %v7437, %v7438
        %v7440 = vsel %vm7078, %v7400, 0.0
        %v7441 = vadd.f32 %v7439, %v7440
        %v7442 = vsel %vm7078, %v7401, 0.0
        %v7443 = vadd.f32 %v7441, %v7442
        %v7444 = vsel %vm7078, %v7402, 0.0
        %v7445 = vadd.f32 %v7443, %v7444
        %v7446 = vsel %vm7078, %v7403, 0.0
        %v7447 = vadd.f32 %v7445, %v7446
        %v7448 = vsel %vm7078, %v7404, 0.0
        %v7449 = vadd.f32 %v7447, %v7448
        %v7450 = vsel %vm7078, %v7405, 0.0
        %v7451 = vadd.f32 %v7449, %v7450
        %v7452 = vsel %vm7078, %v7406, 0.0
        %v7453 = vadd.f32 %v7451, %v7452
        %v7454 = vsel %vm7078, %v7407, 0.0
        %v7455 = vadd.f32 %v7453, %v7454
        %v7456 = vsel %vm7078, %v7408, 0.0
        %v7457 = vadd.f32 %v7455, %v7456
        %v7458 = vsel %vm7078, %v7409, 0.0
        %v7459 = vadd.f32 %v7457, %v7458
        %v7460 = vsel %vm7078, %v7410, 0.0
        %v7461 = vadd.f32 %v7459, %v7460
        %v7462 = vsel %vm7078, %v7411, 0.0
        %v7463 = vadd.f32 %v7461, %v7462
        %v7464 = vsel %vm7078, %v7412, 0.0
        %v7465 = vadd.f32 %v7463, %v7464
        %v7466 = vsel %vm7078, %v7413, 0.0
        %v7467 = vadd.f32 %v7465, %v7466
        %v7468 = vsel %vm7078, %v7414, 0.0
        %v7469 = vadd.f32 %v7467, %v7468
        %v7470 = vsel %vm7078, %v7415, 0.0
        %v7471 = vadd.f32 %v7469, %v7470
        %v7472 = vsel %vm7078, %v7416, 0.0
        %v7473 = vadd.f32 %v7471, %v7472
        %v7474 = vsel %vm7078, %v7417, 0.0
        %v7475 = vadd.f32 %v7473, %v7474
        %v7476 = vsel %vm7078, %v7418, 0.0
        %v7477 = vadd.f32 %v7475, %v7476
        %v7478 = vsel %vm7078, %v7419, 0.0
        %v7479 = vadd.f32 %v7477, %v7478
        %v7480 = vsel %vm7078, %v7420, 0.0
        %v7481 = vadd.f32 %v7479, %v7480
        %v7482 = vsel %vm7078, %v7421, 0.0
        %v7483 = vadd.f32 %v7481, %v7482
        %v7484 = vsel %vm7078, %v7422, 0.0
        %v7485 = vadd.f32 %v7483, %v7484
        %7486 = vadd.xlane.f32.xlu0 %v7485
        %v7487 = vpop.xlane.xlu0 %7486
        %v7488 = vrot.slane %v7487, 4
        %v7489 = vadd.f32 %v7487, %v7488
        %v7490 = vrot.slane %v7489, 2
        %v7491 = vadd.f32 %v7489, %v7490
        %v7492 = vrot.slane %v7491, 1
        %v7493 = vadd.f32 %v7491, %v7492
        %s7494 = vtos %v7493
        %s7495 = sadd.f32 %s7326, %s7494
        %s7496 = scalar_lea.smem [#allocation3], 2
        %7497 = sst [smem:[%s7496]] %s7495
        // Predicated region
        $region113: #{tpu_custom_call.1} parent=107 // pred_check
          %p7498 = pneg %p550
        $region114: #{tpu_custom_call.1} parent=107 // pred_check_branch
          %7500 = sbr.rel (%p7498) target = $region116
        $region115: #{tpu_custom_call.1} parent=107 // pred_region
          %7502 = vsyncadd [#allocation4], 0
          %s7504 = sshll.u32 %s22, 4
          %s7505 = int_to_ptr.hbm [resolvable:$true] %s7504
          %7507 = dma.smem_to_hbm [#allocation3], 16, %s7505, [#allocation4]
        $region116: #{tpu_custom_call.1} parent=107 // pred_fallthru
          _
        // Predicated region
        $region117: #{tpu_custom_call.1} parent=107 // pred_check
          %p7508 = pneg %p550
        $region118: #{tpu_custom_call.1} parent=107 // pred_check_branch
          %7510 = sbr.rel (%p7508) target = $region120
        $region119: #{tpu_custom_call.1} parent=107 // pred_region
          %7512 = dma.done [#allocation4], 16
        $region120: #{tpu_custom_call.1} parent=107 // pred_fallthru
          _
        %7513 = sfence
      $region108: #{tpu_custom_call.1} parent=5 // pred_fallthru
        _
      %p7514 = scmp.le.s32.totalorder 2, %s30
      // Predicated region
      $region121: #{tpu_custom_call.1} parent=5 // pred_check
        %p7515 = pneg %p7514
      $region122: #{tpu_custom_call.1} parent=5 // pred_check_branch
        %7517 = sbr.rel (%p7515) target = $region124
      $region123: #{tpu_custom_call.1} parent=5 // pred_region
        %s7518 = ssub.s32 %s30, 2
      $region124: #{tpu_custom_call.1} parent=5 // pred_fallthru
        _
    $region6: #{tpu_custom_call.1} parent=1 // loop_footer
      %s34 = sadd.s32 1, %s30
    $region7: #{tpu_custom_call.1} parent=1 // loop_footer_branch
      %29 = sbr.rel target = $region3
    $region8: #{tpu_custom_call.1} parent=1 // loop_exit
      _
    %7519 = vsyncpa [#allocation4], 1
    %s7520 = scalar_lea.sflag [#allocation4], 1
    %7521 = vsyncpa %s7520, 1

</llo_original>
